<compile_context>
chip_gen: v6e
topology: v6e:2x2x1
jax: 0.10.0
libtpu: 0.0.40
codegen_flags: <defaults>
</compile_context>

<pallas_src>
import functools
import math

import jax
import jax.numpy as jnp
from jax.experimental import pallas as pl
from jax.experimental.pallas import tpu as pltpu


# ---------------------------------------------------------------------------
# In-kernel helpers
# ---------------------------------------------------------------------------
def _layer_norm(x, g, b, eps=1e-5):
    # PyTorch nn.LayerNorm default eps = 1e-5, biased variance.
    mu = jnp.mean(x, axis=-1, keepdims=True)
    xc = x - mu
    var = jnp.mean(xc * xc, axis=-1, keepdims=True)
    return xc * jax.lax.rsqrt(var + eps) * g + b


_SQRT_2_OVER_PI = math.sqrt(2.0 / math.pi)


def _gelu_tanh(x):
    # tanh-approx GELU (EUP-friendly).  torch.nn.GELU() default is exact erf;
    # the approximation deviates by <~3e-3 per element (documented trade).
    return 0.5 * x * (1.0 + jnp.tanh(_SQRT_2_OVER_PI * (x + 0.044715 * x * x * x)))


def _gelu_exact(x):
    # Exact erf GELU -- used only in the pure-JAX reference (torch parity).
    return 0.5 * x * (1.0 + jax.lax.erf(x * (1.0 / math.sqrt(2.0))))


# ---------------------------------------------------------------------------
# Fused transformer-encoder-layer kernel (one batch *block* per grid step)
# ---------------------------------------------------------------------------
def _encoder_layer_kernel(nhead,
                          src_ref,
                          ln0g_ref, ln0b_ref,
                          wqkv_ref, bqkv_ref, wo_ref, bo_ref,
                          ln1g_ref, ln1b_ref,
                          w1_ref, b1_ref,
                          ln2g_ref, ln2b_ref,
                          w2_ref, b2_ref,
                          o_ref):
    Bblk, S, D = src_ref.shape
    hd = D // nhead
    M = Bblk * S

    # Fold the batch block into the matmul M dimension (free reshape: collapses
    # the two leading dims; lane dim untouched).
    x = src_ref[...].reshape(M, D)                            # (M, D) f32

    # ---- norm0 + fused QKV projection (bf16 MXU, f32 accumulation) ----------
    xn = _layer_norm(x, ln0g_ref[...], ln0b_ref[...])
    qkv = jnp.dot(xn.astype(jnp.bfloat16), wqkv_ref[...],
                  preferred_element_type=jnp.float32) + bqkv_ref[...]
    # 1/sqrt(hd) was folded into the Q columns of wqkv / bqkv offline.
    qkv = qkv.astype(jnp.bfloat16)
    # 128-aligned lane slices, then un-collapse the batch dim for attention.
    q3 = qkv[:, :D].reshape(Bblk, S, D)
    k3 = qkv[:, D:2 * D].reshape(Bblk, S, D)
    v3 = qkv[:, 2 * D:].reshape(Bblk, S, D)

    # ---- multi-head attention: sequences batched in one dot per head, heads
    #      accumulated through the matching row-slice of W_o (no lane concat) --
    acc = jnp.zeros((M, D), jnp.float32)
    for h in range(nhead):
        sl = slice(h * hd, (h + 1) * hd)
        qh = q3[:, :, sl]                                     # (Bblk, S, hd) bf16
        kh = k3[:, :, sl]
        vh = v3[:, :, sl]
        s = jnp.einsum('bqd,bkd->bqk', qh, kh,
                       preferred_element_type=jnp.float32)    # (Bblk, S, S)
        s = s - jnp.max(s, axis=-1, keepdims=True)
        p = jnp.exp(s)
        p = p * pl.reciprocal(jnp.sum(p, axis=-1, keepdims=True), approx=True)
        ah = jnp.einsum('bqk,bkd->bqd', p.astype(jnp.bfloat16), vh,
                        preferred_element_type=jnp.float32)   # (Bblk, S, hd)
        acc = acc + jnp.dot(ah.reshape(M, hd).astype(jnp.bfloat16),
                            wo_ref[sl, :],
                            preferred_element_type=jnp.float32)
    attn = acc + bo_ref[...]                                  # (M, D)

    # ---- residual + norm1 (dropout = identity in eval mode) ------------------
    x = _layer_norm(x + attn, ln1g_ref[...], ln1b_ref[...])

    # ---- feed-forward: linear1 -> GELU -> norm2 -> linear2 (+ residual) ------
    hmid = jnp.dot(x.astype(jnp.bfloat16), w1_ref[...],
                   preferred_element_type=jnp.float32) + b1_ref[...]
    hmid = _gelu_tanh(hmid)
    hmid = _layer_norm(hmid, ln2g_ref[...], ln2b_ref[...])
    z = jnp.dot(hmid.astype(jnp.bfloat16), w2_ref[...],
                preferred_element_type=jnp.float32) + b2_ref[...]

    o_ref[...] = (x + z).reshape(Bblk, S, D).astype(o_ref.dtype)


def _const_spec(shape):
    # Parameter block identical for every grid step -> stays resident in VMEM.
    return pl.BlockSpec(shape, lambda b, _n=len(shape): (0,) * _n)


# ---------------------------------------------------------------------------
# One-time parameter preparation (done once, NOT per forward call):
#   * fold 1/sqrt(head_dim) into the Q columns of the fused in-projection
#   * cast all matmul weights to bf16 once
# ---------------------------------------------------------------------------
def prepare_params(params, *, nhead):
    D = params["w_o"].shape[0]
    hd = D // nhead
    scale = 1.0 / math.sqrt(hd)
    col_scale = jnp.concatenate(
        [jnp.full((D,), scale, jnp.float32), jnp.ones((2 * D,), jnp.float32)])
    prepared = dict(params)
    prepared["w_qkv"] = (params["w_qkv"] * col_scale).astype(jnp.bfloat16)
    prepared["b_qkv"] = params["b_qkv"] * col_scale            # bias stays f32
    prepared["w_o"] = params["w_o"].astype(jnp.bfloat16)
    prepared["w1"] = params["w1"].astype(jnp.bfloat16)
    prepared["w2"] = params["w2"].astype(jnp.bfloat16)
    return prepared


def transformer_encoder_layer(src, padding_mask, prepared, *, nhead):
    """HF_TransformerEncoderLayer.forward (eval mode).

    src: (B, S, d_model) f32, batch_first. padding_mask is accepted but unused —
    the reference forward never passes it to self_attn either.
    `prepared` must come from prepare_params().
    """
    del padding_mask
    B, S, D = src.shape

    # Fold the batch into the matmul M dimension.  Keep two parallel grid steps
    # when B allows, so both TensorCores of a v7x chip get work (on v5e/v6e the
    # two steps simply pipeline).
    n_blocks = 2 if (B % 2 == 0 and B >= 2) else 1
    Bblk = B // n_blocks

    operands = (src,
                prepared["ln0_g"], prepared["ln0_b"],
                prepared["w_qkv"], prepared["b_qkv"],
                prepared["w_o"], prepared["b_o"],
                prepared["ln1_g"], prepared["ln1_b"],
                prepared["w1"], prepared["b1"],
                prepared["ln2_g"], prepared["ln2_b"],
                prepared["w2"], prepared["b2"])

    in_specs = [pl.BlockSpec((Bblk, S, D), lambda b: (b, 0, 0))]
    in_specs += [_const_spec(a.shape) for a in operands[1:]]
    out_spec = pl.BlockSpec((Bblk, S, D), lambda b: (b, 0, 0))

    return pl.pallas_call(
        functools.partial(_encoder_layer_kernel, nhead),
        out_shape=jax.ShapeDtypeStruct((B, S, D), jnp.float32),
        grid_spec=pltpu.PrefetchScalarGridSpec(
            num_scalar_prefetch=0,
            grid=(n_blocks,),
            in_specs=in_specs,
            out_specs=out_spec,
        ),
        compiler_params=pltpu.CompilerParams(
            dimension_semantics=("parallel",),
            vmem_limit_bytes=32 * 1024 * 1024,
        ),
    )(*operands)


# ---------------------------------------------------------------------------
# Deterministic synthetic parameters (matmul weights pre-rounded to bf16 so the
# kernel's bf16 MXU path and the f32 reference share identical weight values).
# ---------------------------------------------------------------------------
def make_params(key, d_model):
    d_ff = 4 * d_model
    ks = jax.random.split(key, 7)

    def linear(k, din, dout):
        kw, kb = jax.random.split(k)
        bound = 1.0 / math.sqrt(din)
        w = jax.random.uniform(kw, (din, dout), jnp.float32, -bound, bound)
        w = w.astype(jnp.bfloat16).astype(jnp.float32)   # bf16-representable
        b = jax.random.uniform(kb, (1, dout), jnp.float32, -bound, bound)
        return w, b

    def ln(k, d):
        kg, kb = jax.random.split(k)
        g = 1.0 + 0.1 * jax.random.normal(kg, (1, d), jnp.float32)
        b = 0.1 * jax.random.normal(kb, (1, d), jnp.float32)
        return g, b

    w_qkv, b_qkv = linear(ks[0], d_model, 3 * d_model)   # fused in-proj (q,k,v)
    w_o, b_o = linear(ks[1], d_model, d_model)
    w1, b1 = linear(ks[2], d_model, d_ff)
    w2, b2 = linear(ks[3], d_ff, d_model)
    ln0_g, ln0_b = ln(ks[4], d_model)
    ln1_g, ln1_b = ln(ks[5], d_model)
    ln2_g, ln2_b = ln(ks[6], d_ff)

    return dict(w_qkv=w_qkv, b_qkv=b_qkv, w_o=w_o, b_o=b_o,
                w1=w1, b1=b1, w2=w2, b2=b2,
                ln0_g=ln0_g, ln0_b=ln0_b,
                ln1_g=ln1_g, ln1_b=ln1_b,
                ln2_g=ln2_g, ln2_b=ln2_b)


# ---------------------------------------------------------------------------
# Pure-JAX f32 reference (mirrors the PyTorch forward in eval mode, exact GELU).
# ---------------------------------------------------------------------------
def ref_encoder_layer(src, params, *, nhead):
    B, S, D = src.shape
    hd = D // nhead

    def ln(x, g, b, eps=1e-5):
        mu = jnp.mean(x, -1, keepdims=True)
        xc = x - mu
        var = jnp.mean(xc * xc, -1, keepdims=True)
        return xc * jax.lax.rsqrt(var + eps) * g + b

    xn = ln(src, params["ln0_g"], params["ln0_b"])
    qkv = xn @ params["w_qkv"] + params["b_qkv"]
    q, k, v = qkv[..., :D], qkv[..., D:2 * D], qkv[..., 2 * D:]
    q = q.reshape(B, S, nhead, hd).transpose(0, 2, 1, 3)
    k = k.reshape(B, S, nhead, hd).transpose(0, 2, 1, 3)
    v = v.reshape(B, S, nhead, hd).transpose(0, 2, 1, 3)
    s = jnp.einsum("bhqd,bhkd->bhqk", q, k) / math.sqrt(hd)
    p = jax.nn.softmax(s, axis=-1)
    attn = jnp.einsum("bhqk,bhkd->bhqd", p, v)
    attn = attn.transpose(0, 2, 1, 3).reshape(B, S, D)
    attn = attn @ params["w_o"] + params["b_o"]

    x = src + attn
    x = ln(x, params["ln1_g"], params["ln1_b"])
    h = _gelu_exact(x @ params["w1"] + params["b1"])
    h = ln(h, params["ln2_g"], params["ln2_b"])
    z = h @ params["w2"] + params["b2"]
    return x + z


if __name__ == "__main__":
    B, S, d_model, nhead = 4, 64, 128, 4

    key = jax.random.PRNGKey(0)
    k_src, k_par = jax.random.split(key)
    src = jax.random.normal(k_src, (B, S, d_model), jnp.float32)
    padding_mask = jnp.zeros((B, S), jnp.bool_)   # accepted but unused (as in the spec)
    params = make_params(k_par, d_model)
    prepared = prepare_params(params, nhead=nhead)   # one-time: scale fold + bf16 cast

    out = transformer_encoder_layer(src, padding_mask, prepared, nhead=nhead)
    out = jax.block_until_ready(out)

    ref = jax.block_until_ready(ref_encoder_layer(src, params, nhead=nhead))

    assert out.shape == (B, S, d_model), out.shape
    max_err = float(jnp.max(jnp.abs(out - ref)))
    # bf16 MXU operands (f32 accumulation), EUP reciprocal softmax and tanh-approx
    # GELU -> small activation-level deviation vs the f32/erf reference.
    assert jnp.allclose(out, ref, atol=5e-2, rtol=5e-2), f"max abs err {max_err}"

    print("KERNEL_OK")
</pallas_src>

<mosaic_0001>
module attributes {stable_mosaic.version = 11 : i64} {
  func.func @_encoder_layer_kernel(%arg0: i32, %arg1: memref<2x64x128xf32, #tpu.memory_space<vmem>>, %arg2: memref<1x128xf32, #tpu.memory_space<vmem>>, %arg3: memref<1x128xf32, #tpu.memory_space<vmem>>, %arg4: memref<128x384xbf16, #tpu.memory_space<vmem>>, %arg5: memref<1x384xf32, #tpu.memory_space<vmem>>, %arg6: memref<128x128xbf16, #tpu.memory_space<vmem>>, %arg7: memref<1x128xf32, #tpu.memory_space<vmem>>, %arg8: memref<1x128xf32, #tpu.memory_space<vmem>>, %arg9: memref<1x128xf32, #tpu.memory_space<vmem>>, %arg10: memref<128x512xbf16, #tpu.memory_space<vmem>>, %arg11: memref<1x512xf32, #tpu.memory_space<vmem>>, %arg12: memref<1x512xf32, #tpu.memory_space<vmem>>, %arg13: memref<1x512xf32, #tpu.memory_space<vmem>>, %arg14: memref<512x128xbf16, #tpu.memory_space<vmem>>, %arg15: memref<1x128xf32, #tpu.memory_space<vmem>>, %arg16: memref<2x64x128xf32, #tpu.memory_space<vmem>>) attributes {dimension_semantics = [#tpu.dimension_semantics<parallel>], iteration_bounds = array<i64: 2>, scalar_prefetch = 0 : i64, scratch_operands = 0 : i64, tpu.core_type = #tpu.core_type<tc>, window_params = [{transform_indices = @transform_0, window_bounds = array<i64: 2, 64, 128>}, {pipeline_mode = #tpu.pipeline_mode<synchronous>, transform_indices = @transform_1, window_bounds = array<i64: 1, 128>}, {pipeline_mode = #tpu.pipeline_mode<synchronous>, transform_indices = @transform_2, window_bounds = array<i64: 1, 128>}, {pipeline_mode = #tpu.pipeline_mode<synchronous>, transform_indices = @transform_3, window_bounds = array<i64: 128, 384>}, {pipeline_mode = #tpu.pipeline_mode<synchronous>, transform_indices = @transform_4, window_bounds = array<i64: 1, 384>}, {pipeline_mode = #tpu.pipeline_mode<synchronous>, transform_indices = @transform_5, window_bounds = array<i64: 128, 128>}, {pipeline_mode = #tpu.pipeline_mode<synchronous>, transform_indices = @transform_6, window_bounds = array<i64: 1, 128>}, {pipeline_mode = #tpu.pipeline_mode<synchronous>, transform_indices = @transform_7, window_bounds = array<i64: 1, 128>}, {pipeline_mode = #tpu.pipeline_mode<synchronous>, transform_indices = @transform_8, window_bounds = array<i64: 1, 128>}, {pipeline_mode = #tpu.pipeline_mode<synchronous>, transform_indices = @transform_9, window_bounds = array<i64: 128, 512>}, {pipeline_mode = #tpu.pipeline_mode<synchronous>, transform_indices = @transform_10, window_bounds = array<i64: 1, 512>}, {pipeline_mode = #tpu.pipeline_mode<synchronous>, transform_indices = @transform_11, window_bounds = array<i64: 1, 512>}, {pipeline_mode = #tpu.pipeline_mode<synchronous>, transform_indices = @transform_12, window_bounds = array<i64: 1, 512>}, {pipeline_mode = #tpu.pipeline_mode<synchronous>, transform_indices = @transform_13, window_bounds = array<i64: 512, 128>}, {pipeline_mode = #tpu.pipeline_mode<synchronous>, transform_indices = @transform_14, window_bounds = array<i64: 1, 128>}, {transform_indices = @transform_15, window_bounds = array<i64: 2, 64, 128>}]} {
    %c0 = arith.constant 0 : index
    %c0_0 = arith.constant 0 : index
    %c0_1 = arith.constant 0 : index
    %0 = vector.load %arg1[%c0, %c0_0, %c0_1] : memref<2x64x128xf32, #tpu.memory_space<vmem>>, vector<2x64x128xf32>
    %1 = vector.shape_cast %0 : vector<2x64x128xf32> to vector<128x128xf32>
    %c0_2 = arith.constant 0 : index
    %c0_3 = arith.constant 0 : index
    %2 = vector.load %arg2[%c0_2, %c0_3] : memref<1x128xf32, #tpu.memory_space<vmem>>, vector<1x128xf32>
    %c0_4 = arith.constant 0 : index
    %c0_5 = arith.constant 0 : index
    %3 = vector.load %arg3[%c0_4, %c0_5] : memref<1x128xf32, #tpu.memory_space<vmem>>, vector<1x128xf32>
    %cst = arith.constant dense<0.000000e+00> : vector<128xf32>
    %4 = vector.multi_reduction <add>, %1, %cst [1] : vector<128x128xf32> to vector<128xf32>
    %5 = vector.shape_cast %4 : vector<128xf32> to vector<128x1xf32>
    %cst_6 = arith.constant 1.280000e+02 : f32
    %6 = vector.broadcast %cst_6 : f32 to vector<128x1xf32>
    %7 = arith.divf %5, %6 : vector<128x1xf32>
    %8 = vector.broadcast %7 : vector<128x1xf32> to vector<128x128xf32>
    %9 = arith.subf %1, %8 : vector<128x128xf32>
    %10 = arith.mulf %9, %9 : vector<128x128xf32>
    %cst_7 = arith.constant dense<0.000000e+00> : vector<128xf32>
    %11 = vector.multi_reduction <add>, %10, %cst_7 [1] : vector<128x128xf32> to vector<128xf32>
    %12 = vector.shape_cast %11 : vector<128xf32> to vector<128x1xf32>
    %cst_8 = arith.constant 1.280000e+02 : f32
    %13 = vector.broadcast %cst_8 : f32 to vector<128x1xf32>
    %14 = arith.divf %12, %13 : vector<128x1xf32>
    %cst_9 = arith.constant 9.99999974E-6 : f32
    %15 = vector.broadcast %cst_9 : f32 to vector<128x1xf32>
    %16 = arith.addf %14, %15 : vector<128x1xf32>
    %17 = math.rsqrt %16 : vector<128x1xf32>
    %18 = vector.broadcast %17 : vector<128x1xf32> to vector<128x128xf32>
    %19 = arith.mulf %9, %18 : vector<128x128xf32>
    %20 = vector.broadcast %2 : vector<1x128xf32> to vector<128x128xf32>
    %21 = arith.mulf %19, %20 : vector<128x128xf32>
    %22 = vector.broadcast %3 : vector<1x128xf32> to vector<128x128xf32>
    %23 = arith.addf %21, %22 : vector<128x128xf32>
    %24 = arith.truncf %23 : vector<128x128xf32> to vector<128x128xbf16>
    %c0_10 = arith.constant 0 : index
    %c0_11 = arith.constant 0 : index
    %25 = vector.load %arg4[%c0_10, %c0_11] : memref<128x384xbf16, #tpu.memory_space<vmem>>, vector<128x384xbf16>
    %cst_12 = arith.constant dense<0.000000e+00> : vector<128x384xf32>
    %26 = tpu.matmul %24, %25, %cst_12 {dimension_numbers = #tpu.dot_dimension_numbers<[1], [0], [0], [1], [0, 0, 1, 1], [], []>} : vector<128x128xbf16>, vector<128x384xbf16>, vector<128x384xf32> -> vector<128x384xf32>
    %c0_13 = arith.constant 0 : index
    %c0_14 = arith.constant 0 : index
    %27 = vector.load %arg5[%c0_13, %c0_14] : memref<1x384xf32, #tpu.memory_space<vmem>>, vector<1x384xf32>
    %28 = vector.broadcast %27 : vector<1x384xf32> to vector<128x384xf32>
    %29 = arith.addf %26, %28 : vector<128x384xf32>
    %30 = arith.truncf %29 : vector<128x384xf32> to vector<128x384xbf16>
    %31 = vector.extract_strided_slice %30 {offsets = [0, 0], sizes = [128, 128], strides = [1, 1]} : vector<128x384xbf16> to vector<128x128xbf16>
    %32 = vector.shape_cast %31 : vector<128x128xbf16> to vector<2x64x128xbf16>
    %33 = vector.extract_strided_slice %30 {offsets = [0, 128], sizes = [128, 128], strides = [1, 1]} : vector<128x384xbf16> to vector<128x128xbf16>
    %34 = vector.shape_cast %33 : vector<128x128xbf16> to vector<2x64x128xbf16>
    %35 = vector.extract_strided_slice %30 {offsets = [0, 256], sizes = [128, 128], strides = [1, 1]} : vector<128x384xbf16> to vector<128x128xbf16>
    %36 = vector.shape_cast %35 : vector<128x128xbf16> to vector<2x64x128xbf16>
    %cst_15 = arith.constant 0.000000e+00 : f32
    %37 = vector.broadcast %cst_15 : f32 to vector<128x128xf32>
    %38 = vector.extract_strided_slice %32 {offsets = [0, 0, 0], sizes = [2, 64, 32], strides = [1, 1, 1]} : vector<2x64x128xbf16> to vector<2x64x32xbf16>
    %39 = vector.extract_strided_slice %34 {offsets = [0, 0, 0], sizes = [2, 64, 32], strides = [1, 1, 1]} : vector<2x64x128xbf16> to vector<2x64x32xbf16>
    %40 = vector.extract_strided_slice %36 {offsets = [0, 0, 0], sizes = [2, 64, 32], strides = [1, 1, 1]} : vector<2x64x128xbf16> to vector<2x64x32xbf16>
    "tpu.trace_start"() <{level = 10 : i32, message = "bqd,bkd->bqk"}> : () -> ()
    %cst_16 = arith.constant dense<0.000000e+00> : vector<2x64x64xf32>
    %41 = tpu.matmul %38, %39, %cst_16 {dimension_numbers = #tpu.dot_dimension_numbers<[2], [2], [1], [1], [0, 0, 0, 1, 1, 1], [0], [0]>} : vector<2x64x32xbf16>, vector<2x64x32xbf16>, vector<2x64x64xf32> -> vector<2x64x64xf32>
    "tpu.trace_stop"() : () -> ()
    %cst_17 = arith.constant dense<0xFF800000> : vector<2x64xf32>
    %42 = vector.multi_reduction <maximumf>, %41, %cst_17 [2] : vector<2x64x64xf32> to vector<2x64xf32>
    %43 = vector.shape_cast %42 : vector<2x64xf32> to vector<2x64x1xf32>
    %44 = vector.broadcast %43 : vector<2x64x1xf32> to vector<2x64x64xf32>
    %45 = arith.subf %41, %44 : vector<2x64x64xf32>
    %46 = math.exp %45 : vector<2x64x64xf32>
    %cst_18 = arith.constant dense<0.000000e+00> : vector<2x64xf32>
    %47 = vector.multi_reduction <add>, %46, %cst_18 [2] : vector<2x64x64xf32> to vector<2x64xf32>
    %48 = vector.shape_cast %47 : vector<2x64xf32> to vector<2x64x1xf32>
    %49 = tpu.reciprocal %48 {approx = true} : vector<2x64x1xf32> -> vector<2x64x1xf32>
    %50 = vector.broadcast %49 : vector<2x64x1xf32> to vector<2x64x64xf32>
    %51 = arith.mulf %46, %50 : vector<2x64x64xf32>
    %52 = arith.truncf %51 : vector<2x64x64xf32> to vector<2x64x64xbf16>
    "tpu.trace_start"() <{level = 10 : i32, message = "bqk,bkd->bqd"}> : () -> ()
    %cst_19 = arith.constant dense<0.000000e+00> : vector<2x64x32xf32>
    %53 = tpu.matmul %52, %40, %cst_19 {dimension_numbers = #tpu.dot_dimension_numbers<[2], [1], [1], [2], [0, 0, 0, 1, 1, 2], [0], [0]>} : vector<2x64x64xbf16>, vector<2x64x32xbf16>, vector<2x64x32xf32> -> vector<2x64x32xf32>
    "tpu.trace_stop"() : () -> ()
    %54 = vector.shape_cast %53 : vector<2x64x32xf32> to vector<128x32xf32>
    %55 = arith.truncf %54 : vector<128x32xf32> to vector<128x32xbf16>
    %c0_20 = arith.constant 0 : index
    %c0_21 = arith.constant 0 : index
    %56 = vector.load %arg6[%c0_20, %c0_21] : memref<128x128xbf16, #tpu.memory_space<vmem>>, vector<32x128xbf16>
    %cst_22 = arith.constant dense<0.000000e+00> : vector<128x128xf32>
    %57 = tpu.matmul %55, %56, %cst_22 {dimension_numbers = #tpu.dot_dimension_numbers<[1], [0], [0], [1], [0, 0, 1, 1], [], []>} : vector<128x32xbf16>, vector<32x128xbf16>, vector<128x128xf32> -> vector<128x128xf32>
    %58 = arith.addf %37, %57 : vector<128x128xf32>
    %59 = vector.extract_strided_slice %32 {offsets = [0, 0, 32], sizes = [2, 64, 32], strides = [1, 1, 1]} : vector<2x64x128xbf16> to vector<2x64x32xbf16>
    %60 = vector.extract_strided_slice %34 {offsets = [0, 0, 32], sizes = [2, 64, 32], strides = [1, 1, 1]} : vector<2x64x128xbf16> to vector<2x64x32xbf16>
    %61 = vector.extract_strided_slice %36 {offsets = [0, 0, 32], sizes = [2, 64, 32], strides = [1, 1, 1]} : vector<2x64x128xbf16> to vector<2x64x32xbf16>
    "tpu.trace_start"() <{level = 10 : i32, message = "bqd,bkd->bqk"}> : () -> ()
    %cst_23 = arith.constant dense<0.000000e+00> : vector<2x64x64xf32>
    %62 = tpu.matmul %59, %60, %cst_23 {dimension_numbers = #tpu.dot_dimension_numbers<[2], [2], [1], [1], [0, 0, 0, 1, 1, 1], [0], [0]>} : vector<2x64x32xbf16>, vector<2x64x32xbf16>, vector<2x64x64xf32> -> vector<2x64x64xf32>
    "tpu.trace_stop"() : () -> ()
    %cst_24 = arith.constant dense<0xFF800000> : vector<2x64xf32>
    %63 = vector.multi_reduction <maximumf>, %62, %cst_24 [2] : vector<2x64x64xf32> to vector<2x64xf32>
    %64 = vector.shape_cast %63 : vector<2x64xf32> to vector<2x64x1xf32>
    %65 = vector.broadcast %64 : vector<2x64x1xf32> to vector<2x64x64xf32>
    %66 = arith.subf %62, %65 : vector<2x64x64xf32>
    %67 = math.exp %66 : vector<2x64x64xf32>
    %cst_25 = arith.constant dense<0.000000e+00> : vector<2x64xf32>
    %68 = vector.multi_reduction <add>, %67, %cst_25 [2] : vector<2x64x64xf32> to vector<2x64xf32>
    %69 = vector.shape_cast %68 : vector<2x64xf32> to vector<2x64x1xf32>
    %70 = tpu.reciprocal %69 {approx = true} : vector<2x64x1xf32> -> vector<2x64x1xf32>
    %71 = vector.broadcast %70 : vector<2x64x1xf32> to vector<2x64x64xf32>
    %72 = arith.mulf %67, %71 : vector<2x64x64xf32>
    %73 = arith.truncf %72 : vector<2x64x64xf32> to vector<2x64x64xbf16>
    "tpu.trace_start"() <{level = 10 : i32, message = "bqk,bkd->bqd"}> : () -> ()
    %cst_26 = arith.constant dense<0.000000e+00> : vector<2x64x32xf32>
    %74 = tpu.matmul %73, %61, %cst_26 {dimension_numbers = #tpu.dot_dimension_numbers<[2], [1], [1], [2], [0, 0, 0, 1, 1, 2], [0], [0]>} : vector<2x64x64xbf16>, vector<2x64x32xbf16>, vector<2x64x32xf32> -> vector<2x64x32xf32>
    "tpu.trace_stop"() : () -> ()
    %75 = vector.shape_cast %74 : vector<2x64x32xf32> to vector<128x32xf32>
    %76 = arith.truncf %75 : vector<128x32xf32> to vector<128x32xbf16>
    %c32 = arith.constant 32 : index
    %c0_27 = arith.constant 0 : index
    %77 = vector.load %arg6[%c32, %c0_27] : memref<128x128xbf16, #tpu.memory_space<vmem>>, vector<32x128xbf16>
    %cst_28 = arith.constant dense<0.000000e+00> : vector<128x128xf32>
    %78 = tpu.matmul %76, %77, %cst_28 {dimension_numbers = #tpu.dot_dimension_numbers<[1], [0], [0], [1], [0, 0, 1, 1], [], []>} : vector<128x32xbf16>, vector<32x128xbf16>, vector<128x128xf32> -> vector<128x128xf32>
    %79 = arith.addf %58, %78 : vector<128x128xf32>
    %80 = vector.extract_strided_slice %32 {offsets = [0, 0, 64], sizes = [2, 64, 32], strides = [1, 1, 1]} : vector<2x64x128xbf16> to vector<2x64x32xbf16>
    %81 = vector.extract_strided_slice %34 {offsets = [0, 0, 64], sizes = [2, 64, 32], strides = [1, 1, 1]} : vector<2x64x128xbf16> to vector<2x64x32xbf16>
    %82 = vector.extract_strided_slice %36 {offsets = [0, 0, 64], sizes = [2, 64, 32], strides = [1, 1, 1]} : vector<2x64x128xbf16> to vector<2x64x32xbf16>
    "tpu.trace_start"() <{level = 10 : i32, message = "bqd,bkd->bqk"}> : () -> ()
    %cst_29 = arith.constant dense<0.000000e+00> : vector<2x64x64xf32>
    %83 = tpu.matmul %80, %81, %cst_29 {dimension_numbers = #tpu.dot_dimension_numbers<[2], [2], [1], [1], [0, 0, 0, 1, 1, 1], [0], [0]>} : vector<2x64x32xbf16>, vector<2x64x32xbf16>, vector<2x64x64xf32> -> vector<2x64x64xf32>
    "tpu.trace_stop"() : () -> ()
    %cst_30 = arith.constant dense<0xFF800000> : vector<2x64xf32>
    %84 = vector.multi_reduction <maximumf>, %83, %cst_30 [2] : vector<2x64x64xf32> to vector<2x64xf32>
    %85 = vector.shape_cast %84 : vector<2x64xf32> to vector<2x64x1xf32>
    %86 = vector.broadcast %85 : vector<2x64x1xf32> to vector<2x64x64xf32>
    %87 = arith.subf %83, %86 : vector<2x64x64xf32>
    %88 = math.exp %87 : vector<2x64x64xf32>
    %cst_31 = arith.constant dense<0.000000e+00> : vector<2x64xf32>
    %89 = vector.multi_reduction <add>, %88, %cst_31 [2] : vector<2x64x64xf32> to vector<2x64xf32>
    %90 = vector.shape_cast %89 : vector<2x64xf32> to vector<2x64x1xf32>
    %91 = tpu.reciprocal %90 {approx = true} : vector<2x64x1xf32> -> vector<2x64x1xf32>
    %92 = vector.broadcast %91 : vector<2x64x1xf32> to vector<2x64x64xf32>
    %93 = arith.mulf %88, %92 : vector<2x64x64xf32>
    %94 = arith.truncf %93 : vector<2x64x64xf32> to vector<2x64x64xbf16>
    "tpu.trace_start"() <{level = 10 : i32, message = "bqk,bkd->bqd"}> : () -> ()
    %cst_32 = arith.constant dense<0.000000e+00> : vector<2x64x32xf32>
    %95 = tpu.matmul %94, %82, %cst_32 {dimension_numbers = #tpu.dot_dimension_numbers<[2], [1], [1], [2], [0, 0, 0, 1, 1, 2], [0], [0]>} : vector<2x64x64xbf16>, vector<2x64x32xbf16>, vector<2x64x32xf32> -> vector<2x64x32xf32>
    "tpu.trace_stop"() : () -> ()
    %96 = vector.shape_cast %95 : vector<2x64x32xf32> to vector<128x32xf32>
    %97 = arith.truncf %96 : vector<128x32xf32> to vector<128x32xbf16>
    %c64 = arith.constant 64 : index
    %c0_33 = arith.constant 0 : index
    %98 = vector.load %arg6[%c64, %c0_33] : memref<128x128xbf16, #tpu.memory_space<vmem>>, vector<32x128xbf16>
    %cst_34 = arith.constant dense<0.000000e+00> : vector<128x128xf32>
    %99 = tpu.matmul %97, %98, %cst_34 {dimension_numbers = #tpu.dot_dimension_numbers<[1], [0], [0], [1], [0, 0, 1, 1], [], []>} : vector<128x32xbf16>, vector<32x128xbf16>, vector<128x128xf32> -> vector<128x128xf32>
    %100 = arith.addf %79, %99 : vector<128x128xf32>
    %101 = vector.extract_strided_slice %32 {offsets = [0, 0, 96], sizes = [2, 64, 32], strides = [1, 1, 1]} : vector<2x64x128xbf16> to vector<2x64x32xbf16>
    %102 = vector.extract_strided_slice %34 {offsets = [0, 0, 96], sizes = [2, 64, 32], strides = [1, 1, 1]} : vector<2x64x128xbf16> to vector<2x64x32xbf16>
    %103 = vector.extract_strided_slice %36 {offsets = [0, 0, 96], sizes = [2, 64, 32], strides = [1, 1, 1]} : vector<2x64x128xbf16> to vector<2x64x32xbf16>
    "tpu.trace_start"() <{level = 10 : i32, message = "bqd,bkd->bqk"}> : () -> ()
    %cst_35 = arith.constant dense<0.000000e+00> : vector<2x64x64xf32>
    %104 = tpu.matmul %101, %102, %cst_35 {dimension_numbers = #tpu.dot_dimension_numbers<[2], [2], [1], [1], [0, 0, 0, 1, 1, 1], [0], [0]>} : vector<2x64x32xbf16>, vector<2x64x32xbf16>, vector<2x64x64xf32> -> vector<2x64x64xf32>
    "tpu.trace_stop"() : () -> ()
    %cst_36 = arith.constant dense<0xFF800000> : vector<2x64xf32>
    %105 = vector.multi_reduction <maximumf>, %104, %cst_36 [2] : vector<2x64x64xf32> to vector<2x64xf32>
    %106 = vector.shape_cast %105 : vector<2x64xf32> to vector<2x64x1xf32>
    %107 = vector.broadcast %106 : vector<2x64x1xf32> to vector<2x64x64xf32>
    %108 = arith.subf %104, %107 : vector<2x64x64xf32>
    %109 = math.exp %108 : vector<2x64x64xf32>
    %cst_37 = arith.constant dense<0.000000e+00> : vector<2x64xf32>
    %110 = vector.multi_reduction <add>, %109, %cst_37 [2] : vector<2x64x64xf32> to vector<2x64xf32>
    %111 = vector.shape_cast %110 : vector<2x64xf32> to vector<2x64x1xf32>
    %112 = tpu.reciprocal %111 {approx = true} : vector<2x64x1xf32> -> vector<2x64x1xf32>
    %113 = vector.broadcast %112 : vector<2x64x1xf32> to vector<2x64x64xf32>
    %114 = arith.mulf %109, %113 : vector<2x64x64xf32>
    %115 = arith.truncf %114 : vector<2x64x64xf32> to vector<2x64x64xbf16>
    "tpu.trace_start"() <{level = 10 : i32, message = "bqk,bkd->bqd"}> : () -> ()
    %cst_38 = arith.constant dense<0.000000e+00> : vector<2x64x32xf32>
    %116 = tpu.matmul %115, %103, %cst_38 {dimension_numbers = #tpu.dot_dimension_numbers<[2], [1], [1], [2], [0, 0, 0, 1, 1, 2], [0], [0]>} : vector<2x64x64xbf16>, vector<2x64x32xbf16>, vector<2x64x32xf32> -> vector<2x64x32xf32>
    "tpu.trace_stop"() : () -> ()
    %117 = vector.shape_cast %116 : vector<2x64x32xf32> to vector<128x32xf32>
    %118 = arith.truncf %117 : vector<128x32xf32> to vector<128x32xbf16>
    %c96 = arith.constant 96 : index
    %c0_39 = arith.constant 0 : index
    %119 = vector.load %arg6[%c96, %c0_39] : memref<128x128xbf16, #tpu.memory_space<vmem>>, vector<32x128xbf16>
    %cst_40 = arith.constant dense<0.000000e+00> : vector<128x128xf32>
    %120 = tpu.matmul %118, %119, %cst_40 {dimension_numbers = #tpu.dot_dimension_numbers<[1], [0], [0], [1], [0, 0, 1, 1], [], []>} : vector<128x32xbf16>, vector<32x128xbf16>, vector<128x128xf32> -> vector<128x128xf32>
    %121 = arith.addf %100, %120 : vector<128x128xf32>
    %c0_41 = arith.constant 0 : index
    %c0_42 = arith.constant 0 : index
    %122 = vector.load %arg7[%c0_41, %c0_42] : memref<1x128xf32, #tpu.memory_space<vmem>>, vector<1x128xf32>
    %123 = vector.broadcast %122 : vector<1x128xf32> to vector<128x128xf32>
    %124 = arith.addf %121, %123 : vector<128x128xf32>
    %125 = arith.addf %1, %124 : vector<128x128xf32>
    %c0_43 = arith.constant 0 : index
    %c0_44 = arith.constant 0 : index
    %126 = vector.load %arg8[%c0_43, %c0_44] : memref<1x128xf32, #tpu.memory_space<vmem>>, vector<1x128xf32>
    %c0_45 = arith.constant 0 : index
    %c0_46 = arith.constant 0 : index
    %127 = vector.load %arg9[%c0_45, %c0_46] : memref<1x128xf32, #tpu.memory_space<vmem>>, vector<1x128xf32>
    %cst_47 = arith.constant dense<0.000000e+00> : vector<128xf32>
    %128 = vector.multi_reduction <add>, %125, %cst_47 [1] : vector<128x128xf32> to vector<128xf32>
    %129 = vector.shape_cast %128 : vector<128xf32> to vector<128x1xf32>
    %cst_48 = arith.constant 1.280000e+02 : f32
    %130 = vector.broadcast %cst_48 : f32 to vector<128x1xf32>
    %131 = arith.divf %129, %130 : vector<128x1xf32>
    %132 = vector.broadcast %131 : vector<128x1xf32> to vector<128x128xf32>
    %133 = arith.subf %125, %132 : vector<128x128xf32>
    %134 = arith.mulf %133, %133 : vector<128x128xf32>
    %cst_49 = arith.constant dense<0.000000e+00> : vector<128xf32>
    %135 = vector.multi_reduction <add>, %134, %cst_49 [1] : vector<128x128xf32> to vector<128xf32>
    %136 = vector.shape_cast %135 : vector<128xf32> to vector<128x1xf32>
    %cst_50 = arith.constant 1.280000e+02 : f32
    %137 = vector.broadcast %cst_50 : f32 to vector<128x1xf32>
    %138 = arith.divf %136, %137 : vector<128x1xf32>
    %cst_51 = arith.constant 9.99999974E-6 : f32
    %139 = vector.broadcast %cst_51 : f32 to vector<128x1xf32>
    %140 = arith.addf %138, %139 : vector<128x1xf32>
    %141 = math.rsqrt %140 : vector<128x1xf32>
    %142 = vector.broadcast %141 : vector<128x1xf32> to vector<128x128xf32>
    %143 = arith.mulf %133, %142 : vector<128x128xf32>
    %144 = vector.broadcast %126 : vector<1x128xf32> to vector<128x128xf32>
    %145 = arith.mulf %143, %144 : vector<128x128xf32>
    %146 = vector.broadcast %127 : vector<1x128xf32> to vector<128x128xf32>
    %147 = arith.addf %145, %146 : vector<128x128xf32>
    %148 = arith.truncf %147 : vector<128x128xf32> to vector<128x128xbf16>
    %c0_52 = arith.constant 0 : index
    %c0_53 = arith.constant 0 : index
    %149 = vector.load %arg10[%c0_52, %c0_53] : memref<128x512xbf16, #tpu.memory_space<vmem>>, vector<128x512xbf16>
    %cst_54 = arith.constant dense<0.000000e+00> : vector<128x512xf32>
    %150 = tpu.matmul %148, %149, %cst_54 {dimension_numbers = #tpu.dot_dimension_numbers<[1], [0], [0], [1], [0, 0, 1, 1], [], []>} : vector<128x128xbf16>, vector<128x512xbf16>, vector<128x512xf32> -> vector<128x512xf32>
    %c0_55 = arith.constant 0 : index
    %c0_56 = arith.constant 0 : index
    %151 = vector.load %arg11[%c0_55, %c0_56] : memref<1x512xf32, #tpu.memory_space<vmem>>, vector<1x512xf32>
    %152 = vector.broadcast %151 : vector<1x512xf32> to vector<128x512xf32>
    %153 = arith.addf %150, %152 : vector<128x512xf32>
    %cst_57 = arith.constant 5.000000e-01 : f32
    %154 = vector.broadcast %cst_57 : f32 to vector<128x512xf32>
    %155 = arith.mulf %154, %153 : vector<128x512xf32>
    %cst_58 = arith.constant 4.471500e-02 : f32
    %156 = vector.broadcast %cst_58 : f32 to vector<128x512xf32>
    %157 = arith.mulf %156, %153 : vector<128x512xf32>
    %158 = arith.mulf %157, %153 : vector<128x512xf32>
    %159 = arith.mulf %158, %153 : vector<128x512xf32>
    %160 = arith.addf %153, %159 : vector<128x512xf32>
    %cst_59 = arith.constant 0.797884583 : f32
    %161 = vector.broadcast %cst_59 : f32 to vector<128x512xf32>
    %162 = arith.mulf %161, %160 : vector<128x512xf32>
    %163 = math.tanh %162 : vector<128x512xf32>
    %cst_60 = arith.constant 1.000000e+00 : f32
    %164 = vector.broadcast %cst_60 : f32 to vector<128x512xf32>
    %165 = arith.addf %164, %163 : vector<128x512xf32>
    %166 = arith.mulf %155, %165 : vector<128x512xf32>
    %c0_61 = arith.constant 0 : index
    %c0_62 = arith.constant 0 : index
    %167 = vector.load %arg12[%c0_61, %c0_62] : memref<1x512xf32, #tpu.memory_space<vmem>>, vector<1x512xf32>
    %c0_63 = arith.constant 0 : index
    %c0_64 = arith.constant 0 : index
    %168 = vector.load %arg13[%c0_63, %c0_64] : memref<1x512xf32, #tpu.memory_space<vmem>>, vector<1x512xf32>
    %cst_65 = arith.constant dense<0.000000e+00> : vector<128xf32>
    %169 = vector.multi_reduction <add>, %166, %cst_65 [1] : vector<128x512xf32> to vector<128xf32>
    %170 = vector.shape_cast %169 : vector<128xf32> to vector<128x1xf32>
    %cst_66 = arith.constant 5.120000e+02 : f32
    %171 = vector.broadcast %cst_66 : f32 to vector<128x1xf32>
    %172 = arith.divf %170, %171 : vector<128x1xf32>
    %173 = vector.broadcast %172 : vector<128x1xf32> to vector<128x512xf32>
    %174 = arith.subf %166, %173 : vector<128x512xf32>
    %175 = arith.mulf %174, %174 : vector<128x512xf32>
    %cst_67 = arith.constant dense<0.000000e+00> : vector<128xf32>
    %176 = vector.multi_reduction <add>, %175, %cst_67 [1] : vector<128x512xf32> to vector<128xf32>
    %177 = vector.shape_cast %176 : vector<128xf32> to vector<128x1xf32>
    %cst_68 = arith.constant 5.120000e+02 : f32
    %178 = vector.broadcast %cst_68 : f32 to vector<128x1xf32>
    %179 = arith.divf %177, %178 : vector<128x1xf32>
    %cst_69 = arith.constant 9.99999974E-6 : f32
    %180 = vector.broadcast %cst_69 : f32 to vector<128x1xf32>
    %181 = arith.addf %179, %180 : vector<128x1xf32>
    %182 = math.rsqrt %181 : vector<128x1xf32>
    %183 = vector.broadcast %182 : vector<128x1xf32> to vector<128x512xf32>
    %184 = arith.mulf %174, %183 : vector<128x512xf32>
    %185 = vector.broadcast %167 : vector<1x512xf32> to vector<128x512xf32>
    %186 = arith.mulf %184, %185 : vector<128x512xf32>
    %187 = vector.broadcast %168 : vector<1x512xf32> to vector<128x512xf32>
    %188 = arith.addf %186, %187 : vector<128x512xf32>
    %189 = arith.truncf %188 : vector<128x512xf32> to vector<128x512xbf16>
    %c0_70 = arith.constant 0 : index
    %c0_71 = arith.constant 0 : index
    %190 = vector.load %arg14[%c0_70, %c0_71] : memref<512x128xbf16, #tpu.memory_space<vmem>>, vector<512x128xbf16>
    %cst_72 = arith.constant dense<0.000000e+00> : vector<128x128xf32>
    %191 = tpu.matmul %189, %190, %cst_72 {dimension_numbers = #tpu.dot_dimension_numbers<[1], [0], [0], [1], [0, 0, 1, 1], [], []>} : vector<128x512xbf16>, vector<512x128xbf16>, vector<128x128xf32> -> vector<128x128xf32>
    %c0_73 = arith.constant 0 : index
    %c0_74 = arith.constant 0 : index
    %192 = vector.load %arg15[%c0_73, %c0_74] : memref<1x128xf32, #tpu.memory_space<vmem>>, vector<1x128xf32>
    %193 = vector.broadcast %192 : vector<1x128xf32> to vector<128x128xf32>
    %194 = arith.addf %191, %193 : vector<128x128xf32>
    %195 = arith.addf %147, %194 : vector<128x128xf32>
    %196 = vector.shape_cast %195 : vector<128x128xf32> to vector<2x64x128xf32>
    %c0_75 = arith.constant 0 : index
    %c0_76 = arith.constant 0 : index
    %c0_77 = arith.constant 0 : index
    %197 = vector.load %arg16[%c0_75, %c0_76, %c0_77] : memref<2x64x128xf32, #tpu.memory_space<vmem>>, vector<2x64x128xf32>
    tpu.vector_store %arg16[%c0_75, %c0_76, %c0_77], %196 {strides = array<i32>} : memref<2x64x128xf32, #tpu.memory_space<vmem>>, vector<2x64x128xf32>,
    return
  }
  func.func @transform_0(%arg0: i32) -> (i32, i32, i32) {
    %c0_i32 = arith.constant 0 : i32
    %c0_i32_0 = arith.constant 0 : i32
    %c0_i32_1 = arith.constant 0 : i32
    return %arg0, %c0_i32, %c0_i32_0 : i32, i32, i32
  }
  func.func @transform_1(%arg0: i32) -> (i32, i32) {
    %c0_i32 = arith.constant 0 : i32
    %c0_i32_0 = arith.constant 0 : i32
    %c0_i32_1 = arith.constant 0 : i32
    return %c0_i32, %c0_i32_0 : i32, i32
  }
  func.func @transform_2(%arg0: i32) -> (i32, i32) {
    %c0_i32 = arith.constant 0 : i32
    %c0_i32_0 = arith.constant 0 : i32
    %c0_i32_1 = arith.constant 0 : i32
    return %c0_i32, %c0_i32_0 : i32, i32
  }
  func.func @transform_3(%arg0: i32) -> (i32, i32) {
    %c0_i32 = arith.constant 0 : i32
    %c0_i32_0 = arith.constant 0 : i32
    %c0_i32_1 = arith.constant 0 : i32
    return %c0_i32, %c0_i32_0 : i32, i32
  }
  func.func @transform_4(%arg0: i32) -> (i32, i32) {
    %c0_i32 = arith.constant 0 : i32
    %c0_i32_0 = arith.constant 0 : i32
    %c0_i32_1 = arith.constant 0 : i32
    return %c0_i32, %c0_i32_0 : i32, i32
  }
  func.func @transform_5(%arg0: i32) -> (i32, i32) {
    %c0_i32 = arith.constant 0 : i32
    %c0_i32_0 = arith.constant 0 : i32
    %c0_i32_1 = arith.constant 0 : i32
    return %c0_i32, %c0_i32_0 : i32, i32
  }
  func.func @transform_6(%arg0: i32) -> (i32, i32) {
    %c0_i32 = arith.constant 0 : i32
    %c0_i32_0 = arith.constant 0 : i32
    %c0_i32_1 = arith.constant 0 : i32
    return %c0_i32, %c0_i32_0 : i32, i32
  }
  func.func @transform_7(%arg0: i32) -> (i32, i32) {
    %c0_i32 = arith.constant 0 : i32
    %c0_i32_0 = arith.constant 0 : i32
    %c0_i32_1 = arith.constant 0 : i32
    return %c0_i32, %c0_i32_0 : i32, i32
  }
  func.func @transform_8(%arg0: i32) -> (i32, i32) {
    %c0_i32 = arith.constant 0 : i32
    %c0_i32_0 = arith.constant 0 : i32
    %c0_i32_1 = arith.constant 0 : i32
    return %c0_i32, %c0_i32_0 : i32, i32
  }
  func.func @transform_9(%arg0: i32) -> (i32, i32) {
    %c0_i32 = arith.constant 0 : i32
    %c0_i32_0 = arith.constant 0 : i32
    %c0_i32_1 = arith.constant 0 : i32
    return %c0_i32, %c0_i32_0 : i32, i32
  }
  func.func @transform_10(%arg0: i32) -> (i32, i32) {
    %c0_i32 = arith.constant 0 : i32
    %c0_i32_0 = arith.constant 0 : i32
    %c0_i32_1 = arith.constant 0 : i32
    return %c0_i32, %c0_i32_0 : i32, i32
  }
  func.func @transform_11(%arg0: i32) -> (i32, i32) {
    %c0_i32 = arith.constant 0 : i32
    %c0_i32_0 = arith.constant 0 : i32
    %c0_i32_1 = arith.constant 0 : i32
    return %c0_i32, %c0_i32_0 : i32, i32
  }
  func.func @transform_12(%arg0: i32) -> (i32, i32) {
    %c0_i32 = arith.constant 0 : i32
    %c0_i32_0 = arith.constant 0 : i32
    %c0_i32_1 = arith.constant 0 : i32
    return %c0_i32, %c0_i32_0 : i32, i32
  }
  func.func @transform_13(%arg0: i32) -> (i32, i32) {
    %c0_i32 = arith.constant 0 : i32
    %c0_i32_0 = arith.constant 0 : i32
    %c0_i32_1 = arith.constant 0 : i32
    return %c0_i32, %c0_i32_0 : i32, i32
  }
  func.func @transform_14(%arg0: i32) -> (i32, i32) {
    %c0_i32 = arith.constant 0 : i32
    %c0_i32_0 = arith.constant 0 : i32
    %c0_i32_1 = arith.constant 0 : i32
    return %c0_i32, %c0_i32_0 : i32, i32
  }
  func.func @transform_15(%arg0: i32) -> (i32, i32, i32) {
    %c0_i32 = arith.constant 0 : i32
    %c0_i32_0 = arith.constant 0 : i32
    %c0_i32_1 = arith.constant 0 : i32
    return %arg0, %c0_i32, %c0_i32_0 : i32, i32, i32
  }
}

</mosaic_0001>

<llo_original>
// kernel: tpu_custom_call.1
$region0: #{tpu_custom_call.1}
  #allocation0 [shape = 'u32[]', space=smem, size = 0x4, offset = 0x4, fixed_abs, tag = 'smem constant byte address 0x4 - core index']
  #allocation1 [shape = 'u32[144,128]{1,0:T(1,128)}', space=vmem, size = 0x12000, scoped, tag = 'internal scratch']
  %s0 = inlined_call_operand.hbm [shape: f32[4,64,128], index: 0, kind: input, shape index: {}]
  %s1 = inlined_call_operand.hbm [shape: f32[1,128], index: 1, kind: input, shape index: {}]
  %s2 = inlined_call_operand.hbm [shape: f32[1,128], index: 2, kind: input, shape index: {}]
  %s3 = inlined_call_operand.hbm [shape: bf16[128,384], index: 3, kind: input, shape index: {}]
  %s4 = inlined_call_operand.hbm [shape: f32[1,384], index: 4, kind: input, shape index: {}]
  %s5 = inlined_call_operand.hbm [shape: bf16[128,128], index: 5, kind: input, shape index: {}]
  %s6 = inlined_call_operand.hbm [shape: f32[1,128], index: 6, kind: input, shape index: {}]
  %s7 = inlined_call_operand.hbm [shape: f32[1,128], index: 7, kind: input, shape index: {}]
  %s8 = inlined_call_operand.vmem [shape: f32[1,128], index: 8, kind: input, shape index: {}]
  %s9 = inlined_call_operand.hbm [shape: bf16[128,512], index: 9, kind: input, shape index: {}]
  %s10 = inlined_call_operand.vmem [shape: f32[1,512], index: 10, kind: input, shape index: {}]
  %s11 = inlined_call_operand.vmem [shape: f32[1,512], index: 11, kind: input, shape index: {}]
  %s12 = inlined_call_operand.vmem [shape: f32[1,512], index: 12, kind: input, shape index: {}]
  %s13 = inlined_call_operand.hbm [shape: bf16[512,128], index: 13, kind: input, shape index: {}]
  %s14 = inlined_call_operand.vmem [shape: f32[1,128], index: 14, kind: input, shape index: {}]
  %s15 = inlined_call_operand.hbm [shape: f32[4,64,128], index: 15, kind: output, shape index: {}]
  %s16 = sld [smem:[#allocation0]]
  $region133: #{tpu_custom_call.1} parent=0
    _
  %s18 = ssub.s32 1, %s16
  %s19 = scalar_select 0, %s18, %s16
  $region1: #{tpu_custom_call.1} parent=0
    #allocation2 [shape = 'u8[131072]{0}', space=vmem, size = 0x20000, scoped, tag = 'input window, operand 0']
    #allocation3 [shape = 's32[2]{0}', space=sflag, size = 0x8, scoped, tag = 'scoped memory for tpu_custom_call.1']
    #allocation4 [shape = 's32[2]{0}', space=sflag, size = 0x8, scoped, tag = 'scoped memory for tpu_custom_call.1']
    #allocation5 [shape = 'u8[512]{0}', space=vmem, size = 0x400, scoped, tag = 'input window, operand 1, single buffered']
    #allocation6 [shape = 's32[1]{0}', space=sflag, size = 0x4, scoped, tag = 'scoped memory for tpu_custom_call.1']
    #allocation7 [shape = 'u8[512]{0}', space=vmem, size = 0x400, scoped, tag = 'input window, operand 2, single buffered']
    #allocation8 [shape = 'u8[98304]{0}', space=vmem, size = 0x18000, scoped, tag = 'input window, operand 3, single buffered']
    #allocation9 [shape = 's32[1]{0}', space=sflag, size = 0x4, scoped, tag = 'scoped memory for tpu_custom_call.1']
    #allocation10 [shape = 'u8[1536]{0}', space=vmem, size = 0x800, scoped, tag = 'input window, operand 4, single buffered']
    #allocation11 [shape = 'u8[32768]{0}', space=vmem, size = 0x8000, scoped, tag = 'input window, operand 5, single buffered']
    #allocation12 [shape = 's32[1]{0}', space=sflag, size = 0x4, scoped, tag = 'scoped memory for tpu_custom_call.1']
    #allocation13 [shape = 'u8[512]{0}', space=vmem, size = 0x400, scoped, tag = 'input window, operand 6, single buffered']
    #allocation14 [shape = 'u8[512]{0}', space=vmem, size = 0x400, scoped, tag = 'input window, operand 7, single buffered']
    #allocation15 [shape = 's32[1]{0}', space=sflag, size = 0x4, scoped, tag = 'scoped memory for tpu_custom_call.1']
    #allocation16 [shape = 'u8[131072]{0}', space=vmem, size = 0x20000, scoped, tag = 'input window, operand 9, single buffered']
    #allocation17 [shape = 'u8[131072]{0}', space=vmem, size = 0x20000, scoped, tag = 'input window, operand 13, single buffered']
    #allocation18 [shape = 's32[1]{0}', space=sflag, size = 0x4, scoped, tag = 'scoped memory for tpu_custom_call.1']
    #allocation19 [shape = 'u8[131072]{0}', space=vmem, size = 0x20000, scoped, tag = 'output window, operand 0']
    %20 = vsyncpa [#allocation3], 0
    %s21 = scalar_lea.sflag [#allocation3], 1
    %22 = vsyncpa %s21, 0
    %23 = vsyncpa [#allocation6], 0
    %24 = vsyncpa [#allocation9], 0
    %25 = vsyncpa [#allocation12], 0
    %26 = vsyncpa [#allocation15], 0
    %27 = vsyncpa [#allocation18], 0
    %28 = vsyncpa [#allocation4], 0
    %s29 = scalar_lea.sflag [#allocation4], 1
    %30 = vsyncpa %s29, 0
    loop: start=0, step=1, limit=4
    $region2: #{tpu_custom_call.1} parent=1 // loop_pre_header
      _
    $region3: #{tpu_custom_call.1} parent=1 // loop_header
      %s32 = sphi 0, %s36
      %p33 = scmp.ge.s32.totalorder %s32, 4
      %s42 = sphi 0, %s44
      %s45 = sphi 0, %s42
      %s46 = sphi 0, %s45
      %s62 = sphi 0, %s46
      %s66 = sphi 0, %s66
      %s68 = sphi 0, %s66
      %s69 = sphi 0, %s68
      %s83 = sphi 0, %s69
      %s87 = sphi 0, %s87
      %s89 = sphi 0, %s87
      %s90 = sphi 0, %s89
      %s104 = sphi 0, %s90
      %s108 = sphi 0, %s108
      %s110 = sphi 0, %s108
      %s111 = sphi 0, %s110
      %s125 = sphi 0, %s111
      %s129 = sphi 0, %s129
      %s131 = sphi 0, %s129
      %s132 = sphi 0, %s131
      %s146 = sphi 0, %s132
      %s150 = sphi 0, %s150
      %s152 = sphi 0, %s150
      %s153 = sphi 0, %s152
      %s167 = sphi 0, %s153
      %s171 = sphi 0, %s171
      %s173 = sphi 0, %s171
      %s174 = sphi 0, %s173
      %s188 = sphi 0, %s174
      %s192 = sphi 0, %s192
      %s194 = sphi 0, %s192
      %s195 = sphi 0, %s194
      %s209 = sphi 0, %s195
      %s213 = sphi 0, %s213
      %s215 = sphi 0, %s213
      %s216 = sphi 0, %s215
      %s230 = sphi 0, %s216
      %s234 = sphi 0, %s234
      %s236 = sphi 0, %s234
      %s237 = sphi 0, %s236
      %s251 = sphi 0, %s237
      %s255 = sphi 0, %s255
      %s257 = sphi 0, %s255
      %s258 = sphi 0, %s257
      %s272 = sphi 0, %s258
      %s276 = sphi 0, %s276
      %s278 = sphi 0, %s276
      %s279 = sphi 0, %s278
      %s293 = sphi 0, %s279
      %s297 = sphi 0, %s297
      %s299 = sphi 0, %s297
      %s300 = sphi 0, %s299
      %s314 = sphi 0, %s300
      %s318 = sphi 0, %s318
      %s320 = sphi 0, %s318
      %s321 = sphi 0, %s320
      %s335 = sphi 0, %s321
      %s339 = sphi 0, %s339
      %s341 = sphi 0, %s339
      %s342 = sphi 0, %s341
      %s356 = sphi 0, %s342
      %s362 = sphi 0, %s364
      %s365 = sphi 0, %s362
      %s366 = sphi 0, %s365
      %s382 = sphi 0, %s366
    $region4: #{tpu_custom_call.1} parent=1 // loop_header_branch
      %35 = sbr.rel (%p33) target = $region8
    $region5: #{tpu_custom_call.1} parent=1 // loop_body
      %s37 = ssub.s32 %s32, 1
      %s38 = ssub.s32 %s32, 2
      %s39 = sadd.s32 %s32, 1
      %s40 = ssub.s32 %s32, %s39
      %p41 = scmp.eq.s32.totalorder %s40, 0
      %s43 = sadd.s32 %s42, 1
      %s44 = scalar_select %p41, %s42, %s43
      %p47 = pneg %p41
      %p48 = scmp.eq.s32.totalorder %s32, 1
      %p49 = por %p47, %p48
      %p50 = scmp.ne.s32.totalorder %s42, %s45
      %p51 = scmp.eq.s32.totalorder %s32, 0
      %p52 = por %p50, %p51
      %p53 = scmp.ne.s32.totalorder %s42, %s45
      %p54 = scmp.eq.s32.totalorder %s37, 1
      %p55 = por %p53, %p54
      %p56 = scmp.ne.s32.totalorder %s45, %s46
      %p57 = scmp.eq.s32.totalorder %s37, 0
      %p58 = por %p56, %p57
      %p59 = scmp.ne.s32.totalorder %s45, %s46
      %p60 = scmp.eq.s32.totalorder %s38, 1
      %p61 = por %p59, %p60
      %p63 = scmp.ne.s32.totalorder %s46, %s62
      %p64 = scmp.eq.s32.totalorder %s38, 0
      %p65 = por %p63, %p64
      %s67 = sadd.s32 %s66, 1
      %p70 = scmp.eq.s32.totalorder %s32, 1
      %p71 = scmp.ne.s32.totalorder %s66, %s68
      %p72 = scmp.eq.s32.totalorder %s32, 0
      %p73 = por %p71, %p72
      %p74 = scmp.ne.s32.totalorder %s66, %s68
      %p75 = scmp.eq.s32.totalorder %s37, 1
      %p76 = por %p74, %p75
      %p77 = scmp.ne.s32.totalorder %s68, %s69
      %p78 = scmp.eq.s32.totalorder %s37, 0
      %p79 = por %p77, %p78
      %p80 = scmp.ne.s32.totalorder %s68, %s69
      %p81 = scmp.eq.s32.totalorder %s38, 1
      %p82 = por %p80, %p81
      %p84 = scmp.ne.s32.totalorder %s69, %s83
      %p85 = scmp.eq.s32.totalorder %s38, 0
      %p86 = por %p84, %p85
      %s88 = sadd.s32 %s87, 1
      %p91 = scmp.eq.s32.totalorder %s32, 1
      %p92 = scmp.ne.s32.totalorder %s87, %s89
      %p93 = scmp.eq.s32.totalorder %s32, 0
      %p94 = por %p92, %p93
      %p95 = scmp.ne.s32.totalorder %s87, %s89
      %p96 = scmp.eq.s32.totalorder %s37, 1
      %p97 = por %p95, %p96
      %p98 = scmp.ne.s32.totalorder %s89, %s90
      %p99 = scmp.eq.s32.totalorder %s37, 0
      %p100 = por %p98, %p99
      %p101 = scmp.ne.s32.totalorder %s89, %s90
      %p102 = scmp.eq.s32.totalorder %s38, 1
      %p103 = por %p101, %p102
      %p105 = scmp.ne.s32.totalorder %s90, %s104
      %p106 = scmp.eq.s32.totalorder %s38, 0
      %p107 = por %p105, %p106
      %s109 = sadd.s32 %s108, 1
      %p112 = scmp.eq.s32.totalorder %s32, 1
      %p113 = scmp.ne.s32.totalorder %s108, %s110
      %p114 = scmp.eq.s32.totalorder %s32, 0
      %p115 = por %p113, %p114
      %p116 = scmp.ne.s32.totalorder %s108, %s110
      %p117 = scmp.eq.s32.totalorder %s37, 1
      %p118 = por %p116, %p117
      %p119 = scmp.ne.s32.totalorder %s110, %s111
      %p120 = scmp.eq.s32.totalorder %s37, 0
      %p121 = por %p119, %p120
      %p122 = scmp.ne.s32.totalorder %s110, %s111
      %p123 = scmp.eq.s32.totalorder %s38, 1
      %p124 = por %p122, %p123
      %p126 = scmp.ne.s32.totalorder %s111, %s125
      %p127 = scmp.eq.s32.totalorder %s38, 0
      %p128 = por %p126, %p127
      %s130 = sadd.s32 %s129, 1
      %p133 = scmp.eq.s32.totalorder %s32, 1
      %p134 = scmp.ne.s32.totalorder %s129, %s131
      %p135 = scmp.eq.s32.totalorder %s32, 0
      %p136 = por %p134, %p135
      %p137 = scmp.ne.s32.totalorder %s129, %s131
      %p138 = scmp.eq.s32.totalorder %s37, 1
      %p139 = por %p137, %p138
      %p140 = scmp.ne.s32.totalorder %s131, %s132
      %p141 = scmp.eq.s32.totalorder %s37, 0
      %p142 = por %p140, %p141
      %p143 = scmp.ne.s32.totalorder %s131, %s132
      %p144 = scmp.eq.s32.totalorder %s38, 1
      %p145 = por %p143, %p144
      %p147 = scmp.ne.s32.totalorder %s132, %s146
      %p148 = scmp.eq.s32.totalorder %s38, 0
      %p149 = por %p147, %p148
      %s151 = sadd.s32 %s150, 1
      %p154 = scmp.eq.s32.totalorder %s32, 1
      %p155 = scmp.ne.s32.totalorder %s150, %s152
      %p156 = scmp.eq.s32.totalorder %s32, 0
      %p157 = por %p155, %p156
      %p158 = scmp.ne.s32.totalorder %s150, %s152
      %p159 = scmp.eq.s32.totalorder %s37, 1
      %p160 = por %p158, %p159
      %p161 = scmp.ne.s32.totalorder %s152, %s153
      %p162 = scmp.eq.s32.totalorder %s37, 0
      %p163 = por %p161, %p162
      %p164 = scmp.ne.s32.totalorder %s152, %s153
      %p165 = scmp.eq.s32.totalorder %s38, 1
      %p166 = por %p164, %p165
      %p168 = scmp.ne.s32.totalorder %s153, %s167
      %p169 = scmp.eq.s32.totalorder %s38, 0
      %p170 = por %p168, %p169
      %s172 = sadd.s32 %s171, 1
      %p175 = scmp.eq.s32.totalorder %s32, 1
      %p176 = scmp.ne.s32.totalorder %s171, %s173
      %p177 = scmp.eq.s32.totalorder %s32, 0
      %p178 = por %p176, %p177
      %p179 = scmp.ne.s32.totalorder %s171, %s173
      %p180 = scmp.eq.s32.totalorder %s37, 1
      %p181 = por %p179, %p180
      %p182 = scmp.ne.s32.totalorder %s173, %s174
      %p183 = scmp.eq.s32.totalorder %s37, 0
      %p184 = por %p182, %p183
      %p185 = scmp.ne.s32.totalorder %s173, %s174
      %p186 = scmp.eq.s32.totalorder %s38, 1
      %p187 = por %p185, %p186
      %p189 = scmp.ne.s32.totalorder %s174, %s188
      %p190 = scmp.eq.s32.totalorder %s38, 0
      %p191 = por %p189, %p190
      %s193 = sadd.s32 %s192, 1
      %p196 = scmp.eq.s32.totalorder %s32, 1
      %p197 = scmp.ne.s32.totalorder %s192, %s194
      %p198 = scmp.eq.s32.totalorder %s32, 0
      %p199 = por %p197, %p198
      %p200 = scmp.ne.s32.totalorder %s192, %s194
      %p201 = scmp.eq.s32.totalorder %s37, 1
      %p202 = por %p200, %p201
      %p203 = scmp.ne.s32.totalorder %s194, %s195
      %p204 = scmp.eq.s32.totalorder %s37, 0
      %p205 = por %p203, %p204
      %p206 = scmp.ne.s32.totalorder %s194, %s195
      %p207 = scmp.eq.s32.totalorder %s38, 1
      %p208 = por %p206, %p207
      %p210 = scmp.ne.s32.totalorder %s195, %s209
      %p211 = scmp.eq.s32.totalorder %s38, 0
      %p212 = por %p210, %p211
      %s214 = sadd.s32 %s213, 1
      %p217 = scmp.eq.s32.totalorder %s32, 1
      %p218 = scmp.ne.s32.totalorder %s213, %s215
      %p219 = scmp.eq.s32.totalorder %s32, 0
      %p220 = por %p218, %p219
      %p221 = scmp.ne.s32.totalorder %s213, %s215
      %p222 = scmp.eq.s32.totalorder %s37, 1
      %p223 = por %p221, %p222
      %p224 = scmp.ne.s32.totalorder %s215, %s216
      %p225 = scmp.eq.s32.totalorder %s37, 0
      %p226 = por %p224, %p225
      %p227 = scmp.ne.s32.totalorder %s215, %s216
      %p228 = scmp.eq.s32.totalorder %s38, 1
      %p229 = por %p227, %p228
      %p231 = scmp.ne.s32.totalorder %s216, %s230
      %p232 = scmp.eq.s32.totalorder %s38, 0
      %p233 = por %p231, %p232
      %s235 = sadd.s32 %s234, 1
      %p238 = scmp.eq.s32.totalorder %s32, 1
      %p239 = scmp.ne.s32.totalorder %s234, %s236
      %p240 = scmp.eq.s32.totalorder %s32, 0
      %p241 = por %p239, %p240
      %p242 = scmp.ne.s32.totalorder %s234, %s236
      %p243 = scmp.eq.s32.totalorder %s37, 1
      %p244 = por %p242, %p243
      %p245 = scmp.ne.s32.totalorder %s236, %s237
      %p246 = scmp.eq.s32.totalorder %s37, 0
      %p247 = por %p245, %p246
      %p248 = scmp.ne.s32.totalorder %s236, %s237
      %p249 = scmp.eq.s32.totalorder %s38, 1
      %p250 = por %p248, %p249
      %p252 = scmp.ne.s32.totalorder %s237, %s251
      %p253 = scmp.eq.s32.totalorder %s38, 0
      %p254 = por %p252, %p253
      %s256 = sadd.s32 %s255, 1
      %p259 = scmp.eq.s32.totalorder %s32, 1
      %p260 = scmp.ne.s32.totalorder %s255, %s257
      %p261 = scmp.eq.s32.totalorder %s32, 0
      %p262 = por %p260, %p261
      %p263 = scmp.ne.s32.totalorder %s255, %s257
      %p264 = scmp.eq.s32.totalorder %s37, 1
      %p265 = por %p263, %p264
      %p266 = scmp.ne.s32.totalorder %s257, %s258
      %p267 = scmp.eq.s32.totalorder %s37, 0
      %p268 = por %p266, %p267
      %p269 = scmp.ne.s32.totalorder %s257, %s258
      %p270 = scmp.eq.s32.totalorder %s38, 1
      %p271 = por %p269, %p270
      %p273 = scmp.ne.s32.totalorder %s258, %s272
      %p274 = scmp.eq.s32.totalorder %s38, 0
      %p275 = por %p273, %p274
      %s277 = sadd.s32 %s276, 1
      %p280 = scmp.eq.s32.totalorder %s32, 1
      %p281 = scmp.ne.s32.totalorder %s276, %s278
      %p282 = scmp.eq.s32.totalorder %s32, 0
      %p283 = por %p281, %p282
      %p284 = scmp.ne.s32.totalorder %s276, %s278
      %p285 = scmp.eq.s32.totalorder %s37, 1
      %p286 = por %p284, %p285
      %p287 = scmp.ne.s32.totalorder %s278, %s279
      %p288 = scmp.eq.s32.totalorder %s37, 0
      %p289 = por %p287, %p288
      %p290 = scmp.ne.s32.totalorder %s278, %s279
      %p291 = scmp.eq.s32.totalorder %s38, 1
      %p292 = por %p290, %p291
      %p294 = scmp.ne.s32.totalorder %s279, %s293
      %p295 = scmp.eq.s32.totalorder %s38, 0
      %p296 = por %p294, %p295
      %s298 = sadd.s32 %s297, 1
      %p301 = scmp.eq.s32.totalorder %s32, 1
      %p302 = scmp.ne.s32.totalorder %s297, %s299
      %p303 = scmp.eq.s32.totalorder %s32, 0
      %p304 = por %p302, %p303
      %p305 = scmp.ne.s32.totalorder %s297, %s299
      %p306 = scmp.eq.s32.totalorder %s37, 1
      %p307 = por %p305, %p306
      %p308 = scmp.ne.s32.totalorder %s299, %s300
      %p309 = scmp.eq.s32.totalorder %s37, 0
      %p310 = por %p308, %p309
      %p311 = scmp.ne.s32.totalorder %s299, %s300
      %p312 = scmp.eq.s32.totalorder %s38, 1
      %p313 = por %p311, %p312
      %p315 = scmp.ne.s32.totalorder %s300, %s314
      %p316 = scmp.eq.s32.totalorder %s38, 0
      %p317 = por %p315, %p316
      %s319 = sadd.s32 %s318, 1
      %p322 = scmp.eq.s32.totalorder %s32, 1
      %p323 = scmp.ne.s32.totalorder %s318, %s320
      %p324 = scmp.eq.s32.totalorder %s32, 0
      %p325 = por %p323, %p324
      %p326 = scmp.ne.s32.totalorder %s318, %s320
      %p327 = scmp.eq.s32.totalorder %s37, 1
      %p328 = por %p326, %p327
      %p329 = scmp.ne.s32.totalorder %s320, %s321
      %p330 = scmp.eq.s32.totalorder %s37, 0
      %p331 = por %p329, %p330
      %p332 = scmp.ne.s32.totalorder %s320, %s321
      %p333 = scmp.eq.s32.totalorder %s38, 1
      %p334 = por %p332, %p333
      %p336 = scmp.ne.s32.totalorder %s321, %s335
      %p337 = scmp.eq.s32.totalorder %s38, 0
      %p338 = por %p336, %p337
      %s340 = sadd.s32 %s339, 1
      %p343 = scmp.eq.s32.totalorder %s32, 1
      %p344 = scmp.ne.s32.totalorder %s339, %s341
      %p345 = scmp.eq.s32.totalorder %s32, 0
      %p346 = por %p344, %p345
      %p347 = scmp.ne.s32.totalorder %s339, %s341
      %p348 = scmp.eq.s32.totalorder %s37, 1
      %p349 = por %p347, %p348
      %p350 = scmp.ne.s32.totalorder %s341, %s342
      %p351 = scmp.eq.s32.totalorder %s37, 0
      %p352 = por %p350, %p351
      %p353 = scmp.ne.s32.totalorder %s341, %s342
      %p354 = scmp.eq.s32.totalorder %s38, 1
      %p355 = por %p353, %p354
      %p357 = scmp.ne.s32.totalorder %s342, %s356
      %p358 = scmp.eq.s32.totalorder %s38, 0
      %p359 = por %p357, %p358
      %s360 = ssub.s32 %s32, %s39
      %p361 = scmp.eq.s32.totalorder %s360, 0
      %s363 = sadd.s32 %s362, 1
      %s364 = scalar_select %p361, %s362, %s363
      %p367 = pneg %p361
      %p368 = scmp.eq.s32.totalorder %s32, 1
      %p369 = por %p367, %p368
      %p370 = scmp.ne.s32.totalorder %s362, %s365
      %p371 = scmp.eq.s32.totalorder %s32, 0
      %p372 = por %p370, %p371
      %p373 = scmp.ne.s32.totalorder %s362, %s365
      %p374 = scmp.eq.s32.totalorder %s37, 1
      %p375 = por %p373, %p374
      %p376 = scmp.ne.s32.totalorder %s365, %s366
      %p377 = scmp.eq.s32.totalorder %s37, 0
      %p378 = por %p376, %p377
      %p379 = scmp.ne.s32.totalorder %s365, %s366
      %p380 = scmp.eq.s32.totalorder %s38, 1
      %p381 = por %p379, %p380
      %p383 = scmp.ne.s32.totalorder %s366, %s382
      %p384 = scmp.eq.s32.totalorder %s38, 0
      %p385 = por %p383, %p384
      %p386 = scmp.le.s32.totalorder 1, %s32
      %p387 = scmp.lt.s32.totalorder %s32, 3
      %p388 = pnand %p386, %p387
      %p389 = pneg %p388
      // Predicated region
      $region9: #{tpu_custom_call.1} parent=5 // pred_check
        _
      $region10: #{tpu_custom_call.1} parent=5 // pred_check_branch
        %391 = sbr.rel (%p388) target = $region12
      $region11: #{tpu_custom_call.1} parent=5 // pred_region
        %s392 = ssub.s32 %s32, 1
        // Predicated region
        $region13: #{tpu_custom_call.1} parent=11 // pred_check
          %p393 = pneg %p79
        $region14: #{tpu_custom_call.1} parent=11 // pred_check_branch
          %395 = sbr.rel (%p393) target = $region16
        $region15: #{tpu_custom_call.1} parent=11 // pred_region
          %s397 = ssub.s32 16, 16
          %398 = vsyncadd [#allocation6], %s397
          %s400 = sshll.u32 [#allocation5], 4
          %s401 = int_to_ptr.vmem [resolvable:$true] %s400
          %403 = dma.hbm_to_vmem [thread:$0]  %s1, 16, %s401, [#allocation6]
        $region16: #{tpu_custom_call.1} parent=11 // pred_fallthru
          _
        // Predicated region
        $region17: #{tpu_custom_call.1} parent=11 // pred_check
          %p404 = pneg %p100
        $region18: #{tpu_custom_call.1} parent=11 // pred_check_branch
          %406 = sbr.rel (%p404) target = $region20
        $region19: #{tpu_custom_call.1} parent=11 // pred_region
          %s408 = ssub.s32 16, 16
          %409 = vsyncadd [#allocation6], %s408
          %s411 = sshll.u32 [#allocation7], 4
          %s412 = int_to_ptr.vmem [resolvable:$true] %s411
          %414 = dma.hbm_to_vmem [thread:$0]  %s2, 16, %s412, [#allocation6]
        $region20: #{tpu_custom_call.1} parent=11 // pred_fallthru
          _
        // Predicated region
        $region21: #{tpu_custom_call.1} parent=11 // pred_check
          %p415 = pneg %p121
        $region22: #{tpu_custom_call.1} parent=11 // pred_check_branch
          %417 = sbr.rel (%p415) target = $region24
        $region23: #{tpu_custom_call.1} parent=11 // pred_region
          %s419 = ssub.s32 3072, 3072
          %420 = vsyncadd [#allocation9], %s419
          %s421 = sshll.u32 [#allocation8], 4
          %s422 = int_to_ptr.vmem [resolvable:$true] %s421
          %427 = dma.hbm_to_vmem [thread:$0]  %s3, 3072, %s422, [#allocation9], 192, 192, 12
        $region24: #{tpu_custom_call.1} parent=11 // pred_fallthru
          _
        // Predicated region
        $region25: #{tpu_custom_call.1} parent=11 // pred_check
          %p428 = pneg %p142
        $region26: #{tpu_custom_call.1} parent=11 // pred_check_branch
          %430 = sbr.rel (%p428) target = $region28
        $region27: #{tpu_custom_call.1} parent=11 // pred_region
          %s432 = ssub.s32 48, 48
          %433 = vsyncadd [#allocation9], %s432
          %s435 = sshll.u32 [#allocation10], 4
          %s436 = int_to_ptr.vmem [resolvable:$true] %s435
          %438 = dma.hbm_to_vmem [thread:$0]  %s4, 48, %s436, [#allocation9]
        $region28: #{tpu_custom_call.1} parent=11 // pred_fallthru
          _
        // Predicated region
        $region29: #{tpu_custom_call.1} parent=11 // pred_check
          %p439 = pneg %p163
        $region30: #{tpu_custom_call.1} parent=11 // pred_check_branch
          %441 = sbr.rel (%p439) target = $region32
        $region31: #{tpu_custom_call.1} parent=11 // pred_region
          %s443 = ssub.s32 1024, 1024
          %444 = vsyncadd [#allocation12], %s443
          %s445 = sshll.u32 [#allocation11], 4
          %s446 = int_to_ptr.vmem [resolvable:$true] %s445
          %451 = dma.hbm_to_vmem [thread:$0]  %s5, 1024, %s446, [#allocation12], 64, 64, 4
        $region32: #{tpu_custom_call.1} parent=11 // pred_fallthru
          _
        // Predicated region
        $region33: #{tpu_custom_call.1} parent=11 // pred_check
          %p452 = pneg %p184
        $region34: #{tpu_custom_call.1} parent=11 // pred_check_branch
          %454 = sbr.rel (%p452) target = $region36
        $region35: #{tpu_custom_call.1} parent=11 // pred_region
          %s456 = ssub.s32 16, 16
          %457 = vsyncadd [#allocation12], %s456
          %s459 = sshll.u32 [#allocation13], 4
          %s460 = int_to_ptr.vmem [resolvable:$true] %s459
          %462 = dma.hbm_to_vmem [thread:$0]  %s6, 16, %s460, [#allocation12]
        $region36: #{tpu_custom_call.1} parent=11 // pred_fallthru
          _
        // Predicated region
        $region37: #{tpu_custom_call.1} parent=11 // pred_check
          %p463 = pneg %p205
        $region38: #{tpu_custom_call.1} parent=11 // pred_check_branch
          %465 = sbr.rel (%p463) target = $region40
        $region39: #{tpu_custom_call.1} parent=11 // pred_region
          %s467 = ssub.s32 16, 16
          %468 = vsyncadd [#allocation15], %s467
          %s470 = sshll.u32 [#allocation14], 4
          %s471 = int_to_ptr.vmem [resolvable:$true] %s470
          %473 = dma.hbm_to_vmem [thread:$0]  %s7, 16, %s471, [#allocation15]
        $region40: #{tpu_custom_call.1} parent=11 // pred_fallthru
          _
        // Predicated region
        $region41: #{tpu_custom_call.1} parent=11 // pred_check
          %p474 = pneg %p226
        $region42: #{tpu_custom_call.1} parent=11 // pred_check_branch
          %476 = sbr.rel (%p474) target = $region44
        $region43: #{tpu_custom_call.1} parent=11 // pred_region
          _
        $region44: #{tpu_custom_call.1} parent=11 // pred_fallthru
          _
        // Predicated region
        $region45: #{tpu_custom_call.1} parent=11 // pred_check
          %p477 = pneg %p247
        $region46: #{tpu_custom_call.1} parent=11 // pred_check_branch
          %479 = sbr.rel (%p477) target = $region48
        $region47: #{tpu_custom_call.1} parent=11 // pred_region
          %s481 = ssub.s32 4096, 4096
          %482 = vsyncadd [#allocation15], %s481
          %s483 = sshll.u32 [#allocation16], 4
          %s484 = int_to_ptr.vmem [resolvable:$true] %s483
          %489 = dma.hbm_to_vmem [thread:$0]  %s9, 4096, %s484, [#allocation15], 256, 256, 16
        $region48: #{tpu_custom_call.1} parent=11 // pred_fallthru
          _
        // Predicated region
        $region49: #{tpu_custom_call.1} parent=11 // pred_check
          %p490 = pneg %p268
        $region50: #{tpu_custom_call.1} parent=11 // pred_check_branch
          %492 = sbr.rel (%p490) target = $region52
        $region51: #{tpu_custom_call.1} parent=11 // pred_region
          _
        $region52: #{tpu_custom_call.1} parent=11 // pred_fallthru
          _
        // Predicated region
        $region53: #{tpu_custom_call.1} parent=11 // pred_check
          %p493 = pneg %p289
        $region54: #{tpu_custom_call.1} parent=11 // pred_check_branch
          %495 = sbr.rel (%p493) target = $region56
        $region55: #{tpu_custom_call.1} parent=11 // pred_region
          _
        $region56: #{tpu_custom_call.1} parent=11 // pred_fallthru
          _
        // Predicated region
        $region57: #{tpu_custom_call.1} parent=11 // pred_check
          %p496 = pneg %p310
        $region58: #{tpu_custom_call.1} parent=11 // pred_check_branch
          %498 = sbr.rel (%p496) target = $region60
        $region59: #{tpu_custom_call.1} parent=11 // pred_region
          _
        $region60: #{tpu_custom_call.1} parent=11 // pred_fallthru
          _
        // Predicated region
        $region61: #{tpu_custom_call.1} parent=11 // pred_check
          %p499 = pneg %p331
        $region62: #{tpu_custom_call.1} parent=11 // pred_check_branch
          %501 = sbr.rel (%p499) target = $region64
        $region63: #{tpu_custom_call.1} parent=11 // pred_region
          %s503 = ssub.s32 4096, 4096
          %504 = vsyncadd [#allocation18], %s503
          %s505 = sshll.u32 [#allocation17], 4
          %s506 = int_to_ptr.vmem [resolvable:$true] %s505
          %511 = dma.hbm_to_vmem [thread:$0]  %s13, 4096, %s506, [#allocation18], 64, 64, 4
        $region64: #{tpu_custom_call.1} parent=11 // pred_fallthru
          _
        // Predicated region
        $region65: #{tpu_custom_call.1} parent=11 // pred_check
          %p512 = pneg %p352
        $region66: #{tpu_custom_call.1} parent=11 // pred_check_branch
          %514 = sbr.rel (%p512) target = $region68
        $region67: #{tpu_custom_call.1} parent=11 // pred_region
          _
        $region68: #{tpu_custom_call.1} parent=11 // pred_fallthru
          _
      $region12: #{tpu_custom_call.1} parent=5 // pred_fallthru
        _
      %p515 = scmp.lt.s32.totalorder %s32, 2
      // Predicated region
      $region69: #{tpu_custom_call.1} parent=5 // pred_check
        %p516 = pneg %p515
      $region70: #{tpu_custom_call.1} parent=5 // pred_check_branch
        %518 = sbr.rel (%p516) target = $region72
      $region71: #{tpu_custom_call.1} parent=5 // pred_region
        // Predicated region
        $region73: #{tpu_custom_call.1} parent=71 // pred_check
          %p519 = pneg %p52
        $region74: #{tpu_custom_call.1} parent=71 // pred_check_branch
          %521 = sbr.rel (%p519) target = $region76
        $region75: #{tpu_custom_call.1} parent=71 // pred_region
          %s522 = sand.u32 %s42, 1
          %s523 = scalar_lea.sflag [#allocation3], %s522
          %s524 = sand.u32 %s42, 1
          %s525 = smul.addr %s524, 128
          %s526 = scalar_lea.vmem [#allocation2], %s525
          %s527 = smul.u32 2, %s32
          %s529 = ssub.s32 2048, 2048
          %530 = vsyncadd %s523, %s529
          %s531 = smul.addr %s527, 8
          %s532 = smul.addr %s531, 128
          %s533 = scalar_lea.hbm %s0, %s532
          %s534 = sshll.u32 %s526, 4
          %s535 = int_to_ptr.vmem [resolvable:$true] %s534
          %540 = dma.hbm_to_vmem [thread:$0]  %s533, 2048, %s535, %s523, 128, 128, 8
        $region76: #{tpu_custom_call.1} parent=71 // pred_fallthru
          _
      $region72: #{tpu_custom_call.1} parent=5 // pred_fallthru
        _
      %p541 = scmp.le.s32.totalorder 1, %s32
      %p542 = scmp.lt.s32.totalorder %s32, 3
      %p543 = pnand %p541, %p542
      %p544 = pneg %p543
      // Predicated region
      $region77: #{tpu_custom_call.1} parent=5 // pred_check
        _
      $region78: #{tpu_custom_call.1} parent=5 // pred_check_branch
        %546 = sbr.rel (%p543) target = $region80
      $region79: #{tpu_custom_call.1} parent=5 // pred_region
        %s547 = ssub.s32 %s32, 1
        %s548 = sand.u32 %s45, 1
        %s549 = scalar_lea.sflag [#allocation3], %s548
        %s550 = sand.u32 %s45, 1
        %s551 = smul.addr %s550, 128
        %s552 = scalar_lea.vmem [#allocation2], %s551
        // Predicated region
        $region81: #{tpu_custom_call.1} parent=79 // pred_check
          %p553 = pneg %p58
        $region82: #{tpu_custom_call.1} parent=79 // pred_check_branch
          %555 = sbr.rel (%p553) target = $region84
        $region83: #{tpu_custom_call.1} parent=79 // pred_region
          %556 = dma.done %s549, 2048
        $region84: #{tpu_custom_call.1} parent=79 // pred_fallthru
          _
        // Predicated region
        $region85: #{tpu_custom_call.1} parent=79 // pred_check
          %p557 = pneg %p79
        $region86: #{tpu_custom_call.1} parent=79 // pred_check_branch
          %559 = sbr.rel (%p557) target = $region88
        $region87: #{tpu_custom_call.1} parent=79 // pred_region
          %560 = dma.done [#allocation6], 16
        $region88: #{tpu_custom_call.1} parent=79 // pred_fallthru
          _
        // Predicated region
        $region89: #{tpu_custom_call.1} parent=79 // pred_check
          %p561 = pneg %p100
        $region90: #{tpu_custom_call.1} parent=79 // pred_check_branch
          %563 = sbr.rel (%p561) target = $region92
        $region91: #{tpu_custom_call.1} parent=79 // pred_region
          %564 = dma.done [#allocation6], 16
        $region92: #{tpu_custom_call.1} parent=79 // pred_fallthru
          _
        // Predicated region
        $region93: #{tpu_custom_call.1} parent=79 // pred_check
          %p565 = pneg %p121
        $region94: #{tpu_custom_call.1} parent=79 // pred_check_branch
          %567 = sbr.rel (%p565) target = $region96
        $region95: #{tpu_custom_call.1} parent=79 // pred_region
          %568 = dma.done [#allocation9], 3072
        $region96: #{tpu_custom_call.1} parent=79 // pred_fallthru
          _
        // Predicated region
        $region97: #{tpu_custom_call.1} parent=79 // pred_check
          %p569 = pneg %p142
        $region98: #{tpu_custom_call.1} parent=79 // pred_check_branch
          %571 = sbr.rel (%p569) target = $region100
        $region99: #{tpu_custom_call.1} parent=79 // pred_region
          %572 = dma.done [#allocation9], 48
        $region100: #{tpu_custom_call.1} parent=79 // pred_fallthru
          _
        // Predicated region
        $region101: #{tpu_custom_call.1} parent=79 // pred_check
          %p573 = pneg %p163
        $region102: #{tpu_custom_call.1} parent=79 // pred_check_branch
          %575 = sbr.rel (%p573) target = $region104
        $region103: #{tpu_custom_call.1} parent=79 // pred_region
          %576 = dma.done [#allocation12], 1024
        $region104: #{tpu_custom_call.1} parent=79 // pred_fallthru
          _
        // Predicated region
        $region105: #{tpu_custom_call.1} parent=79 // pred_check
          %p577 = pneg %p184
        $region106: #{tpu_custom_call.1} parent=79 // pred_check_branch
          %579 = sbr.rel (%p577) target = $region108
        $region107: #{tpu_custom_call.1} parent=79 // pred_region
          %580 = dma.done [#allocation12], 16
        $region108: #{tpu_custom_call.1} parent=79 // pred_fallthru
          _
        // Predicated region
        $region109: #{tpu_custom_call.1} parent=79 // pred_check
          %p581 = pneg %p205
        $region110: #{tpu_custom_call.1} parent=79 // pred_check_branch
          %583 = sbr.rel (%p581) target = $region112
        $region111: #{tpu_custom_call.1} parent=79 // pred_region
          %584 = dma.done [#allocation15], 16
        $region112: #{tpu_custom_call.1} parent=79 // pred_fallthru
          _
        // Predicated region
        $region113: #{tpu_custom_call.1} parent=79 // pred_check
          %p585 = pneg %p247
        $region114: #{tpu_custom_call.1} parent=79 // pred_check_branch
          %587 = sbr.rel (%p585) target = $region116
        $region115: #{tpu_custom_call.1} parent=79 // pred_region
          %588 = dma.done [#allocation15], 4096
        $region116: #{tpu_custom_call.1} parent=79 // pred_fallthru
          _
        // Predicated region
        $region117: #{tpu_custom_call.1} parent=79 // pred_check
          %p589 = pneg %p331
        $region118: #{tpu_custom_call.1} parent=79 // pred_check_branch
          %591 = sbr.rel (%p589) target = $region120
        $region119: #{tpu_custom_call.1} parent=79 // pred_region
          %592 = dma.done [#allocation18], 4096
        $region120: #{tpu_custom_call.1} parent=79 // pred_fallthru
          _
        %s593 = sand.u32 %s45, 1
        %s594 = scalar_lea.sflag [#allocation3], %s593
        %s595 = sand.u32 %s45, 1
        %s596 = smul.addr %s595, 128
        %s597 = scalar_lea.vmem [#allocation2], %s596
        %p598 = pneg %p58
        %p599 = pneg %p55
        %p600 = pneg %p79
        %p601 = pneg %p76
        %p602 = pneg %p100
        %p603 = pneg %p97
        %p604 = pneg %p121
        %p605 = pneg %p118
        %p606 = pneg %p142
        %p607 = pneg %p139
        %p608 = pneg %p163
        %p609 = pneg %p160
        %p610 = pneg %p184
        %p611 = pneg %p181
        %p612 = pneg %p205
        %p613 = pneg %p202
        %p614 = pneg %p226
        %p615 = pneg %p223
        %p616 = pneg %p247
        %p617 = pneg %p244
        %p618 = pneg %p268
        %p619 = pneg %p265
        %p620 = pneg %p289
        %p621 = pneg %p286
        %p622 = pneg %p310
        %p623 = pneg %p307
        %p624 = pneg %p331
        %p625 = pneg %p328
        %p626 = pneg %p352
        %p627 = pneg %p349
        %p628 = pneg %p378
        %p629 = pneg %p375
        %s630 = sand.u32 %s365, 1
        %s631 = scalar_lea.sflag [#allocation4], %s630
        %s632 = sand.u32 %s365, 1
        %s633 = smul.addr %s632, 128
        %s634 = scalar_lea.vmem [#allocation19], %s633
        %s635 = smul.u32 2, %s37
        %s636 = smul.u32 2, %s37
        %v638 = vld [vmem:[%s552] sm:$0xff]
        %v639 = vld [vmem:[%s552 + $0x8] sm:$0xff]
        %v640 = vld [vmem:[%s552 + $0x10] sm:$0xff]
        %v641 = vld [vmem:[%s552 + $0x18] sm:$0xff]
        %v642 = vld [vmem:[%s552 + $0x20] sm:$0xff]
        %v643 = vld [vmem:[%s552 + $0x28] sm:$0xff]
        %v644 = vld [vmem:[%s552 + $0x30] sm:$0xff]
        %v645 = vld [vmem:[%s552 + $0x38] sm:$0xff]
        %v646 = vld [vmem:[%s552 + $0x40] sm:$0xff]
        %v647 = vld [vmem:[%s552 + $0x48] sm:$0xff]
        %v648 = vld [vmem:[%s552 + $0x50] sm:$0xff]
        %v649 = vld [vmem:[%s552 + $0x58] sm:$0xff]
        %v650 = vld [vmem:[%s552 + $0x60] sm:$0xff]
        %v651 = vld [vmem:[%s552 + $0x68] sm:$0xff]
        %v652 = vld [vmem:[%s552 + $0x70] sm:$0xff]
        %v653 = vld [vmem:[%s552 + $0x78] sm:$0xff]
        %v654 = vld [vmem:[#allocation5] sm:$0x1]
        %v655 = vld [vmem:[#allocation7] sm:$0x1]
        %656 = vadd.xlane.f32.xlu0 %v638
        %v657 = vpop.xlane.xlu0 %656
        %658 = vadd.xlane.f32.xlu0 %v639
        %v659 = vpop.xlane.xlu0 %658
        %660 = vadd.xlane.f32.xlu0 %v640
        %v661 = vpop.xlane.xlu0 %660
        %662 = vadd.xlane.f32.xlu0 %v641
        %v663 = vpop.xlane.xlu0 %662
        %664 = vadd.xlane.f32.xlu0 %v642
        %v665 = vpop.xlane.xlu0 %664
        %666 = vadd.xlane.f32.xlu0 %v643
        %v667 = vpop.xlane.xlu0 %666
        %668 = vadd.xlane.f32.xlu0 %v644
        %v669 = vpop.xlane.xlu0 %668
        %670 = vadd.xlane.f32.xlu0 %v645
        %v671 = vpop.xlane.xlu0 %670
        %672 = vadd.xlane.f32.xlu0 %v646
        %v673 = vpop.xlane.xlu0 %672
        %674 = vadd.xlane.f32.xlu0 %v647
        %v675 = vpop.xlane.xlu0 %674
        %676 = vadd.xlane.f32.xlu0 %v648
        %v677 = vpop.xlane.xlu0 %676
        %678 = vadd.xlane.f32.xlu0 %v649
        %v679 = vpop.xlane.xlu0 %678
        %680 = vadd.xlane.f32.xlu0 %v650
        %v681 = vpop.xlane.xlu0 %680
        %682 = vadd.xlane.f32.xlu0 %v651
        %v683 = vpop.xlane.xlu0 %682
        %684 = vadd.xlane.f32.xlu0 %v652
        %v685 = vpop.xlane.xlu0 %684
        %686 = vadd.xlane.f32.xlu0 %v653
        %v687 = vpop.xlane.xlu0 %686
        %v688 = vrcp.pop 128.0
        %v689 = vmul.f32 %v657, %v688
        %v690 = vmul.f32 %v659, %v688
        %v691 = vmul.f32 %v661, %v688
        %v692 = vmul.f32 %v663, %v688
        %v693 = vmul.f32 %v665, %v688
        %v694 = vmul.f32 %v667, %v688
        %v695 = vmul.f32 %v669, %v688
        %v696 = vmul.f32 %v671, %v688
        %v697 = vmul.f32 %v673, %v688
        %v698 = vmul.f32 %v675, %v688
        %v699 = vmul.f32 %v677, %v688
        %v700 = vmul.f32 %v679, %v688
        %v701 = vmul.f32 %v681, %v688
        %v702 = vmul.f32 %v683, %v688
        %v703 = vmul.f32 %v685, %v688
        %v704 = vmul.f32 %v687, %v688
        %v705 = vsub.f32 %v638, %v689
        %v706 = vsub.f32 %v639, %v690
        %v707 = vsub.f32 %v640, %v691
        %v708 = vsub.f32 %v641, %v692
        %v709 = vsub.f32 %v642, %v693
        %v710 = vsub.f32 %v643, %v694
        %v711 = vsub.f32 %v644, %v695
        %v712 = vsub.f32 %v645, %v696
        %v713 = vsub.f32 %v646, %v697
        %v714 = vsub.f32 %v647, %v698
        %v715 = vsub.f32 %v648, %v699
        %v716 = vsub.f32 %v649, %v700
        %v717 = vsub.f32 %v650, %v701
        %v718 = vsub.f32 %v651, %v702
        %v719 = vsub.f32 %v652, %v703
        %v720 = vsub.f32 %v653, %v704
        %v721 = vmul.f32 %v705, %v705
        %v722 = vmul.f32 %v706, %v706
        %v723 = vmul.f32 %v707, %v707
        %v724 = vmul.f32 %v708, %v708
        %v725 = vmul.f32 %v709, %v709
        %v726 = vmul.f32 %v710, %v710
        %v727 = vmul.f32 %v711, %v711
        %v728 = vmul.f32 %v712, %v712
        %v729 = vmul.f32 %v713, %v713
        %v730 = vmul.f32 %v714, %v714
        %v731 = vmul.f32 %v715, %v715
        %v732 = vmul.f32 %v716, %v716
        %v733 = vmul.f32 %v717, %v717
        %v734 = vmul.f32 %v718, %v718
        %v735 = vmul.f32 %v719, %v719
        %v736 = vmul.f32 %v720, %v720
        %737 = vadd.xlane.f32.xlu0 %v721
        %v738 = vpop.xlane.xlu0 %737
        %739 = vadd.xlane.f32.xlu0 %v722
        %v740 = vpop.xlane.xlu0 %739
        %741 = vadd.xlane.f32.xlu0 %v723
        %v742 = vpop.xlane.xlu0 %741
        %743 = vadd.xlane.f32.xlu0 %v724
        %v744 = vpop.xlane.xlu0 %743
        %745 = vadd.xlane.f32.xlu0 %v725
        %v746 = vpop.xlane.xlu0 %745
        %747 = vadd.xlane.f32.xlu0 %v726
        %v748 = vpop.xlane.xlu0 %747
        %749 = vadd.xlane.f32.xlu0 %v727
        %v750 = vpop.xlane.xlu0 %749
        %751 = vadd.xlane.f32.xlu0 %v728
        %v752 = vpop.xlane.xlu0 %751
        %753 = vadd.xlane.f32.xlu0 %v729
        %v754 = vpop.xlane.xlu0 %753
        %755 = vadd.xlane.f32.xlu0 %v730
        %v756 = vpop.xlane.xlu0 %755
        %757 = vadd.xlane.f32.xlu0 %v731
        %v758 = vpop.xlane.xlu0 %757
        %759 = vadd.xlane.f32.xlu0 %v732
        %v760 = vpop.xlane.xlu0 %759
        %761 = vadd.xlane.f32.xlu0 %v733
        %v762 = vpop.xlane.xlu0 %761
        %763 = vadd.xlane.f32.xlu0 %v734
        %v764 = vpop.xlane.xlu0 %763
        %765 = vadd.xlane.f32.xlu0 %v735
        %v766 = vpop.xlane.xlu0 %765
        %767 = vadd.xlane.f32.xlu0 %v736
        %v768 = vpop.xlane.xlu0 %767
        %v769 = vmul.f32 %v738, %v688
        %v770 = vmul.f32 %v740, %v688
        %v771 = vmul.f32 %v742, %v688
        %v772 = vmul.f32 %v744, %v688
        %v773 = vmul.f32 %v746, %v688
        %v774 = vmul.f32 %v748, %v688
        %v775 = vmul.f32 %v750, %v688
        %v776 = vmul.f32 %v752, %v688
        %v777 = vmul.f32 %v754, %v688
        %v778 = vmul.f32 %v756, %v688
        %v779 = vmul.f32 %v758, %v688
        %v780 = vmul.f32 %v760, %v688
        %v781 = vmul.f32 %v762, %v688
        %v782 = vmul.f32 %v764, %v688
        %v783 = vmul.f32 %v766, %v688
        %v784 = vmul.f32 %v768, %v688
        %v785 = vadd.f32 %v769, 1e-05
        %v786 = vadd.f32 %v770, 1e-05
        %v787 = vadd.f32 %v771, 1e-05
        %v788 = vadd.f32 %v772, 1e-05
        %v789 = vadd.f32 %v773, 1e-05
        %v790 = vadd.f32 %v774, 1e-05
        %v791 = vadd.f32 %v775, 1e-05
        %v792 = vadd.f32 %v776, 1e-05
        %v793 = vadd.f32 %v777, 1e-05
        %v794 = vadd.f32 %v778, 1e-05
        %v795 = vadd.f32 %v779, 1e-05
        %v796 = vadd.f32 %v780, 1e-05
        %v797 = vadd.f32 %v781, 1e-05
        %v798 = vadd.f32 %v782, 1e-05
        %v799 = vadd.f32 %v783, 1e-05
        %v800 = vadd.f32 %v784, 1e-05
        %v801 = vrsqrt.pop %v785
        %v802 = vrsqrt.pop %v786
        %v803 = vrsqrt.pop %v787
        %v804 = vrsqrt.pop %v788
        %v805 = vrsqrt.pop %v789
        %v806 = vrsqrt.pop %v790
        %v807 = vrsqrt.pop %v791
        %v808 = vrsqrt.pop %v792
        %v809 = vrsqrt.pop %v793
        %v810 = vrsqrt.pop %v794
        %v811 = vrsqrt.pop %v795
        %v812 = vrsqrt.pop %v796
        %v813 = vrsqrt.pop %v797
        %v814 = vrsqrt.pop %v798
        %v815 = vrsqrt.pop %v799
        %v816 = vrsqrt.pop %v800
        %v817 = vmul.f32 %v705, %v801
        %v818 = vmul.f32 %v706, %v802
        %v819 = vmul.f32 %v707, %v803
        %v820 = vmul.f32 %v708, %v804
        %v821 = vmul.f32 %v709, %v805
        %v822 = vmul.f32 %v710, %v806
        %v823 = vmul.f32 %v711, %v807
        %v824 = vmul.f32 %v712, %v808
        %v825 = vmul.f32 %v713, %v809
        %v826 = vmul.f32 %v714, %v810
        %v827 = vmul.f32 %v715, %v811
        %v828 = vmul.f32 %v716, %v812
        %v829 = vmul.f32 %v717, %v813
        %v830 = vmul.f32 %v718, %v814
        %v831 = vmul.f32 %v719, %v815
        %v832 = vmul.f32 %v720, %v816
        %v834 = vlaneseq
        %v835 = vshrl.u32 %v834, 7
        %v836 = vsub.s32 0, %v835
        %v837 = vrot.slane %v654, %v836
        %v839 = vmul.f32 %v817, %v837
        %v840 = vmul.f32 %v818, %v837
        %v841 = vmul.f32 %v819, %v837
        %v842 = vmul.f32 %v820, %v837
        %v843 = vmul.f32 %v821, %v837
        %v844 = vmul.f32 %v822, %v837
        %v845 = vmul.f32 %v823, %v837
        %v846 = vmul.f32 %v824, %v837
        %v847 = vmul.f32 %v825, %v837
        %v848 = vmul.f32 %v826, %v837
        %v849 = vmul.f32 %v827, %v837
        %v850 = vmul.f32 %v828, %v837
        %v851 = vmul.f32 %v829, %v837
        %v852 = vmul.f32 %v830, %v837
        %v853 = vmul.f32 %v831, %v837
        %v854 = vmul.f32 %v832, %v837
        %v856 = vlaneseq
        %v857 = vshrl.u32 %v856, 7
        %v858 = vsub.s32 0, %v857
        %v859 = vrot.slane %v655, %v858
        %v861 = vadd.f32 %v839, %v859
        %v862 = vadd.f32 %v840, %v859
        %v863 = vadd.f32 %v841, %v859
        %v864 = vadd.f32 %v842, %v859
        %v865 = vadd.f32 %v843, %v859
        %v866 = vadd.f32 %v844, %v859
        %v867 = vadd.f32 %v845, %v859
        %v868 = vadd.f32 %v846, %v859
        %v869 = vadd.f32 %v847, %v859
        %v870 = vadd.f32 %v848, %v859
        %v871 = vadd.f32 %v849, %v859
        %v872 = vadd.f32 %v850, %v859
        %v873 = vadd.f32 %v851, %v859
        %v874 = vadd.f32 %v852, %v859
        %v875 = vadd.f32 %v853, %v859
        %v876 = vadd.f32 %v854, %v859
        %v877 = vpack.c.bf16 %v862, %v861
        %v878 = vpack.c.bf16 %v864, %v863
        %v879 = vpack.c.bf16 %v866, %v865
        %v880 = vpack.c.bf16 %v868, %v867
        %v881 = vpack.c.bf16 %v870, %v869
        %v882 = vpack.c.bf16 %v872, %v871
        %v883 = vpack.c.bf16 %v874, %v873
        %v884 = vpack.c.bf16 %v876, %v875
        %v885 = vld [vmem:[#allocation8] sm:$0xff]
        %v886 = vld [vmem:[#allocation8 + $0x8] sm:$0xf]
        %v887 = vld [vmem:[#allocation8 + $0xc] sm:$0xff]
        %v888 = vld [vmem:[#allocation8 + $0x14] sm:$0xf]
        %v889 = vld [vmem:[#allocation8 + $0x18] sm:$0xff]
        %v890 = vld [vmem:[#allocation8 + $0x20] sm:$0xf]
        %v891 = vld [vmem:[#allocation8 + $0x24] sm:$0xff]
        %v892 = vld [vmem:[#allocation8 + $0x2c] sm:$0xf]
        %v893 = vld [vmem:[#allocation8 + $0x30] sm:$0xff]
        %v894 = vld [vmem:[#allocation8 + $0x38] sm:$0xf]
        %v895 = vld [vmem:[#allocation8 + $0x3c] sm:$0xff]
        %v896 = vld [vmem:[#allocation8 + $0x44] sm:$0xf]
        %v897 = vld [vmem:[#allocation8 + $0x48] sm:$0xff]
        %v898 = vld [vmem:[#allocation8 + $0x50] sm:$0xf]
        %v899 = vld [vmem:[#allocation8 + $0x54] sm:$0xff]
        %v900 = vld [vmem:[#allocation8 + $0x5c] sm:$0xf]
        %v901 = vld [vmem:[#allocation8 + $0x60] sm:$0xff]
        %v902 = vld [vmem:[#allocation8 + $0x68] sm:$0xf]
        %v903 = vld [vmem:[#allocation8 + $0x6c] sm:$0xff]
        %v904 = vld [vmem:[#allocation8 + $0x74] sm:$0xf]
        %v905 = vld [vmem:[#allocation8 + $0x78] sm:$0xff]
        %v906 = vld [vmem:[#allocation8 + $0x80] sm:$0xf]
        %v907 = vld [vmem:[#allocation8 + $0x84] sm:$0xff]
        %v908 = vld [vmem:[#allocation8 + $0x8c] sm:$0xf]
        %v909 = vld [vmem:[#allocation8 + $0x90] sm:$0xff]
        %v910 = vld [vmem:[#allocation8 + $0x98] sm:$0xf]
        %v911 = vld [vmem:[#allocation8 + $0x9c] sm:$0xff]
        %v912 = vld [vmem:[#allocation8 + $0xa4] sm:$0xf]
        %v913 = vld [vmem:[#allocation8 + $0xa8] sm:$0xff]
        %v914 = vld [vmem:[#allocation8 + $0xb0] sm:$0xf]
        %v915 = vld [vmem:[#allocation8 + $0xb4] sm:$0xff]
        %v916 = vld [vmem:[#allocation8 + $0xbc] sm:$0xf]
        %v917 = vld [vmem:[#allocation10] sm:$0x7]
        %v919 = vlaneseq
        %v920 = vshrl.u32 %v919, 7
        %v921 = vsub.s32 0, %v920
        %v922 = vrot.slane %v917, %v921
        %v923 = vlaneseq
        %v924 = vshrl.u32 %v923, 7
        %v925 = vsub.s32 1, %v924
        %v926 = vrot.slane %v917, %v925
        %v927 = vlaneseq
        %v928 = vshrl.u32 %v927, 7
        %v929 = vsub.s32 2, %v928
        %v930 = vrot.slane %v917, %v929
        %v966 = vunpack.c.l.b16 %v885
        %v967 = vunpack.c.h.b16 %v885
        %v968 = vunpack.c.l.b16 %v886
        %v969 = vunpack.c.l.b16 %v887
        %v970 = vunpack.c.h.b16 %v887
        %v971 = vunpack.c.l.b16 %v888
        %v972 = vunpack.c.l.b16 %v889
        %v973 = vunpack.c.h.b16 %v889
        %v974 = vunpack.c.l.b16 %v890
        %v975 = vunpack.c.l.b16 %v891
        %v976 = vunpack.c.h.b16 %v891
        %v977 = vunpack.c.l.b16 %v892
        %v978 = vunpack.c.l.b16 %v893
        %v979 = vunpack.c.h.b16 %v893
        %v980 = vunpack.c.l.b16 %v894
        %v981 = vunpack.c.l.b16 %v895
        %v982 = vunpack.c.h.b16 %v895
        %v983 = vunpack.c.l.b16 %v896
        %v984 = vunpack.c.l.b16 %v897
        %v985 = vunpack.c.h.b16 %v897
        %v986 = vunpack.c.l.b16 %v898
        %v987 = vunpack.c.l.b16 %v899
        %v988 = vunpack.c.h.b16 %v899
        %v989 = vunpack.c.l.b16 %v900
        %v990 = vunpack.c.l.b16 %v901
        %v991 = vunpack.c.h.b16 %v901
        %v992 = vunpack.c.l.b16 %v902
        %v993 = vunpack.c.l.b16 %v903
        %v994 = vunpack.c.h.b16 %v903
        %v995 = vunpack.c.l.b16 %v904
        %v996 = vunpack.c.l.b16 %v905
        %v997 = vunpack.c.h.b16 %v905
        %v998 = vunpack.c.l.b16 %v906
        %v999 = vunpack.c.l.b16 %v907
        %v1000 = vunpack.c.h.b16 %v907
        %v1001 = vunpack.c.l.b16 %v908
        %v1002 = vunpack.c.l.b16 %v909
        %v1003 = vunpack.c.h.b16 %v909
        %v1004 = vunpack.c.l.b16 %v910
        %v1005 = vunpack.c.l.b16 %v911
        %v1006 = vunpack.c.h.b16 %v911
        %v1007 = vunpack.c.l.b16 %v912
        %v1008 = vunpack.c.l.b16 %v913
        %v1009 = vunpack.c.h.b16 %v913
        %v1010 = vunpack.c.l.b16 %v914
        %v1011 = vunpack.c.l.b16 %v915
        %v1012 = vunpack.c.h.b16 %v915
        %v1013 = vunpack.c.l.b16 %v916
        %v1014 = vpack.c.b16 %v969, %v966
        %v1015 = vpack.c.b16 %v970, %v967
        %v1016 = vpack.c.b16 %v971, %v968
        %v1017 = vpack.c.b16 %v975, %v972
        %v1018 = vpack.c.b16 %v976, %v973
        %v1019 = vpack.c.b16 %v977, %v974
        %v1020 = vpack.c.b16 %v981, %v978
        %v1021 = vpack.c.b16 %v982, %v979
        %v1022 = vpack.c.b16 %v983, %v980
        %v1023 = vpack.c.b16 %v987, %v984
        %v1024 = vpack.c.b16 %v988, %v985
        %v1025 = vpack.c.b16 %v989, %v986
        %v1026 = vpack.c.b16 %v993, %v990
        %v1027 = vpack.c.b16 %v994, %v991
        %v1028 = vpack.c.b16 %v995, %v992
        %v1029 = vpack.c.b16 %v999, %v996
        %v1030 = vpack.c.b16 %v1000, %v997
        %v1031 = vpack.c.b16 %v1001, %v998
        %v1032 = vpack.c.b16 %v1005, %v1002
        %v1033 = vpack.c.b16 %v1006, %v1003
        %v1034 = vpack.c.b16 %v1007, %v1004
        %v1035 = vpack.c.b16 %v1011, %v1008
        %v1036 = vpack.c.b16 %v1012, %v1009
        %v1037 = vpack.c.b16 %v1013, %v1010
        %1062 = vmatprep.subr.bf16.mxu0 %v1036
        %1063 = vmatpush1.bf16.msra.mxu0 %v1035
        %1064 = vmatprep.subr.bf16.mxu0 %v1033
        %1065 = vmatpush1.bf16.msra.mxu0 %v1032
        %1066 = vmatprep.subr.bf16.mxu0 %v1030
        %1067 = vmatpush1.bf16.msra.mxu0 %v1029
        %1068 = vmatprep.subr.bf16.mxu0 %v1027
        %1069 = vmatpush1.bf16.msra.mxu0 %v1026
        %1070 = vmatprep.subr.bf16.mxu0 %v1024
        %1071 = vmatpush1.bf16.msra.mxu0 %v1023
        %1072 = vmatprep.subr.bf16.mxu0 %v1021
        %1073 = vmatpush1.bf16.msra.mxu0 %v1020
        %1074 = vmatprep.subr.bf16.mxu0 %v1018
        %1075 = vmatpush1.bf16.msra.mxu0 %v1017
        %1076 = vmatprep.subr.bf16.mxu0 %v1015
        %1077 = vmatpush1.bf16.msra.mxu0 %v1014
        %1078 = vmatprep.subr.bf16.mxu0 0
        %1079 = vmatpush2.bf16.msra.mxu0 0
        %1080 = vmatprep.subr.bf16.mxu0 0
        %1081 = vmatpush2.bf16.msra.mxu0 0
        %1082 = vmatprep.subr.bf16.mxu0 0
        %1083 = vmatpush2.bf16.msra.mxu0 0
        %1084 = vmatprep.subr.bf16.mxu0 0
        %1085 = vmatpush2.bf16.msra.mxu0 0
        %1086 = vmatprep.subr.bf16.mxu0 0
        %1087 = vmatpush2.bf16.msra.mxu0 0
        %1088 = vmatprep.subr.bf16.mxu0 0
        %1089 = vmatpush2.bf16.msra.mxu0 0
        %1090 = vmatprep.subr.bf16.mxu0 0
        %1091 = vmatpush2.bf16.msra.mxu0 0
        %1092 = vmatprep.subr.bf16.mxu0 0
        %1093 = vmatpush2.bf16.msra.mxu0 0
        %1094 = vmatprep.mubr.bf16.mxu0 0
        %1095 = vmatmul.mubr.bf16.gmra.mxu0 %v877
        %v1096 = vpop.f32.mrf.mxu0
        %v1097 = vadd.f32 %v922, %v1096
        %v1098 = vpop.f32.mrf.mxu0
        %v1099 = vadd.f32 %v926, %v1098
        %v1100 = vpop.f32.mrf.mxu0
        %v1101 = vadd.f32 %v922, %v1100
        %v1102 = vpop.f32.mrf.mxu0
        %v1103 = vadd.f32 %v926, %v1102
        %1104 = vmatprep.mubr.bf16.mxu0 0
        %1105 = vmatmul.mubr.bf16.gmra.mxu0 %v878
        %v1106 = vpop.f32.mrf.mxu0
        %v1107 = vadd.f32 %v922, %v1106
        %v1108 = vpop.f32.mrf.mxu0
        %v1109 = vadd.f32 %v926, %v1108
        %v1110 = vpop.f32.mrf.mxu0
        %v1111 = vadd.f32 %v922, %v1110
        %v1112 = vpop.f32.mrf.mxu0
        %v1113 = vadd.f32 %v926, %v1112
        %1114 = vmatprep.mubr.bf16.mxu0 0
        %1115 = vmatmul.mubr.bf16.gmra.mxu0 %v879
        %v1116 = vpop.f32.mrf.mxu0
        %v1117 = vadd.f32 %v922, %v1116
        %v1118 = vpop.f32.mrf.mxu0
        %v1119 = vadd.f32 %v926, %v1118
        %v1120 = vpop.f32.mrf.mxu0
        %v1121 = vadd.f32 %v922, %v1120
        %v1122 = vpop.f32.mrf.mxu0
        %v1123 = vadd.f32 %v926, %v1122
        %1124 = vmatprep.mubr.bf16.mxu0 0
        %1125 = vmatmul.mubr.bf16.gmra.mxu0 %v880
        %v1126 = vpop.f32.mrf.mxu0
        %v1127 = vadd.f32 %v922, %v1126
        %v1128 = vpop.f32.mrf.mxu0
        %v1129 = vadd.f32 %v926, %v1128
        %v1130 = vpop.f32.mrf.mxu0
        %v1131 = vadd.f32 %v922, %v1130
        %v1132 = vpop.f32.mrf.mxu0
        %v1133 = vadd.f32 %v926, %v1132
        %1134 = vmatprep.mubr.bf16.mxu0 0
        %1135 = vmatmul.mubr.bf16.gmra.mxu0 %v881
        %v1136 = vpop.f32.mrf.mxu0
        %v1137 = vadd.f32 %v922, %v1136
        %v1138 = vpop.f32.mrf.mxu0
        %v1139 = vadd.f32 %v926, %v1138
        %v1140 = vpop.f32.mrf.mxu0
        %v1141 = vadd.f32 %v922, %v1140
        %v1142 = vpop.f32.mrf.mxu0
        %v1143 = vadd.f32 %v926, %v1142
        %1144 = vmatprep.mubr.bf16.mxu0 0
        %1145 = vmatmul.mubr.bf16.gmra.mxu0 %v882
        %v1146 = vpop.f32.mrf.mxu0
        %v1147 = vadd.f32 %v922, %v1146
        %v1148 = vpop.f32.mrf.mxu0
        %v1149 = vadd.f32 %v926, %v1148
        %v1150 = vpop.f32.mrf.mxu0
        %v1151 = vadd.f32 %v922, %v1150
        %v1152 = vpop.f32.mrf.mxu0
        %v1153 = vadd.f32 %v926, %v1152
        %1154 = vmatprep.mubr.bf16.mxu0 0
        %1155 = vmatmul.mubr.bf16.gmra.mxu0 %v883
        %v1156 = vpop.f32.mrf.mxu0
        %v1157 = vadd.f32 %v922, %v1156
        %v1158 = vpop.f32.mrf.mxu0
        %v1159 = vadd.f32 %v926, %v1158
        %v1160 = vpop.f32.mrf.mxu0
        %v1161 = vadd.f32 %v922, %v1160
        %v1162 = vpop.f32.mrf.mxu0
        %v1163 = vadd.f32 %v926, %v1162
        %1164 = vmatprep.mubr.bf16.mxu0 0
        %1165 = vmatmul.mubr.bf16.gmra.mxu0 %v884
        %v1166 = vpop.f32.mrf.mxu0
        %v1167 = vadd.f32 %v922, %v1166
        %v1168 = vpop.f32.mrf.mxu0
        %v1169 = vadd.f32 %v926, %v1168
        %v1170 = vpop.f32.mrf.mxu0
        %v1171 = vadd.f32 %v922, %v1170
        %v1172 = vpop.f32.mrf.mxu0
        %v1173 = vadd.f32 %v926, %v1172
        %1174 = vdwg.mxu0
        %1175 = vmatprep.subr.bf16.mxu0 0
        %1176 = vmatpush1.bf16.msra.mxu0 %v1037
        %1177 = vmatprep.subr.bf16.mxu0 0
        %1178 = vmatpush1.bf16.msra.mxu0 %v1034
        %1179 = vmatprep.subr.bf16.mxu0 0
        %1180 = vmatpush1.bf16.msra.mxu0 %v1031
        %1181 = vmatprep.subr.bf16.mxu0 0
        %1182 = vmatpush1.bf16.msra.mxu0 %v1028
        %1183 = vmatprep.subr.bf16.mxu0 0
        %1184 = vmatpush1.bf16.msra.mxu0 %v1025
        %1185 = vmatprep.subr.bf16.mxu0 0
        %1186 = vmatpush1.bf16.msra.mxu0 %v1022
        %1187 = vmatprep.subr.bf16.mxu0 0
        %1188 = vmatpush1.bf16.msra.mxu0 %v1019
        %1189 = vmatprep.subr.bf16.mxu0 0
        %1190 = vmatpush1.bf16.msra.mxu0 %v1016
        %1191 = vmatprep.subr.bf16.mxu0 0
        %1192 = vmatpush2.bf16.msra.mxu0 0
        %1193 = vmatprep.subr.bf16.mxu0 0
        %1194 = vmatpush2.bf16.msra.mxu0 0
        %1195 = vmatprep.subr.bf16.mxu0 0
        %1196 = vmatpush2.bf16.msra.mxu0 0
        %1197 = vmatprep.subr.bf16.mxu0 0
        %1198 = vmatpush2.bf16.msra.mxu0 0
        %1199 = vmatprep.subr.bf16.mxu0 0
        %1200 = vmatpush2.bf16.msra.mxu0 0
        %1201 = vmatprep.subr.bf16.mxu0 0
        %1202 = vmatpush2.bf16.msra.mxu0 0
        %1203 = vmatprep.subr.bf16.mxu0 0
        %1204 = vmatpush2.bf16.msra.mxu0 0
        %1205 = vmatprep.subr.bf16.mxu0 0
        %1206 = vmatpush2.bf16.msra.mxu0 0
        %1207 = vmatprep.mubr.bf16.mxu0 0
        %1208 = vmatmul.mubr.bf16.gmra.mxu0 %v877
        %v1209 = vpop.f32.mrf.mxu0
        %v1210 = vadd.f32 %v930, %v1209
        %v1211 = vpop.f32.mrf.mxu0
        %v1212 = vpop.f32.mrf.mxu0
        %v1213 = vadd.f32 %v930, %v1212
        %v1214 = vpop.f32.mrf.mxu0
        %1215 = vmatprep.mubr.bf16.mxu0 0
        %1216 = vmatmul.mubr.bf16.gmra.mxu0 %v878
        %v1217 = vpop.f32.mrf.mxu0
        %v1218 = vadd.f32 %v930, %v1217
        %v1219 = vpop.f32.mrf.mxu0
        %v1220 = vpop.f32.mrf.mxu0
        %v1221 = vadd.f32 %v930, %v1220
        %v1222 = vpop.f32.mrf.mxu0
        %1223 = vmatprep.mubr.bf16.mxu0 0
        %1224 = vmatmul.mubr.bf16.gmra.mxu0 %v879
        %v1225 = vpop.f32.mrf.mxu0
        %v1226 = vadd.f32 %v930, %v1225
        %v1227 = vpop.f32.mrf.mxu0
        %v1228 = vpop.f32.mrf.mxu0
        %v1229 = vadd.f32 %v930, %v1228
        %v1230 = vpop.f32.mrf.mxu0
        %1231 = vmatprep.mubr.bf16.mxu0 0
        %1232 = vmatmul.mubr.bf16.gmra.mxu0 %v880
        %v1233 = vpop.f32.mrf.mxu0
        %v1234 = vadd.f32 %v930, %v1233
        %v1235 = vpop.f32.mrf.mxu0
        %v1236 = vpop.f32.mrf.mxu0
        %v1237 = vadd.f32 %v930, %v1236
        %v1238 = vpop.f32.mrf.mxu0
        %1239 = vmatprep.mubr.bf16.mxu0 0
        %1240 = vmatmul.mubr.bf16.gmra.mxu0 %v881
        %v1241 = vpop.f32.mrf.mxu0
        %v1242 = vadd.f32 %v930, %v1241
        %v1243 = vpop.f32.mrf.mxu0
        %v1244 = vpop.f32.mrf.mxu0
        %v1245 = vadd.f32 %v930, %v1244
        %v1246 = vpop.f32.mrf.mxu0
        %1247 = vmatprep.mubr.bf16.mxu0 0
        %1248 = vmatmul.mubr.bf16.gmra.mxu0 %v882
        %v1249 = vpop.f32.mrf.mxu0
        %v1250 = vadd.f32 %v930, %v1249
        %v1251 = vpop.f32.mrf.mxu0
        %v1252 = vpop.f32.mrf.mxu0
        %v1253 = vadd.f32 %v930, %v1252
        %v1254 = vpop.f32.mrf.mxu0
        %1255 = vmatprep.mubr.bf16.mxu0 0
        %1256 = vmatmul.mubr.bf16.gmra.mxu0 %v883
        %v1257 = vpop.f32.mrf.mxu0
        %v1258 = vadd.f32 %v930, %v1257
        %v1259 = vpop.f32.mrf.mxu0
        %v1260 = vpop.f32.mrf.mxu0
        %v1261 = vadd.f32 %v930, %v1260
        %v1262 = vpop.f32.mrf.mxu0
        %1263 = vmatprep.mubr.bf16.mxu0 0
        %1264 = vmatmul.mubr.bf16.gmra.mxu0 %v884
        %v1265 = vpop.f32.mrf.mxu0
        %v1266 = vadd.f32 %v930, %v1265
        %v1267 = vpop.f32.mrf.mxu0
        %v1268 = vpop.f32.mrf.mxu0
        %v1269 = vadd.f32 %v930, %v1268
        %v1270 = vpop.f32.mrf.mxu0
        %1271 = vdwg.mxu0
        %v1272 = vpack.c.bf16 %v1101, %v1097
        %v1273 = vpack.c.bf16 %v1103, %v1099
        %v1274 = vpack.c.bf16 %v1213, %v1210
        %v1275 = vpack.c.bf16 %v1111, %v1107
        %v1276 = vpack.c.bf16 %v1113, %v1109
        %v1277 = vpack.c.bf16 %v1221, %v1218
        %v1278 = vpack.c.bf16 %v1121, %v1117
        %v1279 = vpack.c.bf16 %v1123, %v1119
        %v1280 = vpack.c.bf16 %v1229, %v1226
        %v1281 = vpack.c.bf16 %v1131, %v1127
        %v1282 = vpack.c.bf16 %v1133, %v1129
        %v1283 = vpack.c.bf16 %v1237, %v1234
        %v1284 = vpack.c.bf16 %v1141, %v1137
        %v1285 = vpack.c.bf16 %v1143, %v1139
        %v1286 = vpack.c.bf16 %v1245, %v1242
        %v1287 = vpack.c.bf16 %v1151, %v1147
        %v1288 = vpack.c.bf16 %v1153, %v1149
        %v1289 = vpack.c.bf16 %v1253, %v1250
        %v1290 = vpack.c.bf16 %v1161, %v1157
        %v1291 = vpack.c.bf16 %v1163, %v1159
        %v1292 = vpack.c.bf16 %v1261, %v1258
        %v1293 = vpack.c.bf16 %v1171, %v1167
        %v1294 = vpack.c.bf16 %v1173, %v1169
        %v1295 = vpack.c.bf16 %v1269, %v1266
        %vm1296 = vcmask 261120
        %v1298 = vsel %vm1296, %v1272, 0
        %v1301 = vsel %vm1296, %v1275, 0
        %v1304 = vsel %vm1296, %v1278, 0
        %v1307 = vsel %vm1296, %v1281, 0
        %v1310 = vsel %vm1296, %v1273, 0
        %v1313 = vsel %vm1296, %v1276, 0
        %v1316 = vsel %vm1296, %v1279, 0
        %v1319 = vsel %vm1296, %v1282, 0
        %1321 = vmatprep.subr.bf16.mxu0 0
        %1322 = vmatpush1.bf16.xpose.msra.mxu0 0
        %1323 = vmatprep.subr.bf16.mxu0 0
        %1324 = vmatpush1.bf16.xpose.msra.mxu0 0
        %1325 = vmatprep.subr.bf16.mxu0 0
        %1326 = vmatpush1.bf16.xpose.msra.mxu0 0
        %1327 = vmatprep.subr.bf16.mxu0 0
        %1328 = vmatpush1.bf16.xpose.msra.mxu0 0
        %1329 = vmatprep.subr.bf16.mxu0 0
        %1330 = vmatpush1.bf16.xpose.msra.mxu0 %v1319
        %1331 = vmatprep.subr.bf16.mxu0 0
        %1332 = vmatpush1.bf16.xpose.msra.mxu0 %v1316
        %1333 = vmatprep.subr.bf16.mxu0 0
        %1334 = vmatpush1.bf16.xpose.msra.mxu0 %v1313
        %1335 = vmatprep.subr.bf16.mxu0 0
        %1336 = vmatpush1.bf16.xpose.msra.mxu0 %v1310
        %1337 = vmatprep.subr.bf16.mxu0 0
        %1338 = vmatpush2.bf16.xpose.msra.mxu0 0
        %1339 = vmatprep.subr.bf16.mxu0 0
        %1340 = vmatpush2.bf16.xpose.msra.mxu0 0
        %1341 = vmatprep.subr.bf16.mxu0 0
        %1342 = vmatpush2.bf16.xpose.msra.mxu0 0
        %1343 = vmatprep.subr.bf16.mxu0 0
        %1344 = vmatpush2.bf16.xpose.msra.mxu0 0
        %1345 = vmatprep.subr.bf16.mxu0 0
        %1346 = vmatpush2.bf16.xpose.msra.mxu0 0
        %1347 = vmatprep.subr.bf16.mxu0 0
        %1348 = vmatpush2.bf16.xpose.msra.mxu0 0
        %1349 = vmatprep.subr.bf16.mxu0 0
        %1350 = vmatpush2.bf16.xpose.msra.mxu0 0
        %1351 = vmatprep.subr.bf16.mxu0 0
        %1352 = vmatpush2.bf16.xpose.msra.mxu0 0
        %1353 = vmatprep.mubr.bf16.mxu0 0
        %1354 = vmatmul.mubr.bf16.gmra.mxu0 %v1298
        %v1355 = vpop.f32.mrf.mxu0
        %v1356 = vadd.f32 0.0, %v1355
        %v1357 = vpop.f32.mrf.mxu0
        %v1358 = vpop.f32.mrf.mxu0
        %v1359 = vadd.f32 0.0, %v1358
        %v1360 = vpop.f32.mrf.mxu0
        %1361 = vmatprep.mubr.bf16.mxu0 0
        %1362 = vmatmul.mubr.bf16.gmra.mxu0 %v1301
        %v1363 = vpop.f32.mrf.mxu0
        %v1364 = vadd.f32 0.0, %v1363
        %v1365 = vpop.f32.mrf.mxu0
        %v1366 = vpop.f32.mrf.mxu0
        %v1367 = vadd.f32 0.0, %v1366
        %v1368 = vpop.f32.mrf.mxu0
        %1369 = vmatprep.mubr.bf16.mxu0 0
        %1370 = vmatmul.mubr.bf16.gmra.mxu0 %v1304
        %v1371 = vpop.f32.mrf.mxu0
        %v1372 = vadd.f32 0.0, %v1371
        %v1373 = vpop.f32.mrf.mxu0
        %v1374 = vpop.f32.mrf.mxu0
        %v1375 = vadd.f32 0.0, %v1374
        %v1376 = vpop.f32.mrf.mxu0
        %1377 = vmatprep.mubr.bf16.mxu0 0
        %1378 = vmatmul.mubr.bf16.gmra.mxu0 %v1307
        %v1379 = vpop.f32.mrf.mxu0
        %v1380 = vadd.f32 0.0, %v1379
        %v1381 = vpop.f32.mrf.mxu0
        %v1382 = vpop.f32.mrf.mxu0
        %v1383 = vadd.f32 0.0, %v1382
        %v1384 = vpop.f32.mrf.mxu0
        %1385 = vdwg.mxu0
        %v1387 = vsel %vm1296, %v1284, 0
        %v1390 = vsel %vm1296, %v1287, 0
        %v1393 = vsel %vm1296, %v1290, 0
        %v1396 = vsel %vm1296, %v1293, 0
        %v1399 = vsel %vm1296, %v1285, 0
        %v1402 = vsel %vm1296, %v1288, 0
        %v1405 = vsel %vm1296, %v1291, 0
        %v1408 = vsel %vm1296, %v1294, 0
        %1410 = vmatprep.subr.bf16.mxu0 0
        %1411 = vmatpush1.bf16.xpose.msra.mxu0 0
        %1412 = vmatprep.subr.bf16.mxu0 0
        %1413 = vmatpush1.bf16.xpose.msra.mxu0 0
        %1414 = vmatprep.subr.bf16.mxu0 0
        %1415 = vmatpush1.bf16.xpose.msra.mxu0 0
        %1416 = vmatprep.subr.bf16.mxu0 0
        %1417 = vmatpush1.bf16.xpose.msra.mxu0 0
        %1418 = vmatprep.subr.bf16.mxu0 0
        %1419 = vmatpush1.bf16.xpose.msra.mxu0 %v1408
        %1420 = vmatprep.subr.bf16.mxu0 0
        %1421 = vmatpush1.bf16.xpose.msra.mxu0 %v1405
        %1422 = vmatprep.subr.bf16.mxu0 0
        %1423 = vmatpush1.bf16.xpose.msra.mxu0 %v1402
        %1424 = vmatprep.subr.bf16.mxu0 0
        %1425 = vmatpush1.bf16.xpose.msra.mxu0 %v1399
        %1426 = vmatprep.subr.bf16.mxu0 0
        %1427 = vmatpush2.bf16.xpose.msra.mxu0 0
        %1428 = vmatprep.subr.bf16.mxu0 0
        %1429 = vmatpush2.bf16.xpose.msra.mxu0 0
        %1430 = vmatprep.subr.bf16.mxu0 0
        %1431 = vmatpush2.bf16.xpose.msra.mxu0 0
        %1432 = vmatprep.subr.bf16.mxu0 0
        %1433 = vmatpush2.bf16.xpose.msra.mxu0 0
        %1434 = vmatprep.subr.bf16.mxu0 0
        %1435 = vmatpush2.bf16.xpose.msra.mxu0 0
        %1436 = vmatprep.subr.bf16.mxu0 0
        %1437 = vmatpush2.bf16.xpose.msra.mxu0 0
        %1438 = vmatprep.subr.bf16.mxu0 0
        %1439 = vmatpush2.bf16.xpose.msra.mxu0 0
        %1440 = vmatprep.subr.bf16.mxu0 0
        %1441 = vmatpush2.bf16.xpose.msra.mxu0 0
        %1442 = vmatprep.mubr.bf16.mxu0 0
        %1443 = vmatmul.mubr.bf16.gmra.mxu0 %v1387
        %v1444 = vpop.f32.mrf.mxu0
        %v1445 = vadd.f32 0.0, %v1444
        %v1446 = vpop.f32.mrf.mxu0
        %v1447 = vpop.f32.mrf.mxu0
        %v1448 = vadd.f32 0.0, %v1447
        %v1449 = vpop.f32.mrf.mxu0
        %1450 = vmatprep.mubr.bf16.mxu0 0
        %1451 = vmatmul.mubr.bf16.gmra.mxu0 %v1390
        %v1452 = vpop.f32.mrf.mxu0
        %v1453 = vadd.f32 0.0, %v1452
        %v1454 = vpop.f32.mrf.mxu0
        %v1455 = vpop.f32.mrf.mxu0
        %v1456 = vadd.f32 0.0, %v1455
        %v1457 = vpop.f32.mrf.mxu0
        %1458 = vmatprep.mubr.bf16.mxu0 0
        %1459 = vmatmul.mubr.bf16.gmra.mxu0 %v1393
        %v1460 = vpop.f32.mrf.mxu0
        %v1461 = vadd.f32 0.0, %v1460
        %v1462 = vpop.f32.mrf.mxu0
        %v1463 = vpop.f32.mrf.mxu0
        %v1464 = vadd.f32 0.0, %v1463
        %v1465 = vpop.f32.mrf.mxu0
        %1466 = vmatprep.mubr.bf16.mxu0 0
        %1467 = vmatmul.mubr.bf16.gmra.mxu0 %v1396
        %v1468 = vpop.f32.mrf.mxu0
        %v1469 = vadd.f32 0.0, %v1468
        %v1470 = vpop.f32.mrf.mxu0
        %v1471 = vpop.f32.mrf.mxu0
        %v1472 = vadd.f32 0.0, %v1471
        %v1473 = vpop.f32.mrf.mxu0
        %1474 = vdwg.mxu0
        %vm1475 = vcmask 523264
        %v1476 = vsel %vm1475, %v1356, -inf
        %1477 = vmax.xlane.f32.xlu0 %v1476
        %v1478 = vpop.xlane.xlu0 %1477
        %v1479 = vsel %vm1475, %v1359, -inf
        %1480 = vmax.xlane.f32.xlu0 %v1479
        %v1481 = vpop.xlane.xlu0 %1480
        %v1482 = vsel %vm1475, %v1364, -inf
        %1483 = vmax.xlane.f32.xlu0 %v1482
        %v1484 = vpop.xlane.xlu0 %1483
        %v1485 = vsel %vm1475, %v1367, -inf
        %1486 = vmax.xlane.f32.xlu0 %v1485
        %v1487 = vpop.xlane.xlu0 %1486
        %v1488 = vsel %vm1475, %v1372, -inf
        %1489 = vmax.xlane.f32.xlu0 %v1488
        %v1490 = vpop.xlane.xlu0 %1489
        %v1491 = vsel %vm1475, %v1375, -inf
        %1492 = vmax.xlane.f32.xlu0 %v1491
        %v1493 = vpop.xlane.xlu0 %1492
        %v1494 = vsel %vm1475, %v1380, -inf
        %1495 = vmax.xlane.f32.xlu0 %v1494
        %v1496 = vpop.xlane.xlu0 %1495
        %v1497 = vsel %vm1475, %v1383, -inf
        %1498 = vmax.xlane.f32.xlu0 %v1497
        %v1499 = vpop.xlane.xlu0 %1498
        %v1500 = vsel %vm1475, %v1445, -inf
        %1501 = vmax.xlane.f32.xlu0 %v1500
        %v1502 = vpop.xlane.xlu0 %1501
        %v1503 = vsel %vm1475, %v1448, -inf
        %1504 = vmax.xlane.f32.xlu0 %v1503
        %v1505 = vpop.xlane.xlu0 %1504
        %v1506 = vsel %vm1475, %v1453, -inf
        %1507 = vmax.xlane.f32.xlu0 %v1506
        %v1508 = vpop.xlane.xlu0 %1507
        %v1509 = vsel %vm1475, %v1456, -inf
        %1510 = vmax.xlane.f32.xlu0 %v1509
        %v1511 = vpop.xlane.xlu0 %1510
        %v1512 = vsel %vm1475, %v1461, -inf
        %1513 = vmax.xlane.f32.xlu0 %v1512
        %v1514 = vpop.xlane.xlu0 %1513
        %v1515 = vsel %vm1475, %v1464, -inf
        %1516 = vmax.xlane.f32.xlu0 %v1515
        %v1517 = vpop.xlane.xlu0 %1516
        %v1518 = vsel %vm1475, %v1469, -inf
        %1519 = vmax.xlane.f32.xlu0 %v1518
        %v1520 = vpop.xlane.xlu0 %1519
        %v1521 = vsel %vm1475, %v1472, -inf
        %1522 = vmax.xlane.f32.xlu0 %v1521
        %v1523 = vpop.xlane.xlu0 %1522
        %v1524 = vsub.f32 %v1356, %v1478
        %v1525 = vsub.f32 %v1359, %v1481
        %v1526 = vsub.f32 %v1364, %v1484
        %v1527 = vsub.f32 %v1367, %v1487
        %v1528 = vsub.f32 %v1372, %v1490
        %v1529 = vsub.f32 %v1375, %v1493
        %v1530 = vsub.f32 %v1380, %v1496
        %v1531 = vsub.f32 %v1383, %v1499
        %v1532 = vsub.f32 %v1445, %v1502
        %v1533 = vsub.f32 %v1448, %v1505
        %v1534 = vsub.f32 %v1453, %v1508
        %v1535 = vsub.f32 %v1456, %v1511
        %v1536 = vsub.f32 %v1461, %v1514
        %v1537 = vsub.f32 %v1464, %v1517
        %v1538 = vsub.f32 %v1469, %v1520
        %v1539 = vsub.f32 %v1472, %v1523
        %v1540 = vmul.f32 %v1524, 1.442695
        %v1541 = vpow.pop %v1540
        %v1542 = vmul.f32 %v1525, 1.442695
        %v1543 = vpow.pop %v1542
        %v1544 = vmul.f32 %v1526, 1.442695
        %v1545 = vpow.pop %v1544
        %v1546 = vmul.f32 %v1527, 1.442695
        %v1547 = vpow.pop %v1546
        %v1548 = vmul.f32 %v1528, 1.442695
        %v1549 = vpow.pop %v1548
        %v1550 = vmul.f32 %v1529, 1.442695
        %v1551 = vpow.pop %v1550
        %v1552 = vmul.f32 %v1530, 1.442695
        %v1553 = vpow.pop %v1552
        %v1554 = vmul.f32 %v1531, 1.442695
        %v1555 = vpow.pop %v1554
        %v1556 = vmul.f32 %v1532, 1.442695
        %v1557 = vpow.pop %v1556
        %v1558 = vmul.f32 %v1533, 1.442695
        %v1559 = vpow.pop %v1558
        %v1560 = vmul.f32 %v1534, 1.442695
        %v1561 = vpow.pop %v1560
        %v1562 = vmul.f32 %v1535, 1.442695
        %v1563 = vpow.pop %v1562
        %v1564 = vmul.f32 %v1536, 1.442695
        %v1565 = vpow.pop %v1564
        %v1566 = vmul.f32 %v1537, 1.442695
        %v1567 = vpow.pop %v1566
        %v1568 = vmul.f32 %v1538, 1.442695
        %v1569 = vpow.pop %v1568
        %v1570 = vmul.f32 %v1539, 1.442695
        %v1571 = vpow.pop %v1570
        %v1572 = vsel %vm1475, %v1541, 0.0
        %1573 = vadd.xlane.f32.xlu0 %v1572
        %v1574 = vpop.xlane.xlu0 %1573
        %v1575 = vsel %vm1475, %v1543, 0.0
        %1576 = vadd.xlane.f32.xlu0 %v1575
        %v1577 = vpop.xlane.xlu0 %1576
        %v1578 = vsel %vm1475, %v1545, 0.0
        %1579 = vadd.xlane.f32.xlu0 %v1578
        %v1580 = vpop.xlane.xlu0 %1579
        %v1581 = vsel %vm1475, %v1547, 0.0
        %1582 = vadd.xlane.f32.xlu0 %v1581
        %v1583 = vpop.xlane.xlu0 %1582
        %v1584 = vsel %vm1475, %v1549, 0.0
        %1585 = vadd.xlane.f32.xlu0 %v1584
        %v1586 = vpop.xlane.xlu0 %1585
        %v1587 = vsel %vm1475, %v1551, 0.0
        %1588 = vadd.xlane.f32.xlu0 %v1587
        %v1589 = vpop.xlane.xlu0 %1588
        %v1590 = vsel %vm1475, %v1553, 0.0
        %1591 = vadd.xlane.f32.xlu0 %v1590
        %v1592 = vpop.xlane.xlu0 %1591
        %v1593 = vsel %vm1475, %v1555, 0.0
        %1594 = vadd.xlane.f32.xlu0 %v1593
        %v1595 = vpop.xlane.xlu0 %1594
        %v1596 = vsel %vm1475, %v1557, 0.0
        %1597 = vadd.xlane.f32.xlu0 %v1596
        %v1598 = vpop.xlane.xlu0 %1597
        %v1599 = vsel %vm1475, %v1559, 0.0
        %1600 = vadd.xlane.f32.xlu0 %v1599
        %v1601 = vpop.xlane.xlu0 %1600
        %v1602 = vsel %vm1475, %v1561, 0.0
        %1603 = vadd.xlane.f32.xlu0 %v1602
        %v1604 = vpop.xlane.xlu0 %1603
        %v1605 = vsel %vm1475, %v1563, 0.0
        %1606 = vadd.xlane.f32.xlu0 %v1605
        %v1607 = vpop.xlane.xlu0 %1606
        %v1608 = vsel %vm1475, %v1565, 0.0
        %1609 = vadd.xlane.f32.xlu0 %v1608
        %v1610 = vpop.xlane.xlu0 %1609
        %v1611 = vsel %vm1475, %v1567, 0.0
        %1612 = vadd.xlane.f32.xlu0 %v1611
        %v1613 = vpop.xlane.xlu0 %1612
        %v1614 = vsel %vm1475, %v1569, 0.0
        %1615 = vadd.xlane.f32.xlu0 %v1614
        %v1616 = vpop.xlane.xlu0 %1615
        %v1617 = vsel %vm1475, %v1571, 0.0
        %1618 = vadd.xlane.f32.xlu0 %v1617
        %v1619 = vpop.xlane.xlu0 %1618
        %v1620 = vrcp.pop %v1574
        %v1621 = vrcp.pop %v1577
        %v1622 = vrcp.pop %v1580
        %v1623 = vrcp.pop %v1583
        %v1624 = vrcp.pop %v1586
        %v1625 = vrcp.pop %v1589
        %v1626 = vrcp.pop %v1592
        %v1627 = vrcp.pop %v1595
        %v1628 = vrcp.pop %v1598
        %v1629 = vrcp.pop %v1601
        %v1630 = vrcp.pop %v1604
        %v1631 = vrcp.pop %v1607
        %v1632 = vrcp.pop %v1610
        %v1633 = vrcp.pop %v1613
        %v1634 = vrcp.pop %v1616
        %v1635 = vrcp.pop %v1619
        %v1636 = vmul.f32 %v1541, %v1620
        %v1637 = vmul.f32 %v1543, %v1621
        %v1638 = vmul.f32 %v1545, %v1622
        %v1639 = vmul.f32 %v1547, %v1623
        %v1640 = vmul.f32 %v1549, %v1624
        %v1641 = vmul.f32 %v1551, %v1625
        %v1642 = vmul.f32 %v1553, %v1626
        %v1643 = vmul.f32 %v1555, %v1627
        %v1644 = vmul.f32 %v1557, %v1628
        %v1645 = vmul.f32 %v1559, %v1629
        %v1646 = vmul.f32 %v1561, %v1630
        %v1647 = vmul.f32 %v1563, %v1631
        %v1648 = vmul.f32 %v1565, %v1632
        %v1649 = vmul.f32 %v1567, %v1633
        %v1650 = vmul.f32 %v1569, %v1634
        %v1651 = vmul.f32 %v1571, %v1635
        %v1652 = vpack.c.bf16 %v1637, %v1636
        %v1653 = vpack.c.bf16 %v1639, %v1638
        %v1654 = vpack.c.bf16 %v1641, %v1640
        %v1655 = vpack.c.bf16 %v1643, %v1642
        %v1656 = vpack.c.bf16 %v1645, %v1644
        %v1657 = vpack.c.bf16 %v1647, %v1646
        %v1658 = vpack.c.bf16 %v1649, %v1648
        %v1659 = vpack.c.bf16 %v1651, %v1650
        %v1661 = vsel %vm1475, %v1652, 0
        %v1664 = vsel %vm1475, %v1653, 0
        %v1667 = vsel %vm1475, %v1654, 0
        %v1670 = vsel %vm1475, %v1655, 0
        %1672 = vmatprep.subr.bf16.mxu0 0
        %1673 = vmatpush1.bf16.msra.mxu0 0
        %1674 = vmatprep.subr.bf16.mxu0 0
        %1675 = vmatpush1.bf16.msra.mxu0 0
        %1676 = vmatprep.subr.bf16.mxu0 0
        %1677 = vmatpush1.bf16.msra.mxu0 0
        %1678 = vmatprep.subr.bf16.mxu0 0
        %1679 = vmatpush1.bf16.msra.mxu0 0
        %1680 = vmatprep.subr.bf16.mxu0 0
        %1681 = vmatpush1.bf16.msra.mxu0 %v1283
        %1682 = vmatprep.subr.bf16.mxu0 0
        %1683 = vmatpush1.bf16.msra.mxu0 %v1280
        %1684 = vmatprep.subr.bf16.mxu0 0
        %1685 = vmatpush1.bf16.msra.mxu0 %v1277
        %1686 = vmatprep.subr.bf16.mxu0 0
        %1687 = vmatpush1.bf16.msra.mxu0 %v1274
        %1688 = vmatprep.subr.bf16.mxu0 0
        %1689 = vmatpush2.bf16.msra.mxu0 0
        %1690 = vmatprep.subr.bf16.mxu0 0
        %1691 = vmatpush2.bf16.msra.mxu0 0
        %1692 = vmatprep.subr.bf16.mxu0 0
        %1693 = vmatpush2.bf16.msra.mxu0 0
        %1694 = vmatprep.subr.bf16.mxu0 0
        %1695 = vmatpush2.bf16.msra.mxu0 0
        %1696 = vmatprep.subr.bf16.mxu0 0
        %1697 = vmatpush2.bf16.msra.mxu0 0
        %1698 = vmatprep.subr.bf16.mxu0 0
        %1699 = vmatpush2.bf16.msra.mxu0 0
        %1700 = vmatprep.subr.bf16.mxu0 0
        %1701 = vmatpush2.bf16.msra.mxu0 0
        %1702 = vmatprep.subr.bf16.mxu0 0
        %1703 = vmatpush2.bf16.msra.mxu0 0
        %1704 = vmatprep.mubr.bf16.mxu0 0
        %1705 = vmatmul.mubr.bf16.gmra.mxu0 %v1661
        %v1706 = vpop.f32.mrf.mxu0
        %v1707 = vadd.f32 0.0, %v1706
        %v1708 = vpop.f32.mrf.mxu0
        %v1709 = vpop.f32.mrf.mxu0
        %v1710 = vadd.f32 0.0, %v1709
        %v1711 = vpop.f32.mrf.mxu0
        %1712 = vmatprep.mubr.bf16.mxu0 0
        %1713 = vmatmul.mubr.bf16.gmra.mxu0 %v1664
        %v1714 = vpop.f32.mrf.mxu0
        %v1715 = vadd.f32 0.0, %v1714
        %v1716 = vpop.f32.mrf.mxu0
        %v1717 = vpop.f32.mrf.mxu0
        %v1718 = vadd.f32 0.0, %v1717
        %v1719 = vpop.f32.mrf.mxu0
        %1720 = vmatprep.mubr.bf16.mxu0 0
        %1721 = vmatmul.mubr.bf16.gmra.mxu0 %v1667
        %v1722 = vpop.f32.mrf.mxu0
        %v1723 = vadd.f32 0.0, %v1722
        %v1724 = vpop.f32.mrf.mxu0
        %v1725 = vpop.f32.mrf.mxu0
        %v1726 = vadd.f32 0.0, %v1725
        %v1727 = vpop.f32.mrf.mxu0
        %1728 = vmatprep.mubr.bf16.mxu0 0
        %1729 = vmatmul.mubr.bf16.gmra.mxu0 %v1670
        %v1730 = vpop.f32.mrf.mxu0
        %v1731 = vadd.f32 0.0, %v1730
        %v1732 = vpop.f32.mrf.mxu0
        %v1733 = vpop.f32.mrf.mxu0
        %v1734 = vadd.f32 0.0, %v1733
        %v1735 = vpop.f32.mrf.mxu0
        %1736 = vdwg.mxu0
        %v1738 = vsel %vm1475, %v1656, 0
        %v1741 = vsel %vm1475, %v1657, 0
        %v1744 = vsel %vm1475, %v1658, 0
        %v1747 = vsel %vm1475, %v1659, 0
        %1749 = vmatprep.subr.bf16.mxu0 0
        %1750 = vmatpush1.bf16.msra.mxu0 0
        %1751 = vmatprep.subr.bf16.mxu0 0
        %1752 = vmatpush1.bf16.msra.mxu0 0
        %1753 = vmatprep.subr.bf16.mxu0 0
        %1754 = vmatpush1.bf16.msra.mxu0 0
        %1755 = vmatprep.subr.bf16.mxu0 0
        %1756 = vmatpush1.bf16.msra.mxu0 0
        %1757 = vmatprep.subr.bf16.mxu0 0
        %1758 = vmatpush1.bf16.msra.mxu0 %v1295
        %1759 = vmatprep.subr.bf16.mxu0 0
        %1760 = vmatpush1.bf16.msra.mxu0 %v1292
        %1761 = vmatprep.subr.bf16.mxu0 0
        %1762 = vmatpush1.bf16.msra.mxu0 %v1289
        %1763 = vmatprep.subr.bf16.mxu0 0
        %1764 = vmatpush1.bf16.msra.mxu0 %v1286
        %1765 = vmatprep.subr.bf16.mxu0 0
        %1766 = vmatpush2.bf16.msra.mxu0 0
        %1767 = vmatprep.subr.bf16.mxu0 0
        %1768 = vmatpush2.bf16.msra.mxu0 0
        %1769 = vmatprep.subr.bf16.mxu0 0
        %1770 = vmatpush2.bf16.msra.mxu0 0
        %1771 = vmatprep.subr.bf16.mxu0 0
        %1772 = vmatpush2.bf16.msra.mxu0 0
        %1773 = vmatprep.subr.bf16.mxu0 0
        %1774 = vmatpush2.bf16.msra.mxu0 0
        %1775 = vmatprep.subr.bf16.mxu0 0
        %1776 = vmatpush2.bf16.msra.mxu0 0
        %1777 = vmatprep.subr.bf16.mxu0 0
        %1778 = vmatpush2.bf16.msra.mxu0 0
        %1779 = vmatprep.subr.bf16.mxu0 0
        %1780 = vmatpush2.bf16.msra.mxu0 0
        %1781 = vmatprep.mubr.bf16.mxu0 0
        %1782 = vmatmul.mubr.bf16.gmra.mxu0 %v1738
        %v1783 = vpop.f32.mrf.mxu0
        %v1784 = vadd.f32 0.0, %v1783
        %v1785 = vpop.f32.mrf.mxu0
        %v1786 = vpop.f32.mrf.mxu0
        %v1787 = vadd.f32 0.0, %v1786
        %v1788 = vpop.f32.mrf.mxu0
        %1789 = vmatprep.mubr.bf16.mxu0 0
        %1790 = vmatmul.mubr.bf16.gmra.mxu0 %v1741
        %v1791 = vpop.f32.mrf.mxu0
        %v1792 = vadd.f32 0.0, %v1791
        %v1793 = vpop.f32.mrf.mxu0
        %v1794 = vpop.f32.mrf.mxu0
        %v1795 = vadd.f32 0.0, %v1794
        %v1796 = vpop.f32.mrf.mxu0
        %1797 = vmatprep.mubr.bf16.mxu0 0
        %1798 = vmatmul.mubr.bf16.gmra.mxu0 %v1744
        %v1799 = vpop.f32.mrf.mxu0
        %v1800 = vadd.f32 0.0, %v1799
        %v1801 = vpop.f32.mrf.mxu0
        %v1802 = vpop.f32.mrf.mxu0
        %v1803 = vadd.f32 0.0, %v1802
        %v1804 = vpop.f32.mrf.mxu0
        %1805 = vmatprep.mubr.bf16.mxu0 0
        %1806 = vmatmul.mubr.bf16.gmra.mxu0 %v1747
        %v1807 = vpop.f32.mrf.mxu0
        %v1808 = vadd.f32 0.0, %v1807
        %v1809 = vpop.f32.mrf.mxu0
        %v1810 = vpop.f32.mrf.mxu0
        %v1811 = vadd.f32 0.0, %v1810
        %v1812 = vpop.f32.mrf.mxu0
        %1813 = vdwg.mxu0
        %v1814 = vpack.c.bf16 %v1710, %v1707
        %v1815 = vpack.c.bf16 %v1718, %v1715
        %v1816 = vpack.c.bf16 %v1726, %v1723
        %v1817 = vpack.c.bf16 %v1734, %v1731
        %v1818 = vpack.c.bf16 %v1787, %v1784
        %v1819 = vpack.c.bf16 %v1795, %v1792
        %v1820 = vpack.c.bf16 %v1803, %v1800
        %v1821 = vpack.c.bf16 %v1811, %v1808
        %v1822 = vld [vmem:[#allocation11] sm:$0xf]
        %v1823 = vld [vmem:[#allocation11 + $0x4] sm:$0xf]
        %v1824 = vld [vmem:[#allocation11 + $0x8] sm:$0xf]
        %v1825 = vld [vmem:[#allocation11 + $0xc] sm:$0xf]
        %1830 = vrot.lane.b32.xlu0 %v1272, 96
        %v1831 = vpop.permute.xlu0 %1830
        %1832 = vrot.lane.b32.xlu0 %v1275, 96
        %v1833 = vpop.permute.xlu0 %1832
        %1834 = vrot.lane.b32.xlu0 %v1278, 96
        %v1835 = vpop.permute.xlu0 %1834
        %1836 = vrot.lane.b32.xlu0 %v1281, 96
        %v1837 = vpop.permute.xlu0 %1836
        %1842 = vrot.lane.b32.xlu0 %v1273, 96
        %v1843 = vpop.permute.xlu0 %1842
        %1844 = vrot.lane.b32.xlu0 %v1276, 96
        %v1845 = vpop.permute.xlu0 %1844
        %1846 = vrot.lane.b32.xlu0 %v1279, 96
        %v1847 = vpop.permute.xlu0 %1846
        %1848 = vrot.lane.b32.xlu0 %v1282, 96
        %v1849 = vpop.permute.xlu0 %1848
        %v1851 = vsel %vm1296, %v1831, 0
        %v1854 = vsel %vm1296, %v1833, 0
        %v1857 = vsel %vm1296, %v1835, 0
        %v1860 = vsel %vm1296, %v1837, 0
        %v1863 = vsel %vm1296, %v1843, 0
        %v1866 = vsel %vm1296, %v1845, 0
        %v1869 = vsel %vm1296, %v1847, 0
        %v1872 = vsel %vm1296, %v1849, 0
        %1874 = vmatprep.subr.bf16.mxu0 0
        %1875 = vmatpush1.bf16.xpose.msra.mxu0 0
        %1876 = vmatprep.subr.bf16.mxu0 0
        %1877 = vmatpush1.bf16.xpose.msra.mxu0 0
        %1878 = vmatprep.subr.bf16.mxu0 0
        %1879 = vmatpush1.bf16.xpose.msra.mxu0 0
        %1880 = vmatprep.subr.bf16.mxu0 0
        %1881 = vmatpush1.bf16.xpose.msra.mxu0 0
        %1882 = vmatprep.subr.bf16.mxu0 0
        %1883 = vmatpush1.bf16.xpose.msra.mxu0 %v1872
        %1884 = vmatprep.subr.bf16.mxu0 0
        %1885 = vmatpush1.bf16.xpose.msra.mxu0 %v1869
        %1886 = vmatprep.subr.bf16.mxu0 0
        %1887 = vmatpush1.bf16.xpose.msra.mxu0 %v1866
        %1888 = vmatprep.subr.bf16.mxu0 0
        %1889 = vmatpush1.bf16.xpose.msra.mxu0 %v1863
        %1890 = vmatprep.subr.bf16.mxu0 0
        %1891 = vmatpush2.bf16.xpose.msra.mxu0 0
        %1892 = vmatprep.subr.bf16.mxu0 0
        %1893 = vmatpush2.bf16.xpose.msra.mxu0 0
        %1894 = vmatprep.subr.bf16.mxu0 0
        %1895 = vmatpush2.bf16.xpose.msra.mxu0 0
        %1896 = vmatprep.subr.bf16.mxu0 0
        %1897 = vmatpush2.bf16.xpose.msra.mxu0 0
        %1898 = vmatprep.subr.bf16.mxu0 0
        %1899 = vmatpush2.bf16.xpose.msra.mxu0 0
        %1900 = vmatprep.subr.bf16.mxu0 0
        %1901 = vmatpush2.bf16.xpose.msra.mxu0 0
        %1902 = vmatprep.subr.bf16.mxu0 0
        %1903 = vmatpush2.bf16.xpose.msra.mxu0 0
        %1904 = vmatprep.subr.bf16.mxu0 0
        %1905 = vmatpush2.bf16.xpose.msra.mxu0 0
        %1906 = vmatprep.mubr.bf16.mxu0 0
        %1907 = vmatmul.mubr.bf16.gmra.mxu0 %v1851
        %v1908 = vpop.f32.mrf.mxu0
        %v1909 = vadd.f32 0.0, %v1908
        %v1910 = vpop.f32.mrf.mxu0
        %v1911 = vpop.f32.mrf.mxu0
        %v1912 = vadd.f32 0.0, %v1911
        %v1913 = vpop.f32.mrf.mxu0
        %1914 = vmatprep.mubr.bf16.mxu0 0
        %1915 = vmatmul.mubr.bf16.gmra.mxu0 %v1854
        %v1916 = vpop.f32.mrf.mxu0
        %v1917 = vadd.f32 0.0, %v1916
        %v1918 = vpop.f32.mrf.mxu0
        %v1919 = vpop.f32.mrf.mxu0
        %v1920 = vadd.f32 0.0, %v1919
        %v1921 = vpop.f32.mrf.mxu0
        %1922 = vmatprep.mubr.bf16.mxu0 0
        %1923 = vmatmul.mubr.bf16.gmra.mxu0 %v1857
        %v1924 = vpop.f32.mrf.mxu0
        %v1925 = vadd.f32 0.0, %v1924
        %v1926 = vpop.f32.mrf.mxu0
        %v1927 = vpop.f32.mrf.mxu0
        %v1928 = vadd.f32 0.0, %v1927
        %v1929 = vpop.f32.mrf.mxu0
        %1930 = vmatprep.mubr.bf16.mxu0 0
        %1931 = vmatmul.mubr.bf16.gmra.mxu0 %v1860
        %v1932 = vpop.f32.mrf.mxu0
        %v1933 = vadd.f32 0.0, %v1932
        %v1934 = vpop.f32.mrf.mxu0
        %v1935 = vpop.f32.mrf.mxu0
        %v1936 = vadd.f32 0.0, %v1935
        %v1937 = vpop.f32.mrf.mxu0
        %1938 = vdwg.mxu0
        %1943 = vrot.lane.b32.xlu0 %v1284, 96
        %v1944 = vpop.permute.xlu0 %1943
        %1945 = vrot.lane.b32.xlu0 %v1287, 96
        %v1946 = vpop.permute.xlu0 %1945
        %1947 = vrot.lane.b32.xlu0 %v1290, 96
        %v1948 = vpop.permute.xlu0 %1947
        %1949 = vrot.lane.b32.xlu0 %v1293, 96
        %v1950 = vpop.permute.xlu0 %1949
        %1955 = vrot.lane.b32.xlu0 %v1285, 96
        %v1956 = vpop.permute.xlu0 %1955
        %1957 = vrot.lane.b32.xlu0 %v1288, 96
        %v1958 = vpop.permute.xlu0 %1957
        %1959 = vrot.lane.b32.xlu0 %v1291, 96
        %v1960 = vpop.permute.xlu0 %1959
        %1961 = vrot.lane.b32.xlu0 %v1294, 96
        %v1962 = vpop.permute.xlu0 %1961
        %v1964 = vsel %vm1296, %v1944, 0
        %v1967 = vsel %vm1296, %v1946, 0
        %v1970 = vsel %vm1296, %v1948, 0
        %v1973 = vsel %vm1296, %v1950, 0
        %v1976 = vsel %vm1296, %v1956, 0
        %v1979 = vsel %vm1296, %v1958, 0
        %v1982 = vsel %vm1296, %v1960, 0
        %v1985 = vsel %vm1296, %v1962, 0
        %1987 = vmatprep.subr.bf16.mxu0 0
        %1988 = vmatpush1.bf16.xpose.msra.mxu0 0
        %1989 = vmatprep.subr.bf16.mxu0 0
        %1990 = vmatpush1.bf16.xpose.msra.mxu0 0
        %1991 = vmatprep.subr.bf16.mxu0 0
        %1992 = vmatpush1.bf16.xpose.msra.mxu0 0
        %1993 = vmatprep.subr.bf16.mxu0 0
        %1994 = vmatpush1.bf16.xpose.msra.mxu0 0
        %1995 = vmatprep.subr.bf16.mxu0 0
        %1996 = vmatpush1.bf16.xpose.msra.mxu0 %v1985
        %1997 = vmatprep.subr.bf16.mxu0 0
        %1998 = vmatpush1.bf16.xpose.msra.mxu0 %v1982
        %1999 = vmatprep.subr.bf16.mxu0 0
        %2000 = vmatpush1.bf16.xpose.msra.mxu0 %v1979
        %2001 = vmatprep.subr.bf16.mxu0 0
        %2002 = vmatpush1.bf16.xpose.msra.mxu0 %v1976
        %2003 = vmatprep.subr.bf16.mxu0 0
        %2004 = vmatpush2.bf16.xpose.msra.mxu0 0
        %2005 = vmatprep.subr.bf16.mxu0 0
        %2006 = vmatpush2.bf16.xpose.msra.mxu0 0
        %2007 = vmatprep.subr.bf16.mxu0 0
        %2008 = vmatpush2.bf16.xpose.msra.mxu0 0
        %2009 = vmatprep.subr.bf16.mxu0 0
        %2010 = vmatpush2.bf16.xpose.msra.mxu0 0
        %2011 = vmatprep.subr.bf16.mxu0 0
        %2012 = vmatpush2.bf16.xpose.msra.mxu0 0
        %2013 = vmatprep.subr.bf16.mxu0 0
        %2014 = vmatpush2.bf16.xpose.msra.mxu0 0
        %2015 = vmatprep.subr.bf16.mxu0 0
        %2016 = vmatpush2.bf16.xpose.msra.mxu0 0
        %2017 = vmatprep.subr.bf16.mxu0 0
        %2018 = vmatpush2.bf16.xpose.msra.mxu0 0
        %2019 = vmatprep.mubr.bf16.mxu0 0
        %2020 = vmatmul.mubr.bf16.gmra.mxu0 %v1964
        %v2021 = vpop.f32.mrf.mxu0
        %v2022 = vadd.f32 0.0, %v2021
        %v2023 = vpop.f32.mrf.mxu0
        %v2024 = vpop.f32.mrf.mxu0
        %v2025 = vadd.f32 0.0, %v2024
        %v2026 = vpop.f32.mrf.mxu0
        %2027 = vmatprep.mubr.bf16.mxu0 0
        %2028 = vmatmul.mubr.bf16.gmra.mxu0 %v1967
        %v2029 = vpop.f32.mrf.mxu0
        %v2030 = vadd.f32 0.0, %v2029
        %v2031 = vpop.f32.mrf.mxu0
        %v2032 = vpop.f32.mrf.mxu0
        %v2033 = vadd.f32 0.0, %v2032
        %v2034 = vpop.f32.mrf.mxu0
        %2035 = vmatprep.mubr.bf16.mxu0 0
        %2036 = vmatmul.mubr.bf16.gmra.mxu0 %v1970
        %v2037 = vpop.f32.mrf.mxu0
        %v2038 = vadd.f32 0.0, %v2037
        %v2039 = vpop.f32.mrf.mxu0
        %v2040 = vpop.f32.mrf.mxu0
        %v2041 = vadd.f32 0.0, %v2040
        %v2042 = vpop.f32.mrf.mxu0
        %2043 = vmatprep.mubr.bf16.mxu0 0
        %2044 = vmatmul.mubr.bf16.gmra.mxu0 %v1973
        %v2045 = vpop.f32.mrf.mxu0
        %v2046 = vadd.f32 0.0, %v2045
        %v2047 = vpop.f32.mrf.mxu0
        %v2048 = vpop.f32.mrf.mxu0
        %v2049 = vadd.f32 0.0, %v2048
        %v2050 = vpop.f32.mrf.mxu0
        %2051 = vdwg.mxu0
        %v2052 = vsel %vm1475, %v1909, -inf
        %2053 = vmax.xlane.f32.xlu0 %v2052
        %v2054 = vpop.xlane.xlu0 %2053
        %v2055 = vsel %vm1475, %v1912, -inf
        %2056 = vmax.xlane.f32.xlu0 %v2055
        %v2057 = vpop.xlane.xlu0 %2056
        %v2058 = vsel %vm1475, %v1917, -inf
        %2059 = vmax.xlane.f32.xlu0 %v2058
        %v2060 = vpop.xlane.xlu0 %2059
        %v2061 = vsel %vm1475, %v1920, -inf
        %2062 = vmax.xlane.f32.xlu0 %v2061
        %v2063 = vpop.xlane.xlu0 %2062
        %v2064 = vsel %vm1475, %v1925, -inf
        %2065 = vmax.xlane.f32.xlu0 %v2064
        %v2066 = vpop.xlane.xlu0 %2065
        %v2067 = vsel %vm1475, %v1928, -inf
        %2068 = vmax.xlane.f32.xlu0 %v2067
        %v2069 = vpop.xlane.xlu0 %2068
        %v2070 = vsel %vm1475, %v1933, -inf
        %2071 = vmax.xlane.f32.xlu0 %v2070
        %v2072 = vpop.xlane.xlu0 %2071
        %v2073 = vsel %vm1475, %v1936, -inf
        %2074 = vmax.xlane.f32.xlu0 %v2073
        %v2075 = vpop.xlane.xlu0 %2074
        %v2076 = vsel %vm1475, %v2022, -inf
        %2077 = vmax.xlane.f32.xlu0 %v2076
        %v2078 = vpop.xlane.xlu0 %2077
        %v2079 = vsel %vm1475, %v2025, -inf
        %2080 = vmax.xlane.f32.xlu0 %v2079
        %v2081 = vpop.xlane.xlu0 %2080
        %v2082 = vsel %vm1475, %v2030, -inf
        %2083 = vmax.xlane.f32.xlu0 %v2082
        %v2084 = vpop.xlane.xlu0 %2083
        %v2085 = vsel %vm1475, %v2033, -inf
        %2086 = vmax.xlane.f32.xlu0 %v2085
        %v2087 = vpop.xlane.xlu0 %2086
        %v2088 = vsel %vm1475, %v2038, -inf
        %2089 = vmax.xlane.f32.xlu0 %v2088
        %v2090 = vpop.xlane.xlu0 %2089
        %v2091 = vsel %vm1475, %v2041, -inf
        %2092 = vmax.xlane.f32.xlu0 %v2091
        %v2093 = vpop.xlane.xlu0 %2092
        %v2094 = vsel %vm1475, %v2046, -inf
        %2095 = vmax.xlane.f32.xlu0 %v2094
        %v2096 = vpop.xlane.xlu0 %2095
        %v2097 = vsel %vm1475, %v2049, -inf
        %2098 = vmax.xlane.f32.xlu0 %v2097
        %v2099 = vpop.xlane.xlu0 %2098
        %v2100 = vsub.f32 %v1909, %v2054
        %v2101 = vsub.f32 %v1912, %v2057
        %v2102 = vsub.f32 %v1917, %v2060
        %v2103 = vsub.f32 %v1920, %v2063
        %v2104 = vsub.f32 %v1925, %v2066
        %v2105 = vsub.f32 %v1928, %v2069
        %v2106 = vsub.f32 %v1933, %v2072
        %v2107 = vsub.f32 %v1936, %v2075
        %v2108 = vsub.f32 %v2022, %v2078
        %v2109 = vsub.f32 %v2025, %v2081
        %v2110 = vsub.f32 %v2030, %v2084
        %v2111 = vsub.f32 %v2033, %v2087
        %v2112 = vsub.f32 %v2038, %v2090
        %v2113 = vsub.f32 %v2041, %v2093
        %v2114 = vsub.f32 %v2046, %v2096
        %v2115 = vsub.f32 %v2049, %v2099
        %v2116 = vmul.f32 %v2100, 1.442695
        %v2117 = vpow.pop %v2116
        %v2118 = vmul.f32 %v2101, 1.442695
        %v2119 = vpow.pop %v2118
        %v2120 = vmul.f32 %v2102, 1.442695
        %v2121 = vpow.pop %v2120
        %v2122 = vmul.f32 %v2103, 1.442695
        %v2123 = vpow.pop %v2122
        %v2124 = vmul.f32 %v2104, 1.442695
        %v2125 = vpow.pop %v2124
        %v2126 = vmul.f32 %v2105, 1.442695
        %v2127 = vpow.pop %v2126
        %v2128 = vmul.f32 %v2106, 1.442695
        %v2129 = vpow.pop %v2128
        %v2130 = vmul.f32 %v2107, 1.442695
        %v2131 = vpow.pop %v2130
        %v2132 = vmul.f32 %v2108, 1.442695
        %v2133 = vpow.pop %v2132
        %v2134 = vmul.f32 %v2109, 1.442695
        %v2135 = vpow.pop %v2134
        %v2136 = vmul.f32 %v2110, 1.442695
        %v2137 = vpow.pop %v2136
        %v2138 = vmul.f32 %v2111, 1.442695
        %v2139 = vpow.pop %v2138
        %v2140 = vmul.f32 %v2112, 1.442695
        %v2141 = vpow.pop %v2140
        %v2142 = vmul.f32 %v2113, 1.442695
        %v2143 = vpow.pop %v2142
        %v2144 = vmul.f32 %v2114, 1.442695
        %v2145 = vpow.pop %v2144
        %v2146 = vmul.f32 %v2115, 1.442695
        %v2147 = vpow.pop %v2146
        %v2148 = vsel %vm1475, %v2117, 0.0
        %2149 = vadd.xlane.f32.xlu0 %v2148
        %v2150 = vpop.xlane.xlu0 %2149
        %v2151 = vsel %vm1475, %v2119, 0.0
        %2152 = vadd.xlane.f32.xlu0 %v2151
        %v2153 = vpop.xlane.xlu0 %2152
        %v2154 = vsel %vm1475, %v2121, 0.0
        %2155 = vadd.xlane.f32.xlu0 %v2154
        %v2156 = vpop.xlane.xlu0 %2155
        %v2157 = vsel %vm1475, %v2123, 0.0
        %2158 = vadd.xlane.f32.xlu0 %v2157
        %v2159 = vpop.xlane.xlu0 %2158
        %v2160 = vsel %vm1475, %v2125, 0.0
        %2161 = vadd.xlane.f32.xlu0 %v2160
        %v2162 = vpop.xlane.xlu0 %2161
        %v2163 = vsel %vm1475, %v2127, 0.0
        %2164 = vadd.xlane.f32.xlu0 %v2163
        %v2165 = vpop.xlane.xlu0 %2164
        %v2166 = vsel %vm1475, %v2129, 0.0
        %2167 = vadd.xlane.f32.xlu0 %v2166
        %v2168 = vpop.xlane.xlu0 %2167
        %v2169 = vsel %vm1475, %v2131, 0.0
        %2170 = vadd.xlane.f32.xlu0 %v2169
        %v2171 = vpop.xlane.xlu0 %2170
        %v2172 = vsel %vm1475, %v2133, 0.0
        %2173 = vadd.xlane.f32.xlu0 %v2172
        %v2174 = vpop.xlane.xlu0 %2173
        %v2175 = vsel %vm1475, %v2135, 0.0
        %2176 = vadd.xlane.f32.xlu0 %v2175
        %v2177 = vpop.xlane.xlu0 %2176
        %v2178 = vsel %vm1475, %v2137, 0.0
        %2179 = vadd.xlane.f32.xlu0 %v2178
        %v2180 = vpop.xlane.xlu0 %2179
        %v2181 = vsel %vm1475, %v2139, 0.0
        %2182 = vadd.xlane.f32.xlu0 %v2181
        %v2183 = vpop.xlane.xlu0 %2182
        %v2184 = vsel %vm1475, %v2141, 0.0
        %2185 = vadd.xlane.f32.xlu0 %v2184
        %v2186 = vpop.xlane.xlu0 %2185
        %v2187 = vsel %vm1475, %v2143, 0.0
        %2188 = vadd.xlane.f32.xlu0 %v2187
        %v2189 = vpop.xlane.xlu0 %2188
        %v2190 = vsel %vm1475, %v2145, 0.0
        %2191 = vadd.xlane.f32.xlu0 %v2190
        %v2192 = vpop.xlane.xlu0 %2191
        %v2193 = vsel %vm1475, %v2147, 0.0
        %2194 = vadd.xlane.f32.xlu0 %v2193
        %v2195 = vpop.xlane.xlu0 %2194
        %v2196 = vrcp.pop %v2150
        %v2197 = vrcp.pop %v2153
        %v2198 = vrcp.pop %v2156
        %v2199 = vrcp.pop %v2159
        %v2200 = vrcp.pop %v2162
        %v2201 = vrcp.pop %v2165
        %v2202 = vrcp.pop %v2168
        %v2203 = vrcp.pop %v2171
        %v2204 = vrcp.pop %v2174
        %v2205 = vrcp.pop %v2177
        %v2206 = vrcp.pop %v2180
        %v2207 = vrcp.pop %v2183
        %v2208 = vrcp.pop %v2186
        %v2209 = vrcp.pop %v2189
        %v2210 = vrcp.pop %v2192
        %v2211 = vrcp.pop %v2195
        %v2212 = vmul.f32 %v2117, %v2196
        %v2213 = vmul.f32 %v2119, %v2197
        %v2214 = vmul.f32 %v2121, %v2198
        %v2215 = vmul.f32 %v2123, %v2199
        %v2216 = vmul.f32 %v2125, %v2200
        %v2217 = vmul.f32 %v2127, %v2201
        %v2218 = vmul.f32 %v2129, %v2202
        %v2219 = vmul.f32 %v2131, %v2203
        %v2220 = vmul.f32 %v2133, %v2204
        %v2221 = vmul.f32 %v2135, %v2205
        %v2222 = vmul.f32 %v2137, %v2206
        %v2223 = vmul.f32 %v2139, %v2207
        %v2224 = vmul.f32 %v2141, %v2208
        %v2225 = vmul.f32 %v2143, %v2209
        %v2226 = vmul.f32 %v2145, %v2210
        %v2227 = vmul.f32 %v2147, %v2211
        %v2228 = vpack.c.bf16 %v2213, %v2212
        %v2229 = vpack.c.bf16 %v2215, %v2214
        %v2230 = vpack.c.bf16 %v2217, %v2216
        %v2231 = vpack.c.bf16 %v2219, %v2218
        %v2232 = vpack.c.bf16 %v2221, %v2220
        %v2233 = vpack.c.bf16 %v2223, %v2222
        %v2234 = vpack.c.bf16 %v2225, %v2224
        %v2235 = vpack.c.bf16 %v2227, %v2226
        %2240 = vrot.lane.b32.xlu0 %v1274, 96
        %v2241 = vpop.permute.xlu0 %2240
        %2242 = vrot.lane.b32.xlu0 %v1277, 96
        %v2243 = vpop.permute.xlu0 %2242
        %2244 = vrot.lane.b32.xlu0 %v1280, 96
        %v2245 = vpop.permute.xlu0 %2244
        %2246 = vrot.lane.b32.xlu0 %v1283, 96
        %v2247 = vpop.permute.xlu0 %2246
        %v2253 = vsel %vm1475, %v2228, 0
        %v2256 = vsel %vm1475, %v2229, 0
        %v2259 = vsel %vm1475, %v2230, 0
        %v2262 = vsel %vm1475, %v2231, 0
        %2264 = vmatprep.subr.bf16.mxu0 0
        %2265 = vmatpush1.bf16.msra.mxu0 0
        %2266 = vmatprep.subr.bf16.mxu0 0
        %2267 = vmatpush1.bf16.msra.mxu0 0
        %2268 = vmatprep.subr.bf16.mxu0 0
        %2269 = vmatpush1.bf16.msra.mxu0 0
        %2270 = vmatprep.subr.bf16.mxu0 0
        %2271 = vmatpush1.bf16.msra.mxu0 0
        %2272 = vmatprep.subr.bf16.mxu0 0
        %2273 = vmatpush1.bf16.msra.mxu0 %v2247
        %2274 = vmatprep.subr.bf16.mxu0 0
        %2275 = vmatpush1.bf16.msra.mxu0 %v2245
        %2276 = vmatprep.subr.bf16.mxu0 0
        %2277 = vmatpush1.bf16.msra.mxu0 %v2243
        %2278 = vmatprep.subr.bf16.mxu0 0
        %2279 = vmatpush1.bf16.msra.mxu0 %v2241
        %2280 = vmatprep.subr.bf16.mxu0 0
        %2281 = vmatpush2.bf16.msra.mxu0 0
        %2282 = vmatprep.subr.bf16.mxu0 0
        %2283 = vmatpush2.bf16.msra.mxu0 0
        %2284 = vmatprep.subr.bf16.mxu0 0
        %2285 = vmatpush2.bf16.msra.mxu0 0
        %2286 = vmatprep.subr.bf16.mxu0 0
        %2287 = vmatpush2.bf16.msra.mxu0 0
        %2288 = vmatprep.subr.bf16.mxu0 0
        %2289 = vmatpush2.bf16.msra.mxu0 0
        %2290 = vmatprep.subr.bf16.mxu0 0
        %2291 = vmatpush2.bf16.msra.mxu0 0
        %2292 = vmatprep.subr.bf16.mxu0 0
        %2293 = vmatpush2.bf16.msra.mxu0 0
        %2294 = vmatprep.subr.bf16.mxu0 0
        %2295 = vmatpush2.bf16.msra.mxu0 0
        %2296 = vmatprep.mubr.bf16.mxu0 0
        %2297 = vmatmul.mubr.bf16.gmra.mxu0 %v2253
        %v2298 = vpop.f32.mrf.mxu0
        %v2299 = vadd.f32 0.0, %v2298
        %v2300 = vpop.f32.mrf.mxu0
        %v2301 = vpop.f32.mrf.mxu0
        %v2302 = vadd.f32 0.0, %v2301
        %v2303 = vpop.f32.mrf.mxu0
        %2304 = vmatprep.mubr.bf16.mxu0 0
        %2305 = vmatmul.mubr.bf16.gmra.mxu0 %v2256
        %v2306 = vpop.f32.mrf.mxu0
        %v2307 = vadd.f32 0.0, %v2306
        %v2308 = vpop.f32.mrf.mxu0
        %v2309 = vpop.f32.mrf.mxu0
        %v2310 = vadd.f32 0.0, %v2309
        %v2311 = vpop.f32.mrf.mxu0
        %2312 = vmatprep.mubr.bf16.mxu0 0
        %2313 = vmatmul.mubr.bf16.gmra.mxu0 %v2259
        %v2314 = vpop.f32.mrf.mxu0
        %v2315 = vadd.f32 0.0, %v2314
        %v2316 = vpop.f32.mrf.mxu0
        %v2317 = vpop.f32.mrf.mxu0
        %v2318 = vadd.f32 0.0, %v2317
        %v2319 = vpop.f32.mrf.mxu0
        %2320 = vmatprep.mubr.bf16.mxu0 0
        %2321 = vmatmul.mubr.bf16.gmra.mxu0 %v2262
        %v2322 = vpop.f32.mrf.mxu0
        %v2323 = vadd.f32 0.0, %v2322
        %v2324 = vpop.f32.mrf.mxu0
        %v2325 = vpop.f32.mrf.mxu0
        %v2326 = vadd.f32 0.0, %v2325
        %v2327 = vpop.f32.mrf.mxu0
        %2328 = vdwg.mxu0
        %2333 = vrot.lane.b32.xlu0 %v1286, 96
        %v2334 = vpop.permute.xlu0 %2333
        %2335 = vrot.lane.b32.xlu0 %v1289, 96
        %v2336 = vpop.permute.xlu0 %2335
        %2337 = vrot.lane.b32.xlu0 %v1292, 96
        %v2338 = vpop.permute.xlu0 %2337
        %2339 = vrot.lane.b32.xlu0 %v1295, 96
        %v2340 = vpop.permute.xlu0 %2339
        %v2346 = vsel %vm1475, %v2232, 0
        %v2349 = vsel %vm1475, %v2233, 0
        %v2352 = vsel %vm1475, %v2234, 0
        %v2355 = vsel %vm1475, %v2235, 0
        %2357 = vmatprep.subr.bf16.mxu0 0
        %2358 = vmatpush1.bf16.msra.mxu0 0
        %2359 = vmatprep.subr.bf16.mxu0 0
        %2360 = vmatpush1.bf16.msra.mxu0 0
        %2361 = vmatprep.subr.bf16.mxu0 0
        %2362 = vmatpush1.bf16.msra.mxu0 0
        %2363 = vmatprep.subr.bf16.mxu0 0
        %2364 = vmatpush1.bf16.msra.mxu0 0
        %2365 = vmatprep.subr.bf16.mxu0 0
        %2366 = vmatpush1.bf16.msra.mxu0 %v2340
        %2367 = vmatprep.subr.bf16.mxu0 0
        %2368 = vmatpush1.bf16.msra.mxu0 %v2338
        %2369 = vmatprep.subr.bf16.mxu0 0
        %2370 = vmatpush1.bf16.msra.mxu0 %v2336
        %2371 = vmatprep.subr.bf16.mxu0 0
        %2372 = vmatpush1.bf16.msra.mxu0 %v2334
        %2373 = vmatprep.subr.bf16.mxu0 0
        %2374 = vmatpush2.bf16.msra.mxu0 0
        %2375 = vmatprep.subr.bf16.mxu0 0
        %2376 = vmatpush2.bf16.msra.mxu0 0
        %2377 = vmatprep.subr.bf16.mxu0 0
        %2378 = vmatpush2.bf16.msra.mxu0 0
        %2379 = vmatprep.subr.bf16.mxu0 0
        %2380 = vmatpush2.bf16.msra.mxu0 0
        %2381 = vmatprep.subr.bf16.mxu0 0
        %2382 = vmatpush2.bf16.msra.mxu0 0
        %2383 = vmatprep.subr.bf16.mxu0 0
        %2384 = vmatpush2.bf16.msra.mxu0 0
        %2385 = vmatprep.subr.bf16.mxu0 0
        %2386 = vmatpush2.bf16.msra.mxu0 0
        %2387 = vmatprep.subr.bf16.mxu0 0
        %2388 = vmatpush2.bf16.msra.mxu0 0
        %2389 = vmatprep.mubr.bf16.mxu0 0
        %2390 = vmatmul.mubr.bf16.gmra.mxu0 %v2346
        %v2391 = vpop.f32.mrf.mxu0
        %v2392 = vadd.f32 0.0, %v2391
        %v2393 = vpop.f32.mrf.mxu0
        %v2394 = vpop.f32.mrf.mxu0
        %v2395 = vadd.f32 0.0, %v2394
        %v2396 = vpop.f32.mrf.mxu0
        %2397 = vmatprep.mubr.bf16.mxu0 0
        %2398 = vmatmul.mubr.bf16.gmra.mxu0 %v2349
        %v2399 = vpop.f32.mrf.mxu0
        %v2400 = vadd.f32 0.0, %v2399
        %v2401 = vpop.f32.mrf.mxu0
        %v2402 = vpop.f32.mrf.mxu0
        %v2403 = vadd.f32 0.0, %v2402
        %v2404 = vpop.f32.mrf.mxu0
        %2405 = vmatprep.mubr.bf16.mxu0 0
        %2406 = vmatmul.mubr.bf16.gmra.mxu0 %v2352
        %v2407 = vpop.f32.mrf.mxu0
        %v2408 = vadd.f32 0.0, %v2407
        %v2409 = vpop.f32.mrf.mxu0
        %v2410 = vpop.f32.mrf.mxu0
        %v2411 = vadd.f32 0.0, %v2410
        %v2412 = vpop.f32.mrf.mxu0
        %2413 = vmatprep.mubr.bf16.mxu0 0
        %2414 = vmatmul.mubr.bf16.gmra.mxu0 %v2355
        %v2415 = vpop.f32.mrf.mxu0
        %v2416 = vadd.f32 0.0, %v2415
        %v2417 = vpop.f32.mrf.mxu0
        %v2418 = vpop.f32.mrf.mxu0
        %v2419 = vadd.f32 0.0, %v2418
        %v2420 = vpop.f32.mrf.mxu0
        %2421 = vdwg.mxu0
        %v2422 = vpack.c.bf16 %v2302, %v2299
        %v2423 = vpack.c.bf16 %v2310, %v2307
        %v2424 = vpack.c.bf16 %v2318, %v2315
        %v2425 = vpack.c.bf16 %v2326, %v2323
        %v2426 = vpack.c.bf16 %v2395, %v2392
        %v2427 = vpack.c.bf16 %v2403, %v2400
        %v2428 = vpack.c.bf16 %v2411, %v2408
        %v2429 = vpack.c.bf16 %v2419, %v2416
        %v2430 = vld [vmem:[#allocation11 + $0x10] sm:$0xf]
        %v2431 = vld [vmem:[#allocation11 + $0x14] sm:$0xf]
        %v2432 = vld [vmem:[#allocation11 + $0x18] sm:$0xf]
        %v2433 = vld [vmem:[#allocation11 + $0x1c] sm:$0xf]
        %v2438 = vunpack.c.l.b16 %v2430
        %v2439 = vunpack.c.l.b16 %v2431
        %v2440 = vunpack.c.l.b16 %v2432
        %v2441 = vunpack.c.l.b16 %v2433
        %v2442 = vpack.c.b16 %v2439, %v2438
        %v2443 = vpack.c.b16 %v2441, %v2440
        %v2447 = vsel %vm1296, %v2422, 0
        %v2450 = vsel %vm1296, %v2423, 0
        %v2453 = vsel %vm1296, %v2424, 0
        %v2456 = vsel %vm1296, %v2425, 0
        %v2459 = vsel %vm1296, %v2426, 0
        %v2462 = vsel %vm1296, %v2427, 0
        %v2465 = vsel %vm1296, %v2428, 0
        %v2468 = vsel %vm1296, %v2429, 0
        %2470 = vmatprep.subr.bf16.mxu0 0
        %2471 = vmatpush1.bf16.msra.mxu0 0
        %2472 = vmatprep.subr.bf16.mxu0 0
        %2473 = vmatpush1.bf16.msra.mxu0 0
        %2474 = vmatprep.subr.bf16.mxu0 0
        %2475 = vmatpush1.bf16.msra.mxu0 0
        %2476 = vmatprep.subr.bf16.mxu0 0
        %2477 = vmatpush1.bf16.msra.mxu0 0
        %2478 = vmatprep.subr.bf16.mxu0 0
        %2479 = vmatpush1.bf16.msra.mxu0 0
        %2480 = vmatprep.subr.bf16.mxu0 0
        %2481 = vmatpush1.bf16.msra.mxu0 0
        %2482 = vmatprep.subr.bf16.mxu0 0
        %2483 = vmatpush1.bf16.msra.mxu0 %v2443
        %2484 = vmatprep.subr.bf16.mxu0 0
        %2485 = vmatpush1.bf16.msra.mxu0 %v2442
        %2486 = vmatprep.subr.bf16.mxu0 0
        %2487 = vmatpush2.bf16.msra.mxu0 0
        %2488 = vmatprep.subr.bf16.mxu0 0
        %2489 = vmatpush2.bf16.msra.mxu0 0
        %2490 = vmatprep.subr.bf16.mxu0 0
        %2491 = vmatpush2.bf16.msra.mxu0 0
        %2492 = vmatprep.subr.bf16.mxu0 0
        %2493 = vmatpush2.bf16.msra.mxu0 0
        %2494 = vmatprep.subr.bf16.mxu0 0
        %2495 = vmatpush2.bf16.msra.mxu0 0
        %2496 = vmatprep.subr.bf16.mxu0 0
        %2497 = vmatpush2.bf16.msra.mxu0 0
        %2498 = vmatprep.subr.bf16.mxu0 0
        %2499 = vmatpush2.bf16.msra.mxu0 0
        %2500 = vmatprep.subr.bf16.mxu0 0
        %2501 = vmatpush2.bf16.msra.mxu0 0
        %2502 = vmatprep.mubr.bf16.mxu0 0
        %2503 = vmatmul.mubr.bf16.gmra.mxu0 %v2447
        %v2504 = vpop.f32.mrf.mxu0
        %v2505 = vadd.f32 0.0, %v2504
        %v2506 = vpop.f32.mrf.mxu0
        %v2507 = vpop.f32.mrf.mxu0
        %v2508 = vadd.f32 0.0, %v2507
        %v2509 = vpop.f32.mrf.mxu0
        %2510 = vmatprep.mubr.bf16.mxu0 0
        %2511 = vmatmul.mubr.bf16.gmra.mxu0 %v2450
        %v2512 = vpop.f32.mrf.mxu0
        %v2513 = vadd.f32 0.0, %v2512
        %v2514 = vpop.f32.mrf.mxu0
        %v2515 = vpop.f32.mrf.mxu0
        %v2516 = vadd.f32 0.0, %v2515
        %v2517 = vpop.f32.mrf.mxu0
        %2518 = vmatprep.mubr.bf16.mxu0 0
        %2519 = vmatmul.mubr.bf16.gmra.mxu0 %v2453
        %v2520 = vpop.f32.mrf.mxu0
        %v2521 = vadd.f32 0.0, %v2520
        %v2522 = vpop.f32.mrf.mxu0
        %v2523 = vpop.f32.mrf.mxu0
        %v2524 = vadd.f32 0.0, %v2523
        %v2525 = vpop.f32.mrf.mxu0
        %2526 = vmatprep.mubr.bf16.mxu0 0
        %2527 = vmatmul.mubr.bf16.gmra.mxu0 %v2456
        %v2528 = vpop.f32.mrf.mxu0
        %v2529 = vadd.f32 0.0, %v2528
        %v2530 = vpop.f32.mrf.mxu0
        %v2531 = vpop.f32.mrf.mxu0
        %v2532 = vadd.f32 0.0, %v2531
        %v2533 = vpop.f32.mrf.mxu0
        %2534 = vmatprep.mubr.bf16.mxu0 0
        %2535 = vmatmul.mubr.bf16.gmra.mxu0 %v2459
        %v2536 = vpop.f32.mrf.mxu0
        %v2537 = vadd.f32 0.0, %v2536
        %v2538 = vpop.f32.mrf.mxu0
        %v2539 = vpop.f32.mrf.mxu0
        %v2540 = vadd.f32 0.0, %v2539
        %v2541 = vpop.f32.mrf.mxu0
        %2542 = vmatprep.mubr.bf16.mxu0 0
        %2543 = vmatmul.mubr.bf16.gmra.mxu0 %v2462
        %v2544 = vpop.f32.mrf.mxu0
        %v2545 = vadd.f32 0.0, %v2544
        %v2546 = vpop.f32.mrf.mxu0
        %v2547 = vpop.f32.mrf.mxu0
        %v2548 = vadd.f32 0.0, %v2547
        %v2549 = vpop.f32.mrf.mxu0
        %2550 = vmatprep.mubr.bf16.mxu0 0
        %2551 = vmatmul.mubr.bf16.gmra.mxu0 %v2465
        %v2552 = vpop.f32.mrf.mxu0
        %v2553 = vadd.f32 0.0, %v2552
        %v2554 = vpop.f32.mrf.mxu0
        %v2555 = vpop.f32.mrf.mxu0
        %v2556 = vadd.f32 0.0, %v2555
        %v2557 = vpop.f32.mrf.mxu0
        %2558 = vmatprep.mubr.bf16.mxu0 0
        %2559 = vmatmul.mubr.bf16.gmra.mxu0 %v2468
        %v2560 = vpop.f32.mrf.mxu0
        %v2561 = vadd.f32 0.0, %v2560
        %v2562 = vpop.f32.mrf.mxu0
        %v2563 = vpop.f32.mrf.mxu0
        %v2564 = vadd.f32 0.0, %v2563
        %v2565 = vpop.f32.mrf.mxu0
        %2566 = vdwg.mxu0
        %v2571 = vunpack.c.l.b16 %v1822
        %v2572 = vunpack.c.l.b16 %v1823
        %v2573 = vunpack.c.l.b16 %v1824
        %v2574 = vunpack.c.l.b16 %v1825
        %v2575 = vpack.c.b16 %v2572, %v2571
        %v2576 = vpack.c.b16 %v2574, %v2573
        %v2580 = vsel %vm1296, %v1814, 0
        %v2583 = vsel %vm1296, %v1815, 0
        %v2586 = vsel %vm1296, %v1816, 0
        %v2589 = vsel %vm1296, %v1817, 0
        %v2592 = vsel %vm1296, %v1818, 0
        %v2595 = vsel %vm1296, %v1819, 0
        %v2598 = vsel %vm1296, %v1820, 0
        %v2601 = vsel %vm1296, %v1821, 0
        %2603 = vmatprep.subr.bf16.mxu0 0
        %2604 = vmatpush1.bf16.msra.mxu0 0
        %2605 = vmatprep.subr.bf16.mxu0 0
        %2606 = vmatpush1.bf16.msra.mxu0 0
        %2607 = vmatprep.subr.bf16.mxu0 0
        %2608 = vmatpush1.bf16.msra.mxu0 0
        %2609 = vmatprep.subr.bf16.mxu0 0
        %2610 = vmatpush1.bf16.msra.mxu0 0
        %2611 = vmatprep.subr.bf16.mxu0 0
        %2612 = vmatpush1.bf16.msra.mxu0 0
        %2613 = vmatprep.subr.bf16.mxu0 0
        %2614 = vmatpush1.bf16.msra.mxu0 0
        %2615 = vmatprep.subr.bf16.mxu0 0
        %2616 = vmatpush1.bf16.msra.mxu0 %v2576
        %2617 = vmatprep.subr.bf16.mxu0 0
        %2618 = vmatpush1.bf16.msra.mxu0 %v2575
        %2619 = vmatprep.subr.bf16.mxu0 0
        %2620 = vmatpush2.bf16.msra.mxu0 0
        %2621 = vmatprep.subr.bf16.mxu0 0
        %2622 = vmatpush2.bf16.msra.mxu0 0
        %2623 = vmatprep.subr.bf16.mxu0 0
        %2624 = vmatpush2.bf16.msra.mxu0 0
        %2625 = vmatprep.subr.bf16.mxu0 0
        %2626 = vmatpush2.bf16.msra.mxu0 0
        %2627 = vmatprep.subr.bf16.mxu0 0
        %2628 = vmatpush2.bf16.msra.mxu0 0
        %2629 = vmatprep.subr.bf16.mxu0 0
        %2630 = vmatpush2.bf16.msra.mxu0 0
        %2631 = vmatprep.subr.bf16.mxu0 0
        %2632 = vmatpush2.bf16.msra.mxu0 0
        %2633 = vmatprep.subr.bf16.mxu0 0
        %2634 = vmatpush2.bf16.msra.mxu0 0
        %2635 = vmatprep.mubr.bf16.mxu0 0
        %2636 = vmatmul.mubr.bf16.gmra.mxu0 %v2580
        %v2637 = vpop.f32.mrf.mxu0
        %v2638 = vadd.f32 %v2505, %v2637
        %v2639 = vpop.f32.mrf.mxu0
        %v2640 = vpop.f32.mrf.mxu0
        %v2641 = vadd.f32 %v2508, %v2640
        %v2642 = vpop.f32.mrf.mxu0
        %2643 = vmatprep.mubr.bf16.mxu0 0
        %2644 = vmatmul.mubr.bf16.gmra.mxu0 %v2583
        %v2645 = vpop.f32.mrf.mxu0
        %v2646 = vadd.f32 %v2513, %v2645
        %v2647 = vpop.f32.mrf.mxu0
        %v2648 = vpop.f32.mrf.mxu0
        %v2649 = vadd.f32 %v2516, %v2648
        %v2650 = vpop.f32.mrf.mxu0
        %2651 = vmatprep.mubr.bf16.mxu0 0
        %2652 = vmatmul.mubr.bf16.gmra.mxu0 %v2586
        %v2653 = vpop.f32.mrf.mxu0
        %v2654 = vadd.f32 %v2521, %v2653
        %v2655 = vpop.f32.mrf.mxu0
        %v2656 = vpop.f32.mrf.mxu0
        %v2657 = vadd.f32 %v2524, %v2656
        %v2658 = vpop.f32.mrf.mxu0
        %2659 = vmatprep.mubr.bf16.mxu0 0
        %2660 = vmatmul.mubr.bf16.gmra.mxu0 %v2589
        %v2661 = vpop.f32.mrf.mxu0
        %v2662 = vadd.f32 %v2529, %v2661
        %v2663 = vpop.f32.mrf.mxu0
        %v2664 = vpop.f32.mrf.mxu0
        %v2665 = vadd.f32 %v2532, %v2664
        %v2666 = vpop.f32.mrf.mxu0
        %2667 = vmatprep.mubr.bf16.mxu0 0
        %2668 = vmatmul.mubr.bf16.gmra.mxu0 %v2592
        %v2669 = vpop.f32.mrf.mxu0
        %v2670 = vadd.f32 %v2537, %v2669
        %v2671 = vpop.f32.mrf.mxu0
        %v2672 = vpop.f32.mrf.mxu0
        %v2673 = vadd.f32 %v2540, %v2672
        %v2674 = vpop.f32.mrf.mxu0
        %2675 = vmatprep.mubr.bf16.mxu0 0
        %2676 = vmatmul.mubr.bf16.gmra.mxu0 %v2595
        %v2677 = vpop.f32.mrf.mxu0
        %v2678 = vadd.f32 %v2545, %v2677
        %v2679 = vpop.f32.mrf.mxu0
        %v2680 = vpop.f32.mrf.mxu0
        %v2681 = vadd.f32 %v2548, %v2680
        %v2682 = vpop.f32.mrf.mxu0
        %2683 = vmatprep.mubr.bf16.mxu0 0
        %2684 = vmatmul.mubr.bf16.gmra.mxu0 %v2598
        %v2685 = vpop.f32.mrf.mxu0
        %v2686 = vadd.f32 %v2553, %v2685
        %v2687 = vpop.f32.mrf.mxu0
        %v2688 = vpop.f32.mrf.mxu0
        %v2689 = vadd.f32 %v2556, %v2688
        %v2690 = vpop.f32.mrf.mxu0
        %2691 = vmatprep.mubr.bf16.mxu0 0
        %2692 = vmatmul.mubr.bf16.gmra.mxu0 %v2601
        %v2693 = vpop.f32.mrf.mxu0
        %v2694 = vadd.f32 %v2561, %v2693
        %v2695 = vpop.f32.mrf.mxu0
        %v2696 = vpop.f32.mrf.mxu0
        %v2697 = vadd.f32 %v2564, %v2696
        %v2698 = vpop.f32.mrf.mxu0
        %2699 = vdwg.mxu0
        %2700 = vrot.lane.b32.xlu0 %v1272, 64
        %v2701 = vpop.permute.xlu0 %2700
        %2702 = vrot.lane.b32.xlu0 %v1275, 64
        %v2703 = vpop.permute.xlu0 %2702
        %2704 = vrot.lane.b32.xlu0 %v1278, 64
        %v2705 = vpop.permute.xlu0 %2704
        %2706 = vrot.lane.b32.xlu0 %v1281, 64
        %v2707 = vpop.permute.xlu0 %2706
        %2708 = vrot.lane.b32.xlu0 %v1273, 64
        %v2709 = vpop.permute.xlu0 %2708
        %2710 = vrot.lane.b32.xlu0 %v1276, 64
        %v2711 = vpop.permute.xlu0 %2710
        %2712 = vrot.lane.b32.xlu0 %v1279, 64
        %v2713 = vpop.permute.xlu0 %2712
        %2714 = vrot.lane.b32.xlu0 %v1282, 64
        %v2715 = vpop.permute.xlu0 %2714
        %v2717 = vsel %vm1296, %v2701, 0
        %v2720 = vsel %vm1296, %v2703, 0
        %v2723 = vsel %vm1296, %v2705, 0
        %v2726 = vsel %vm1296, %v2707, 0
        %v2729 = vsel %vm1296, %v2709, 0
        %v2732 = vsel %vm1296, %v2711, 0
        %v2735 = vsel %vm1296, %v2713, 0
        %v2738 = vsel %vm1296, %v2715, 0
        %2740 = vmatprep.subr.bf16.mxu0 0
        %2741 = vmatpush1.bf16.xpose.msra.mxu0 0
        %2742 = vmatprep.subr.bf16.mxu0 0
        %2743 = vmatpush1.bf16.xpose.msra.mxu0 0
        %2744 = vmatprep.subr.bf16.mxu0 0
        %2745 = vmatpush1.bf16.xpose.msra.mxu0 0
        %2746 = vmatprep.subr.bf16.mxu0 0
        %2747 = vmatpush1.bf16.xpose.msra.mxu0 0
        %2748 = vmatprep.subr.bf16.mxu0 0
        %2749 = vmatpush1.bf16.xpose.msra.mxu0 %v2738
        %2750 = vmatprep.subr.bf16.mxu0 0
        %2751 = vmatpush1.bf16.xpose.msra.mxu0 %v2735
        %2752 = vmatprep.subr.bf16.mxu0 0
        %2753 = vmatpush1.bf16.xpose.msra.mxu0 %v2732
        %2754 = vmatprep.subr.bf16.mxu0 0
        %2755 = vmatpush1.bf16.xpose.msra.mxu0 %v2729
        %2756 = vmatprep.subr.bf16.mxu0 0
        %2757 = vmatpush2.bf16.xpose.msra.mxu0 0
        %2758 = vmatprep.subr.bf16.mxu0 0
        %2759 = vmatpush2.bf16.xpose.msra.mxu0 0
        %2760 = vmatprep.subr.bf16.mxu0 0
        %2761 = vmatpush2.bf16.xpose.msra.mxu0 0
        %2762 = vmatprep.subr.bf16.mxu0 0
        %2763 = vmatpush2.bf16.xpose.msra.mxu0 0
        %2764 = vmatprep.subr.bf16.mxu0 0
        %2765 = vmatpush2.bf16.xpose.msra.mxu0 0
        %2766 = vmatprep.subr.bf16.mxu0 0
        %2767 = vmatpush2.bf16.xpose.msra.mxu0 0
        %2768 = vmatprep.subr.bf16.mxu0 0
        %2769 = vmatpush2.bf16.xpose.msra.mxu0 0
        %2770 = vmatprep.subr.bf16.mxu0 0
        %2771 = vmatpush2.bf16.xpose.msra.mxu0 0
        %2772 = vmatprep.mubr.bf16.mxu0 0
        %2773 = vmatmul.mubr.bf16.gmra.mxu0 %v2717
        %v2774 = vpop.f32.mrf.mxu0
        %v2775 = vadd.f32 0.0, %v2774
        %v2776 = vpop.f32.mrf.mxu0
        %v2777 = vpop.f32.mrf.mxu0
        %v2778 = vadd.f32 0.0, %v2777
        %v2779 = vpop.f32.mrf.mxu0
        %2780 = vmatprep.mubr.bf16.mxu0 0
        %2781 = vmatmul.mubr.bf16.gmra.mxu0 %v2720
        %v2782 = vpop.f32.mrf.mxu0
        %v2783 = vadd.f32 0.0, %v2782
        %v2784 = vpop.f32.mrf.mxu0
        %v2785 = vpop.f32.mrf.mxu0
        %v2786 = vadd.f32 0.0, %v2785
        %v2787 = vpop.f32.mrf.mxu0
        %2788 = vmatprep.mubr.bf16.mxu0 0
        %2789 = vmatmul.mubr.bf16.gmra.mxu0 %v2723
        %v2790 = vpop.f32.mrf.mxu0
        %v2791 = vadd.f32 0.0, %v2790
        %v2792 = vpop.f32.mrf.mxu0
        %v2793 = vpop.f32.mrf.mxu0
        %v2794 = vadd.f32 0.0, %v2793
        %v2795 = vpop.f32.mrf.mxu0
        %2796 = vmatprep.mubr.bf16.mxu0 0
        %2797 = vmatmul.mubr.bf16.gmra.mxu0 %v2726
        %v2798 = vpop.f32.mrf.mxu0
        %v2799 = vadd.f32 0.0, %v2798
        %v2800 = vpop.f32.mrf.mxu0
        %v2801 = vpop.f32.mrf.mxu0
        %v2802 = vadd.f32 0.0, %v2801
        %v2803 = vpop.f32.mrf.mxu0
        %2804 = vdwg.mxu0
        %2805 = vrot.lane.b32.xlu0 %v1284, 64
        %v2806 = vpop.permute.xlu0 %2805
        %2807 = vrot.lane.b32.xlu0 %v1287, 64
        %v2808 = vpop.permute.xlu0 %2807
        %2809 = vrot.lane.b32.xlu0 %v1290, 64
        %v2810 = vpop.permute.xlu0 %2809
        %2811 = vrot.lane.b32.xlu0 %v1293, 64
        %v2812 = vpop.permute.xlu0 %2811
        %2813 = vrot.lane.b32.xlu0 %v1285, 64
        %v2814 = vpop.permute.xlu0 %2813
        %2815 = vrot.lane.b32.xlu0 %v1288, 64
        %v2816 = vpop.permute.xlu0 %2815
        %2817 = vrot.lane.b32.xlu0 %v1291, 64
        %v2818 = vpop.permute.xlu0 %2817
        %2819 = vrot.lane.b32.xlu0 %v1294, 64
        %v2820 = vpop.permute.xlu0 %2819
        %v2822 = vsel %vm1296, %v2806, 0
        %v2825 = vsel %vm1296, %v2808, 0
        %v2828 = vsel %vm1296, %v2810, 0
        %v2831 = vsel %vm1296, %v2812, 0
        %v2834 = vsel %vm1296, %v2814, 0
        %v2837 = vsel %vm1296, %v2816, 0
        %v2840 = vsel %vm1296, %v2818, 0
        %v2843 = vsel %vm1296, %v2820, 0
        %2845 = vmatprep.subr.bf16.mxu0 0
        %2846 = vmatpush1.bf16.xpose.msra.mxu0 0
        %2847 = vmatprep.subr.bf16.mxu0 0
        %2848 = vmatpush1.bf16.xpose.msra.mxu0 0
        %2849 = vmatprep.subr.bf16.mxu0 0
        %2850 = vmatpush1.bf16.xpose.msra.mxu0 0
        %2851 = vmatprep.subr.bf16.mxu0 0
        %2852 = vmatpush1.bf16.xpose.msra.mxu0 0
        %2853 = vmatprep.subr.bf16.mxu0 0
        %2854 = vmatpush1.bf16.xpose.msra.mxu0 %v2843
        %2855 = vmatprep.subr.bf16.mxu0 0
        %2856 = vmatpush1.bf16.xpose.msra.mxu0 %v2840
        %2857 = vmatprep.subr.bf16.mxu0 0
        %2858 = vmatpush1.bf16.xpose.msra.mxu0 %v2837
        %2859 = vmatprep.subr.bf16.mxu0 0
        %2860 = vmatpush1.bf16.xpose.msra.mxu0 %v2834
        %2861 = vmatprep.subr.bf16.mxu0 0
        %2862 = vmatpush2.bf16.xpose.msra.mxu0 0
        %2863 = vmatprep.subr.bf16.mxu0 0
        %2864 = vmatpush2.bf16.xpose.msra.mxu0 0
        %2865 = vmatprep.subr.bf16.mxu0 0
        %2866 = vmatpush2.bf16.xpose.msra.mxu0 0
        %2867 = vmatprep.subr.bf16.mxu0 0
        %2868 = vmatpush2.bf16.xpose.msra.mxu0 0
        %2869 = vmatprep.subr.bf16.mxu0 0
        %2870 = vmatpush2.bf16.xpose.msra.mxu0 0
        %2871 = vmatprep.subr.bf16.mxu0 0
        %2872 = vmatpush2.bf16.xpose.msra.mxu0 0
        %2873 = vmatprep.subr.bf16.mxu0 0
        %2874 = vmatpush2.bf16.xpose.msra.mxu0 0
        %2875 = vmatprep.subr.bf16.mxu0 0
        %2876 = vmatpush2.bf16.xpose.msra.mxu0 0
        %2877 = vmatprep.mubr.bf16.mxu0 0
        %2878 = vmatmul.mubr.bf16.gmra.mxu0 %v2822
        %v2879 = vpop.f32.mrf.mxu0
        %v2880 = vadd.f32 0.0, %v2879
        %v2881 = vpop.f32.mrf.mxu0
        %v2882 = vpop.f32.mrf.mxu0
        %v2883 = vadd.f32 0.0, %v2882
        %v2884 = vpop.f32.mrf.mxu0
        %2885 = vmatprep.mubr.bf16.mxu0 0
        %2886 = vmatmul.mubr.bf16.gmra.mxu0 %v2825
        %v2887 = vpop.f32.mrf.mxu0
        %v2888 = vadd.f32 0.0, %v2887
        %v2889 = vpop.f32.mrf.mxu0
        %v2890 = vpop.f32.mrf.mxu0
        %v2891 = vadd.f32 0.0, %v2890
        %v2892 = vpop.f32.mrf.mxu0
        %2893 = vmatprep.mubr.bf16.mxu0 0
        %2894 = vmatmul.mubr.bf16.gmra.mxu0 %v2828
        %v2895 = vpop.f32.mrf.mxu0
        %v2896 = vadd.f32 0.0, %v2895
        %v2897 = vpop.f32.mrf.mxu0
        %v2898 = vpop.f32.mrf.mxu0
        %v2899 = vadd.f32 0.0, %v2898
        %v2900 = vpop.f32.mrf.mxu0
        %2901 = vmatprep.mubr.bf16.mxu0 0
        %2902 = vmatmul.mubr.bf16.gmra.mxu0 %v2831
        %v2903 = vpop.f32.mrf.mxu0
        %v2904 = vadd.f32 0.0, %v2903
        %v2905 = vpop.f32.mrf.mxu0
        %v2906 = vpop.f32.mrf.mxu0
        %v2907 = vadd.f32 0.0, %v2906
        %v2908 = vpop.f32.mrf.mxu0
        %2909 = vdwg.mxu0
        %v2910 = vsel %vm1475, %v2775, -inf
        %2911 = vmax.xlane.f32.xlu0 %v2910
        %v2912 = vpop.xlane.xlu0 %2911
        %v2913 = vsel %vm1475, %v2778, -inf
        %2914 = vmax.xlane.f32.xlu0 %v2913
        %v2915 = vpop.xlane.xlu0 %2914
        %v2916 = vsel %vm1475, %v2783, -inf
        %2917 = vmax.xlane.f32.xlu0 %v2916
        %v2918 = vpop.xlane.xlu0 %2917
        %v2919 = vsel %vm1475, %v2786, -inf
        %2920 = vmax.xlane.f32.xlu0 %v2919
        %v2921 = vpop.xlane.xlu0 %2920
        %v2922 = vsel %vm1475, %v2791, -inf
        %2923 = vmax.xlane.f32.xlu0 %v2922
        %v2924 = vpop.xlane.xlu0 %2923
        %v2925 = vsel %vm1475, %v2794, -inf
        %2926 = vmax.xlane.f32.xlu0 %v2925
        %v2927 = vpop.xlane.xlu0 %2926
        %v2928 = vsel %vm1475, %v2799, -inf
        %2929 = vmax.xlane.f32.xlu0 %v2928
        %v2930 = vpop.xlane.xlu0 %2929
        %v2931 = vsel %vm1475, %v2802, -inf
        %2932 = vmax.xlane.f32.xlu0 %v2931
        %v2933 = vpop.xlane.xlu0 %2932
        %v2934 = vsel %vm1475, %v2880, -inf
        %2935 = vmax.xlane.f32.xlu0 %v2934
        %v2936 = vpop.xlane.xlu0 %2935
        %v2937 = vsel %vm1475, %v2883, -inf
        %2938 = vmax.xlane.f32.xlu0 %v2937
        %v2939 = vpop.xlane.xlu0 %2938
        %v2940 = vsel %vm1475, %v2888, -inf
        %2941 = vmax.xlane.f32.xlu0 %v2940
        %v2942 = vpop.xlane.xlu0 %2941
        %v2943 = vsel %vm1475, %v2891, -inf
        %2944 = vmax.xlane.f32.xlu0 %v2943
        %v2945 = vpop.xlane.xlu0 %2944
        %v2946 = vsel %vm1475, %v2896, -inf
        %2947 = vmax.xlane.f32.xlu0 %v2946
        %v2948 = vpop.xlane.xlu0 %2947
        %v2949 = vsel %vm1475, %v2899, -inf
        %2950 = vmax.xlane.f32.xlu0 %v2949
        %v2951 = vpop.xlane.xlu0 %2950
        %v2952 = vsel %vm1475, %v2904, -inf
        %2953 = vmax.xlane.f32.xlu0 %v2952
        %v2954 = vpop.xlane.xlu0 %2953
        %v2955 = vsel %vm1475, %v2907, -inf
        %2956 = vmax.xlane.f32.xlu0 %v2955
        %v2957 = vpop.xlane.xlu0 %2956
        %v2958 = vsub.f32 %v2775, %v2912
        %v2959 = vsub.f32 %v2778, %v2915
        %v2960 = vsub.f32 %v2783, %v2918
        %v2961 = vsub.f32 %v2786, %v2921
        %v2962 = vsub.f32 %v2791, %v2924
        %v2963 = vsub.f32 %v2794, %v2927
        %v2964 = vsub.f32 %v2799, %v2930
        %v2965 = vsub.f32 %v2802, %v2933
        %v2966 = vsub.f32 %v2880, %v2936
        %v2967 = vsub.f32 %v2883, %v2939
        %v2968 = vsub.f32 %v2888, %v2942
        %v2969 = vsub.f32 %v2891, %v2945
        %v2970 = vsub.f32 %v2896, %v2948
        %v2971 = vsub.f32 %v2899, %v2951
        %v2972 = vsub.f32 %v2904, %v2954
        %v2973 = vsub.f32 %v2907, %v2957
        %v2974 = vmul.f32 %v2958, 1.442695
        %v2975 = vpow.pop %v2974
        %v2976 = vmul.f32 %v2959, 1.442695
        %v2977 = vpow.pop %v2976
        %v2978 = vmul.f32 %v2960, 1.442695
        %v2979 = vpow.pop %v2978
        %v2980 = vmul.f32 %v2961, 1.442695
        %v2981 = vpow.pop %v2980
        %v2982 = vmul.f32 %v2962, 1.442695
        %v2983 = vpow.pop %v2982
        %v2984 = vmul.f32 %v2963, 1.442695
        %v2985 = vpow.pop %v2984
        %v2986 = vmul.f32 %v2964, 1.442695
        %v2987 = vpow.pop %v2986
        %v2988 = vmul.f32 %v2965, 1.442695
        %v2989 = vpow.pop %v2988
        %v2990 = vmul.f32 %v2966, 1.442695
        %v2991 = vpow.pop %v2990
        %v2992 = vmul.f32 %v2967, 1.442695
        %v2993 = vpow.pop %v2992
        %v2994 = vmul.f32 %v2968, 1.442695
        %v2995 = vpow.pop %v2994
        %v2996 = vmul.f32 %v2969, 1.442695
        %v2997 = vpow.pop %v2996
        %v2998 = vmul.f32 %v2970, 1.442695
        %v2999 = vpow.pop %v2998
        %v3000 = vmul.f32 %v2971, 1.442695
        %v3001 = vpow.pop %v3000
        %v3002 = vmul.f32 %v2972, 1.442695
        %v3003 = vpow.pop %v3002
        %v3004 = vmul.f32 %v2973, 1.442695
        %v3005 = vpow.pop %v3004
        %v3006 = vsel %vm1475, %v2975, 0.0
        %3007 = vadd.xlane.f32.xlu0 %v3006
        %v3008 = vpop.xlane.xlu0 %3007
        %v3009 = vsel %vm1475, %v2977, 0.0
        %3010 = vadd.xlane.f32.xlu0 %v3009
        %v3011 = vpop.xlane.xlu0 %3010
        %v3012 = vsel %vm1475, %v2979, 0.0
        %3013 = vadd.xlane.f32.xlu0 %v3012
        %v3014 = vpop.xlane.xlu0 %3013
        %v3015 = vsel %vm1475, %v2981, 0.0
        %3016 = vadd.xlane.f32.xlu0 %v3015
        %v3017 = vpop.xlane.xlu0 %3016
        %v3018 = vsel %vm1475, %v2983, 0.0
        %3019 = vadd.xlane.f32.xlu0 %v3018
        %v3020 = vpop.xlane.xlu0 %3019
        %v3021 = vsel %vm1475, %v2985, 0.0
        %3022 = vadd.xlane.f32.xlu0 %v3021
        %v3023 = vpop.xlane.xlu0 %3022
        %v3024 = vsel %vm1475, %v2987, 0.0
        %3025 = vadd.xlane.f32.xlu0 %v3024
        %v3026 = vpop.xlane.xlu0 %3025
        %v3027 = vsel %vm1475, %v2989, 0.0
        %3028 = vadd.xlane.f32.xlu0 %v3027
        %v3029 = vpop.xlane.xlu0 %3028
        %v3030 = vsel %vm1475, %v2991, 0.0
        %3031 = vadd.xlane.f32.xlu0 %v3030
        %v3032 = vpop.xlane.xlu0 %3031
        %v3033 = vsel %vm1475, %v2993, 0.0
        %3034 = vadd.xlane.f32.xlu0 %v3033
        %v3035 = vpop.xlane.xlu0 %3034
        %v3036 = vsel %vm1475, %v2995, 0.0
        %3037 = vadd.xlane.f32.xlu0 %v3036
        %v3038 = vpop.xlane.xlu0 %3037
        %v3039 = vsel %vm1475, %v2997, 0.0
        %3040 = vadd.xlane.f32.xlu0 %v3039
        %v3041 = vpop.xlane.xlu0 %3040
        %v3042 = vsel %vm1475, %v2999, 0.0
        %3043 = vadd.xlane.f32.xlu0 %v3042
        %v3044 = vpop.xlane.xlu0 %3043
        %v3045 = vsel %vm1475, %v3001, 0.0
        %3046 = vadd.xlane.f32.xlu0 %v3045
        %v3047 = vpop.xlane.xlu0 %3046
        %v3048 = vsel %vm1475, %v3003, 0.0
        %3049 = vadd.xlane.f32.xlu0 %v3048
        %v3050 = vpop.xlane.xlu0 %3049
        %v3051 = vsel %vm1475, %v3005, 0.0
        %3052 = vadd.xlane.f32.xlu0 %v3051
        %v3053 = vpop.xlane.xlu0 %3052
        %v3054 = vrcp.pop %v3008
        %v3055 = vrcp.pop %v3011
        %v3056 = vrcp.pop %v3014
        %v3057 = vrcp.pop %v3017
        %v3058 = vrcp.pop %v3020
        %v3059 = vrcp.pop %v3023
        %v3060 = vrcp.pop %v3026
        %v3061 = vrcp.pop %v3029
        %v3062 = vrcp.pop %v3032
        %v3063 = vrcp.pop %v3035
        %v3064 = vrcp.pop %v3038
        %v3065 = vrcp.pop %v3041
        %v3066 = vrcp.pop %v3044
        %v3067 = vrcp.pop %v3047
        %v3068 = vrcp.pop %v3050
        %v3069 = vrcp.pop %v3053
        %v3070 = vmul.f32 %v2975, %v3054
        %v3071 = vmul.f32 %v2977, %v3055
        %v3072 = vmul.f32 %v2979, %v3056
        %v3073 = vmul.f32 %v2981, %v3057
        %v3074 = vmul.f32 %v2983, %v3058
        %v3075 = vmul.f32 %v2985, %v3059
        %v3076 = vmul.f32 %v2987, %v3060
        %v3077 = vmul.f32 %v2989, %v3061
        %v3078 = vmul.f32 %v2991, %v3062
        %v3079 = vmul.f32 %v2993, %v3063
        %v3080 = vmul.f32 %v2995, %v3064
        %v3081 = vmul.f32 %v2997, %v3065
        %v3082 = vmul.f32 %v2999, %v3066
        %v3083 = vmul.f32 %v3001, %v3067
        %v3084 = vmul.f32 %v3003, %v3068
        %v3085 = vmul.f32 %v3005, %v3069
        %v3086 = vpack.c.bf16 %v3071, %v3070
        %v3087 = vpack.c.bf16 %v3073, %v3072
        %v3088 = vpack.c.bf16 %v3075, %v3074
        %v3089 = vpack.c.bf16 %v3077, %v3076
        %v3090 = vpack.c.bf16 %v3079, %v3078
        %v3091 = vpack.c.bf16 %v3081, %v3080
        %v3092 = vpack.c.bf16 %v3083, %v3082
        %v3093 = vpack.c.bf16 %v3085, %v3084
        %3094 = vrot.lane.b32.xlu0 %v1274, 64
        %v3095 = vpop.permute.xlu0 %3094
        %3096 = vrot.lane.b32.xlu0 %v1277, 64
        %v3097 = vpop.permute.xlu0 %3096
        %3098 = vrot.lane.b32.xlu0 %v1280, 64
        %v3099 = vpop.permute.xlu0 %3098
        %3100 = vrot.lane.b32.xlu0 %v1283, 64
        %v3101 = vpop.permute.xlu0 %3100
        %v3107 = vsel %vm1475, %v3086, 0
        %v3110 = vsel %vm1475, %v3087, 0
        %v3113 = vsel %vm1475, %v3088, 0
        %v3116 = vsel %vm1475, %v3089, 0
        %3118 = vmatprep.subr.bf16.mxu0 0
        %3119 = vmatpush1.bf16.msra.mxu0 0
        %3120 = vmatprep.subr.bf16.mxu0 0
        %3121 = vmatpush1.bf16.msra.mxu0 0
        %3122 = vmatprep.subr.bf16.mxu0 0
        %3123 = vmatpush1.bf16.msra.mxu0 0
        %3124 = vmatprep.subr.bf16.mxu0 0
        %3125 = vmatpush1.bf16.msra.mxu0 0
        %3126 = vmatprep.subr.bf16.mxu0 0
        %3127 = vmatpush1.bf16.msra.mxu0 %v3101
        %3128 = vmatprep.subr.bf16.mxu0 0
        %3129 = vmatpush1.bf16.msra.mxu0 %v3099
        %3130 = vmatprep.subr.bf16.mxu0 0
        %3131 = vmatpush1.bf16.msra.mxu0 %v3097
        %3132 = vmatprep.subr.bf16.mxu0 0
        %3133 = vmatpush1.bf16.msra.mxu0 %v3095
        %3134 = vmatprep.subr.bf16.mxu0 0
        %3135 = vmatpush2.bf16.msra.mxu0 0
        %3136 = vmatprep.subr.bf16.mxu0 0
        %3137 = vmatpush2.bf16.msra.mxu0 0
        %3138 = vmatprep.subr.bf16.mxu0 0
        %3139 = vmatpush2.bf16.msra.mxu0 0
        %3140 = vmatprep.subr.bf16.mxu0 0
        %3141 = vmatpush2.bf16.msra.mxu0 0
        %3142 = vmatprep.subr.bf16.mxu0 0
        %3143 = vmatpush2.bf16.msra.mxu0 0
        %3144 = vmatprep.subr.bf16.mxu0 0
        %3145 = vmatpush2.bf16.msra.mxu0 0
        %3146 = vmatprep.subr.bf16.mxu0 0
        %3147 = vmatpush2.bf16.msra.mxu0 0
        %3148 = vmatprep.subr.bf16.mxu0 0
        %3149 = vmatpush2.bf16.msra.mxu0 0
        %3150 = vmatprep.mubr.bf16.mxu0 0
        %3151 = vmatmul.mubr.bf16.gmra.mxu0 %v3107
        %v3152 = vpop.f32.mrf.mxu0
        %v3153 = vadd.f32 0.0, %v3152
        %v3154 = vpop.f32.mrf.mxu0
        %v3155 = vpop.f32.mrf.mxu0
        %v3156 = vadd.f32 0.0, %v3155
        %v3157 = vpop.f32.mrf.mxu0
        %3158 = vmatprep.mubr.bf16.mxu0 0
        %3159 = vmatmul.mubr.bf16.gmra.mxu0 %v3110
        %v3160 = vpop.f32.mrf.mxu0
        %v3161 = vadd.f32 0.0, %v3160
        %v3162 = vpop.f32.mrf.mxu0
        %v3163 = vpop.f32.mrf.mxu0
        %v3164 = vadd.f32 0.0, %v3163
        %v3165 = vpop.f32.mrf.mxu0
        %3166 = vmatprep.mubr.bf16.mxu0 0
        %3167 = vmatmul.mubr.bf16.gmra.mxu0 %v3113
        %v3168 = vpop.f32.mrf.mxu0
        %v3169 = vadd.f32 0.0, %v3168
        %v3170 = vpop.f32.mrf.mxu0
        %v3171 = vpop.f32.mrf.mxu0
        %v3172 = vadd.f32 0.0, %v3171
        %v3173 = vpop.f32.mrf.mxu0
        %3174 = vmatprep.mubr.bf16.mxu0 0
        %3175 = vmatmul.mubr.bf16.gmra.mxu0 %v3116
        %v3176 = vpop.f32.mrf.mxu0
        %v3177 = vadd.f32 0.0, %v3176
        %v3178 = vpop.f32.mrf.mxu0
        %v3179 = vpop.f32.mrf.mxu0
        %v3180 = vadd.f32 0.0, %v3179
        %v3181 = vpop.f32.mrf.mxu0
        %3182 = vdwg.mxu0
        %3183 = vrot.lane.b32.xlu0 %v1286, 64
        %v3184 = vpop.permute.xlu0 %3183
        %3185 = vrot.lane.b32.xlu0 %v1289, 64
        %v3186 = vpop.permute.xlu0 %3185
        %3187 = vrot.lane.b32.xlu0 %v1292, 64
        %v3188 = vpop.permute.xlu0 %3187
        %3189 = vrot.lane.b32.xlu0 %v1295, 64
        %v3190 = vpop.permute.xlu0 %3189
        %v3196 = vsel %vm1475, %v3090, 0
        %v3199 = vsel %vm1475, %v3091, 0
        %v3202 = vsel %vm1475, %v3092, 0
        %v3205 = vsel %vm1475, %v3093, 0
        %3207 = vmatprep.subr.bf16.mxu0 0
        %3208 = vmatpush1.bf16.msra.mxu0 0
        %3209 = vmatprep.subr.bf16.mxu0 0
        %3210 = vmatpush1.bf16.msra.mxu0 0
        %3211 = vmatprep.subr.bf16.mxu0 0
        %3212 = vmatpush1.bf16.msra.mxu0 0
        %3213 = vmatprep.subr.bf16.mxu0 0
        %3214 = vmatpush1.bf16.msra.mxu0 0
        %3215 = vmatprep.subr.bf16.mxu0 0
        %3216 = vmatpush1.bf16.msra.mxu0 %v3190
        %3217 = vmatprep.subr.bf16.mxu0 0
        %3218 = vmatpush1.bf16.msra.mxu0 %v3188
        %3219 = vmatprep.subr.bf16.mxu0 0
        %3220 = vmatpush1.bf16.msra.mxu0 %v3186
        %3221 = vmatprep.subr.bf16.mxu0 0
        %3222 = vmatpush1.bf16.msra.mxu0 %v3184
        %3223 = vmatprep.subr.bf16.mxu0 0
        %3224 = vmatpush2.bf16.msra.mxu0 0
        %3225 = vmatprep.subr.bf16.mxu0 0
        %3226 = vmatpush2.bf16.msra.mxu0 0
        %3227 = vmatprep.subr.bf16.mxu0 0
        %3228 = vmatpush2.bf16.msra.mxu0 0
        %3229 = vmatprep.subr.bf16.mxu0 0
        %3230 = vmatpush2.bf16.msra.mxu0 0
        %3231 = vmatprep.subr.bf16.mxu0 0
        %3232 = vmatpush2.bf16.msra.mxu0 0
        %3233 = vmatprep.subr.bf16.mxu0 0
        %3234 = vmatpush2.bf16.msra.mxu0 0
        %3235 = vmatprep.subr.bf16.mxu0 0
        %3236 = vmatpush2.bf16.msra.mxu0 0
        %3237 = vmatprep.subr.bf16.mxu0 0
        %3238 = vmatpush2.bf16.msra.mxu0 0
        %3239 = vmatprep.mubr.bf16.mxu0 0
        %3240 = vmatmul.mubr.bf16.gmra.mxu0 %v3196
        %v3241 = vpop.f32.mrf.mxu0
        %v3242 = vadd.f32 0.0, %v3241
        %v3243 = vpop.f32.mrf.mxu0
        %v3244 = vpop.f32.mrf.mxu0
        %v3245 = vadd.f32 0.0, %v3244
        %v3246 = vpop.f32.mrf.mxu0
        %3247 = vmatprep.mubr.bf16.mxu0 0
        %3248 = vmatmul.mubr.bf16.gmra.mxu0 %v3199
        %v3249 = vpop.f32.mrf.mxu0
        %v3250 = vadd.f32 0.0, %v3249
        %v3251 = vpop.f32.mrf.mxu0
        %v3252 = vpop.f32.mrf.mxu0
        %v3253 = vadd.f32 0.0, %v3252
        %v3254 = vpop.f32.mrf.mxu0
        %3255 = vmatprep.mubr.bf16.mxu0 0
        %3256 = vmatmul.mubr.bf16.gmra.mxu0 %v3202
        %v3257 = vpop.f32.mrf.mxu0
        %v3258 = vadd.f32 0.0, %v3257
        %v3259 = vpop.f32.mrf.mxu0
        %v3260 = vpop.f32.mrf.mxu0
        %v3261 = vadd.f32 0.0, %v3260
        %v3262 = vpop.f32.mrf.mxu0
        %3263 = vmatprep.mubr.bf16.mxu0 0
        %3264 = vmatmul.mubr.bf16.gmra.mxu0 %v3205
        %v3265 = vpop.f32.mrf.mxu0
        %v3266 = vadd.f32 0.0, %v3265
        %v3267 = vpop.f32.mrf.mxu0
        %v3268 = vpop.f32.mrf.mxu0
        %v3269 = vadd.f32 0.0, %v3268
        %v3270 = vpop.f32.mrf.mxu0
        %3271 = vdwg.mxu0
        %v3272 = vpack.c.bf16 %v3156, %v3153
        %v3273 = vpack.c.bf16 %v3164, %v3161
        %v3274 = vpack.c.bf16 %v3172, %v3169
        %v3275 = vpack.c.bf16 %v3180, %v3177
        %v3276 = vpack.c.bf16 %v3245, %v3242
        %v3277 = vpack.c.bf16 %v3253, %v3250
        %v3278 = vpack.c.bf16 %v3261, %v3258
        %v3279 = vpack.c.bf16 %v3269, %v3266
        %v3280 = vld [vmem:[#allocation11 + $0x20] sm:$0xf]
        %v3281 = vld [vmem:[#allocation11 + $0x24] sm:$0xf]
        %v3282 = vld [vmem:[#allocation11 + $0x28] sm:$0xf]
        %v3283 = vld [vmem:[#allocation11 + $0x2c] sm:$0xf]
        %v3288 = vunpack.c.l.b16 %v3280
        %v3289 = vunpack.c.l.b16 %v3281
        %v3290 = vunpack.c.l.b16 %v3282
        %v3291 = vunpack.c.l.b16 %v3283
        %v3292 = vpack.c.b16 %v3289, %v3288
        %v3293 = vpack.c.b16 %v3291, %v3290
        %v3297 = vsel %vm1296, %v3272, 0
        %v3300 = vsel %vm1296, %v3273, 0
        %v3303 = vsel %vm1296, %v3274, 0
        %v3306 = vsel %vm1296, %v3275, 0
        %v3309 = vsel %vm1296, %v3276, 0
        %v3312 = vsel %vm1296, %v3277, 0
        %v3315 = vsel %vm1296, %v3278, 0
        %v3318 = vsel %vm1296, %v3279, 0
        %3320 = vmatprep.subr.bf16.mxu0 0
        %3321 = vmatpush1.bf16.msra.mxu0 0
        %3322 = vmatprep.subr.bf16.mxu0 0
        %3323 = vmatpush1.bf16.msra.mxu0 0
        %3324 = vmatprep.subr.bf16.mxu0 0
        %3325 = vmatpush1.bf16.msra.mxu0 0
        %3326 = vmatprep.subr.bf16.mxu0 0
        %3327 = vmatpush1.bf16.msra.mxu0 0
        %3328 = vmatprep.subr.bf16.mxu0 0
        %3329 = vmatpush1.bf16.msra.mxu0 0
        %3330 = vmatprep.subr.bf16.mxu0 0
        %3331 = vmatpush1.bf16.msra.mxu0 0
        %3332 = vmatprep.subr.bf16.mxu0 0
        %3333 = vmatpush1.bf16.msra.mxu0 %v3293
        %3334 = vmatprep.subr.bf16.mxu0 0
        %3335 = vmatpush1.bf16.msra.mxu0 %v3292
        %3336 = vmatprep.subr.bf16.mxu0 0
        %3337 = vmatpush2.bf16.msra.mxu0 0
        %3338 = vmatprep.subr.bf16.mxu0 0
        %3339 = vmatpush2.bf16.msra.mxu0 0
        %3340 = vmatprep.subr.bf16.mxu0 0
        %3341 = vmatpush2.bf16.msra.mxu0 0
        %3342 = vmatprep.subr.bf16.mxu0 0
        %3343 = vmatpush2.bf16.msra.mxu0 0
        %3344 = vmatprep.subr.bf16.mxu0 0
        %3345 = vmatpush2.bf16.msra.mxu0 0
        %3346 = vmatprep.subr.bf16.mxu0 0
        %3347 = vmatpush2.bf16.msra.mxu0 0
        %3348 = vmatprep.subr.bf16.mxu0 0
        %3349 = vmatpush2.bf16.msra.mxu0 0
        %3350 = vmatprep.subr.bf16.mxu0 0
        %3351 = vmatpush2.bf16.msra.mxu0 0
        %3352 = vmatprep.mubr.bf16.mxu0 0
        %3353 = vmatmul.mubr.bf16.gmra.mxu0 %v3297
        %v3354 = vpop.f32.mrf.mxu0
        %v3355 = vadd.f32 0.0, %v3354
        %v3356 = vpop.f32.mrf.mxu0
        %v3357 = vpop.f32.mrf.mxu0
        %v3358 = vadd.f32 0.0, %v3357
        %v3359 = vpop.f32.mrf.mxu0
        %3360 = vmatprep.mubr.bf16.mxu0 0
        %3361 = vmatmul.mubr.bf16.gmra.mxu0 %v3300
        %v3362 = vpop.f32.mrf.mxu0
        %v3363 = vadd.f32 0.0, %v3362
        %v3364 = vpop.f32.mrf.mxu0
        %v3365 = vpop.f32.mrf.mxu0
        %v3366 = vadd.f32 0.0, %v3365
        %v3367 = vpop.f32.mrf.mxu0
        %3368 = vmatprep.mubr.bf16.mxu0 0
        %3369 = vmatmul.mubr.bf16.gmra.mxu0 %v3303
        %v3370 = vpop.f32.mrf.mxu0
        %v3371 = vadd.f32 0.0, %v3370
        %v3372 = vpop.f32.mrf.mxu0
        %v3373 = vpop.f32.mrf.mxu0
        %v3374 = vadd.f32 0.0, %v3373
        %v3375 = vpop.f32.mrf.mxu0
        %3376 = vmatprep.mubr.bf16.mxu0 0
        %3377 = vmatmul.mubr.bf16.gmra.mxu0 %v3306
        %v3378 = vpop.f32.mrf.mxu0
        %v3379 = vadd.f32 0.0, %v3378
        %v3380 = vpop.f32.mrf.mxu0
        %v3381 = vpop.f32.mrf.mxu0
        %v3382 = vadd.f32 0.0, %v3381
        %v3383 = vpop.f32.mrf.mxu0
        %3384 = vmatprep.mubr.bf16.mxu0 0
        %3385 = vmatmul.mubr.bf16.gmra.mxu0 %v3309
        %v3386 = vpop.f32.mrf.mxu0
        %v3387 = vadd.f32 0.0, %v3386
        %v3388 = vpop.f32.mrf.mxu0
        %v3389 = vpop.f32.mrf.mxu0
        %v3390 = vadd.f32 0.0, %v3389
        %v3391 = vpop.f32.mrf.mxu0
        %3392 = vmatprep.mubr.bf16.mxu0 0
        %3393 = vmatmul.mubr.bf16.gmra.mxu0 %v3312
        %v3394 = vpop.f32.mrf.mxu0
        %v3395 = vadd.f32 0.0, %v3394
        %v3396 = vpop.f32.mrf.mxu0
        %v3397 = vpop.f32.mrf.mxu0
        %v3398 = vadd.f32 0.0, %v3397
        %v3399 = vpop.f32.mrf.mxu0
        %3400 = vmatprep.mubr.bf16.mxu0 0
        %3401 = vmatmul.mubr.bf16.gmra.mxu0 %v3315
        %v3402 = vpop.f32.mrf.mxu0
        %v3403 = vadd.f32 0.0, %v3402
        %v3404 = vpop.f32.mrf.mxu0
        %v3405 = vpop.f32.mrf.mxu0
        %v3406 = vadd.f32 0.0, %v3405
        %v3407 = vpop.f32.mrf.mxu0
        %3408 = vmatprep.mubr.bf16.mxu0 0
        %3409 = vmatmul.mubr.bf16.gmra.mxu0 %v3318
        %v3410 = vpop.f32.mrf.mxu0
        %v3411 = vadd.f32 0.0, %v3410
        %v3412 = vpop.f32.mrf.mxu0
        %v3413 = vpop.f32.mrf.mxu0
        %v3414 = vadd.f32 0.0, %v3413
        %v3415 = vpop.f32.mrf.mxu0
        %3416 = vdwg.mxu0
        %v3417 = vadd.f32 %v2638, %v3355
        %v3418 = vadd.f32 %v2641, %v3358
        %v3419 = vadd.f32 %v2646, %v3363
        %v3420 = vadd.f32 %v2649, %v3366
        %v3421 = vadd.f32 %v2654, %v3371
        %v3422 = vadd.f32 %v2657, %v3374
        %v3423 = vadd.f32 %v2662, %v3379
        %v3424 = vadd.f32 %v2665, %v3382
        %v3425 = vadd.f32 %v2670, %v3387
        %v3426 = vadd.f32 %v2673, %v3390
        %v3427 = vadd.f32 %v2678, %v3395
        %v3428 = vadd.f32 %v2681, %v3398
        %v3429 = vadd.f32 %v2686, %v3403
        %v3430 = vadd.f32 %v2689, %v3406
        %v3431 = vadd.f32 %v2694, %v3411
        %v3432 = vadd.f32 %v2697, %v3414
        %3433 = vrot.lane.b32.xlu0 %v1272, 32
        %v3434 = vpop.permute.xlu0 %3433
        %3435 = vrot.lane.b32.xlu0 %v1275, 32
        %v3436 = vpop.permute.xlu0 %3435
        %3437 = vrot.lane.b32.xlu0 %v1278, 32
        %v3438 = vpop.permute.xlu0 %3437
        %3439 = vrot.lane.b32.xlu0 %v1281, 32
        %v3440 = vpop.permute.xlu0 %3439
        %3441 = vrot.lane.b32.xlu0 %v1273, 32
        %v3442 = vpop.permute.xlu0 %3441
        %3443 = vrot.lane.b32.xlu0 %v1276, 32
        %v3444 = vpop.permute.xlu0 %3443
        %3445 = vrot.lane.b32.xlu0 %v1279, 32
        %v3446 = vpop.permute.xlu0 %3445
        %3447 = vrot.lane.b32.xlu0 %v1282, 32
        %v3448 = vpop.permute.xlu0 %3447
        %v3450 = vsel %vm1296, %v3434, 0
        %v3453 = vsel %vm1296, %v3436, 0
        %v3456 = vsel %vm1296, %v3438, 0
        %v3459 = vsel %vm1296, %v3440, 0
        %v3462 = vsel %vm1296, %v3442, 0
        %v3465 = vsel %vm1296, %v3444, 0
        %v3468 = vsel %vm1296, %v3446, 0
        %v3471 = vsel %vm1296, %v3448, 0
        %3473 = vmatprep.subr.bf16.mxu0 0
        %3474 = vmatpush1.bf16.xpose.msra.mxu0 0
        %3475 = vmatprep.subr.bf16.mxu0 0
        %3476 = vmatpush1.bf16.xpose.msra.mxu0 0
        %3477 = vmatprep.subr.bf16.mxu0 0
        %3478 = vmatpush1.bf16.xpose.msra.mxu0 0
        %3479 = vmatprep.subr.bf16.mxu0 0
        %3480 = vmatpush1.bf16.xpose.msra.mxu0 0
        %3481 = vmatprep.subr.bf16.mxu0 0
        %3482 = vmatpush1.bf16.xpose.msra.mxu0 %v3471
        %3483 = vmatprep.subr.bf16.mxu0 0
        %3484 = vmatpush1.bf16.xpose.msra.mxu0 %v3468
        %3485 = vmatprep.subr.bf16.mxu0 0
        %3486 = vmatpush1.bf16.xpose.msra.mxu0 %v3465
        %3487 = vmatprep.subr.bf16.mxu0 0
        %3488 = vmatpush1.bf16.xpose.msra.mxu0 %v3462
        %3489 = vmatprep.subr.bf16.mxu0 0
        %3490 = vmatpush2.bf16.xpose.msra.mxu0 0
        %3491 = vmatprep.subr.bf16.mxu0 0
        %3492 = vmatpush2.bf16.xpose.msra.mxu0 0
        %3493 = vmatprep.subr.bf16.mxu0 0
        %3494 = vmatpush2.bf16.xpose.msra.mxu0 0
        %3495 = vmatprep.subr.bf16.mxu0 0
        %3496 = vmatpush2.bf16.xpose.msra.mxu0 0
        %3497 = vmatprep.subr.bf16.mxu0 0
        %3498 = vmatpush2.bf16.xpose.msra.mxu0 0
        %3499 = vmatprep.subr.bf16.mxu0 0
        %3500 = vmatpush2.bf16.xpose.msra.mxu0 0
        %3501 = vmatprep.subr.bf16.mxu0 0
        %3502 = vmatpush2.bf16.xpose.msra.mxu0 0
        %3503 = vmatprep.subr.bf16.mxu0 0
        %3504 = vmatpush2.bf16.xpose.msra.mxu0 0
        %3505 = vmatprep.mubr.bf16.mxu0 0
        %3506 = vmatmul.mubr.bf16.gmra.mxu0 %v3450
        %v3507 = vpop.f32.mrf.mxu0
        %v3508 = vadd.f32 0.0, %v3507
        %v3509 = vpop.f32.mrf.mxu0
        %v3510 = vpop.f32.mrf.mxu0
        %v3511 = vadd.f32 0.0, %v3510
        %v3512 = vpop.f32.mrf.mxu0
        %3513 = vmatprep.mubr.bf16.mxu0 0
        %3514 = vmatmul.mubr.bf16.gmra.mxu0 %v3453
        %v3515 = vpop.f32.mrf.mxu0
        %v3516 = vadd.f32 0.0, %v3515
        %v3517 = vpop.f32.mrf.mxu0
        %v3518 = vpop.f32.mrf.mxu0
        %v3519 = vadd.f32 0.0, %v3518
        %v3520 = vpop.f32.mrf.mxu0
        %3521 = vmatprep.mubr.bf16.mxu0 0
        %3522 = vmatmul.mubr.bf16.gmra.mxu0 %v3456
        %v3523 = vpop.f32.mrf.mxu0
        %v3524 = vadd.f32 0.0, %v3523
        %v3525 = vpop.f32.mrf.mxu0
        %v3526 = vpop.f32.mrf.mxu0
        %v3527 = vadd.f32 0.0, %v3526
        %v3528 = vpop.f32.mrf.mxu0
        %3529 = vmatprep.mubr.bf16.mxu0 0
        %3530 = vmatmul.mubr.bf16.gmra.mxu0 %v3459
        %v3531 = vpop.f32.mrf.mxu0
        %v3532 = vadd.f32 0.0, %v3531
        %v3533 = vpop.f32.mrf.mxu0
        %v3534 = vpop.f32.mrf.mxu0
        %v3535 = vadd.f32 0.0, %v3534
        %v3536 = vpop.f32.mrf.mxu0
        %3537 = vdwg.mxu0
        %3538 = vrot.lane.b32.xlu0 %v1284, 32
        %v3539 = vpop.permute.xlu0 %3538
        %3540 = vrot.lane.b32.xlu0 %v1287, 32
        %v3541 = vpop.permute.xlu0 %3540
        %3542 = vrot.lane.b32.xlu0 %v1290, 32
        %v3543 = vpop.permute.xlu0 %3542
        %3544 = vrot.lane.b32.xlu0 %v1293, 32
        %v3545 = vpop.permute.xlu0 %3544
        %3546 = vrot.lane.b32.xlu0 %v1285, 32
        %v3547 = vpop.permute.xlu0 %3546
        %3548 = vrot.lane.b32.xlu0 %v1288, 32
        %v3549 = vpop.permute.xlu0 %3548
        %3550 = vrot.lane.b32.xlu0 %v1291, 32
        %v3551 = vpop.permute.xlu0 %3550
        %3552 = vrot.lane.b32.xlu0 %v1294, 32
        %v3553 = vpop.permute.xlu0 %3552
        %v3555 = vsel %vm1296, %v3539, 0
        %v3558 = vsel %vm1296, %v3541, 0
        %v3561 = vsel %vm1296, %v3543, 0
        %v3564 = vsel %vm1296, %v3545, 0
        %v3567 = vsel %vm1296, %v3547, 0
        %v3570 = vsel %vm1296, %v3549, 0
        %v3573 = vsel %vm1296, %v3551, 0
        %v3576 = vsel %vm1296, %v3553, 0
        %3578 = vmatprep.subr.bf16.mxu0 0
        %3579 = vmatpush1.bf16.xpose.msra.mxu0 0
        %3580 = vmatprep.subr.bf16.mxu0 0
        %3581 = vmatpush1.bf16.xpose.msra.mxu0 0
        %3582 = vmatprep.subr.bf16.mxu0 0
        %3583 = vmatpush1.bf16.xpose.msra.mxu0 0
        %3584 = vmatprep.subr.bf16.mxu0 0
        %3585 = vmatpush1.bf16.xpose.msra.mxu0 0
        %3586 = vmatprep.subr.bf16.mxu0 0
        %3587 = vmatpush1.bf16.xpose.msra.mxu0 %v3576
        %3588 = vmatprep.subr.bf16.mxu0 0
        %3589 = vmatpush1.bf16.xpose.msra.mxu0 %v3573
        %3590 = vmatprep.subr.bf16.mxu0 0
        %3591 = vmatpush1.bf16.xpose.msra.mxu0 %v3570
        %3592 = vmatprep.subr.bf16.mxu0 0
        %3593 = vmatpush1.bf16.xpose.msra.mxu0 %v3567
        %3594 = vmatprep.subr.bf16.mxu0 0
        %3595 = vmatpush2.bf16.xpose.msra.mxu0 0
        %3596 = vmatprep.subr.bf16.mxu0 0
        %3597 = vmatpush2.bf16.xpose.msra.mxu0 0
        %3598 = vmatprep.subr.bf16.mxu0 0
        %3599 = vmatpush2.bf16.xpose.msra.mxu0 0
        %3600 = vmatprep.subr.bf16.mxu0 0
        %3601 = vmatpush2.bf16.xpose.msra.mxu0 0
        %3602 = vmatprep.subr.bf16.mxu0 0
        %3603 = vmatpush2.bf16.xpose.msra.mxu0 0
        %3604 = vmatprep.subr.bf16.mxu0 0
        %3605 = vmatpush2.bf16.xpose.msra.mxu0 0
        %3606 = vmatprep.subr.bf16.mxu0 0
        %3607 = vmatpush2.bf16.xpose.msra.mxu0 0
        %3608 = vmatprep.subr.bf16.mxu0 0
        %3609 = vmatpush2.bf16.xpose.msra.mxu0 0
        %3610 = vmatprep.mubr.bf16.mxu0 0
        %3611 = vmatmul.mubr.bf16.gmra.mxu0 %v3555
        %v3612 = vpop.f32.mrf.mxu0
        %v3613 = vadd.f32 0.0, %v3612
        %v3614 = vpop.f32.mrf.mxu0
        %v3615 = vpop.f32.mrf.mxu0
        %v3616 = vadd.f32 0.0, %v3615
        %v3617 = vpop.f32.mrf.mxu0
        %3618 = vmatprep.mubr.bf16.mxu0 0
        %3619 = vmatmul.mubr.bf16.gmra.mxu0 %v3558
        %v3620 = vpop.f32.mrf.mxu0
        %v3621 = vadd.f32 0.0, %v3620
        %v3622 = vpop.f32.mrf.mxu0
        %v3623 = vpop.f32.mrf.mxu0
        %v3624 = vadd.f32 0.0, %v3623
        %v3625 = vpop.f32.mrf.mxu0
        %3626 = vmatprep.mubr.bf16.mxu0 0
        %3627 = vmatmul.mubr.bf16.gmra.mxu0 %v3561
        %v3628 = vpop.f32.mrf.mxu0
        %v3629 = vadd.f32 0.0, %v3628
        %v3630 = vpop.f32.mrf.mxu0
        %v3631 = vpop.f32.mrf.mxu0
        %v3632 = vadd.f32 0.0, %v3631
        %v3633 = vpop.f32.mrf.mxu0
        %3634 = vmatprep.mubr.bf16.mxu0 0
        %3635 = vmatmul.mubr.bf16.gmra.mxu0 %v3564
        %v3636 = vpop.f32.mrf.mxu0
        %v3637 = vadd.f32 0.0, %v3636
        %v3638 = vpop.f32.mrf.mxu0
        %v3639 = vpop.f32.mrf.mxu0
        %v3640 = vadd.f32 0.0, %v3639
        %v3641 = vpop.f32.mrf.mxu0
        %3642 = vdwg.mxu0
        %v3643 = vsel %vm1475, %v3508, -inf
        %3644 = vmax.xlane.f32.xlu0 %v3643
        %v3645 = vpop.xlane.xlu0 %3644
        %v3646 = vsel %vm1475, %v3511, -inf
        %3647 = vmax.xlane.f32.xlu0 %v3646
        %v3648 = vpop.xlane.xlu0 %3647
        %v3649 = vsel %vm1475, %v3516, -inf
        %3650 = vmax.xlane.f32.xlu0 %v3649
        %v3651 = vpop.xlane.xlu0 %3650
        %v3652 = vsel %vm1475, %v3519, -inf
        %3653 = vmax.xlane.f32.xlu0 %v3652
        %v3654 = vpop.xlane.xlu0 %3653
        %v3655 = vsel %vm1475, %v3524, -inf
        %3656 = vmax.xlane.f32.xlu0 %v3655
        %v3657 = vpop.xlane.xlu0 %3656
        %v3658 = vsel %vm1475, %v3527, -inf
        %3659 = vmax.xlane.f32.xlu0 %v3658
        %v3660 = vpop.xlane.xlu0 %3659
        %v3661 = vsel %vm1475, %v3532, -inf
        %3662 = vmax.xlane.f32.xlu0 %v3661
        %v3663 = vpop.xlane.xlu0 %3662
        %v3664 = vsel %vm1475, %v3535, -inf
        %3665 = vmax.xlane.f32.xlu0 %v3664
        %v3666 = vpop.xlane.xlu0 %3665
        %v3667 = vsel %vm1475, %v3613, -inf
        %3668 = vmax.xlane.f32.xlu0 %v3667
        %v3669 = vpop.xlane.xlu0 %3668
        %v3670 = vsel %vm1475, %v3616, -inf
        %3671 = vmax.xlane.f32.xlu0 %v3670
        %v3672 = vpop.xlane.xlu0 %3671
        %v3673 = vsel %vm1475, %v3621, -inf
        %3674 = vmax.xlane.f32.xlu0 %v3673
        %v3675 = vpop.xlane.xlu0 %3674
        %v3676 = vsel %vm1475, %v3624, -inf
        %3677 = vmax.xlane.f32.xlu0 %v3676
        %v3678 = vpop.xlane.xlu0 %3677
        %v3679 = vsel %vm1475, %v3629, -inf
        %3680 = vmax.xlane.f32.xlu0 %v3679
        %v3681 = vpop.xlane.xlu0 %3680
        %v3682 = vsel %vm1475, %v3632, -inf
        %3683 = vmax.xlane.f32.xlu0 %v3682
        %v3684 = vpop.xlane.xlu0 %3683
        %v3685 = vsel %vm1475, %v3637, -inf
        %3686 = vmax.xlane.f32.xlu0 %v3685
        %v3687 = vpop.xlane.xlu0 %3686
        %v3688 = vsel %vm1475, %v3640, -inf
        %3689 = vmax.xlane.f32.xlu0 %v3688
        %v3690 = vpop.xlane.xlu0 %3689
        %v3691 = vsub.f32 %v3508, %v3645
        %v3692 = vsub.f32 %v3511, %v3648
        %v3693 = vsub.f32 %v3516, %v3651
        %v3694 = vsub.f32 %v3519, %v3654
        %v3695 = vsub.f32 %v3524, %v3657
        %v3696 = vsub.f32 %v3527, %v3660
        %v3697 = vsub.f32 %v3532, %v3663
        %v3698 = vsub.f32 %v3535, %v3666
        %v3699 = vsub.f32 %v3613, %v3669
        %v3700 = vsub.f32 %v3616, %v3672
        %v3701 = vsub.f32 %v3621, %v3675
        %v3702 = vsub.f32 %v3624, %v3678
        %v3703 = vsub.f32 %v3629, %v3681
        %v3704 = vsub.f32 %v3632, %v3684
        %v3705 = vsub.f32 %v3637, %v3687
        %v3706 = vsub.f32 %v3640, %v3690
        %v3707 = vmul.f32 %v3691, 1.442695
        %v3708 = vpow.pop %v3707
        %v3709 = vmul.f32 %v3692, 1.442695
        %v3710 = vpow.pop %v3709
        %v3711 = vmul.f32 %v3693, 1.442695
        %v3712 = vpow.pop %v3711
        %v3713 = vmul.f32 %v3694, 1.442695
        %v3714 = vpow.pop %v3713
        %v3715 = vmul.f32 %v3695, 1.442695
        %v3716 = vpow.pop %v3715
        %v3717 = vmul.f32 %v3696, 1.442695
        %v3718 = vpow.pop %v3717
        %v3719 = vmul.f32 %v3697, 1.442695
        %v3720 = vpow.pop %v3719
        %v3721 = vmul.f32 %v3698, 1.442695
        %v3722 = vpow.pop %v3721
        %v3723 = vmul.f32 %v3699, 1.442695
        %v3724 = vpow.pop %v3723
        %v3725 = vmul.f32 %v3700, 1.442695
        %v3726 = vpow.pop %v3725
        %v3727 = vmul.f32 %v3701, 1.442695
        %v3728 = vpow.pop %v3727
        %v3729 = vmul.f32 %v3702, 1.442695
        %v3730 = vpow.pop %v3729
        %v3731 = vmul.f32 %v3703, 1.442695
        %v3732 = vpow.pop %v3731
        %v3733 = vmul.f32 %v3704, 1.442695
        %v3734 = vpow.pop %v3733
        %v3735 = vmul.f32 %v3705, 1.442695
        %v3736 = vpow.pop %v3735
        %v3737 = vmul.f32 %v3706, 1.442695
        %v3738 = vpow.pop %v3737
        %v3739 = vsel %vm1475, %v3708, 0.0
        %3740 = vadd.xlane.f32.xlu0 %v3739
        %v3741 = vpop.xlane.xlu0 %3740
        %v3742 = vsel %vm1475, %v3710, 0.0
        %3743 = vadd.xlane.f32.xlu0 %v3742
        %v3744 = vpop.xlane.xlu0 %3743
        %v3745 = vsel %vm1475, %v3712, 0.0
        %3746 = vadd.xlane.f32.xlu0 %v3745
        %v3747 = vpop.xlane.xlu0 %3746
        %v3748 = vsel %vm1475, %v3714, 0.0
        %3749 = vadd.xlane.f32.xlu0 %v3748
        %v3750 = vpop.xlane.xlu0 %3749
        %v3751 = vsel %vm1475, %v3716, 0.0
        %3752 = vadd.xlane.f32.xlu0 %v3751
        %v3753 = vpop.xlane.xlu0 %3752
        %v3754 = vsel %vm1475, %v3718, 0.0
        %3755 = vadd.xlane.f32.xlu0 %v3754
        %v3756 = vpop.xlane.xlu0 %3755
        %v3757 = vsel %vm1475, %v3720, 0.0
        %3758 = vadd.xlane.f32.xlu0 %v3757
        %v3759 = vpop.xlane.xlu0 %3758
        %v3760 = vsel %vm1475, %v3722, 0.0
        %3761 = vadd.xlane.f32.xlu0 %v3760
        %v3762 = vpop.xlane.xlu0 %3761
        %v3763 = vsel %vm1475, %v3724, 0.0
        %3764 = vadd.xlane.f32.xlu0 %v3763
        %v3765 = vpop.xlane.xlu0 %3764
        %v3766 = vsel %vm1475, %v3726, 0.0
        %3767 = vadd.xlane.f32.xlu0 %v3766
        %v3768 = vpop.xlane.xlu0 %3767
        %v3769 = vsel %vm1475, %v3728, 0.0
        %3770 = vadd.xlane.f32.xlu0 %v3769
        %v3771 = vpop.xlane.xlu0 %3770
        %v3772 = vsel %vm1475, %v3730, 0.0
        %3773 = vadd.xlane.f32.xlu0 %v3772
        %v3774 = vpop.xlane.xlu0 %3773
        %v3775 = vsel %vm1475, %v3732, 0.0
        %3776 = vadd.xlane.f32.xlu0 %v3775
        %v3777 = vpop.xlane.xlu0 %3776
        %v3778 = vsel %vm1475, %v3734, 0.0
        %3779 = vadd.xlane.f32.xlu0 %v3778
        %v3780 = vpop.xlane.xlu0 %3779
        %v3781 = vsel %vm1475, %v3736, 0.0
        %3782 = vadd.xlane.f32.xlu0 %v3781
        %v3783 = vpop.xlane.xlu0 %3782
        %v3784 = vsel %vm1475, %v3738, 0.0
        %3785 = vadd.xlane.f32.xlu0 %v3784
        %v3786 = vpop.xlane.xlu0 %3785
        %v3787 = vrcp.pop %v3741
        %v3788 = vrcp.pop %v3744
        %v3789 = vrcp.pop %v3747
        %v3790 = vrcp.pop %v3750
        %v3791 = vrcp.pop %v3753
        %v3792 = vrcp.pop %v3756
        %v3793 = vrcp.pop %v3759
        %v3794 = vrcp.pop %v3762
        %v3795 = vrcp.pop %v3765
        %v3796 = vrcp.pop %v3768
        %v3797 = vrcp.pop %v3771
        %v3798 = vrcp.pop %v3774
        %v3799 = vrcp.pop %v3777
        %v3800 = vrcp.pop %v3780
        %v3801 = vrcp.pop %v3783
        %v3802 = vrcp.pop %v3786
        %v3803 = vmul.f32 %v3708, %v3787
        %v3804 = vmul.f32 %v3710, %v3788
        %v3805 = vmul.f32 %v3712, %v3789
        %v3806 = vmul.f32 %v3714, %v3790
        %v3807 = vmul.f32 %v3716, %v3791
        %v3808 = vmul.f32 %v3718, %v3792
        %v3809 = vmul.f32 %v3720, %v3793
        %v3810 = vmul.f32 %v3722, %v3794
        %v3811 = vmul.f32 %v3724, %v3795
        %v3812 = vmul.f32 %v3726, %v3796
        %v3813 = vmul.f32 %v3728, %v3797
        %v3814 = vmul.f32 %v3730, %v3798
        %v3815 = vmul.f32 %v3732, %v3799
        %v3816 = vmul.f32 %v3734, %v3800
        %v3817 = vmul.f32 %v3736, %v3801
        %v3818 = vmul.f32 %v3738, %v3802
        %v3819 = vpack.c.bf16 %v3804, %v3803
        %v3820 = vpack.c.bf16 %v3806, %v3805
        %v3821 = vpack.c.bf16 %v3808, %v3807
        %v3822 = vpack.c.bf16 %v3810, %v3809
        %v3823 = vpack.c.bf16 %v3812, %v3811
        %v3824 = vpack.c.bf16 %v3814, %v3813
        %v3825 = vpack.c.bf16 %v3816, %v3815
        %v3826 = vpack.c.bf16 %v3818, %v3817
        %3827 = vrot.lane.b32.xlu0 %v1274, 32
        %v3828 = vpop.permute.xlu0 %3827
        %3829 = vrot.lane.b32.xlu0 %v1277, 32
        %v3830 = vpop.permute.xlu0 %3829
        %3831 = vrot.lane.b32.xlu0 %v1280, 32
        %v3832 = vpop.permute.xlu0 %3831
        %3833 = vrot.lane.b32.xlu0 %v1283, 32
        %v3834 = vpop.permute.xlu0 %3833
        %v3840 = vsel %vm1475, %v3819, 0
        %v3843 = vsel %vm1475, %v3820, 0
        %v3846 = vsel %vm1475, %v3821, 0
        %v3849 = vsel %vm1475, %v3822, 0
        %3851 = vmatprep.subr.bf16.mxu0 0
        %3852 = vmatpush1.bf16.msra.mxu0 0
        %3853 = vmatprep.subr.bf16.mxu0 0
        %3854 = vmatpush1.bf16.msra.mxu0 0
        %3855 = vmatprep.subr.bf16.mxu0 0
        %3856 = vmatpush1.bf16.msra.mxu0 0
        %3857 = vmatprep.subr.bf16.mxu0 0
        %3858 = vmatpush1.bf16.msra.mxu0 0
        %3859 = vmatprep.subr.bf16.mxu0 0
        %3860 = vmatpush1.bf16.msra.mxu0 %v3834
        %3861 = vmatprep.subr.bf16.mxu0 0
        %3862 = vmatpush1.bf16.msra.mxu0 %v3832
        %3863 = vmatprep.subr.bf16.mxu0 0
        %3864 = vmatpush1.bf16.msra.mxu0 %v3830
        %3865 = vmatprep.subr.bf16.mxu0 0
        %3866 = vmatpush1.bf16.msra.mxu0 %v3828
        %3867 = vmatprep.subr.bf16.mxu0 0
        %3868 = vmatpush2.bf16.msra.mxu0 0
        %3869 = vmatprep.subr.bf16.mxu0 0
        %3870 = vmatpush2.bf16.msra.mxu0 0
        %3871 = vmatprep.subr.bf16.mxu0 0
        %3872 = vmatpush2.bf16.msra.mxu0 0
        %3873 = vmatprep.subr.bf16.mxu0 0
        %3874 = vmatpush2.bf16.msra.mxu0 0
        %3875 = vmatprep.subr.bf16.mxu0 0
        %3876 = vmatpush2.bf16.msra.mxu0 0
        %3877 = vmatprep.subr.bf16.mxu0 0
        %3878 = vmatpush2.bf16.msra.mxu0 0
        %3879 = vmatprep.subr.bf16.mxu0 0
        %3880 = vmatpush2.bf16.msra.mxu0 0
        %3881 = vmatprep.subr.bf16.mxu0 0
        %3882 = vmatpush2.bf16.msra.mxu0 0
        %3883 = vmatprep.mubr.bf16.mxu0 0
        %3884 = vmatmul.mubr.bf16.gmra.mxu0 %v3840
        %v3885 = vpop.f32.mrf.mxu0
        %v3886 = vadd.f32 0.0, %v3885
        %v3887 = vpop.f32.mrf.mxu0
        %v3888 = vpop.f32.mrf.mxu0
        %v3889 = vadd.f32 0.0, %v3888
        %v3890 = vpop.f32.mrf.mxu0
        %3891 = vmatprep.mubr.bf16.mxu0 0
        %3892 = vmatmul.mubr.bf16.gmra.mxu0 %v3843
        %v3893 = vpop.f32.mrf.mxu0
        %v3894 = vadd.f32 0.0, %v3893
        %v3895 = vpop.f32.mrf.mxu0
        %v3896 = vpop.f32.mrf.mxu0
        %v3897 = vadd.f32 0.0, %v3896
        %v3898 = vpop.f32.mrf.mxu0
        %3899 = vmatprep.mubr.bf16.mxu0 0
        %3900 = vmatmul.mubr.bf16.gmra.mxu0 %v3846
        %v3901 = vpop.f32.mrf.mxu0
        %v3902 = vadd.f32 0.0, %v3901
        %v3903 = vpop.f32.mrf.mxu0
        %v3904 = vpop.f32.mrf.mxu0
        %v3905 = vadd.f32 0.0, %v3904
        %v3906 = vpop.f32.mrf.mxu0
        %3907 = vmatprep.mubr.bf16.mxu0 0
        %3908 = vmatmul.mubr.bf16.gmra.mxu0 %v3849
        %v3909 = vpop.f32.mrf.mxu0
        %v3910 = vadd.f32 0.0, %v3909
        %v3911 = vpop.f32.mrf.mxu0
        %v3912 = vpop.f32.mrf.mxu0
        %v3913 = vadd.f32 0.0, %v3912
        %v3914 = vpop.f32.mrf.mxu0
        %3915 = vdwg.mxu0
        %3916 = vrot.lane.b32.xlu0 %v1286, 32
        %v3917 = vpop.permute.xlu0 %3916
        %3918 = vrot.lane.b32.xlu0 %v1289, 32
        %v3919 = vpop.permute.xlu0 %3918
        %3920 = vrot.lane.b32.xlu0 %v1292, 32
        %v3921 = vpop.permute.xlu0 %3920
        %3922 = vrot.lane.b32.xlu0 %v1295, 32
        %v3923 = vpop.permute.xlu0 %3922
        %v3929 = vsel %vm1475, %v3823, 0
        %v3932 = vsel %vm1475, %v3824, 0
        %v3935 = vsel %vm1475, %v3825, 0
        %v3938 = vsel %vm1475, %v3826, 0
        %3940 = vmatprep.subr.bf16.mxu0 0
        %3941 = vmatpush1.bf16.msra.mxu0 0
        %3942 = vmatprep.subr.bf16.mxu0 0
        %3943 = vmatpush1.bf16.msra.mxu0 0
        %3944 = vmatprep.subr.bf16.mxu0 0
        %3945 = vmatpush1.bf16.msra.mxu0 0
        %3946 = vmatprep.subr.bf16.mxu0 0
        %3947 = vmatpush1.bf16.msra.mxu0 0
        %3948 = vmatprep.subr.bf16.mxu0 0
        %3949 = vmatpush1.bf16.msra.mxu0 %v3923
        %3950 = vmatprep.subr.bf16.mxu0 0
        %3951 = vmatpush1.bf16.msra.mxu0 %v3921
        %3952 = vmatprep.subr.bf16.mxu0 0
        %3953 = vmatpush1.bf16.msra.mxu0 %v3919
        %3954 = vmatprep.subr.bf16.mxu0 0
        %3955 = vmatpush1.bf16.msra.mxu0 %v3917
        %3956 = vmatprep.subr.bf16.mxu0 0
        %3957 = vmatpush2.bf16.msra.mxu0 0
        %3958 = vmatprep.subr.bf16.mxu0 0
        %3959 = vmatpush2.bf16.msra.mxu0 0
        %3960 = vmatprep.subr.bf16.mxu0 0
        %3961 = vmatpush2.bf16.msra.mxu0 0
        %3962 = vmatprep.subr.bf16.mxu0 0
        %3963 = vmatpush2.bf16.msra.mxu0 0
        %3964 = vmatprep.subr.bf16.mxu0 0
        %3965 = vmatpush2.bf16.msra.mxu0 0
        %3966 = vmatprep.subr.bf16.mxu0 0
        %3967 = vmatpush2.bf16.msra.mxu0 0
        %3968 = vmatprep.subr.bf16.mxu0 0
        %3969 = vmatpush2.bf16.msra.mxu0 0
        %3970 = vmatprep.subr.bf16.mxu0 0
        %3971 = vmatpush2.bf16.msra.mxu0 0
        %3972 = vmatprep.mubr.bf16.mxu0 0
        %3973 = vmatmul.mubr.bf16.gmra.mxu0 %v3929
        %v3974 = vpop.f32.mrf.mxu0
        %v3975 = vadd.f32 0.0, %v3974
        %v3976 = vpop.f32.mrf.mxu0
        %v3977 = vpop.f32.mrf.mxu0
        %v3978 = vadd.f32 0.0, %v3977
        %v3979 = vpop.f32.mrf.mxu0
        %3980 = vmatprep.mubr.bf16.mxu0 0
        %3981 = vmatmul.mubr.bf16.gmra.mxu0 %v3932
        %v3982 = vpop.f32.mrf.mxu0
        %v3983 = vadd.f32 0.0, %v3982
        %v3984 = vpop.f32.mrf.mxu0
        %v3985 = vpop.f32.mrf.mxu0
        %v3986 = vadd.f32 0.0, %v3985
        %v3987 = vpop.f32.mrf.mxu0
        %3988 = vmatprep.mubr.bf16.mxu0 0
        %3989 = vmatmul.mubr.bf16.gmra.mxu0 %v3935
        %v3990 = vpop.f32.mrf.mxu0
        %v3991 = vadd.f32 0.0, %v3990
        %v3992 = vpop.f32.mrf.mxu0
        %v3993 = vpop.f32.mrf.mxu0
        %v3994 = vadd.f32 0.0, %v3993
        %v3995 = vpop.f32.mrf.mxu0
        %3996 = vmatprep.mubr.bf16.mxu0 0
        %3997 = vmatmul.mubr.bf16.gmra.mxu0 %v3938
        %v3998 = vpop.f32.mrf.mxu0
        %v3999 = vadd.f32 0.0, %v3998
        %v4000 = vpop.f32.mrf.mxu0
        %v4001 = vpop.f32.mrf.mxu0
        %v4002 = vadd.f32 0.0, %v4001
        %v4003 = vpop.f32.mrf.mxu0
        %4004 = vdwg.mxu0
        %v4005 = vpack.c.bf16 %v3889, %v3886
        %v4006 = vpack.c.bf16 %v3897, %v3894
        %v4007 = vpack.c.bf16 %v3905, %v3902
        %v4008 = vpack.c.bf16 %v3913, %v3910
        %v4009 = vpack.c.bf16 %v3978, %v3975
        %v4010 = vpack.c.bf16 %v3986, %v3983
        %v4011 = vpack.c.bf16 %v3994, %v3991
        %v4012 = vpack.c.bf16 %v4002, %v3999
        %v4013 = vld [vmem:[#allocation11 + $0x30] sm:$0xf]
        %v4014 = vld [vmem:[#allocation11 + $0x34] sm:$0xf]
        %v4015 = vld [vmem:[#allocation11 + $0x38] sm:$0xf]
        %v4016 = vld [vmem:[#allocation11 + $0x3c] sm:$0xf]
        %v4021 = vunpack.c.l.b16 %v4013
        %v4022 = vunpack.c.l.b16 %v4014
        %v4023 = vunpack.c.l.b16 %v4015
        %v4024 = vunpack.c.l.b16 %v4016
        %v4025 = vpack.c.b16 %v4022, %v4021
        %v4026 = vpack.c.b16 %v4024, %v4023
        %v4030 = vsel %vm1296, %v4005, 0
        %v4033 = vsel %vm1296, %v4006, 0
        %v4036 = vsel %vm1296, %v4007, 0
        %v4039 = vsel %vm1296, %v4008, 0
        %v4042 = vsel %vm1296, %v4009, 0
        %v4045 = vsel %vm1296, %v4010, 0
        %v4048 = vsel %vm1296, %v4011, 0
        %v4051 = vsel %vm1296, %v4012, 0
        %4053 = vmatprep.subr.bf16.mxu0 0
        %4054 = vmatpush1.bf16.msra.mxu0 0
        %4055 = vmatprep.subr.bf16.mxu0 0
        %4056 = vmatpush1.bf16.msra.mxu0 0
        %4057 = vmatprep.subr.bf16.mxu0 0
        %4058 = vmatpush1.bf16.msra.mxu0 0
        %4059 = vmatprep.subr.bf16.mxu0 0
        %4060 = vmatpush1.bf16.msra.mxu0 0
        %4061 = vmatprep.subr.bf16.mxu0 0
        %4062 = vmatpush1.bf16.msra.mxu0 0
        %4063 = vmatprep.subr.bf16.mxu0 0
        %4064 = vmatpush1.bf16.msra.mxu0 0
        %4065 = vmatprep.subr.bf16.mxu0 0
        %4066 = vmatpush1.bf16.msra.mxu0 %v4026
        %4067 = vmatprep.subr.bf16.mxu0 0
        %4068 = vmatpush1.bf16.msra.mxu0 %v4025
        %4069 = vmatprep.subr.bf16.mxu0 0
        %4070 = vmatpush2.bf16.msra.mxu0 0
        %4071 = vmatprep.subr.bf16.mxu0 0
        %4072 = vmatpush2.bf16.msra.mxu0 0
        %4073 = vmatprep.subr.bf16.mxu0 0
        %4074 = vmatpush2.bf16.msra.mxu0 0
        %4075 = vmatprep.subr.bf16.mxu0 0
        %4076 = vmatpush2.bf16.msra.mxu0 0
        %4077 = vmatprep.subr.bf16.mxu0 0
        %4078 = vmatpush2.bf16.msra.mxu0 0
        %4079 = vmatprep.subr.bf16.mxu0 0
        %4080 = vmatpush2.bf16.msra.mxu0 0
        %4081 = vmatprep.subr.bf16.mxu0 0
        %4082 = vmatpush2.bf16.msra.mxu0 0
        %4083 = vmatprep.subr.bf16.mxu0 0
        %4084 = vmatpush2.bf16.msra.mxu0 0
        %4085 = vmatprep.mubr.bf16.mxu0 0
        %4086 = vmatmul.mubr.bf16.gmra.mxu0 %v4030
        %v4087 = vpop.f32.mrf.mxu0
        %v4088 = vadd.f32 0.0, %v4087
        %v4089 = vpop.f32.mrf.mxu0
        %v4090 = vpop.f32.mrf.mxu0
        %v4091 = vadd.f32 0.0, %v4090
        %v4092 = vpop.f32.mrf.mxu0
        %4093 = vmatprep.mubr.bf16.mxu0 0
        %4094 = vmatmul.mubr.bf16.gmra.mxu0 %v4033
        %v4095 = vpop.f32.mrf.mxu0
        %v4096 = vadd.f32 0.0, %v4095
        %v4097 = vpop.f32.mrf.mxu0
        %v4098 = vpop.f32.mrf.mxu0
        %v4099 = vadd.f32 0.0, %v4098
        %v4100 = vpop.f32.mrf.mxu0
        %4101 = vmatprep.mubr.bf16.mxu0 0
        %4102 = vmatmul.mubr.bf16.gmra.mxu0 %v4036
        %v4103 = vpop.f32.mrf.mxu0
        %v4104 = vadd.f32 0.0, %v4103
        %v4105 = vpop.f32.mrf.mxu0
        %v4106 = vpop.f32.mrf.mxu0
        %v4107 = vadd.f32 0.0, %v4106
        %v4108 = vpop.f32.mrf.mxu0
        %4109 = vmatprep.mubr.bf16.mxu0 0
        %4110 = vmatmul.mubr.bf16.gmra.mxu0 %v4039
        %v4111 = vpop.f32.mrf.mxu0
        %v4112 = vadd.f32 0.0, %v4111
        %v4113 = vpop.f32.mrf.mxu0
        %v4114 = vpop.f32.mrf.mxu0
        %v4115 = vadd.f32 0.0, %v4114
        %v4116 = vpop.f32.mrf.mxu0
        %4117 = vmatprep.mubr.bf16.mxu0 0
        %4118 = vmatmul.mubr.bf16.gmra.mxu0 %v4042
        %v4119 = vpop.f32.mrf.mxu0
        %v4120 = vadd.f32 0.0, %v4119
        %v4121 = vpop.f32.mrf.mxu0
        %v4122 = vpop.f32.mrf.mxu0
        %v4123 = vadd.f32 0.0, %v4122
        %v4124 = vpop.f32.mrf.mxu0
        %4125 = vmatprep.mubr.bf16.mxu0 0
        %4126 = vmatmul.mubr.bf16.gmra.mxu0 %v4045
        %v4127 = vpop.f32.mrf.mxu0
        %v4128 = vadd.f32 0.0, %v4127
        %v4129 = vpop.f32.mrf.mxu0
        %v4130 = vpop.f32.mrf.mxu0
        %v4131 = vadd.f32 0.0, %v4130
        %v4132 = vpop.f32.mrf.mxu0
        %4133 = vmatprep.mubr.bf16.mxu0 0
        %4134 = vmatmul.mubr.bf16.gmra.mxu0 %v4048
        %v4135 = vpop.f32.mrf.mxu0
        %v4136 = vadd.f32 0.0, %v4135
        %v4137 = vpop.f32.mrf.mxu0
        %v4138 = vpop.f32.mrf.mxu0
        %v4139 = vadd.f32 0.0, %v4138
        %v4140 = vpop.f32.mrf.mxu0
        %4141 = vmatprep.mubr.bf16.mxu0 0
        %4142 = vmatmul.mubr.bf16.gmra.mxu0 %v4051
        %v4143 = vpop.f32.mrf.mxu0
        %v4144 = vadd.f32 0.0, %v4143
        %v4145 = vpop.f32.mrf.mxu0
        %v4146 = vpop.f32.mrf.mxu0
        %v4147 = vadd.f32 0.0, %v4146
        %v4148 = vpop.f32.mrf.mxu0
        %4149 = vdwg.mxu0
        %v4150 = vadd.f32 %v3417, %v4088
        %v4151 = vadd.f32 %v3418, %v4091
        %v4152 = vadd.f32 %v3419, %v4096
        %v4153 = vadd.f32 %v3420, %v4099
        %v4154 = vadd.f32 %v3421, %v4104
        %v4155 = vadd.f32 %v3422, %v4107
        %v4156 = vadd.f32 %v3423, %v4112
        %v4157 = vadd.f32 %v3424, %v4115
        %v4158 = vadd.f32 %v3425, %v4120
        %v4159 = vadd.f32 %v3426, %v4123
        %v4160 = vadd.f32 %v3427, %v4128
        %v4161 = vadd.f32 %v3428, %v4131
        %v4162 = vadd.f32 %v3429, %v4136
        %v4163 = vadd.f32 %v3430, %v4139
        %v4164 = vadd.f32 %v3431, %v4144
        %v4165 = vadd.f32 %v3432, %v4147
        %v4166 = vld [vmem:[#allocation13] sm:$0x1]
        %v4168 = vlaneseq
        %v4169 = vshrl.u32 %v4168, 7
        %v4170 = vsub.s32 0, %v4169
        %v4171 = vrot.slane %v4166, %v4170
        %v4173 = vadd.f32 %v4150, %v4171
        %v4174 = vadd.f32 %v4151, %v4171
        %v4175 = vadd.f32 %v4152, %v4171
        %v4176 = vadd.f32 %v4153, %v4171
        %v4177 = vadd.f32 %v4154, %v4171
        %v4178 = vadd.f32 %v4155, %v4171
        %v4179 = vadd.f32 %v4156, %v4171
        %v4180 = vadd.f32 %v4157, %v4171
        %v4181 = vadd.f32 %v4158, %v4171
        %v4182 = vadd.f32 %v4159, %v4171
        %v4183 = vadd.f32 %v4160, %v4171
        %v4184 = vadd.f32 %v4161, %v4171
        %v4185 = vadd.f32 %v4162, %v4171
        %v4186 = vadd.f32 %v4163, %v4171
        %v4187 = vadd.f32 %v4164, %v4171
        %v4188 = vadd.f32 %v4165, %v4171
        %v4189 = vadd.f32 %v638, %v4173
        %v4190 = vadd.f32 %v639, %v4174
        %v4191 = vadd.f32 %v640, %v4175
        %v4192 = vadd.f32 %v641, %v4176
        %v4193 = vadd.f32 %v642, %v4177
        %v4194 = vadd.f32 %v643, %v4178
        %v4195 = vadd.f32 %v644, %v4179
        %v4196 = vadd.f32 %v645, %v4180
        %v4197 = vadd.f32 %v646, %v4181
        %v4198 = vadd.f32 %v647, %v4182
        %v4199 = vadd.f32 %v648, %v4183
        %v4200 = vadd.f32 %v649, %v4184
        %v4201 = vadd.f32 %v650, %v4185
        %v4202 = vadd.f32 %v651, %v4186
        %v4203 = vadd.f32 %v652, %v4187
        %v4204 = vadd.f32 %v653, %v4188
        %v4205 = vld [vmem:[#allocation14] sm:$0x1]
        %v4206 = vld [vmem:[%s8] sm:$0x1]
        %4207 = vadd.xlane.f32.xlu0 %v4189
        %v4208 = vpop.xlane.xlu0 %4207
        %4209 = vadd.xlane.f32.xlu0 %v4190
        %v4210 = vpop.xlane.xlu0 %4209
        %4211 = vadd.xlane.f32.xlu0 %v4191
        %v4212 = vpop.xlane.xlu0 %4211
        %4213 = vadd.xlane.f32.xlu0 %v4192
        %v4214 = vpop.xlane.xlu0 %4213
        %4215 = vadd.xlane.f32.xlu0 %v4193
        %v4216 = vpop.xlane.xlu0 %4215
        %4217 = vadd.xlane.f32.xlu0 %v4194
        %v4218 = vpop.xlane.xlu0 %4217
        %4219 = vadd.xlane.f32.xlu0 %v4195
        %v4220 = vpop.xlane.xlu0 %4219
        %4221 = vadd.xlane.f32.xlu0 %v4196
        %v4222 = vpop.xlane.xlu0 %4221
        %4223 = vadd.xlane.f32.xlu0 %v4197
        %v4224 = vpop.xlane.xlu0 %4223
        %4225 = vadd.xlane.f32.xlu0 %v4198
        %v4226 = vpop.xlane.xlu0 %4225
        %4227 = vadd.xlane.f32.xlu0 %v4199
        %v4228 = vpop.xlane.xlu0 %4227
        %4229 = vadd.xlane.f32.xlu0 %v4200
        %v4230 = vpop.xlane.xlu0 %4229
        %4231 = vadd.xlane.f32.xlu0 %v4201
        %v4232 = vpop.xlane.xlu0 %4231
        %4233 = vadd.xlane.f32.xlu0 %v4202
        %v4234 = vpop.xlane.xlu0 %4233
        %4235 = vadd.xlane.f32.xlu0 %v4203
        %v4236 = vpop.xlane.xlu0 %4235
        %4237 = vadd.xlane.f32.xlu0 %v4204
        %v4238 = vpop.xlane.xlu0 %4237
        %v4239 = vmul.f32 %v4208, %v688
        %v4240 = vmul.f32 %v4210, %v688
        %v4241 = vmul.f32 %v4212, %v688
        %v4242 = vmul.f32 %v4214, %v688
        %v4243 = vmul.f32 %v4216, %v688
        %v4244 = vmul.f32 %v4218, %v688
        %v4245 = vmul.f32 %v4220, %v688
        %v4246 = vmul.f32 %v4222, %v688
        %v4247 = vmul.f32 %v4224, %v688
        %v4248 = vmul.f32 %v4226, %v688
        %v4249 = vmul.f32 %v4228, %v688
        %v4250 = vmul.f32 %v4230, %v688
        %v4251 = vmul.f32 %v4232, %v688
        %v4252 = vmul.f32 %v4234, %v688
        %v4253 = vmul.f32 %v4236, %v688
        %v4254 = vmul.f32 %v4238, %v688
        %v4255 = vsub.f32 %v4189, %v4239
        %v4256 = vsub.f32 %v4190, %v4240
        %v4257 = vsub.f32 %v4191, %v4241
        %v4258 = vsub.f32 %v4192, %v4242
        %v4259 = vsub.f32 %v4193, %v4243
        %v4260 = vsub.f32 %v4194, %v4244
        %v4261 = vsub.f32 %v4195, %v4245
        %v4262 = vsub.f32 %v4196, %v4246
        %v4263 = vsub.f32 %v4197, %v4247
        %v4264 = vsub.f32 %v4198, %v4248
        %v4265 = vsub.f32 %v4199, %v4249
        %v4266 = vsub.f32 %v4200, %v4250
        %v4267 = vsub.f32 %v4201, %v4251
        %v4268 = vsub.f32 %v4202, %v4252
        %v4269 = vsub.f32 %v4203, %v4253
        %v4270 = vsub.f32 %v4204, %v4254
        %v4271 = vmul.f32 %v4255, %v4255
        %v4272 = vmul.f32 %v4256, %v4256
        %v4273 = vmul.f32 %v4257, %v4257
        %v4274 = vmul.f32 %v4258, %v4258
        %v4275 = vmul.f32 %v4259, %v4259
        %v4276 = vmul.f32 %v4260, %v4260
        %v4277 = vmul.f32 %v4261, %v4261
        %v4278 = vmul.f32 %v4262, %v4262
        %v4279 = vmul.f32 %v4263, %v4263
        %v4280 = vmul.f32 %v4264, %v4264
        %v4281 = vmul.f32 %v4265, %v4265
        %v4282 = vmul.f32 %v4266, %v4266
        %v4283 = vmul.f32 %v4267, %v4267
        %v4284 = vmul.f32 %v4268, %v4268
        %v4285 = vmul.f32 %v4269, %v4269
        %v4286 = vmul.f32 %v4270, %v4270
        %4287 = vadd.xlane.f32.xlu0 %v4271
        %v4288 = vpop.xlane.xlu0 %4287
        %4289 = vadd.xlane.f32.xlu0 %v4272
        %v4290 = vpop.xlane.xlu0 %4289
        %4291 = vadd.xlane.f32.xlu0 %v4273
        %v4292 = vpop.xlane.xlu0 %4291
        %4293 = vadd.xlane.f32.xlu0 %v4274
        %v4294 = vpop.xlane.xlu0 %4293
        %4295 = vadd.xlane.f32.xlu0 %v4275
        %v4296 = vpop.xlane.xlu0 %4295
        %4297 = vadd.xlane.f32.xlu0 %v4276
        %v4298 = vpop.xlane.xlu0 %4297
        %4299 = vadd.xlane.f32.xlu0 %v4277
        %v4300 = vpop.xlane.xlu0 %4299
        %4301 = vadd.xlane.f32.xlu0 %v4278
        %v4302 = vpop.xlane.xlu0 %4301
        %4303 = vadd.xlane.f32.xlu0 %v4279
        %v4304 = vpop.xlane.xlu0 %4303
        %4305 = vadd.xlane.f32.xlu0 %v4280
        %v4306 = vpop.xlane.xlu0 %4305
        %4307 = vadd.xlane.f32.xlu0 %v4281
        %v4308 = vpop.xlane.xlu0 %4307
        %4309 = vadd.xlane.f32.xlu0 %v4282
        %v4310 = vpop.xlane.xlu0 %4309
        %4311 = vadd.xlane.f32.xlu0 %v4283
        %v4312 = vpop.xlane.xlu0 %4311
        %4313 = vadd.xlane.f32.xlu0 %v4284
        %v4314 = vpop.xlane.xlu0 %4313
        %4315 = vadd.xlane.f32.xlu0 %v4285
        %v4316 = vpop.xlane.xlu0 %4315
        %4317 = vadd.xlane.f32.xlu0 %v4286
        %v4318 = vpop.xlane.xlu0 %4317
        %v4319 = vmul.f32 %v4288, %v688
        %v4320 = vmul.f32 %v4290, %v688
        %v4321 = vmul.f32 %v4292, %v688
        %v4322 = vmul.f32 %v4294, %v688
        %v4323 = vmul.f32 %v4296, %v688
        %v4324 = vmul.f32 %v4298, %v688
        %v4325 = vmul.f32 %v4300, %v688
        %v4326 = vmul.f32 %v4302, %v688
        %v4327 = vmul.f32 %v4304, %v688
        %v4328 = vmul.f32 %v4306, %v688
        %v4329 = vmul.f32 %v4308, %v688
        %v4330 = vmul.f32 %v4310, %v688
        %v4331 = vmul.f32 %v4312, %v688
        %v4332 = vmul.f32 %v4314, %v688
        %v4333 = vmul.f32 %v4316, %v688
        %v4334 = vmul.f32 %v4318, %v688
        %v4335 = vadd.f32 %v4319, 1e-05
        %v4336 = vadd.f32 %v4320, 1e-05
        %v4337 = vadd.f32 %v4321, 1e-05
        %v4338 = vadd.f32 %v4322, 1e-05
        %v4339 = vadd.f32 %v4323, 1e-05
        %v4340 = vadd.f32 %v4324, 1e-05
        %v4341 = vadd.f32 %v4325, 1e-05
        %v4342 = vadd.f32 %v4326, 1e-05
        %v4343 = vadd.f32 %v4327, 1e-05
        %v4344 = vadd.f32 %v4328, 1e-05
        %v4345 = vadd.f32 %v4329, 1e-05
        %v4346 = vadd.f32 %v4330, 1e-05
        %v4347 = vadd.f32 %v4331, 1e-05
        %v4348 = vadd.f32 %v4332, 1e-05
        %v4349 = vadd.f32 %v4333, 1e-05
        %v4350 = vadd.f32 %v4334, 1e-05
        %v4351 = vrsqrt.pop %v4335
        %v4352 = vrsqrt.pop %v4336
        %v4353 = vrsqrt.pop %v4337
        %v4354 = vrsqrt.pop %v4338
        %v4355 = vrsqrt.pop %v4339
        %v4356 = vrsqrt.pop %v4340
        %v4357 = vrsqrt.pop %v4341
        %v4358 = vrsqrt.pop %v4342
        %v4359 = vrsqrt.pop %v4343
        %v4360 = vrsqrt.pop %v4344
        %v4361 = vrsqrt.pop %v4345
        %v4362 = vrsqrt.pop %v4346
        %v4363 = vrsqrt.pop %v4347
        %v4364 = vrsqrt.pop %v4348
        %v4365 = vrsqrt.pop %v4349
        %v4366 = vrsqrt.pop %v4350
        %v4367 = vmul.f32 %v4255, %v4351
        %v4368 = vmul.f32 %v4256, %v4352
        %v4369 = vmul.f32 %v4257, %v4353
        %v4370 = vmul.f32 %v4258, %v4354
        %v4371 = vmul.f32 %v4259, %v4355
        %v4372 = vmul.f32 %v4260, %v4356
        %v4373 = vmul.f32 %v4261, %v4357
        %v4374 = vmul.f32 %v4262, %v4358
        %v4375 = vmul.f32 %v4263, %v4359
        %v4376 = vmul.f32 %v4264, %v4360
        %v4377 = vmul.f32 %v4265, %v4361
        %v4378 = vmul.f32 %v4266, %v4362
        %v4379 = vmul.f32 %v4267, %v4363
        %v4380 = vmul.f32 %v4268, %v4364
        %v4381 = vmul.f32 %v4269, %v4365
        %v4382 = vmul.f32 %v4270, %v4366
        %v4384 = vlaneseq
        %v4385 = vshrl.u32 %v4384, 7
        %v4386 = vsub.s32 0, %v4385
        %v4387 = vrot.slane %v4205, %v4386
        %v4389 = vmul.f32 %v4367, %v4387
        %v4390 = vmul.f32 %v4368, %v4387
        %v4391 = vmul.f32 %v4369, %v4387
        %v4392 = vmul.f32 %v4370, %v4387
        %v4393 = vmul.f32 %v4371, %v4387
        %v4394 = vmul.f32 %v4372, %v4387
        %v4395 = vmul.f32 %v4373, %v4387
        %v4396 = vmul.f32 %v4374, %v4387
        %v4397 = vmul.f32 %v4375, %v4387
        %v4398 = vmul.f32 %v4376, %v4387
        %v4399 = vmul.f32 %v4377, %v4387
        %v4400 = vmul.f32 %v4378, %v4387
        %v4401 = vmul.f32 %v4379, %v4387
        %v4402 = vmul.f32 %v4380, %v4387
        %v4403 = vmul.f32 %v4381, %v4387
        %v4404 = vmul.f32 %v4382, %v4387
        %v4406 = vlaneseq
        %v4407 = vshrl.u32 %v4406, 7
        %v4408 = vsub.s32 0, %v4407
        %v4409 = vrot.slane %v4206, %v4408
        %v4411 = vadd.f32 %v4389, %v4409
        %v4412 = vadd.f32 %v4390, %v4409
        %v4413 = vadd.f32 %v4391, %v4409
        %v4414 = vadd.f32 %v4392, %v4409
        %v4415 = vadd.f32 %v4393, %v4409
        %v4416 = vadd.f32 %v4394, %v4409
        %v4417 = vadd.f32 %v4395, %v4409
        %v4418 = vadd.f32 %v4396, %v4409
        %v4419 = vadd.f32 %v4397, %v4409
        %v4420 = vadd.f32 %v4398, %v4409
        %v4421 = vadd.f32 %v4399, %v4409
        %v4422 = vadd.f32 %v4400, %v4409
        %v4423 = vadd.f32 %v4401, %v4409
        %v4424 = vadd.f32 %v4402, %v4409
        %v4425 = vadd.f32 %v4403, %v4409
        %v4426 = vadd.f32 %v4404, %v4409
        %v4427 = vpack.c.bf16 %v4412, %v4411
        %v4428 = vpack.c.bf16 %v4414, %v4413
        %v4429 = vpack.c.bf16 %v4416, %v4415
        %v4430 = vpack.c.bf16 %v4418, %v4417
        %v4431 = vpack.c.bf16 %v4420, %v4419
        %v4432 = vpack.c.bf16 %v4422, %v4421
        %v4433 = vpack.c.bf16 %v4424, %v4423
        %v4434 = vpack.c.bf16 %v4426, %v4425
        %v4435 = vld [vmem:[#allocation16] sm:$0xff]
        %v4436 = vld [vmem:[#allocation16 + $0x8] sm:$0xff]
        %v4437 = vld [vmem:[#allocation16 + $0x10] sm:$0xff]
        %v4438 = vld [vmem:[#allocation16 + $0x18] sm:$0xff]
        %v4439 = vld [vmem:[#allocation16 + $0x20] sm:$0xff]
        %v4440 = vld [vmem:[#allocation16 + $0x28] sm:$0xff]
        %v4441 = vld [vmem:[#allocation16 + $0x30] sm:$0xff]
        %v4442 = vld [vmem:[#allocation16 + $0x38] sm:$0xff]
        %v4443 = vld [vmem:[#allocation16 + $0x40] sm:$0xff]
        %v4444 = vld [vmem:[#allocation16 + $0x48] sm:$0xff]
        %v4445 = vld [vmem:[#allocation16 + $0x50] sm:$0xff]
        %v4446 = vld [vmem:[#allocation16 + $0x58] sm:$0xff]
        %v4447 = vld [vmem:[#allocation16 + $0x60] sm:$0xff]
        %v4448 = vld [vmem:[#allocation16 + $0x68] sm:$0xff]
        %v4449 = vld [vmem:[#allocation16 + $0x70] sm:$0xff]
        %v4450 = vld [vmem:[#allocation16 + $0x78] sm:$0xff]
        %v4451 = vld [vmem:[#allocation16 + $0x80] sm:$0xff]
        %v4452 = vld [vmem:[#allocation16 + $0x88] sm:$0xff]
        %v4453 = vld [vmem:[#allocation16 + $0x90] sm:$0xff]
        %v4454 = vld [vmem:[#allocation16 + $0x98] sm:$0xff]
        %v4455 = vld [vmem:[#allocation16 + $0xa0] sm:$0xff]
        %v4456 = vld [vmem:[#allocation16 + $0xa8] sm:$0xff]
        %v4457 = vld [vmem:[#allocation16 + $0xb0] sm:$0xff]
        %v4458 = vld [vmem:[#allocation16 + $0xb8] sm:$0xff]
        %v4459 = vld [vmem:[#allocation16 + $0xc0] sm:$0xff]
        %v4460 = vld [vmem:[#allocation16 + $0xc8] sm:$0xff]
        %v4461 = vld [vmem:[#allocation16 + $0xd0] sm:$0xff]
        %v4462 = vld [vmem:[#allocation16 + $0xd8] sm:$0xff]
        %v4463 = vld [vmem:[#allocation16 + $0xe0] sm:$0xff]
        %v4464 = vld [vmem:[#allocation16 + $0xe8] sm:$0xff]
        %v4465 = vld [vmem:[#allocation16 + $0xf0] sm:$0xff]
        %v4466 = vld [vmem:[#allocation16 + $0xf8] sm:$0xff]
        %v4467 = vld [vmem:[%s10] sm:$0xf]
        %v4469 = vlaneseq
        %v4470 = vshrl.u32 %v4469, 7
        %v4471 = vsub.s32 0, %v4470
        %v4472 = vrot.slane %v4467, %v4471
        %v4473 = vlaneseq
        %v4474 = vshrl.u32 %v4473, 7
        %v4475 = vsub.s32 1, %v4474
        %v4476 = vrot.slane %v4467, %v4475
        %v4477 = vlaneseq
        %v4478 = vshrl.u32 %v4477, 7
        %v4479 = vsub.s32 2, %v4478
        %v4480 = vrot.slane %v4467, %v4479
        %v4481 = vlaneseq
        %v4482 = vshrl.u32 %v4481, 7
        %v4483 = vsub.s32 3, %v4482
        %v4484 = vrot.slane %v4467, %v4483
        %v4521 = vunpack.c.l.b16 %v4435
        %v4522 = vunpack.c.h.b16 %v4435
        %v4523 = vunpack.c.l.b16 %v4436
        %v4524 = vunpack.c.h.b16 %v4436
        %v4525 = vunpack.c.l.b16 %v4437
        %v4526 = vunpack.c.h.b16 %v4437
        %v4527 = vunpack.c.l.b16 %v4438
        %v4528 = vunpack.c.h.b16 %v4438
        %v4529 = vunpack.c.l.b16 %v4439
        %v4530 = vunpack.c.h.b16 %v4439
        %v4531 = vunpack.c.l.b16 %v4440
        %v4532 = vunpack.c.h.b16 %v4440
        %v4533 = vunpack.c.l.b16 %v4441
        %v4534 = vunpack.c.h.b16 %v4441
        %v4535 = vunpack.c.l.b16 %v4442
        %v4536 = vunpack.c.h.b16 %v4442
        %v4537 = vunpack.c.l.b16 %v4443
        %v4538 = vunpack.c.h.b16 %v4443
        %v4539 = vunpack.c.l.b16 %v4444
        %v4540 = vunpack.c.h.b16 %v4444
        %v4541 = vunpack.c.l.b16 %v4445
        %v4542 = vunpack.c.h.b16 %v4445
        %v4543 = vunpack.c.l.b16 %v4446
        %v4544 = vunpack.c.h.b16 %v4446
        %v4545 = vunpack.c.l.b16 %v4447
        %v4546 = vunpack.c.h.b16 %v4447
        %v4547 = vunpack.c.l.b16 %v4448
        %v4548 = vunpack.c.h.b16 %v4448
        %v4549 = vunpack.c.l.b16 %v4449
        %v4550 = vunpack.c.h.b16 %v4449
        %v4551 = vunpack.c.l.b16 %v4450
        %v4552 = vunpack.c.h.b16 %v4450
        %v4553 = vunpack.c.l.b16 %v4451
        %v4554 = vunpack.c.h.b16 %v4451
        %v4555 = vunpack.c.l.b16 %v4452
        %v4556 = vunpack.c.h.b16 %v4452
        %v4557 = vunpack.c.l.b16 %v4453
        %v4558 = vunpack.c.h.b16 %v4453
        %v4559 = vunpack.c.l.b16 %v4454
        %v4560 = vunpack.c.h.b16 %v4454
        %v4561 = vunpack.c.l.b16 %v4455
        %v4562 = vunpack.c.h.b16 %v4455
        %v4563 = vunpack.c.l.b16 %v4456
        %v4564 = vunpack.c.h.b16 %v4456
        %v4565 = vunpack.c.l.b16 %v4457
        %v4566 = vunpack.c.h.b16 %v4457
        %v4567 = vunpack.c.l.b16 %v4458
        %v4568 = vunpack.c.h.b16 %v4458
        %v4569 = vunpack.c.l.b16 %v4459
        %v4570 = vunpack.c.h.b16 %v4459
        %v4571 = vunpack.c.l.b16 %v4460
        %v4572 = vunpack.c.h.b16 %v4460
        %v4573 = vunpack.c.l.b16 %v4461
        %v4574 = vunpack.c.h.b16 %v4461
        %v4575 = vunpack.c.l.b16 %v4462
        %v4576 = vunpack.c.h.b16 %v4462
        %v4577 = vunpack.c.l.b16 %v4463
        %v4578 = vunpack.c.h.b16 %v4463
        %v4579 = vunpack.c.l.b16 %v4464
        %v4580 = vunpack.c.h.b16 %v4464
        %v4581 = vunpack.c.l.b16 %v4465
        %v4582 = vunpack.c.h.b16 %v4465
        %v4583 = vunpack.c.l.b16 %v4466
        %v4584 = vunpack.c.h.b16 %v4466
        %v4585 = vpack.c.b16 %v4525, %v4521
        %v4586 = vpack.c.b16 %v4526, %v4522
        %v4587 = vpack.c.b16 %v4527, %v4523
        %v4588 = vpack.c.b16 %v4528, %v4524
        %v4589 = vpack.c.b16 %v4533, %v4529
        %v4590 = vpack.c.b16 %v4534, %v4530
        %v4591 = vpack.c.b16 %v4535, %v4531
        %v4592 = vpack.c.b16 %v4536, %v4532
        %v4593 = vpack.c.b16 %v4541, %v4537
        %v4594 = vpack.c.b16 %v4542, %v4538
        %v4595 = vpack.c.b16 %v4543, %v4539
        %v4596 = vpack.c.b16 %v4544, %v4540
        %v4597 = vpack.c.b16 %v4549, %v4545
        %v4598 = vpack.c.b16 %v4550, %v4546
        %v4599 = vpack.c.b16 %v4551, %v4547
        %v4600 = vpack.c.b16 %v4552, %v4548
        %v4601 = vpack.c.b16 %v4557, %v4553
        %v4602 = vpack.c.b16 %v4558, %v4554
        %v4603 = vpack.c.b16 %v4559, %v4555
        %v4604 = vpack.c.b16 %v4560, %v4556
        %v4605 = vpack.c.b16 %v4565, %v4561
        %v4606 = vpack.c.b16 %v4566, %v4562
        %v4607 = vpack.c.b16 %v4567, %v4563
        %v4608 = vpack.c.b16 %v4568, %v4564
        %v4609 = vpack.c.b16 %v4573, %v4569
        %v4610 = vpack.c.b16 %v4574, %v4570
        %v4611 = vpack.c.b16 %v4575, %v4571
        %v4612 = vpack.c.b16 %v4576, %v4572
        %v4613 = vpack.c.b16 %v4581, %v4577
        %v4614 = vpack.c.b16 %v4582, %v4578
        %v4615 = vpack.c.b16 %v4583, %v4579
        %v4616 = vpack.c.b16 %v4584, %v4580
        %4649 = vmatprep.subr.bf16.mxu0 %v4614
        %4650 = vmatpush1.bf16.msra.mxu0 %v4613
        %4651 = vmatprep.subr.bf16.mxu0 %v4610
        %4652 = vmatpush1.bf16.msra.mxu0 %v4609
        %4653 = vmatprep.subr.bf16.mxu0 %v4606
        %4654 = vmatpush1.bf16.msra.mxu0 %v4605
        %4655 = vmatprep.subr.bf16.mxu0 %v4602
        %4656 = vmatpush1.bf16.msra.mxu0 %v4601
        %4657 = vmatprep.subr.bf16.mxu0 %v4598
        %4658 = vmatpush1.bf16.msra.mxu0 %v4597
        %4659 = vmatprep.subr.bf16.mxu0 %v4594
        %4660 = vmatpush1.bf16.msra.mxu0 %v4593
        %4661 = vmatprep.subr.bf16.mxu0 %v4590
        %4662 = vmatpush1.bf16.msra.mxu0 %v4589
        %4663 = vmatprep.subr.bf16.mxu0 %v4586
        %4664 = vmatpush1.bf16.msra.mxu0 %v4585
        %4665 = vmatprep.subr.bf16.mxu0 0
        %4666 = vmatpush2.bf16.msra.mxu0 0
        %4667 = vmatprep.subr.bf16.mxu0 0
        %4668 = vmatpush2.bf16.msra.mxu0 0
        %4669 = vmatprep.subr.bf16.mxu0 0
        %4670 = vmatpush2.bf16.msra.mxu0 0
        %4671 = vmatprep.subr.bf16.mxu0 0
        %4672 = vmatpush2.bf16.msra.mxu0 0
        %4673 = vmatprep.subr.bf16.mxu0 0
        %4674 = vmatpush2.bf16.msra.mxu0 0
        %4675 = vmatprep.subr.bf16.mxu0 0
        %4676 = vmatpush2.bf16.msra.mxu0 0
        %4677 = vmatprep.subr.bf16.mxu0 0
        %4678 = vmatpush2.bf16.msra.mxu0 0
        %4679 = vmatprep.subr.bf16.mxu0 0
        %4680 = vmatpush2.bf16.msra.mxu0 0
        %4681 = vmatprep.mubr.bf16.mxu0 0
        %4682 = vmatmul.mubr.bf16.gmra.mxu0 %v4427
        %v4683 = vpop.f32.mrf.mxu0
        %v4684 = vadd.f32 %v4472, %v4683
        %v4685 = vpop.f32.mrf.mxu0
        %v4686 = vadd.f32 %v4476, %v4685
        %v4687 = vpop.f32.mrf.mxu0
        %v4688 = vadd.f32 %v4472, %v4687
        %v4689 = vpop.f32.mrf.mxu0
        %v4690 = vadd.f32 %v4476, %v4689
        %4691 = vmatprep.mubr.bf16.mxu0 0
        %4692 = vmatmul.mubr.bf16.gmra.mxu0 %v4428
        %v4693 = vpop.f32.mrf.mxu0
        %v4694 = vadd.f32 %v4472, %v4693
        %v4695 = vpop.f32.mrf.mxu0
        %v4696 = vadd.f32 %v4476, %v4695
        %v4697 = vpop.f32.mrf.mxu0
        %v4698 = vadd.f32 %v4472, %v4697
        %v4699 = vpop.f32.mrf.mxu0
        %v4700 = vadd.f32 %v4476, %v4699
        %4701 = vmatprep.mubr.bf16.mxu0 0
        %4702 = vmatmul.mubr.bf16.gmra.mxu0 %v4429
        %v4703 = vpop.f32.mrf.mxu0
        %v4704 = vadd.f32 %v4472, %v4703
        %v4705 = vpop.f32.mrf.mxu0
        %v4706 = vadd.f32 %v4476, %v4705
        %v4707 = vpop.f32.mrf.mxu0
        %v4708 = vadd.f32 %v4472, %v4707
        %v4709 = vpop.f32.mrf.mxu0
        %v4710 = vadd.f32 %v4476, %v4709
        %4711 = vmatprep.mubr.bf16.mxu0 0
        %4712 = vmatmul.mubr.bf16.gmra.mxu0 %v4430
        %v4713 = vpop.f32.mrf.mxu0
        %v4714 = vadd.f32 %v4472, %v4713
        %v4715 = vpop.f32.mrf.mxu0
        %v4716 = vadd.f32 %v4476, %v4715
        %v4717 = vpop.f32.mrf.mxu0
        %v4718 = vadd.f32 %v4472, %v4717
        %v4719 = vpop.f32.mrf.mxu0
        %v4720 = vadd.f32 %v4476, %v4719
        %4721 = vmatprep.mubr.bf16.mxu0 0
        %4722 = vmatmul.mubr.bf16.gmra.mxu0 %v4431
        %v4723 = vpop.f32.mrf.mxu0
        %v4724 = vadd.f32 %v4472, %v4723
        %v4725 = vpop.f32.mrf.mxu0
        %v4726 = vadd.f32 %v4476, %v4725
        %v4727 = vpop.f32.mrf.mxu0
        %v4728 = vadd.f32 %v4472, %v4727
        %v4729 = vpop.f32.mrf.mxu0
        %v4730 = vadd.f32 %v4476, %v4729
        %4731 = vmatprep.mubr.bf16.mxu0 0
        %4732 = vmatmul.mubr.bf16.gmra.mxu0 %v4432
        %v4733 = vpop.f32.mrf.mxu0
        %v4734 = vadd.f32 %v4472, %v4733
        %v4735 = vpop.f32.mrf.mxu0
        %v4736 = vadd.f32 %v4476, %v4735
        %v4737 = vpop.f32.mrf.mxu0
        %v4738 = vadd.f32 %v4472, %v4737
        %v4739 = vpop.f32.mrf.mxu0
        %v4740 = vadd.f32 %v4476, %v4739
        %4741 = vmatprep.mubr.bf16.mxu0 0
        %4742 = vmatmul.mubr.bf16.gmra.mxu0 %v4433
        %v4743 = vpop.f32.mrf.mxu0
        %v4744 = vadd.f32 %v4472, %v4743
        %v4745 = vpop.f32.mrf.mxu0
        %v4746 = vadd.f32 %v4476, %v4745
        %v4747 = vpop.f32.mrf.mxu0
        %v4748 = vadd.f32 %v4472, %v4747
        %v4749 = vpop.f32.mrf.mxu0
        %v4750 = vadd.f32 %v4476, %v4749
        %4751 = vmatprep.mubr.bf16.mxu0 0
        %4752 = vmatmul.mubr.bf16.gmra.mxu0 %v4434
        %v4753 = vpop.f32.mrf.mxu0
        %v4754 = vadd.f32 %v4472, %v4753
        %v4755 = vpop.f32.mrf.mxu0
        %v4756 = vadd.f32 %v4476, %v4755
        %v4757 = vpop.f32.mrf.mxu0
        %v4758 = vadd.f32 %v4472, %v4757
        %v4759 = vpop.f32.mrf.mxu0
        %v4760 = vadd.f32 %v4476, %v4759
        %4761 = vdwg.mxu0
        %4762 = vmatprep.subr.bf16.mxu0 %v4616
        %4763 = vmatpush1.bf16.msra.mxu0 %v4615
        %4764 = vmatprep.subr.bf16.mxu0 %v4612
        %4765 = vmatpush1.bf16.msra.mxu0 %v4611
        %4766 = vmatprep.subr.bf16.mxu0 %v4608
        %4767 = vmatpush1.bf16.msra.mxu0 %v4607
        %4768 = vmatprep.subr.bf16.mxu0 %v4604
        %4769 = vmatpush1.bf16.msra.mxu0 %v4603
        %4770 = vmatprep.subr.bf16.mxu0 %v4600
        %4771 = vmatpush1.bf16.msra.mxu0 %v4599
        %4772 = vmatprep.subr.bf16.mxu0 %v4596
        %4773 = vmatpush1.bf16.msra.mxu0 %v4595
        %4774 = vmatprep.subr.bf16.mxu0 %v4592
        %4775 = vmatpush1.bf16.msra.mxu0 %v4591
        %4776 = vmatprep.subr.bf16.mxu0 %v4588
        %4777 = vmatpush1.bf16.msra.mxu0 %v4587
        %4778 = vmatprep.subr.bf16.mxu0 0
        %4779 = vmatpush2.bf16.msra.mxu0 0
        %4780 = vmatprep.subr.bf16.mxu0 0
        %4781 = vmatpush2.bf16.msra.mxu0 0
        %4782 = vmatprep.subr.bf16.mxu0 0
        %4783 = vmatpush2.bf16.msra.mxu0 0
        %4784 = vmatprep.subr.bf16.mxu0 0
        %4785 = vmatpush2.bf16.msra.mxu0 0
        %4786 = vmatprep.subr.bf16.mxu0 0
        %4787 = vmatpush2.bf16.msra.mxu0 0
        %4788 = vmatprep.subr.bf16.mxu0 0
        %4789 = vmatpush2.bf16.msra.mxu0 0
        %4790 = vmatprep.subr.bf16.mxu0 0
        %4791 = vmatpush2.bf16.msra.mxu0 0
        %4792 = vmatprep.subr.bf16.mxu0 0
        %4793 = vmatpush2.bf16.msra.mxu0 0
        %4794 = vmatprep.mubr.bf16.mxu0 0
        %4795 = vmatmul.mubr.bf16.gmra.mxu0 %v4427
        %v4796 = vpop.f32.mrf.mxu0
        %v4797 = vadd.f32 %v4480, %v4796
        %v4798 = vpop.f32.mrf.mxu0
        %v4799 = vadd.f32 %v4484, %v4798
        %v4800 = vpop.f32.mrf.mxu0
        %v4801 = vadd.f32 %v4480, %v4800
        %v4802 = vpop.f32.mrf.mxu0
        %v4803 = vadd.f32 %v4484, %v4802
        %4804 = vmatprep.mubr.bf16.mxu0 0
        %4805 = vmatmul.mubr.bf16.gmra.mxu0 %v4428
        %v4806 = vpop.f32.mrf.mxu0
        %v4807 = vadd.f32 %v4480, %v4806
        %v4808 = vpop.f32.mrf.mxu0
        %v4809 = vadd.f32 %v4484, %v4808
        %v4810 = vpop.f32.mrf.mxu0
        %v4811 = vadd.f32 %v4480, %v4810
        %v4812 = vpop.f32.mrf.mxu0
        %v4813 = vadd.f32 %v4484, %v4812
        %4814 = vmatprep.mubr.bf16.mxu0 0
        %4815 = vmatmul.mubr.bf16.gmra.mxu0 %v4429
        %v4816 = vpop.f32.mrf.mxu0
        %v4817 = vadd.f32 %v4480, %v4816
        %v4818 = vpop.f32.mrf.mxu0
        %v4819 = vadd.f32 %v4484, %v4818
        %v4820 = vpop.f32.mrf.mxu0
        %v4821 = vadd.f32 %v4480, %v4820
        %v4822 = vpop.f32.mrf.mxu0
        %v4823 = vadd.f32 %v4484, %v4822
        %4824 = vmatprep.mubr.bf16.mxu0 0
        %4825 = vmatmul.mubr.bf16.gmra.mxu0 %v4430
        %v4826 = vpop.f32.mrf.mxu0
        %v4827 = vadd.f32 %v4480, %v4826
        %v4828 = vpop.f32.mrf.mxu0
        %v4829 = vadd.f32 %v4484, %v4828
        %v4830 = vpop.f32.mrf.mxu0
        %v4831 = vadd.f32 %v4480, %v4830
        %v4832 = vpop.f32.mrf.mxu0
        %v4833 = vadd.f32 %v4484, %v4832
        %4834 = vmatprep.mubr.bf16.mxu0 0
        %4835 = vmatmul.mubr.bf16.gmra.mxu0 %v4431
        %v4836 = vpop.f32.mrf.mxu0
        %v4837 = vadd.f32 %v4480, %v4836
        %v4838 = vpop.f32.mrf.mxu0
        %v4839 = vadd.f32 %v4484, %v4838
        %v4840 = vpop.f32.mrf.mxu0
        %v4841 = vadd.f32 %v4480, %v4840
        %v4842 = vpop.f32.mrf.mxu0
        %v4843 = vadd.f32 %v4484, %v4842
        %4844 = vmatprep.mubr.bf16.mxu0 0
        %4845 = vmatmul.mubr.bf16.gmra.mxu0 %v4432
        %v4846 = vpop.f32.mrf.mxu0
        %v4847 = vadd.f32 %v4480, %v4846
        %v4848 = vpop.f32.mrf.mxu0
        %v4849 = vadd.f32 %v4484, %v4848
        %v4850 = vpop.f32.mrf.mxu0
        %v4851 = vadd.f32 %v4480, %v4850
        %v4852 = vpop.f32.mrf.mxu0
        %v4853 = vadd.f32 %v4484, %v4852
        %4854 = vmatprep.mubr.bf16.mxu0 0
        %4855 = vmatmul.mubr.bf16.gmra.mxu0 %v4433
        %v4856 = vpop.f32.mrf.mxu0
        %v4857 = vadd.f32 %v4480, %v4856
        %v4858 = vpop.f32.mrf.mxu0
        %v4859 = vadd.f32 %v4484, %v4858
        %v4860 = vpop.f32.mrf.mxu0
        %v4861 = vadd.f32 %v4480, %v4860
        %v4862 = vpop.f32.mrf.mxu0
        %v4863 = vadd.f32 %v4484, %v4862
        %4864 = vmatprep.mubr.bf16.mxu0 0
        %4865 = vmatmul.mubr.bf16.gmra.mxu0 %v4434
        %v4866 = vpop.f32.mrf.mxu0
        %v4867 = vadd.f32 %v4480, %v4866
        %v4868 = vpop.f32.mrf.mxu0
        %v4869 = vadd.f32 %v4484, %v4868
        %v4870 = vpop.f32.mrf.mxu0
        %v4871 = vadd.f32 %v4480, %v4870
        %v4872 = vpop.f32.mrf.mxu0
        %v4873 = vadd.f32 %v4484, %v4872
        %4874 = vdwg.mxu0
        %v4875 = vmul.f32 %v4684, 0.5
        %v4876 = vmul.f32 %v4686, 0.5
        %v4877 = vmul.f32 %v4797, 0.5
        %v4878 = vmul.f32 %v4799, 0.5
        %v4879 = vmul.f32 %v4688, 0.5
        %v4880 = vmul.f32 %v4690, 0.5
        %v4881 = vmul.f32 %v4801, 0.5
        %v4882 = vmul.f32 %v4803, 0.5
        %v4883 = vmul.f32 %v4694, 0.5
        %v4884 = vmul.f32 %v4696, 0.5
        %v4885 = vmul.f32 %v4807, 0.5
        %v4886 = vmul.f32 %v4809, 0.5
        %v4887 = vmul.f32 %v4698, 0.5
        %v4888 = vmul.f32 %v4700, 0.5
        %v4889 = vmul.f32 %v4811, 0.5
        %v4890 = vmul.f32 %v4813, 0.5
        %v4891 = vmul.f32 %v4704, 0.5
        %v4892 = vmul.f32 %v4706, 0.5
        %v4893 = vmul.f32 %v4817, 0.5
        %v4894 = vmul.f32 %v4819, 0.5
        %v4895 = vmul.f32 %v4708, 0.5
        %v4896 = vmul.f32 %v4710, 0.5
        %v4897 = vmul.f32 %v4821, 0.5
        %v4898 = vmul.f32 %v4823, 0.5
        %v4899 = vmul.f32 %v4714, 0.5
        %v4900 = vmul.f32 %v4716, 0.5
        %v4901 = vmul.f32 %v4827, 0.5
        %v4902 = vmul.f32 %v4829, 0.5
        %v4903 = vmul.f32 %v4718, 0.5
        %v4904 = vmul.f32 %v4720, 0.5
        %v4905 = vmul.f32 %v4831, 0.5
        %v4906 = vmul.f32 %v4833, 0.5
        %v4907 = vmul.f32 %v4724, 0.5
        %v4908 = vmul.f32 %v4726, 0.5
        %v4909 = vmul.f32 %v4837, 0.5
        %v4910 = vmul.f32 %v4839, 0.5
        %v4911 = vmul.f32 %v4728, 0.5
        %v4912 = vmul.f32 %v4730, 0.5
        %v4913 = vmul.f32 %v4841, 0.5
        %v4914 = vmul.f32 %v4843, 0.5
        %v4915 = vmul.f32 %v4734, 0.5
        %v4916 = vmul.f32 %v4736, 0.5
        %v4917 = vmul.f32 %v4847, 0.5
        %v4918 = vmul.f32 %v4849, 0.5
        %v4919 = vmul.f32 %v4738, 0.5
        %v4920 = vmul.f32 %v4740, 0.5
        %v4921 = vmul.f32 %v4851, 0.5
        %v4922 = vmul.f32 %v4853, 0.5
        %v4923 = vmul.f32 %v4744, 0.5
        %v4924 = vmul.f32 %v4746, 0.5
        %v4925 = vmul.f32 %v4857, 0.5
        %v4926 = vmul.f32 %v4859, 0.5
        %v4927 = vmul.f32 %v4748, 0.5
        %v4928 = vmul.f32 %v4750, 0.5
        %v4929 = vmul.f32 %v4861, 0.5
        %v4930 = vmul.f32 %v4863, 0.5
        %v4931 = vmul.f32 %v4754, 0.5
        %v4932 = vmul.f32 %v4756, 0.5
        %v4933 = vmul.f32 %v4867, 0.5
        %v4934 = vmul.f32 %v4869, 0.5
        %v4935 = vmul.f32 %v4758, 0.5
        %v4936 = vmul.f32 %v4760, 0.5
        %v4937 = vmul.f32 %v4871, 0.5
        %v4938 = vmul.f32 %v4873, 0.5
        %v4939 = vmul.f32 %v4684, 0.044715
        %v4940 = vmul.f32 %v4686, 0.044715
        %v4941 = vmul.f32 %v4797, 0.044715
        %v4942 = vmul.f32 %v4799, 0.044715
        %v4943 = vmul.f32 %v4688, 0.044715
        %v4944 = vmul.f32 %v4690, 0.044715
        %v4945 = vmul.f32 %v4801, 0.044715
        %v4946 = vmul.f32 %v4803, 0.044715
        %v4947 = vmul.f32 %v4694, 0.044715
        %v4948 = vmul.f32 %v4696, 0.044715
        %v4949 = vmul.f32 %v4807, 0.044715
        %v4950 = vmul.f32 %v4809, 0.044715
        %v4951 = vmul.f32 %v4698, 0.044715
        %v4952 = vmul.f32 %v4700, 0.044715
        %v4953 = vmul.f32 %v4811, 0.044715
        %v4954 = vmul.f32 %v4813, 0.044715
        %v4955 = vmul.f32 %v4704, 0.044715
        %v4956 = vmul.f32 %v4706, 0.044715
        %v4957 = vmul.f32 %v4817, 0.044715
        %v4958 = vmul.f32 %v4819, 0.044715
        %v4959 = vmul.f32 %v4708, 0.044715
        %v4960 = vmul.f32 %v4710, 0.044715
        %v4961 = vmul.f32 %v4821, 0.044715
        %v4962 = vmul.f32 %v4823, 0.044715
        %v4963 = vmul.f32 %v4714, 0.044715
        %v4964 = vmul.f32 %v4716, 0.044715
        %v4965 = vmul.f32 %v4827, 0.044715
        %v4966 = vmul.f32 %v4829, 0.044715
        %v4967 = vmul.f32 %v4718, 0.044715
        %v4968 = vmul.f32 %v4720, 0.044715
        %v4969 = vmul.f32 %v4831, 0.044715
        %v4970 = vmul.f32 %v4833, 0.044715
        %v4971 = vmul.f32 %v4724, 0.044715
        %v4972 = vmul.f32 %v4726, 0.044715
        %v4973 = vmul.f32 %v4837, 0.044715
        %v4974 = vmul.f32 %v4839, 0.044715
        %v4975 = vmul.f32 %v4728, 0.044715
        %v4976 = vmul.f32 %v4730, 0.044715
        %v4977 = vmul.f32 %v4841, 0.044715
        %v4978 = vmul.f32 %v4843, 0.044715
        %v4979 = vmul.f32 %v4734, 0.044715
        %v4980 = vmul.f32 %v4736, 0.044715
        %v4981 = vmul.f32 %v4847, 0.044715
        %v4982 = vmul.f32 %v4849, 0.044715
        %v4983 = vmul.f32 %v4738, 0.044715
        %v4984 = vmul.f32 %v4740, 0.044715
        %v4985 = vmul.f32 %v4851, 0.044715
        %v4986 = vmul.f32 %v4853, 0.044715
        %v4987 = vmul.f32 %v4744, 0.044715
        %v4988 = vmul.f32 %v4746, 0.044715
        %v4989 = vmul.f32 %v4857, 0.044715
        %v4990 = vmul.f32 %v4859, 0.044715
        %v4991 = vmul.f32 %v4748, 0.044715
        %v4992 = vmul.f32 %v4750, 0.044715
        %v4993 = vmul.f32 %v4861, 0.044715
        %v4994 = vmul.f32 %v4863, 0.044715
        %v4995 = vmul.f32 %v4754, 0.044715
        %v4996 = vmul.f32 %v4756, 0.044715
        %v4997 = vmul.f32 %v4867, 0.044715
        %v4998 = vmul.f32 %v4869, 0.044715
        %v4999 = vmul.f32 %v4758, 0.044715
        %v5000 = vmul.f32 %v4760, 0.044715
        %v5001 = vmul.f32 %v4871, 0.044715
        %v5002 = vmul.f32 %v4873, 0.044715
        %v5003 = vmul.f32 %v4939, %v4684
        %v5004 = vmul.f32 %v4940, %v4686
        %v5005 = vmul.f32 %v4941, %v4797
        %v5006 = vmul.f32 %v4942, %v4799
        %v5007 = vmul.f32 %v4943, %v4688
        %v5008 = vmul.f32 %v4944, %v4690
        %v5009 = vmul.f32 %v4945, %v4801
        %v5010 = vmul.f32 %v4946, %v4803
        %v5011 = vmul.f32 %v4947, %v4694
        %v5012 = vmul.f32 %v4948, %v4696
        %v5013 = vmul.f32 %v4949, %v4807
        %v5014 = vmul.f32 %v4950, %v4809
        %v5015 = vmul.f32 %v4951, %v4698
        %v5016 = vmul.f32 %v4952, %v4700
        %v5017 = vmul.f32 %v4953, %v4811
        %v5018 = vmul.f32 %v4954, %v4813
        %v5019 = vmul.f32 %v4955, %v4704
        %v5020 = vmul.f32 %v4956, %v4706
        %v5021 = vmul.f32 %v4957, %v4817
        %v5022 = vmul.f32 %v4958, %v4819
        %v5023 = vmul.f32 %v4959, %v4708
        %v5024 = vmul.f32 %v4960, %v4710
        %v5025 = vmul.f32 %v4961, %v4821
        %v5026 = vmul.f32 %v4962, %v4823
        %v5027 = vmul.f32 %v4963, %v4714
        %v5028 = vmul.f32 %v4964, %v4716
        %v5029 = vmul.f32 %v4965, %v4827
        %v5030 = vmul.f32 %v4966, %v4829
        %v5031 = vmul.f32 %v4967, %v4718
        %v5032 = vmul.f32 %v4968, %v4720
        %v5033 = vmul.f32 %v4969, %v4831
        %v5034 = vmul.f32 %v4970, %v4833
        %v5035 = vmul.f32 %v4971, %v4724
        %v5036 = vmul.f32 %v4972, %v4726
        %v5037 = vmul.f32 %v4973, %v4837
        %v5038 = vmul.f32 %v4974, %v4839
        %v5039 = vmul.f32 %v4975, %v4728
        %v5040 = vmul.f32 %v4976, %v4730
        %v5041 = vmul.f32 %v4977, %v4841
        %v5042 = vmul.f32 %v4978, %v4843
        %v5043 = vmul.f32 %v4979, %v4734
        %v5044 = vmul.f32 %v4980, %v4736
        %v5045 = vmul.f32 %v4981, %v4847
        %v5046 = vmul.f32 %v4982, %v4849
        %v5047 = vmul.f32 %v4983, %v4738
        %v5048 = vmul.f32 %v4984, %v4740
        %v5049 = vmul.f32 %v4985, %v4851
        %v5050 = vmul.f32 %v4986, %v4853
        %v5051 = vmul.f32 %v4987, %v4744
        %v5052 = vmul.f32 %v4988, %v4746
        %v5053 = vmul.f32 %v4989, %v4857
        %v5054 = vmul.f32 %v4990, %v4859
        %v5055 = vmul.f32 %v4991, %v4748
        %v5056 = vmul.f32 %v4992, %v4750
        %v5057 = vmul.f32 %v4993, %v4861
        %v5058 = vmul.f32 %v4994, %v4863
        %v5059 = vmul.f32 %v4995, %v4754
        %v5060 = vmul.f32 %v4996, %v4756
        %v5061 = vmul.f32 %v4997, %v4867
        %v5062 = vmul.f32 %v4998, %v4869
        %v5063 = vmul.f32 %v4999, %v4758
        %v5064 = vmul.f32 %v5000, %v4760
        %v5065 = vmul.f32 %v5001, %v4871
        %v5066 = vmul.f32 %v5002, %v4873
        %v5067 = vmul.f32 %v5003, %v4684
        %v5068 = vmul.f32 %v5004, %v4686
        %v5069 = vmul.f32 %v5005, %v4797
        %v5070 = vmul.f32 %v5006, %v4799
        %v5071 = vmul.f32 %v5007, %v4688
        %v5072 = vmul.f32 %v5008, %v4690
        %v5073 = vmul.f32 %v5009, %v4801
        %v5074 = vmul.f32 %v5010, %v4803
        %v5075 = vmul.f32 %v5011, %v4694
        %v5076 = vmul.f32 %v5012, %v4696
        %v5077 = vmul.f32 %v5013, %v4807
        %v5078 = vmul.f32 %v5014, %v4809
        %v5079 = vmul.f32 %v5015, %v4698
        %v5080 = vmul.f32 %v5016, %v4700
        %v5081 = vmul.f32 %v5017, %v4811
        %v5082 = vmul.f32 %v5018, %v4813
        %v5083 = vmul.f32 %v5019, %v4704
        %v5084 = vmul.f32 %v5020, %v4706
        %v5085 = vmul.f32 %v5021, %v4817
        %v5086 = vmul.f32 %v5022, %v4819
        %v5087 = vmul.f32 %v5023, %v4708
        %v5088 = vmul.f32 %v5024, %v4710
        %v5089 = vmul.f32 %v5025, %v4821
        %v5090 = vmul.f32 %v5026, %v4823
        %v5091 = vmul.f32 %v5027, %v4714
        %v5092 = vmul.f32 %v5028, %v4716
        %v5093 = vmul.f32 %v5029, %v4827
        %v5094 = vmul.f32 %v5030, %v4829
        %v5095 = vmul.f32 %v5031, %v4718
        %v5096 = vmul.f32 %v5032, %v4720
        %v5097 = vmul.f32 %v5033, %v4831
        %v5098 = vmul.f32 %v5034, %v4833
        %v5099 = vmul.f32 %v5035, %v4724
        %v5100 = vmul.f32 %v5036, %v4726
        %v5101 = vmul.f32 %v5037, %v4837
        %v5102 = vmul.f32 %v5038, %v4839
        %v5103 = vmul.f32 %v5039, %v4728
        %v5104 = vmul.f32 %v5040, %v4730
        %v5105 = vmul.f32 %v5041, %v4841
        %v5106 = vmul.f32 %v5042, %v4843
        %v5107 = vmul.f32 %v5043, %v4734
        %v5108 = vmul.f32 %v5044, %v4736
        %v5109 = vmul.f32 %v5045, %v4847
        %v5110 = vmul.f32 %v5046, %v4849
        %v5111 = vmul.f32 %v5047, %v4738
        %v5112 = vmul.f32 %v5048, %v4740
        %v5113 = vmul.f32 %v5049, %v4851
        %v5114 = vmul.f32 %v5050, %v4853
        %v5115 = vmul.f32 %v5051, %v4744
        %v5116 = vmul.f32 %v5052, %v4746
        %v5117 = vmul.f32 %v5053, %v4857
        %v5118 = vmul.f32 %v5054, %v4859
        %v5119 = vmul.f32 %v5055, %v4748
        %v5120 = vmul.f32 %v5056, %v4750
        %v5121 = vmul.f32 %v5057, %v4861
        %v5122 = vmul.f32 %v5058, %v4863
        %v5123 = vmul.f32 %v5059, %v4754
        %v5124 = vmul.f32 %v5060, %v4756
        %v5125 = vmul.f32 %v5061, %v4867
        %v5126 = vmul.f32 %v5062, %v4869
        %v5127 = vmul.f32 %v5063, %v4758
        %v5128 = vmul.f32 %v5064, %v4760
        %v5129 = vmul.f32 %v5065, %v4871
        %v5130 = vmul.f32 %v5066, %v4873
        %v5131 = vadd.f32 %v4684, %v5067
        %v5132 = vadd.f32 %v4686, %v5068
        %v5133 = vadd.f32 %v4797, %v5069
        %v5134 = vadd.f32 %v4799, %v5070
        %v5135 = vadd.f32 %v4688, %v5071
        %v5136 = vadd.f32 %v4690, %v5072
        %v5137 = vadd.f32 %v4801, %v5073
        %v5138 = vadd.f32 %v4803, %v5074
        %v5139 = vadd.f32 %v4694, %v5075
        %v5140 = vadd.f32 %v4696, %v5076
        %v5141 = vadd.f32 %v4807, %v5077
        %v5142 = vadd.f32 %v4809, %v5078
        %v5143 = vadd.f32 %v4698, %v5079
        %v5144 = vadd.f32 %v4700, %v5080
        %v5145 = vadd.f32 %v4811, %v5081
        %v5146 = vadd.f32 %v4813, %v5082
        %v5147 = vadd.f32 %v4704, %v5083
        %v5148 = vadd.f32 %v4706, %v5084
        %v5149 = vadd.f32 %v4817, %v5085
        %v5150 = vadd.f32 %v4819, %v5086
        %v5151 = vadd.f32 %v4708, %v5087
        %v5152 = vadd.f32 %v4710, %v5088
        %v5153 = vadd.f32 %v4821, %v5089
        %v5154 = vadd.f32 %v4823, %v5090
        %v5155 = vadd.f32 %v4714, %v5091
        %v5156 = vadd.f32 %v4716, %v5092
        %v5157 = vadd.f32 %v4827, %v5093
        %v5158 = vadd.f32 %v4829, %v5094
        %v5159 = vadd.f32 %v4718, %v5095
        %v5160 = vadd.f32 %v4720, %v5096
        %v5161 = vadd.f32 %v4831, %v5097
        %v5162 = vadd.f32 %v4833, %v5098
        %v5163 = vadd.f32 %v4724, %v5099
        %v5164 = vadd.f32 %v4726, %v5100
        %v5165 = vadd.f32 %v4837, %v5101
        %v5166 = vadd.f32 %v4839, %v5102
        %v5167 = vadd.f32 %v4728, %v5103
        %v5168 = vadd.f32 %v4730, %v5104
        %v5169 = vadd.f32 %v4841, %v5105
        %v5170 = vadd.f32 %v4843, %v5106
        %v5171 = vadd.f32 %v4734, %v5107
        %v5172 = vadd.f32 %v4736, %v5108
        %v5173 = vadd.f32 %v4847, %v5109
        %v5174 = vadd.f32 %v4849, %v5110
        %v5175 = vadd.f32 %v4738, %v5111
        %v5176 = vadd.f32 %v4740, %v5112
        %v5177 = vadd.f32 %v4851, %v5113
        %v5178 = vadd.f32 %v4853, %v5114
        %v5179 = vadd.f32 %v4744, %v5115
        %v5180 = vadd.f32 %v4746, %v5116
        %v5181 = vadd.f32 %v4857, %v5117
        %v5182 = vadd.f32 %v4859, %v5118
        %v5183 = vadd.f32 %v4748, %v5119
        %v5184 = vadd.f32 %v4750, %v5120
        %v5185 = vadd.f32 %v4861, %v5121
        %v5186 = vadd.f32 %v4863, %v5122
        %v5187 = vadd.f32 %v4754, %v5123
        %v5188 = vadd.f32 %v4756, %v5124
        %v5189 = vadd.f32 %v4867, %v5125
        %v5190 = vadd.f32 %v4869, %v5126
        %v5191 = vadd.f32 %v4758, %v5127
        %v5192 = vadd.f32 %v4760, %v5128
        %v5193 = vadd.f32 %v4871, %v5129
        %v5194 = vadd.f32 %v4873, %v5130
        %v5195 = vmul.f32 %v5131, 0.7978846
        %v5196 = vmul.f32 %v5132, 0.7978846
        %v5197 = vmul.f32 %v5133, 0.7978846
        %v5198 = vmul.f32 %v5134, 0.7978846
        %v5199 = vmul.f32 %v5135, 0.7978846
        %v5200 = vmul.f32 %v5136, 0.7978846
        %v5201 = vmul.f32 %v5137, 0.7978846
        %v5202 = vmul.f32 %v5138, 0.7978846
        %v5203 = vmul.f32 %v5139, 0.7978846
        %v5204 = vmul.f32 %v5140, 0.7978846
        %v5205 = vmul.f32 %v5141, 0.7978846
        %v5206 = vmul.f32 %v5142, 0.7978846
        %v5207 = vmul.f32 %v5143, 0.7978846
        %v5208 = vmul.f32 %v5144, 0.7978846
        %v5209 = vmul.f32 %v5145, 0.7978846
        %v5210 = vmul.f32 %v5146, 0.7978846
        %v5211 = vmul.f32 %v5147, 0.7978846
        %v5212 = vmul.f32 %v5148, 0.7978846
        %v5213 = vmul.f32 %v5149, 0.7978846
        %v5214 = vmul.f32 %v5150, 0.7978846
        %v5215 = vmul.f32 %v5151, 0.7978846
        %v5216 = vmul.f32 %v5152, 0.7978846
        %v5217 = vmul.f32 %v5153, 0.7978846
        %v5218 = vmul.f32 %v5154, 0.7978846
        %v5219 = vmul.f32 %v5155, 0.7978846
        %v5220 = vmul.f32 %v5156, 0.7978846
        %v5221 = vmul.f32 %v5157, 0.7978846
        %v5222 = vmul.f32 %v5158, 0.7978846
        %v5223 = vmul.f32 %v5159, 0.7978846
        %v5224 = vmul.f32 %v5160, 0.7978846
        %v5225 = vmul.f32 %v5161, 0.7978846
        %v5226 = vmul.f32 %v5162, 0.7978846
        %v5227 = vmul.f32 %v5163, 0.7978846
        %v5228 = vmul.f32 %v5164, 0.7978846
        %v5229 = vmul.f32 %v5165, 0.7978846
        %v5230 = vmul.f32 %v5166, 0.7978846
        %v5231 = vmul.f32 %v5167, 0.7978846
        %v5232 = vmul.f32 %v5168, 0.7978846
        %v5233 = vmul.f32 %v5169, 0.7978846
        %v5234 = vmul.f32 %v5170, 0.7978846
        %v5235 = vmul.f32 %v5171, 0.7978846
        %v5236 = vmul.f32 %v5172, 0.7978846
        %v5237 = vmul.f32 %v5173, 0.7978846
        %v5238 = vmul.f32 %v5174, 0.7978846
        %v5239 = vmul.f32 %v5175, 0.7978846
        %v5240 = vmul.f32 %v5176, 0.7978846
        %v5241 = vmul.f32 %v5177, 0.7978846
        %v5242 = vmul.f32 %v5178, 0.7978846
        %v5243 = vmul.f32 %v5179, 0.7978846
        %v5244 = vmul.f32 %v5180, 0.7978846
        %v5245 = vmul.f32 %v5181, 0.7978846
        %v5246 = vmul.f32 %v5182, 0.7978846
        %v5247 = vmul.f32 %v5183, 0.7978846
        %v5248 = vmul.f32 %v5184, 0.7978846
        %v5249 = vmul.f32 %v5185, 0.7978846
        %v5250 = vmul.f32 %v5186, 0.7978846
        %v5251 = vmul.f32 %v5187, 0.7978846
        %v5252 = vmul.f32 %v5188, 0.7978846
        %v5253 = vmul.f32 %v5189, 0.7978846
        %v5254 = vmul.f32 %v5190, 0.7978846
        %v5255 = vmul.f32 %v5191, 0.7978846
        %v5256 = vmul.f32 %v5192, 0.7978846
        %v5257 = vmul.f32 %v5193, 0.7978846
        %v5258 = vmul.f32 %v5194, 0.7978846
        %v5259 = vtanh.pop %v5195
        %v5260 = vtanh.pop %v5196
        %v5261 = vtanh.pop %v5197
        %v5262 = vtanh.pop %v5198
        %v5263 = vtanh.pop %v5199
        %v5264 = vtanh.pop %v5200
        %v5265 = vtanh.pop %v5201
        %v5266 = vtanh.pop %v5202
        %v5267 = vtanh.pop %v5203
        %v5268 = vtanh.pop %v5204
        %v5269 = vtanh.pop %v5205
        %v5270 = vtanh.pop %v5206
        %v5271 = vtanh.pop %v5207
        %v5272 = vtanh.pop %v5208
        %v5273 = vtanh.pop %v5209
        %v5274 = vtanh.pop %v5210
        %v5275 = vtanh.pop %v5211
        %v5276 = vtanh.pop %v5212
        %v5277 = vtanh.pop %v5213
        %v5278 = vtanh.pop %v5214
        %v5279 = vtanh.pop %v5215
        %v5280 = vtanh.pop %v5216
        %v5281 = vtanh.pop %v5217
        %v5282 = vtanh.pop %v5218
        %v5283 = vtanh.pop %v5219
        %v5284 = vtanh.pop %v5220
        %v5285 = vtanh.pop %v5221
        %v5286 = vtanh.pop %v5222
        %v5287 = vtanh.pop %v5223
        %v5288 = vtanh.pop %v5224
        %v5289 = vtanh.pop %v5225
        %v5290 = vtanh.pop %v5226
        %v5291 = vtanh.pop %v5227
        %v5292 = vtanh.pop %v5228
        %v5293 = vtanh.pop %v5229
        %v5294 = vtanh.pop %v5230
        %v5295 = vtanh.pop %v5231
        %v5296 = vtanh.pop %v5232
        %v5297 = vtanh.pop %v5233
        %v5298 = vtanh.pop %v5234
        %v5299 = vtanh.pop %v5235
        %v5300 = vtanh.pop %v5236
        %v5301 = vtanh.pop %v5237
        %v5302 = vtanh.pop %v5238
        %v5303 = vtanh.pop %v5239
        %v5304 = vtanh.pop %v5240
        %v5305 = vtanh.pop %v5241
        %v5306 = vtanh.pop %v5242
        %v5307 = vtanh.pop %v5243
        %v5308 = vtanh.pop %v5244
        %v5309 = vtanh.pop %v5245
        %v5310 = vtanh.pop %v5246
        %v5311 = vtanh.pop %v5247
        %v5312 = vtanh.pop %v5248
        %v5313 = vtanh.pop %v5249
        %v5314 = vtanh.pop %v5250
        %v5315 = vtanh.pop %v5251
        %v5316 = vtanh.pop %v5252
        %v5317 = vtanh.pop %v5253
        %v5318 = vtanh.pop %v5254
        %v5319 = vtanh.pop %v5255
        %v5320 = vtanh.pop %v5256
        %v5321 = vtanh.pop %v5257
        %v5322 = vtanh.pop %v5258
        %v5323 = vadd.f32 %v5259, 1.0
        %v5324 = vadd.f32 %v5260, 1.0
        %v5325 = vadd.f32 %v5261, 1.0
        %v5326 = vadd.f32 %v5262, 1.0
        %v5327 = vadd.f32 %v5263, 1.0
        %v5328 = vadd.f32 %v5264, 1.0
        %v5329 = vadd.f32 %v5265, 1.0
        %v5330 = vadd.f32 %v5266, 1.0
        %v5331 = vadd.f32 %v5267, 1.0
        %v5332 = vadd.f32 %v5268, 1.0
        %v5333 = vadd.f32 %v5269, 1.0
        %v5334 = vadd.f32 %v5270, 1.0
        %v5335 = vadd.f32 %v5271, 1.0
        %v5336 = vadd.f32 %v5272, 1.0
        %v5337 = vadd.f32 %v5273, 1.0
        %v5338 = vadd.f32 %v5274, 1.0
        %v5339 = vadd.f32 %v5275, 1.0
        %v5340 = vadd.f32 %v5276, 1.0
        %v5341 = vadd.f32 %v5277, 1.0
        %v5342 = vadd.f32 %v5278, 1.0
        %v5343 = vadd.f32 %v5279, 1.0
        %v5344 = vadd.f32 %v5280, 1.0
        %v5345 = vadd.f32 %v5281, 1.0
        %v5346 = vadd.f32 %v5282, 1.0
        %v5347 = vadd.f32 %v5283, 1.0
        %v5348 = vadd.f32 %v5284, 1.0
        %v5349 = vadd.f32 %v5285, 1.0
        %v5350 = vadd.f32 %v5286, 1.0
        %v5351 = vadd.f32 %v5287, 1.0
        %v5352 = vadd.f32 %v5288, 1.0
        %v5353 = vadd.f32 %v5289, 1.0
        %v5354 = vadd.f32 %v5290, 1.0
        %v5355 = vadd.f32 %v5291, 1.0
        %v5356 = vadd.f32 %v5292, 1.0
        %v5357 = vadd.f32 %v5293, 1.0
        %v5358 = vadd.f32 %v5294, 1.0
        %v5359 = vadd.f32 %v5295, 1.0
        %v5360 = vadd.f32 %v5296, 1.0
        %v5361 = vadd.f32 %v5297, 1.0
        %v5362 = vadd.f32 %v5298, 1.0
        %v5363 = vadd.f32 %v5299, 1.0
        %v5364 = vadd.f32 %v5300, 1.0
        %v5365 = vadd.f32 %v5301, 1.0
        %v5366 = vadd.f32 %v5302, 1.0
        %v5367 = vadd.f32 %v5303, 1.0
        %v5368 = vadd.f32 %v5304, 1.0
        %v5369 = vadd.f32 %v5305, 1.0
        %v5370 = vadd.f32 %v5306, 1.0
        %v5371 = vadd.f32 %v5307, 1.0
        %v5372 = vadd.f32 %v5308, 1.0
        %v5373 = vadd.f32 %v5309, 1.0
        %v5374 = vadd.f32 %v5310, 1.0
        %v5375 = vadd.f32 %v5311, 1.0
        %v5376 = vadd.f32 %v5312, 1.0
        %v5377 = vadd.f32 %v5313, 1.0
        %v5378 = vadd.f32 %v5314, 1.0
        %v5379 = vadd.f32 %v5315, 1.0
        %v5380 = vadd.f32 %v5316, 1.0
        %v5381 = vadd.f32 %v5317, 1.0
        %v5382 = vadd.f32 %v5318, 1.0
        %v5383 = vadd.f32 %v5319, 1.0
        %v5384 = vadd.f32 %v5320, 1.0
        %v5385 = vadd.f32 %v5321, 1.0
        %v5386 = vadd.f32 %v5322, 1.0
        %v5387 = vmul.f32 %v4875, %v5323
        %v5388 = vmul.f32 %v4876, %v5324
        %v5389 = vmul.f32 %v4877, %v5325
        %v5390 = vmul.f32 %v4878, %v5326
        %v5391 = vmul.f32 %v4879, %v5327
        %v5392 = vmul.f32 %v4880, %v5328
        %v5393 = vmul.f32 %v4881, %v5329
        %v5394 = vmul.f32 %v4882, %v5330
        %v5395 = vmul.f32 %v4883, %v5331
        %v5396 = vmul.f32 %v4884, %v5332
        %v5397 = vmul.f32 %v4885, %v5333
        %v5398 = vmul.f32 %v4886, %v5334
        %v5399 = vmul.f32 %v4887, %v5335
        %v5400 = vmul.f32 %v4888, %v5336
        %v5401 = vmul.f32 %v4889, %v5337
        %v5402 = vmul.f32 %v4890, %v5338
        %v5403 = vmul.f32 %v4891, %v5339
        %v5404 = vmul.f32 %v4892, %v5340
        %v5405 = vmul.f32 %v4893, %v5341
        %v5406 = vmul.f32 %v4894, %v5342
        %v5407 = vmul.f32 %v4895, %v5343
        %v5408 = vmul.f32 %v4896, %v5344
        %v5409 = vmul.f32 %v4897, %v5345
        %v5410 = vmul.f32 %v4898, %v5346
        %v5411 = vmul.f32 %v4899, %v5347
        %v5412 = vmul.f32 %v4900, %v5348
        %v5413 = vmul.f32 %v4901, %v5349
        %v5414 = vmul.f32 %v4902, %v5350
        %v5415 = vmul.f32 %v4903, %v5351
        %v5416 = vmul.f32 %v4904, %v5352
        %v5417 = vmul.f32 %v4905, %v5353
        %v5418 = vmul.f32 %v4906, %v5354
        %v5419 = vmul.f32 %v4907, %v5355
        %v5420 = vmul.f32 %v4908, %v5356
        %v5421 = vmul.f32 %v4909, %v5357
        %v5422 = vmul.f32 %v4910, %v5358
        %v5423 = vmul.f32 %v4911, %v5359
        %v5424 = vmul.f32 %v4912, %v5360
        %v5425 = vmul.f32 %v4913, %v5361
        %v5426 = vmul.f32 %v4914, %v5362
        %v5427 = vmul.f32 %v4915, %v5363
        %v5428 = vmul.f32 %v4916, %v5364
        %v5429 = vmul.f32 %v4917, %v5365
        %v5430 = vmul.f32 %v4918, %v5366
        %v5431 = vmul.f32 %v4919, %v5367
        %v5432 = vmul.f32 %v4920, %v5368
        %v5433 = vmul.f32 %v4921, %v5369
        %v5434 = vmul.f32 %v4922, %v5370
        %v5435 = vmul.f32 %v4923, %v5371
        %v5436 = vmul.f32 %v4924, %v5372
        %v5437 = vmul.f32 %v4925, %v5373
        %v5438 = vmul.f32 %v4926, %v5374
        %v5439 = vmul.f32 %v4927, %v5375
        %v5440 = vmul.f32 %v4928, %v5376
        %v5441 = vmul.f32 %v4929, %v5377
        %v5442 = vmul.f32 %v4930, %v5378
        %v5443 = vmul.f32 %v4931, %v5379
        %v5444 = vmul.f32 %v4932, %v5380
        %v5445 = vmul.f32 %v4933, %v5381
        %v5446 = vmul.f32 %v4934, %v5382
        %v5447 = vmul.f32 %v4935, %v5383
        %v5448 = vmul.f32 %v4936, %v5384
        %v5449 = vmul.f32 %v4937, %v5385
        %v5450 = vmul.f32 %v4938, %v5386
        %v5451 = vld [vmem:[%s11] sm:$0xf]
        %v5452 = vld [vmem:[%s12] sm:$0xf]
        %v5453 = vadd.f32 %v5387, %v5388
        %v5454 = vadd.f32 %v5453, %v5389
        %v5455 = vadd.f32 %v5454, %v5390
        %5456 = vadd.xlane.f32.xlu0 %v5455
        %v5457 = vpop.xlane.xlu0 %5456
        %v5458 = vadd.f32 %v5391, %v5392
        %v5459 = vadd.f32 %v5458, %v5393
        %v5460 = vadd.f32 %v5459, %v5394
        %5461 = vadd.xlane.f32.xlu0 %v5460
        %v5462 = vpop.xlane.xlu0 %5461
        %v5463 = vadd.f32 %v5395, %v5396
        %v5464 = vadd.f32 %v5463, %v5397
        %v5465 = vadd.f32 %v5464, %v5398
        %5466 = vadd.xlane.f32.xlu0 %v5465
        %v5467 = vpop.xlane.xlu0 %5466
        %v5468 = vadd.f32 %v5399, %v5400
        %v5469 = vadd.f32 %v5468, %v5401
        %v5470 = vadd.f32 %v5469, %v5402
        %5471 = vadd.xlane.f32.xlu0 %v5470
        %v5472 = vpop.xlane.xlu0 %5471
        %v5473 = vadd.f32 %v5403, %v5404
        %v5474 = vadd.f32 %v5473, %v5405
        %v5475 = vadd.f32 %v5474, %v5406
        %5476 = vadd.xlane.f32.xlu0 %v5475
        %v5477 = vpop.xlane.xlu0 %5476
        %v5478 = vadd.f32 %v5407, %v5408
        %v5479 = vadd.f32 %v5478, %v5409
        %v5480 = vadd.f32 %v5479, %v5410
        %5481 = vadd.xlane.f32.xlu0 %v5480
        %v5482 = vpop.xlane.xlu0 %5481
        %v5483 = vadd.f32 %v5411, %v5412
        %v5484 = vadd.f32 %v5483, %v5413
        %v5485 = vadd.f32 %v5484, %v5414
        %5486 = vadd.xlane.f32.xlu0 %v5485
        %v5487 = vpop.xlane.xlu0 %5486
        %v5488 = vadd.f32 %v5415, %v5416
        %v5489 = vadd.f32 %v5488, %v5417
        %v5490 = vadd.f32 %v5489, %v5418
        %5491 = vadd.xlane.f32.xlu0 %v5490
        %v5492 = vpop.xlane.xlu0 %5491
        %v5493 = vadd.f32 %v5419, %v5420
        %v5494 = vadd.f32 %v5493, %v5421
        %v5495 = vadd.f32 %v5494, %v5422
        %5496 = vadd.xlane.f32.xlu0 %v5495
        %v5497 = vpop.xlane.xlu0 %5496
        %v5498 = vadd.f32 %v5423, %v5424
        %v5499 = vadd.f32 %v5498, %v5425
        %v5500 = vadd.f32 %v5499, %v5426
        %5501 = vadd.xlane.f32.xlu0 %v5500
        %v5502 = vpop.xlane.xlu0 %5501
        %v5503 = vadd.f32 %v5427, %v5428
        %v5504 = vadd.f32 %v5503, %v5429
        %v5505 = vadd.f32 %v5504, %v5430
        %5506 = vadd.xlane.f32.xlu0 %v5505
        %v5507 = vpop.xlane.xlu0 %5506
        %v5508 = vadd.f32 %v5431, %v5432
        %v5509 = vadd.f32 %v5508, %v5433
        %v5510 = vadd.f32 %v5509, %v5434
        %5511 = vadd.xlane.f32.xlu0 %v5510
        %v5512 = vpop.xlane.xlu0 %5511
        %v5513 = vadd.f32 %v5435, %v5436
        %v5514 = vadd.f32 %v5513, %v5437
        %v5515 = vadd.f32 %v5514, %v5438
        %5516 = vadd.xlane.f32.xlu0 %v5515
        %v5517 = vpop.xlane.xlu0 %5516
        %v5518 = vadd.f32 %v5439, %v5440
        %v5519 = vadd.f32 %v5518, %v5441
        %v5520 = vadd.f32 %v5519, %v5442
        %5521 = vadd.xlane.f32.xlu0 %v5520
        %v5522 = vpop.xlane.xlu0 %5521
        %v5523 = vadd.f32 %v5443, %v5444
        %v5524 = vadd.f32 %v5523, %v5445
        %v5525 = vadd.f32 %v5524, %v5446
        %5526 = vadd.xlane.f32.xlu0 %v5525
        %v5527 = vpop.xlane.xlu0 %5526
        %v5528 = vadd.f32 %v5447, %v5448
        %v5529 = vadd.f32 %v5528, %v5449
        %v5530 = vadd.f32 %v5529, %v5450
        %5531 = vadd.xlane.f32.xlu0 %v5530
        %v5532 = vpop.xlane.xlu0 %5531
        %v5533 = vrcp.pop 512.0
        %v5534 = vmul.f32 %v5457, %v5533
        %v5535 = vmul.f32 %v5462, %v5533
        %v5536 = vmul.f32 %v5467, %v5533
        %v5537 = vmul.f32 %v5472, %v5533
        %v5538 = vmul.f32 %v5477, %v5533
        %v5539 = vmul.f32 %v5482, %v5533
        %v5540 = vmul.f32 %v5487, %v5533
        %v5541 = vmul.f32 %v5492, %v5533
        %v5542 = vmul.f32 %v5497, %v5533
        %v5543 = vmul.f32 %v5502, %v5533
        %v5544 = vmul.f32 %v5507, %v5533
        %v5545 = vmul.f32 %v5512, %v5533
        %v5546 = vmul.f32 %v5517, %v5533
        %v5547 = vmul.f32 %v5522, %v5533
        %v5548 = vmul.f32 %v5527, %v5533
        %v5549 = vmul.f32 %v5532, %v5533
        %v5550 = vsub.f32 %v5387, %v5534
        %v5551 = vsub.f32 %v5388, %v5534
        %v5552 = vsub.f32 %v5389, %v5534
        %v5553 = vsub.f32 %v5390, %v5534
        %v5554 = vsub.f32 %v5391, %v5535
        %v5555 = vsub.f32 %v5392, %v5535
        %v5556 = vsub.f32 %v5393, %v5535
        %v5557 = vsub.f32 %v5394, %v5535
        %v5558 = vsub.f32 %v5395, %v5536
        %v5559 = vsub.f32 %v5396, %v5536
        %v5560 = vsub.f32 %v5397, %v5536
        %v5561 = vsub.f32 %v5398, %v5536
        %v5562 = vsub.f32 %v5399, %v5537
        %v5563 = vsub.f32 %v5400, %v5537
        %v5564 = vsub.f32 %v5401, %v5537
        %v5565 = vsub.f32 %v5402, %v5537
        %v5566 = vsub.f32 %v5403, %v5538
        %v5567 = vsub.f32 %v5404, %v5538
        %v5568 = vsub.f32 %v5405, %v5538
        %v5569 = vsub.f32 %v5406, %v5538
        %v5570 = vsub.f32 %v5407, %v5539
        %v5571 = vsub.f32 %v5408, %v5539
        %v5572 = vsub.f32 %v5409, %v5539
        %v5573 = vsub.f32 %v5410, %v5539
        %v5574 = vsub.f32 %v5411, %v5540
        %v5575 = vsub.f32 %v5412, %v5540
        %v5576 = vsub.f32 %v5413, %v5540
        %v5577 = vsub.f32 %v5414, %v5540
        %v5578 = vsub.f32 %v5415, %v5541
        %v5579 = vsub.f32 %v5416, %v5541
        %v5580 = vsub.f32 %v5417, %v5541
        %v5581 = vsub.f32 %v5418, %v5541
        %v5582 = vsub.f32 %v5419, %v5542
        %v5583 = vsub.f32 %v5420, %v5542
        %v5584 = vsub.f32 %v5421, %v5542
        %v5585 = vsub.f32 %v5422, %v5542
        %v5586 = vsub.f32 %v5423, %v5543
        %v5587 = vsub.f32 %v5424, %v5543
        %v5588 = vsub.f32 %v5425, %v5543
        %v5589 = vsub.f32 %v5426, %v5543
        %v5590 = vsub.f32 %v5427, %v5544
        %v5591 = vsub.f32 %v5428, %v5544
        %v5592 = vsub.f32 %v5429, %v5544
        %v5593 = vsub.f32 %v5430, %v5544
        %v5594 = vsub.f32 %v5431, %v5545
        %v5595 = vsub.f32 %v5432, %v5545
        %v5596 = vsub.f32 %v5433, %v5545
        %v5597 = vsub.f32 %v5434, %v5545
        %v5598 = vsub.f32 %v5435, %v5546
        %v5599 = vsub.f32 %v5436, %v5546
        %v5600 = vsub.f32 %v5437, %v5546
        %v5601 = vsub.f32 %v5438, %v5546
        %v5602 = vsub.f32 %v5439, %v5547
        %v5603 = vsub.f32 %v5440, %v5547
        %v5604 = vsub.f32 %v5441, %v5547
        %v5605 = vsub.f32 %v5442, %v5547
        %v5606 = vsub.f32 %v5443, %v5548
        %v5607 = vsub.f32 %v5444, %v5548
        %v5608 = vsub.f32 %v5445, %v5548
        %v5609 = vsub.f32 %v5446, %v5548
        %v5610 = vsub.f32 %v5447, %v5549
        %v5611 = vsub.f32 %v5448, %v5549
        %v5612 = vsub.f32 %v5449, %v5549
        %v5613 = vsub.f32 %v5450, %v5549
        %v5614 = vmul.f32 %v5550, %v5550
        %v5615 = vmul.f32 %v5551, %v5551
        %v5616 = vmul.f32 %v5552, %v5552
        %v5617 = vmul.f32 %v5553, %v5553
        %v5618 = vmul.f32 %v5554, %v5554
        %v5619 = vmul.f32 %v5555, %v5555
        %v5620 = vmul.f32 %v5556, %v5556
        %v5621 = vmul.f32 %v5557, %v5557
        %v5622 = vmul.f32 %v5558, %v5558
        %v5623 = vmul.f32 %v5559, %v5559
        %v5624 = vmul.f32 %v5560, %v5560
        %v5625 = vmul.f32 %v5561, %v5561
        %v5626 = vmul.f32 %v5562, %v5562
        %v5627 = vmul.f32 %v5563, %v5563
        %v5628 = vmul.f32 %v5564, %v5564
        %v5629 = vmul.f32 %v5565, %v5565
        %v5630 = vmul.f32 %v5566, %v5566
        %v5631 = vmul.f32 %v5567, %v5567
        %v5632 = vmul.f32 %v5568, %v5568
        %v5633 = vmul.f32 %v5569, %v5569
        %v5634 = vmul.f32 %v5570, %v5570
        %v5635 = vmul.f32 %v5571, %v5571
        %v5636 = vmul.f32 %v5572, %v5572
        %v5637 = vmul.f32 %v5573, %v5573
        %v5638 = vmul.f32 %v5574, %v5574
        %v5639 = vmul.f32 %v5575, %v5575
        %v5640 = vmul.f32 %v5576, %v5576
        %v5641 = vmul.f32 %v5577, %v5577
        %v5642 = vmul.f32 %v5578, %v5578
        %v5643 = vmul.f32 %v5579, %v5579
        %v5644 = vmul.f32 %v5580, %v5580
        %v5645 = vmul.f32 %v5581, %v5581
        %v5646 = vmul.f32 %v5582, %v5582
        %v5647 = vmul.f32 %v5583, %v5583
        %v5648 = vmul.f32 %v5584, %v5584
        %v5649 = vmul.f32 %v5585, %v5585
        %v5650 = vmul.f32 %v5586, %v5586
        %v5651 = vmul.f32 %v5587, %v5587
        %v5652 = vmul.f32 %v5588, %v5588
        %v5653 = vmul.f32 %v5589, %v5589
        %v5654 = vmul.f32 %v5590, %v5590
        %v5655 = vmul.f32 %v5591, %v5591
        %v5656 = vmul.f32 %v5592, %v5592
        %v5657 = vmul.f32 %v5593, %v5593
        %v5658 = vmul.f32 %v5594, %v5594
        %v5659 = vmul.f32 %v5595, %v5595
        %v5660 = vmul.f32 %v5596, %v5596
        %v5661 = vmul.f32 %v5597, %v5597
        %v5662 = vmul.f32 %v5598, %v5598
        %v5663 = vmul.f32 %v5599, %v5599
        %v5664 = vmul.f32 %v5600, %v5600
        %v5665 = vmul.f32 %v5601, %v5601
        %v5666 = vmul.f32 %v5602, %v5602
        %v5667 = vmul.f32 %v5603, %v5603
        %v5668 = vmul.f32 %v5604, %v5604
        %v5669 = vmul.f32 %v5605, %v5605
        %v5670 = vmul.f32 %v5606, %v5606
        %v5671 = vmul.f32 %v5607, %v5607
        %v5672 = vmul.f32 %v5608, %v5608
        %v5673 = vmul.f32 %v5609, %v5609
        %v5674 = vmul.f32 %v5610, %v5610
        %v5675 = vmul.f32 %v5611, %v5611
        %v5676 = vmul.f32 %v5612, %v5612
        %v5677 = vmul.f32 %v5613, %v5613
        %v5678 = vadd.f32 %v5614, %v5615
        %v5679 = vadd.f32 %v5678, %v5616
        %v5680 = vadd.f32 %v5679, %v5617
        %5681 = vadd.xlane.f32.xlu0 %v5680
        %v5682 = vpop.xlane.xlu0 %5681
        %v5683 = vadd.f32 %v5618, %v5619
        %v5684 = vadd.f32 %v5683, %v5620
        %v5685 = vadd.f32 %v5684, %v5621
        %5686 = vadd.xlane.f32.xlu0 %v5685
        %v5687 = vpop.xlane.xlu0 %5686
        %v5688 = vadd.f32 %v5622, %v5623
        %v5689 = vadd.f32 %v5688, %v5624
        %v5690 = vadd.f32 %v5689, %v5625
        %5691 = vadd.xlane.f32.xlu0 %v5690
        %v5692 = vpop.xlane.xlu0 %5691
        %v5693 = vadd.f32 %v5626, %v5627
        %v5694 = vadd.f32 %v5693, %v5628
        %v5695 = vadd.f32 %v5694, %v5629
        %5696 = vadd.xlane.f32.xlu0 %v5695
        %v5697 = vpop.xlane.xlu0 %5696
        %v5698 = vadd.f32 %v5630, %v5631
        %v5699 = vadd.f32 %v5698, %v5632
        %v5700 = vadd.f32 %v5699, %v5633
        %5701 = vadd.xlane.f32.xlu0 %v5700
        %v5702 = vpop.xlane.xlu0 %5701
        %v5703 = vadd.f32 %v5634, %v5635
        %v5704 = vadd.f32 %v5703, %v5636
        %v5705 = vadd.f32 %v5704, %v5637
        %5706 = vadd.xlane.f32.xlu0 %v5705
        %v5707 = vpop.xlane.xlu0 %5706
        %v5708 = vadd.f32 %v5638, %v5639
        %v5709 = vadd.f32 %v5708, %v5640
        %v5710 = vadd.f32 %v5709, %v5641
        %5711 = vadd.xlane.f32.xlu0 %v5710
        %v5712 = vpop.xlane.xlu0 %5711
        %v5713 = vadd.f32 %v5642, %v5643
        %v5714 = vadd.f32 %v5713, %v5644
        %v5715 = vadd.f32 %v5714, %v5645
        %5716 = vadd.xlane.f32.xlu0 %v5715
        %v5717 = vpop.xlane.xlu0 %5716
        %v5718 = vadd.f32 %v5646, %v5647
        %v5719 = vadd.f32 %v5718, %v5648
        %v5720 = vadd.f32 %v5719, %v5649
        %5721 = vadd.xlane.f32.xlu0 %v5720
        %v5722 = vpop.xlane.xlu0 %5721
        %v5723 = vadd.f32 %v5650, %v5651
        %v5724 = vadd.f32 %v5723, %v5652
        %v5725 = vadd.f32 %v5724, %v5653
        %5726 = vadd.xlane.f32.xlu0 %v5725
        %v5727 = vpop.xlane.xlu0 %5726
        %v5728 = vadd.f32 %v5654, %v5655
        %v5729 = vadd.f32 %v5728, %v5656
        %v5730 = vadd.f32 %v5729, %v5657
        %5731 = vadd.xlane.f32.xlu0 %v5730
        %v5732 = vpop.xlane.xlu0 %5731
        %v5733 = vadd.f32 %v5658, %v5659
        %v5734 = vadd.f32 %v5733, %v5660
        %v5735 = vadd.f32 %v5734, %v5661
        %5736 = vadd.xlane.f32.xlu0 %v5735
        %v5737 = vpop.xlane.xlu0 %5736
        %v5738 = vadd.f32 %v5662, %v5663
        %v5739 = vadd.f32 %v5738, %v5664
        %v5740 = vadd.f32 %v5739, %v5665
        %5741 = vadd.xlane.f32.xlu0 %v5740
        %v5742 = vpop.xlane.xlu0 %5741
        %v5743 = vadd.f32 %v5666, %v5667
        %v5744 = vadd.f32 %v5743, %v5668
        %v5745 = vadd.f32 %v5744, %v5669
        %5746 = vadd.xlane.f32.xlu0 %v5745
        %v5747 = vpop.xlane.xlu0 %5746
        %v5748 = vadd.f32 %v5670, %v5671
        %v5749 = vadd.f32 %v5748, %v5672
        %v5750 = vadd.f32 %v5749, %v5673
        %5751 = vadd.xlane.f32.xlu0 %v5750
        %v5752 = vpop.xlane.xlu0 %5751
        %v5753 = vadd.f32 %v5674, %v5675
        %v5754 = vadd.f32 %v5753, %v5676
        %v5755 = vadd.f32 %v5754, %v5677
        %5756 = vadd.xlane.f32.xlu0 %v5755
        %v5757 = vpop.xlane.xlu0 %5756
        %v5758 = vmul.f32 %v5682, %v5533
        %v5759 = vmul.f32 %v5687, %v5533
        %v5760 = vmul.f32 %v5692, %v5533
        %v5761 = vmul.f32 %v5697, %v5533
        %v5762 = vmul.f32 %v5702, %v5533
        %v5763 = vmul.f32 %v5707, %v5533
        %v5764 = vmul.f32 %v5712, %v5533
        %v5765 = vmul.f32 %v5717, %v5533
        %v5766 = vmul.f32 %v5722, %v5533
        %v5767 = vmul.f32 %v5727, %v5533
        %v5768 = vmul.f32 %v5732, %v5533
        %v5769 = vmul.f32 %v5737, %v5533
        %v5770 = vmul.f32 %v5742, %v5533
        %v5771 = vmul.f32 %v5747, %v5533
        %v5772 = vmul.f32 %v5752, %v5533
        %v5773 = vmul.f32 %v5757, %v5533
        %v5774 = vadd.f32 %v5758, 1e-05
        %v5775 = vadd.f32 %v5759, 1e-05
        %v5776 = vadd.f32 %v5760, 1e-05
        %v5777 = vadd.f32 %v5761, 1e-05
        %v5778 = vadd.f32 %v5762, 1e-05
        %v5779 = vadd.f32 %v5763, 1e-05
        %v5780 = vadd.f32 %v5764, 1e-05
        %v5781 = vadd.f32 %v5765, 1e-05
        %v5782 = vadd.f32 %v5766, 1e-05
        %v5783 = vadd.f32 %v5767, 1e-05
        %v5784 = vadd.f32 %v5768, 1e-05
        %v5785 = vadd.f32 %v5769, 1e-05
        %v5786 = vadd.f32 %v5770, 1e-05
        %v5787 = vadd.f32 %v5771, 1e-05
        %v5788 = vadd.f32 %v5772, 1e-05
        %v5789 = vadd.f32 %v5773, 1e-05
        %v5790 = vrsqrt.pop %v5774
        %v5791 = vrsqrt.pop %v5775
        %v5792 = vrsqrt.pop %v5776
        %v5793 = vrsqrt.pop %v5777
        %v5794 = vrsqrt.pop %v5778
        %v5795 = vrsqrt.pop %v5779
        %v5796 = vrsqrt.pop %v5780
        %v5797 = vrsqrt.pop %v5781
        %v5798 = vrsqrt.pop %v5782
        %v5799 = vrsqrt.pop %v5783
        %v5800 = vrsqrt.pop %v5784
        %v5801 = vrsqrt.pop %v5785
        %v5802 = vrsqrt.pop %v5786
        %v5803 = vrsqrt.pop %v5787
        %v5804 = vrsqrt.pop %v5788
        %v5805 = vrsqrt.pop %v5789
        %v5806 = vmul.f32 %v5550, %v5790
        %v5807 = vmul.f32 %v5551, %v5790
        %v5808 = vmul.f32 %v5552, %v5790
        %v5809 = vmul.f32 %v5553, %v5790
        %v5810 = vmul.f32 %v5554, %v5791
        %v5811 = vmul.f32 %v5555, %v5791
        %v5812 = vmul.f32 %v5556, %v5791
        %v5813 = vmul.f32 %v5557, %v5791
        %v5814 = vmul.f32 %v5558, %v5792
        %v5815 = vmul.f32 %v5559, %v5792
        %v5816 = vmul.f32 %v5560, %v5792
        %v5817 = vmul.f32 %v5561, %v5792
        %v5818 = vmul.f32 %v5562, %v5793
        %v5819 = vmul.f32 %v5563, %v5793
        %v5820 = vmul.f32 %v5564, %v5793
        %v5821 = vmul.f32 %v5565, %v5793
        %v5822 = vmul.f32 %v5566, %v5794
        %v5823 = vmul.f32 %v5567, %v5794
        %v5824 = vmul.f32 %v5568, %v5794
        %v5825 = vmul.f32 %v5569, %v5794
        %v5826 = vmul.f32 %v5570, %v5795
        %v5827 = vmul.f32 %v5571, %v5795
        %v5828 = vmul.f32 %v5572, %v5795
        %v5829 = vmul.f32 %v5573, %v5795
        %v5830 = vmul.f32 %v5574, %v5796
        %v5831 = vmul.f32 %v5575, %v5796
        %v5832 = vmul.f32 %v5576, %v5796
        %v5833 = vmul.f32 %v5577, %v5796
        %v5834 = vmul.f32 %v5578, %v5797
        %v5835 = vmul.f32 %v5579, %v5797
        %v5836 = vmul.f32 %v5580, %v5797
        %v5837 = vmul.f32 %v5581, %v5797
        %v5838 = vmul.f32 %v5582, %v5798
        %v5839 = vmul.f32 %v5583, %v5798
        %v5840 = vmul.f32 %v5584, %v5798
        %v5841 = vmul.f32 %v5585, %v5798
        %v5842 = vmul.f32 %v5586, %v5799
        %v5843 = vmul.f32 %v5587, %v5799
        %v5844 = vmul.f32 %v5588, %v5799
        %v5845 = vmul.f32 %v5589, %v5799
        %v5846 = vmul.f32 %v5590, %v5800
        %v5847 = vmul.f32 %v5591, %v5800
        %v5848 = vmul.f32 %v5592, %v5800
        %v5849 = vmul.f32 %v5593, %v5800
        %v5850 = vmul.f32 %v5594, %v5801
        %v5851 = vmul.f32 %v5595, %v5801
        %v5852 = vmul.f32 %v5596, %v5801
        %v5853 = vmul.f32 %v5597, %v5801
        %v5854 = vmul.f32 %v5598, %v5802
        %v5855 = vmul.f32 %v5599, %v5802
        %v5856 = vmul.f32 %v5600, %v5802
        %v5857 = vmul.f32 %v5601, %v5802
        %v5858 = vmul.f32 %v5602, %v5803
        %v5859 = vmul.f32 %v5603, %v5803
        %v5860 = vmul.f32 %v5604, %v5803
        %v5861 = vmul.f32 %v5605, %v5803
        %v5862 = vmul.f32 %v5606, %v5804
        %v5863 = vmul.f32 %v5607, %v5804
        %v5864 = vmul.f32 %v5608, %v5804
        %v5865 = vmul.f32 %v5609, %v5804
        %v5866 = vmul.f32 %v5610, %v5805
        %v5867 = vmul.f32 %v5611, %v5805
        %v5868 = vmul.f32 %v5612, %v5805
        %v5869 = vmul.f32 %v5613, %v5805
        %v5871 = vlaneseq
        %v5872 = vshrl.u32 %v5871, 7
        %v5873 = vsub.s32 0, %v5872
        %v5874 = vrot.slane %v5451, %v5873
        %v5875 = vlaneseq
        %v5876 = vshrl.u32 %v5875, 7
        %v5877 = vsub.s32 1, %v5876
        %v5878 = vrot.slane %v5451, %v5877
        %v5879 = vlaneseq
        %v5880 = vshrl.u32 %v5879, 7
        %v5881 = vsub.s32 2, %v5880
        %v5882 = vrot.slane %v5451, %v5881
        %v5883 = vlaneseq
        %v5884 = vshrl.u32 %v5883, 7
        %v5885 = vsub.s32 3, %v5884
        %v5886 = vrot.slane %v5451, %v5885
        %v5891 = vmul.f32 %v5806, %v5874
        %v5892 = vmul.f32 %v5807, %v5878
        %v5893 = vmul.f32 %v5808, %v5882
        %v5894 = vmul.f32 %v5809, %v5886
        %v5895 = vmul.f32 %v5810, %v5874
        %v5896 = vmul.f32 %v5811, %v5878
        %v5897 = vmul.f32 %v5812, %v5882
        %v5898 = vmul.f32 %v5813, %v5886
        %v5899 = vmul.f32 %v5814, %v5874
        %v5900 = vmul.f32 %v5815, %v5878
        %v5901 = vmul.f32 %v5816, %v5882
        %v5902 = vmul.f32 %v5817, %v5886
        %v5903 = vmul.f32 %v5818, %v5874
        %v5904 = vmul.f32 %v5819, %v5878
        %v5905 = vmul.f32 %v5820, %v5882
        %v5906 = vmul.f32 %v5821, %v5886
        %v5907 = vmul.f32 %v5822, %v5874
        %v5908 = vmul.f32 %v5823, %v5878
        %v5909 = vmul.f32 %v5824, %v5882
        %v5910 = vmul.f32 %v5825, %v5886
        %v5911 = vmul.f32 %v5826, %v5874
        %v5912 = vmul.f32 %v5827, %v5878
        %v5913 = vmul.f32 %v5828, %v5882
        %v5914 = vmul.f32 %v5829, %v5886
        %v5915 = vmul.f32 %v5830, %v5874
        %v5916 = vmul.f32 %v5831, %v5878
        %v5917 = vmul.f32 %v5832, %v5882
        %v5918 = vmul.f32 %v5833, %v5886
        %v5919 = vmul.f32 %v5834, %v5874
        %v5920 = vmul.f32 %v5835, %v5878
        %v5921 = vmul.f32 %v5836, %v5882
        %v5922 = vmul.f32 %v5837, %v5886
        %v5923 = vmul.f32 %v5838, %v5874
        %v5924 = vmul.f32 %v5839, %v5878
        %v5925 = vmul.f32 %v5840, %v5882
        %v5926 = vmul.f32 %v5841, %v5886
        %v5927 = vmul.f32 %v5842, %v5874
        %v5928 = vmul.f32 %v5843, %v5878
        %v5929 = vmul.f32 %v5844, %v5882
        %v5930 = vmul.f32 %v5845, %v5886
        %v5931 = vmul.f32 %v5846, %v5874
        %v5932 = vmul.f32 %v5847, %v5878
        %v5933 = vmul.f32 %v5848, %v5882
        %v5934 = vmul.f32 %v5849, %v5886
        %v5935 = vmul.f32 %v5850, %v5874
        %v5936 = vmul.f32 %v5851, %v5878
        %v5937 = vmul.f32 %v5852, %v5882
        %v5938 = vmul.f32 %v5853, %v5886
        %v5939 = vmul.f32 %v5854, %v5874
        %v5940 = vmul.f32 %v5855, %v5878
        %v5941 = vmul.f32 %v5856, %v5882
        %v5942 = vmul.f32 %v5857, %v5886
        %v5943 = vmul.f32 %v5858, %v5874
        %v5944 = vmul.f32 %v5859, %v5878
        %v5945 = vmul.f32 %v5860, %v5882
        %v5946 = vmul.f32 %v5861, %v5886
        %v5947 = vmul.f32 %v5862, %v5874
        %v5948 = vmul.f32 %v5863, %v5878
        %v5949 = vmul.f32 %v5864, %v5882
        %v5950 = vmul.f32 %v5865, %v5886
        %v5951 = vmul.f32 %v5866, %v5874
        %v5952 = vmul.f32 %v5867, %v5878
        %v5953 = vmul.f32 %v5868, %v5882
        %v5954 = vmul.f32 %v5869, %v5886
        %v5956 = vlaneseq
        %v5957 = vshrl.u32 %v5956, 7
        %v5958 = vsub.s32 0, %v5957
        %v5959 = vrot.slane %v5452, %v5958
        %v5960 = vlaneseq
        %v5961 = vshrl.u32 %v5960, 7
        %v5962 = vsub.s32 1, %v5961
        %v5963 = vrot.slane %v5452, %v5962
        %v5964 = vlaneseq
        %v5965 = vshrl.u32 %v5964, 7
        %v5966 = vsub.s32 2, %v5965
        %v5967 = vrot.slane %v5452, %v5966
        %v5968 = vlaneseq
        %v5969 = vshrl.u32 %v5968, 7
        %v5970 = vsub.s32 3, %v5969
        %v5971 = vrot.slane %v5452, %v5970
        %v5976 = vadd.f32 %v5891, %v5959
        %v5977 = vadd.f32 %v5892, %v5963
        %v5978 = vadd.f32 %v5893, %v5967
        %v5979 = vadd.f32 %v5894, %v5971
        %v5980 = vadd.f32 %v5895, %v5959
        %v5981 = vadd.f32 %v5896, %v5963
        %v5982 = vadd.f32 %v5897, %v5967
        %v5983 = vadd.f32 %v5898, %v5971
        %v5984 = vadd.f32 %v5899, %v5959
        %v5985 = vadd.f32 %v5900, %v5963
        %v5986 = vadd.f32 %v5901, %v5967
        %v5987 = vadd.f32 %v5902, %v5971
        %v5988 = vadd.f32 %v5903, %v5959
        %v5989 = vadd.f32 %v5904, %v5963
        %v5990 = vadd.f32 %v5905, %v5967
        %v5991 = vadd.f32 %v5906, %v5971
        %v5992 = vadd.f32 %v5907, %v5959
        %v5993 = vadd.f32 %v5908, %v5963
        %v5994 = vadd.f32 %v5909, %v5967
        %v5995 = vadd.f32 %v5910, %v5971
        %v5996 = vadd.f32 %v5911, %v5959
        %v5997 = vadd.f32 %v5912, %v5963
        %v5998 = vadd.f32 %v5913, %v5967
        %v5999 = vadd.f32 %v5914, %v5971
        %v6000 = vadd.f32 %v5915, %v5959
        %v6001 = vadd.f32 %v5916, %v5963
        %v6002 = vadd.f32 %v5917, %v5967
        %v6003 = vadd.f32 %v5918, %v5971
        %v6004 = vadd.f32 %v5919, %v5959
        %v6005 = vadd.f32 %v5920, %v5963
        %v6006 = vadd.f32 %v5921, %v5967
        %v6007 = vadd.f32 %v5922, %v5971
        %v6008 = vadd.f32 %v5923, %v5959
        %v6009 = vadd.f32 %v5924, %v5963
        %v6010 = vadd.f32 %v5925, %v5967
        %v6011 = vadd.f32 %v5926, %v5971
        %v6012 = vadd.f32 %v5927, %v5959
        %v6013 = vadd.f32 %v5928, %v5963
        %v6014 = vadd.f32 %v5929, %v5967
        %v6015 = vadd.f32 %v5930, %v5971
        %v6016 = vadd.f32 %v5931, %v5959
        %v6017 = vadd.f32 %v5932, %v5963
        %v6018 = vadd.f32 %v5933, %v5967
        %v6019 = vadd.f32 %v5934, %v5971
        %v6020 = vadd.f32 %v5935, %v5959
        %v6021 = vadd.f32 %v5936, %v5963
        %v6022 = vadd.f32 %v5937, %v5967
        %v6023 = vadd.f32 %v5938, %v5971
        %v6024 = vadd.f32 %v5939, %v5959
        %v6025 = vadd.f32 %v5940, %v5963
        %v6026 = vadd.f32 %v5941, %v5967
        %v6027 = vadd.f32 %v5942, %v5971
        %v6028 = vadd.f32 %v5943, %v5959
        %v6029 = vadd.f32 %v5944, %v5963
        %v6030 = vadd.f32 %v5945, %v5967
        %v6031 = vadd.f32 %v5946, %v5971
        %v6032 = vadd.f32 %v5947, %v5959
        %v6033 = vadd.f32 %v5948, %v5963
        %v6034 = vadd.f32 %v5949, %v5967
        %v6035 = vadd.f32 %v5950, %v5971
        %v6036 = vadd.f32 %v5951, %v5959
        %v6037 = vadd.f32 %v5952, %v5963
        %v6038 = vadd.f32 %v5953, %v5967
        %v6039 = vadd.f32 %v5954, %v5971
        %v6040 = vpack.c.bf16 %v5980, %v5976
        %v6041 = vpack.c.bf16 %v5981, %v5977
        %v6042 = vpack.c.bf16 %v5982, %v5978
        %v6043 = vpack.c.bf16 %v5983, %v5979
        %v6044 = vpack.c.bf16 %v5988, %v5984
        %v6045 = vpack.c.bf16 %v5989, %v5985
        %v6046 = vpack.c.bf16 %v5990, %v5986
        %v6047 = vpack.c.bf16 %v5991, %v5987
        %v6048 = vpack.c.bf16 %v5996, %v5992
        %v6049 = vpack.c.bf16 %v5997, %v5993
        %v6050 = vpack.c.bf16 %v5998, %v5994
        %v6051 = vpack.c.bf16 %v5999, %v5995
        %v6052 = vpack.c.bf16 %v6004, %v6000
        %v6053 = vpack.c.bf16 %v6005, %v6001
        %v6054 = vpack.c.bf16 %v6006, %v6002
        %v6055 = vpack.c.bf16 %v6007, %v6003
        %v6056 = vpack.c.bf16 %v6012, %v6008
        %v6057 = vpack.c.bf16 %v6013, %v6009
        %v6058 = vpack.c.bf16 %v6014, %v6010
        %v6059 = vpack.c.bf16 %v6015, %v6011
        %v6060 = vpack.c.bf16 %v6020, %v6016
        %v6061 = vpack.c.bf16 %v6021, %v6017
        %v6062 = vpack.c.bf16 %v6022, %v6018
        %v6063 = vpack.c.bf16 %v6023, %v6019
        %v6064 = vpack.c.bf16 %v6028, %v6024
        %v6065 = vpack.c.bf16 %v6029, %v6025
        %v6066 = vpack.c.bf16 %v6030, %v6026
        %v6067 = vpack.c.bf16 %v6031, %v6027
        %v6068 = vpack.c.bf16 %v6036, %v6032
        %v6069 = vpack.c.bf16 %v6037, %v6033
        %v6070 = vpack.c.bf16 %v6038, %v6034
        %v6071 = vpack.c.bf16 %v6039, %v6035
        %v6072 = vld [vmem:[#allocation17] sm:$0xf]
        %v6073 = vld [vmem:[#allocation17 + $0x4] sm:$0xf]
        %v6074 = vld [vmem:[#allocation17 + $0x8] sm:$0xf]
        %v6075 = vld [vmem:[#allocation17 + $0xc] sm:$0xf]
        %v6076 = vld [vmem:[#allocation17 + $0x10] sm:$0xf]
        %v6077 = vld [vmem:[#allocation17 + $0x14] sm:$0xf]
        %v6078 = vld [vmem:[#allocation17 + $0x18] sm:$0xf]
        %v6079 = vld [vmem:[#allocation17 + $0x1c] sm:$0xf]
        %v6080 = vld [vmem:[#allocation17 + $0x20] sm:$0xf]
        %v6081 = vld [vmem:[#allocation17 + $0x24] sm:$0xf]
        %v6082 = vld [vmem:[#allocation17 + $0x28] sm:$0xf]
        %v6083 = vld [vmem:[#allocation17 + $0x2c] sm:$0xf]
        %v6084 = vld [vmem:[#allocation17 + $0x30] sm:$0xf]
        %v6085 = vld [vmem:[#allocation17 + $0x34] sm:$0xf]
        %v6086 = vld [vmem:[#allocation17 + $0x38] sm:$0xf]
        %v6087 = vld [vmem:[#allocation17 + $0x3c] sm:$0xf]
        %v6088 = vld [vmem:[#allocation17 + $0x40] sm:$0xf]
        %v6089 = vld [vmem:[#allocation17 + $0x44] sm:$0xf]
        %v6090 = vld [vmem:[#allocation17 + $0x48] sm:$0xf]
        %v6091 = vld [vmem:[#allocation17 + $0x4c] sm:$0xf]
        %v6092 = vld [vmem:[#allocation17 + $0x50] sm:$0xf]
        %v6093 = vld [vmem:[#allocation17 + $0x54] sm:$0xf]
        %v6094 = vld [vmem:[#allocation17 + $0x58] sm:$0xf]
        %v6095 = vld [vmem:[#allocation17 + $0x5c] sm:$0xf]
        %v6096 = vld [vmem:[#allocation17 + $0x60] sm:$0xf]
        %v6097 = vld [vmem:[#allocation17 + $0x64] sm:$0xf]
        %v6098 = vld [vmem:[#allocation17 + $0x68] sm:$0xf]
        %v6099 = vld [vmem:[#allocation17 + $0x6c] sm:$0xf]
        %v6100 = vld [vmem:[#allocation17 + $0x70] sm:$0xf]
        %v6101 = vld [vmem:[#allocation17 + $0x74] sm:$0xf]
        %v6102 = vld [vmem:[#allocation17 + $0x78] sm:$0xf]
        %v6103 = vld [vmem:[#allocation17 + $0x7c] sm:$0xf]
        %v6104 = vld [vmem:[#allocation17 + $0x80] sm:$0xf]
        %v6105 = vld [vmem:[#allocation17 + $0x84] sm:$0xf]
        %v6106 = vld [vmem:[#allocation17 + $0x88] sm:$0xf]
        %v6107 = vld [vmem:[#allocation17 + $0x8c] sm:$0xf]
        %v6108 = vld [vmem:[#allocation17 + $0x90] sm:$0xf]
        %v6109 = vld [vmem:[#allocation17 + $0x94] sm:$0xf]
        %v6110 = vld [vmem:[#allocation17 + $0x98] sm:$0xf]
        %v6111 = vld [vmem:[#allocation17 + $0x9c] sm:$0xf]
        %v6112 = vld [vmem:[#allocation17 + $0xa0] sm:$0xf]
        %v6113 = vld [vmem:[#allocation17 + $0xa4] sm:$0xf]
        %v6114 = vld [vmem:[#allocation17 + $0xa8] sm:$0xf]
        %v6115 = vld [vmem:[#allocation17 + $0xac] sm:$0xf]
        %v6116 = vld [vmem:[#allocation17 + $0xb0] sm:$0xf]
        %v6117 = vld [vmem:[#allocation17 + $0xb4] sm:$0xf]
        %v6118 = vld [vmem:[#allocation17 + $0xb8] sm:$0xf]
        %v6119 = vld [vmem:[#allocation17 + $0xbc] sm:$0xf]
        %v6120 = vld [vmem:[#allocation17 + $0xc0] sm:$0xf]
        %v6121 = vld [vmem:[#allocation17 + $0xc4] sm:$0xf]
        %v6122 = vld [vmem:[#allocation17 + $0xc8] sm:$0xf]
        %v6123 = vld [vmem:[#allocation17 + $0xcc] sm:$0xf]
        %v6124 = vld [vmem:[#allocation17 + $0xd0] sm:$0xf]
        %v6125 = vld [vmem:[#allocation17 + $0xd4] sm:$0xf]
        %v6126 = vld [vmem:[#allocation17 + $0xd8] sm:$0xf]
        %v6127 = vld [vmem:[#allocation17 + $0xdc] sm:$0xf]
        %v6128 = vld [vmem:[#allocation17 + $0xe0] sm:$0xf]
        %v6129 = vld [vmem:[#allocation17 + $0xe4] sm:$0xf]
        %v6130 = vld [vmem:[#allocation17 + $0xe8] sm:$0xf]
        %v6131 = vld [vmem:[#allocation17 + $0xec] sm:$0xf]
        %v6132 = vld [vmem:[#allocation17 + $0xf0] sm:$0xf]
        %v6133 = vld [vmem:[#allocation17 + $0xf4] sm:$0xf]
        %v6134 = vld [vmem:[#allocation17 + $0xf8] sm:$0xf]
        %v6135 = vld [vmem:[#allocation17 + $0xfc] sm:$0xf]
        %v6136 = vld [vmem:[%s14] sm:$0x1]
        %v6138 = vlaneseq
        %v6139 = vshrl.u32 %v6138, 7
        %v6140 = vsub.s32 0, %v6139
        %v6141 = vrot.slane %v6136, %v6140
        %v6207 = vunpack.c.l.b16 %v6072
        %v6208 = vunpack.c.l.b16 %v6073
        %v6209 = vunpack.c.l.b16 %v6074
        %v6210 = vunpack.c.l.b16 %v6075
        %v6211 = vunpack.c.l.b16 %v6076
        %v6212 = vunpack.c.l.b16 %v6077
        %v6213 = vunpack.c.l.b16 %v6078
        %v6214 = vunpack.c.l.b16 %v6079
        %v6215 = vunpack.c.l.b16 %v6080
        %v6216 = vunpack.c.l.b16 %v6081
        %v6217 = vunpack.c.l.b16 %v6082
        %v6218 = vunpack.c.l.b16 %v6083
        %v6219 = vunpack.c.l.b16 %v6084
        %v6220 = vunpack.c.l.b16 %v6085
        %v6221 = vunpack.c.l.b16 %v6086
        %v6222 = vunpack.c.l.b16 %v6087
        %v6223 = vunpack.c.l.b16 %v6088
        %v6224 = vunpack.c.l.b16 %v6089
        %v6225 = vunpack.c.l.b16 %v6090
        %v6226 = vunpack.c.l.b16 %v6091
        %v6227 = vunpack.c.l.b16 %v6092
        %v6228 = vunpack.c.l.b16 %v6093
        %v6229 = vunpack.c.l.b16 %v6094
        %v6230 = vunpack.c.l.b16 %v6095
        %v6231 = vunpack.c.l.b16 %v6096
        %v6232 = vunpack.c.l.b16 %v6097
        %v6233 = vunpack.c.l.b16 %v6098
        %v6234 = vunpack.c.l.b16 %v6099
        %v6235 = vunpack.c.l.b16 %v6100
        %v6236 = vunpack.c.l.b16 %v6101
        %v6237 = vunpack.c.l.b16 %v6102
        %v6238 = vunpack.c.l.b16 %v6103
        %v6239 = vunpack.c.l.b16 %v6104
        %v6240 = vunpack.c.l.b16 %v6105
        %v6241 = vunpack.c.l.b16 %v6106
        %v6242 = vunpack.c.l.b16 %v6107
        %v6243 = vunpack.c.l.b16 %v6108
        %v6244 = vunpack.c.l.b16 %v6109
        %v6245 = vunpack.c.l.b16 %v6110
        %v6246 = vunpack.c.l.b16 %v6111
        %v6247 = vunpack.c.l.b16 %v6112
        %v6248 = vunpack.c.l.b16 %v6113
        %v6249 = vunpack.c.l.b16 %v6114
        %v6250 = vunpack.c.l.b16 %v6115
        %v6251 = vunpack.c.l.b16 %v6116
        %v6252 = vunpack.c.l.b16 %v6117
        %v6253 = vunpack.c.l.b16 %v6118
        %v6254 = vunpack.c.l.b16 %v6119
        %v6255 = vunpack.c.l.b16 %v6120
        %v6256 = vunpack.c.l.b16 %v6121
        %v6257 = vunpack.c.l.b16 %v6122
        %v6258 = vunpack.c.l.b16 %v6123
        %v6259 = vunpack.c.l.b16 %v6124
        %v6260 = vunpack.c.l.b16 %v6125
        %v6261 = vunpack.c.l.b16 %v6126
        %v6262 = vunpack.c.l.b16 %v6127
        %v6263 = vunpack.c.l.b16 %v6128
        %v6264 = vunpack.c.l.b16 %v6129
        %v6265 = vunpack.c.l.b16 %v6130
        %v6266 = vunpack.c.l.b16 %v6131
        %v6267 = vunpack.c.l.b16 %v6132
        %v6268 = vunpack.c.l.b16 %v6133
        %v6269 = vunpack.c.l.b16 %v6134
        %v6270 = vunpack.c.l.b16 %v6135
        %v6271 = vpack.c.b16 %v6208, %v6207
        %v6272 = vpack.c.b16 %v6210, %v6209
        %v6273 = vpack.c.b16 %v6212, %v6211
        %v6274 = vpack.c.b16 %v6214, %v6213
        %v6275 = vpack.c.b16 %v6216, %v6215
        %v6276 = vpack.c.b16 %v6218, %v6217
        %v6277 = vpack.c.b16 %v6220, %v6219
        %v6278 = vpack.c.b16 %v6222, %v6221
        %v6279 = vpack.c.b16 %v6224, %v6223
        %v6280 = vpack.c.b16 %v6226, %v6225
        %v6281 = vpack.c.b16 %v6228, %v6227
        %v6282 = vpack.c.b16 %v6230, %v6229
        %v6283 = vpack.c.b16 %v6232, %v6231
        %v6284 = vpack.c.b16 %v6234, %v6233
        %v6285 = vpack.c.b16 %v6236, %v6235
        %v6286 = vpack.c.b16 %v6238, %v6237
        %v6287 = vpack.c.b16 %v6240, %v6239
        %v6288 = vpack.c.b16 %v6242, %v6241
        %v6289 = vpack.c.b16 %v6244, %v6243
        %v6290 = vpack.c.b16 %v6246, %v6245
        %v6291 = vpack.c.b16 %v6248, %v6247
        %v6292 = vpack.c.b16 %v6250, %v6249
        %v6293 = vpack.c.b16 %v6252, %v6251
        %v6294 = vpack.c.b16 %v6254, %v6253
        %v6295 = vpack.c.b16 %v6256, %v6255
        %v6296 = vpack.c.b16 %v6258, %v6257
        %v6297 = vpack.c.b16 %v6260, %v6259
        %v6298 = vpack.c.b16 %v6262, %v6261
        %v6299 = vpack.c.b16 %v6264, %v6263
        %v6300 = vpack.c.b16 %v6266, %v6265
        %v6301 = vpack.c.b16 %v6268, %v6267
        %v6302 = vpack.c.b16 %v6270, %v6269
        %6335 = vmatprep.subr.bf16.mxu0 0
        %6336 = vmatpush1.bf16.msra.mxu0 %v6278
        %6337 = vmatprep.subr.bf16.mxu0 0
        %6338 = vmatpush1.bf16.msra.mxu0 %v6277
        %6339 = vmatprep.subr.bf16.mxu0 0
        %6340 = vmatpush1.bf16.msra.mxu0 %v6276
        %6341 = vmatprep.subr.bf16.mxu0 0
        %6342 = vmatpush1.bf16.msra.mxu0 %v6275
        %6343 = vmatprep.subr.bf16.mxu0 0
        %6344 = vmatpush1.bf16.msra.mxu0 %v6274
        %6345 = vmatprep.subr.bf16.mxu0 0
        %6346 = vmatpush1.bf16.msra.mxu0 %v6273
        %6347 = vmatprep.subr.bf16.mxu0 0
        %6348 = vmatpush1.bf16.msra.mxu0 %v6272
        %6349 = vmatprep.subr.bf16.mxu0 0
        %6350 = vmatpush1.bf16.msra.mxu0 %v6271
        %6351 = vmatprep.subr.bf16.mxu0 0
        %6352 = vmatpush2.bf16.msra.mxu0 %v6286
        %6353 = vmatprep.subr.bf16.mxu0 0
        %6354 = vmatpush2.bf16.msra.mxu0 %v6285
        %6355 = vmatprep.subr.bf16.mxu0 0
        %6356 = vmatpush2.bf16.msra.mxu0 %v6284
        %6357 = vmatprep.subr.bf16.mxu0 0
        %6358 = vmatpush2.bf16.msra.mxu0 %v6283
        %6359 = vmatprep.subr.bf16.mxu0 0
        %6360 = vmatpush2.bf16.msra.mxu0 %v6282
        %6361 = vmatprep.subr.bf16.mxu0 0
        %6362 = vmatpush2.bf16.msra.mxu0 %v6281
        %6363 = vmatprep.subr.bf16.mxu0 0
        %6364 = vmatpush2.bf16.msra.mxu0 %v6280
        %6365 = vmatprep.subr.bf16.mxu0 0
        %6366 = vmatpush2.bf16.msra.mxu0 %v6279
        %6367 = vmatprep.mubr.bf16.mxu0 %v6041
        %6368 = vmatmul.mubr.bf16.gmra.mxu0 %v6040
        %v6369 = vpop.f32.mrf.mxu0
        %v6370 = vadd.f32 %v6141, %v6369
        %v6371 = vpop.f32.mrf.mxu0
        %v6372 = vpop.f32.mrf.mxu0
        %v6373 = vadd.f32 %v6141, %v6372
        %v6374 = vpop.f32.mrf.mxu0
        %6375 = vmatprep.mubr.bf16.mxu0 %v6045
        %6376 = vmatmul.mubr.bf16.gmra.mxu0 %v6044
        %v6377 = vpop.f32.mrf.mxu0
        %v6378 = vadd.f32 %v6141, %v6377
        %v6379 = vpop.f32.mrf.mxu0
        %v6380 = vpop.f32.mrf.mxu0
        %v6381 = vadd.f32 %v6141, %v6380
        %v6382 = vpop.f32.mrf.mxu0
        %6383 = vmatprep.mubr.bf16.mxu0 %v6049
        %6384 = vmatmul.mubr.bf16.gmra.mxu0 %v6048
        %v6385 = vpop.f32.mrf.mxu0
        %v6386 = vadd.f32 %v6141, %v6385
        %v6387 = vpop.f32.mrf.mxu0
        %v6388 = vpop.f32.mrf.mxu0
        %v6389 = vadd.f32 %v6141, %v6388
        %v6390 = vpop.f32.mrf.mxu0
        %6391 = vmatprep.mubr.bf16.mxu0 %v6053
        %6392 = vmatmul.mubr.bf16.gmra.mxu0 %v6052
        %v6393 = vpop.f32.mrf.mxu0
        %v6394 = vadd.f32 %v6141, %v6393
        %v6395 = vpop.f32.mrf.mxu0
        %v6396 = vpop.f32.mrf.mxu0
        %v6397 = vadd.f32 %v6141, %v6396
        %v6398 = vpop.f32.mrf.mxu0
        %6399 = vmatprep.mubr.bf16.mxu0 %v6057
        %6400 = vmatmul.mubr.bf16.gmra.mxu0 %v6056
        %v6401 = vpop.f32.mrf.mxu0
        %v6402 = vadd.f32 %v6141, %v6401
        %v6403 = vpop.f32.mrf.mxu0
        %v6404 = vpop.f32.mrf.mxu0
        %v6405 = vadd.f32 %v6141, %v6404
        %v6406 = vpop.f32.mrf.mxu0
        %6407 = vmatprep.mubr.bf16.mxu0 %v6061
        %6408 = vmatmul.mubr.bf16.gmra.mxu0 %v6060
        %v6409 = vpop.f32.mrf.mxu0
        %v6410 = vadd.f32 %v6141, %v6409
        %v6411 = vpop.f32.mrf.mxu0
        %v6412 = vpop.f32.mrf.mxu0
        %v6413 = vadd.f32 %v6141, %v6412
        %v6414 = vpop.f32.mrf.mxu0
        %6415 = vmatprep.mubr.bf16.mxu0 %v6065
        %6416 = vmatmul.mubr.bf16.gmra.mxu0 %v6064
        %v6417 = vpop.f32.mrf.mxu0
        %v6418 = vadd.f32 %v6141, %v6417
        %v6419 = vpop.f32.mrf.mxu0
        %v6420 = vpop.f32.mrf.mxu0
        %v6421 = vadd.f32 %v6141, %v6420
        %v6422 = vpop.f32.mrf.mxu0
        %6423 = vmatprep.mubr.bf16.mxu0 %v6069
        %6424 = vmatmul.mubr.bf16.gmra.mxu0 %v6068
        %v6425 = vpop.f32.mrf.mxu0
        %v6426 = vadd.f32 %v6141, %v6425
        %v6427 = vpop.f32.mrf.mxu0
        %v6428 = vpop.f32.mrf.mxu0
        %v6429 = vadd.f32 %v6141, %v6428
        %v6430 = vpop.f32.mrf.mxu0
        %6431 = vdwg.mxu0
        %6432 = vmatprep.subr.bf16.mxu0 0
        %6433 = vmatpush1.bf16.msra.mxu0 %v6294
        %6434 = vmatprep.subr.bf16.mxu0 0
        %6435 = vmatpush1.bf16.msra.mxu0 %v6293
        %6436 = vmatprep.subr.bf16.mxu0 0
        %6437 = vmatpush1.bf16.msra.mxu0 %v6292
        %6438 = vmatprep.subr.bf16.mxu0 0
        %6439 = vmatpush1.bf16.msra.mxu0 %v6291
        %6440 = vmatprep.subr.bf16.mxu0 0
        %6441 = vmatpush1.bf16.msra.mxu0 %v6290
        %6442 = vmatprep.subr.bf16.mxu0 0
        %6443 = vmatpush1.bf16.msra.mxu0 %v6289
        %6444 = vmatprep.subr.bf16.mxu0 0
        %6445 = vmatpush1.bf16.msra.mxu0 %v6288
        %6446 = vmatprep.subr.bf16.mxu0 0
        %6447 = vmatpush1.bf16.msra.mxu0 %v6287
        %6448 = vmatprep.subr.bf16.mxu0 0
        %6449 = vmatpush2.bf16.msra.mxu0 %v6302
        %6450 = vmatprep.subr.bf16.mxu0 0
        %6451 = vmatpush2.bf16.msra.mxu0 %v6301
        %6452 = vmatprep.subr.bf16.mxu0 0
        %6453 = vmatpush2.bf16.msra.mxu0 %v6300
        %6454 = vmatprep.subr.bf16.mxu0 0
        %6455 = vmatpush2.bf16.msra.mxu0 %v6299
        %6456 = vmatprep.subr.bf16.mxu0 0
        %6457 = vmatpush2.bf16.msra.mxu0 %v6298
        %6458 = vmatprep.subr.bf16.mxu0 0
        %6459 = vmatpush2.bf16.msra.mxu0 %v6297
        %6460 = vmatprep.subr.bf16.mxu0 0
        %6461 = vmatpush2.bf16.msra.mxu0 %v6296
        %6462 = vmatprep.subr.bf16.mxu0 0
        %6463 = vmatpush2.bf16.msra.mxu0 %v6295
        %6464 = vmatprep.mubr.bf16.mxu0 %v6043
        %6465 = vmatmul.mubr.bf16.gmra.mxu0 %v6042
        %v6466 = vpop.f32.mrf.mxu0
        %v6467 = vadd.f32 %v6370, %v6466
        %v6468 = vpop.f32.mrf.mxu0
        %v6469 = vpop.f32.mrf.mxu0
        %v6470 = vadd.f32 %v6373, %v6469
        %v6471 = vpop.f32.mrf.mxu0
        %6472 = vmatprep.mubr.bf16.mxu0 %v6047
        %6473 = vmatmul.mubr.bf16.gmra.mxu0 %v6046
        %v6474 = vpop.f32.mrf.mxu0
        %v6475 = vadd.f32 %v6378, %v6474
        %v6476 = vpop.f32.mrf.mxu0
        %v6477 = vpop.f32.mrf.mxu0
        %v6478 = vadd.f32 %v6381, %v6477
        %v6479 = vpop.f32.mrf.mxu0
        %6480 = vmatprep.mubr.bf16.mxu0 %v6051
        %6481 = vmatmul.mubr.bf16.gmra.mxu0 %v6050
        %v6482 = vpop.f32.mrf.mxu0
        %v6483 = vadd.f32 %v6386, %v6482
        %v6484 = vpop.f32.mrf.mxu0
        %v6485 = vpop.f32.mrf.mxu0
        %v6486 = vadd.f32 %v6389, %v6485
        %v6487 = vpop.f32.mrf.mxu0
        %6488 = vmatprep.mubr.bf16.mxu0 %v6055
        %6489 = vmatmul.mubr.bf16.gmra.mxu0 %v6054
        %v6490 = vpop.f32.mrf.mxu0
        %v6491 = vadd.f32 %v6394, %v6490
        %v6492 = vpop.f32.mrf.mxu0
        %v6493 = vpop.f32.mrf.mxu0
        %v6494 = vadd.f32 %v6397, %v6493
        %v6495 = vpop.f32.mrf.mxu0
        %6496 = vmatprep.mubr.bf16.mxu0 %v6059
        %6497 = vmatmul.mubr.bf16.gmra.mxu0 %v6058
        %v6498 = vpop.f32.mrf.mxu0
        %v6499 = vadd.f32 %v6402, %v6498
        %v6500 = vpop.f32.mrf.mxu0
        %v6501 = vpop.f32.mrf.mxu0
        %v6502 = vadd.f32 %v6405, %v6501
        %v6503 = vpop.f32.mrf.mxu0
        %6504 = vmatprep.mubr.bf16.mxu0 %v6063
        %6505 = vmatmul.mubr.bf16.gmra.mxu0 %v6062
        %v6506 = vpop.f32.mrf.mxu0
        %v6507 = vadd.f32 %v6410, %v6506
        %v6508 = vpop.f32.mrf.mxu0
        %v6509 = vpop.f32.mrf.mxu0
        %v6510 = vadd.f32 %v6413, %v6509
        %v6511 = vpop.f32.mrf.mxu0
        %6512 = vmatprep.mubr.bf16.mxu0 %v6067
        %6513 = vmatmul.mubr.bf16.gmra.mxu0 %v6066
        %v6514 = vpop.f32.mrf.mxu0
        %v6515 = vadd.f32 %v6418, %v6514
        %v6516 = vpop.f32.mrf.mxu0
        %v6517 = vpop.f32.mrf.mxu0
        %v6518 = vadd.f32 %v6421, %v6517
        %v6519 = vpop.f32.mrf.mxu0
        %6520 = vmatprep.mubr.bf16.mxu0 %v6071
        %6521 = vmatmul.mubr.bf16.gmra.mxu0 %v6070
        %v6522 = vpop.f32.mrf.mxu0
        %v6523 = vadd.f32 %v6426, %v6522
        %v6524 = vpop.f32.mrf.mxu0
        %v6525 = vpop.f32.mrf.mxu0
        %v6526 = vadd.f32 %v6429, %v6525
        %v6527 = vpop.f32.mrf.mxu0
        %6528 = vdwg.mxu0
        %v6529 = vadd.f32 %v4411, %v6467
        %v6530 = vadd.f32 %v4412, %v6470
        %v6531 = vadd.f32 %v4413, %v6475
        %v6532 = vadd.f32 %v4414, %v6478
        %v6533 = vadd.f32 %v4415, %v6483
        %v6534 = vadd.f32 %v4416, %v6486
        %v6535 = vadd.f32 %v4417, %v6491
        %v6536 = vadd.f32 %v4418, %v6494
        %v6537 = vadd.f32 %v4419, %v6499
        %v6538 = vadd.f32 %v4420, %v6502
        %v6539 = vadd.f32 %v4421, %v6507
        %v6540 = vadd.f32 %v4422, %v6510
        %v6541 = vadd.f32 %v4423, %v6515
        %v6542 = vadd.f32 %v4424, %v6518
        %v6543 = vadd.f32 %v4425, %v6523
        %v6544 = vadd.f32 %v4426, %v6526
        %6545 = vst [vmem:[%s634] sm:$0xff] %v6529
        %6546 = vst [vmem:[%s634 + $0x8] sm:$0xff] %v6530
        %6547 = vst [vmem:[%s634 + $0x10] sm:$0xff] %v6531
        %6548 = vst [vmem:[%s634 + $0x18] sm:$0xff] %v6532
        %6549 = vst [vmem:[%s634 + $0x20] sm:$0xff] %v6533
        %6550 = vst [vmem:[%s634 + $0x28] sm:$0xff] %v6534
        %6551 = vst [vmem:[%s634 + $0x30] sm:$0xff] %v6535
        %6552 = vst [vmem:[%s634 + $0x38] sm:$0xff] %v6536
        %6553 = vst [vmem:[%s634 + $0x40] sm:$0xff] %v6537
        %6554 = vst [vmem:[%s634 + $0x48] sm:$0xff] %v6538
        %6555 = vst [vmem:[%s634 + $0x50] sm:$0xff] %v6539
        %6556 = vst [vmem:[%s634 + $0x58] sm:$0xff] %v6540
        %6557 = vst [vmem:[%s634 + $0x60] sm:$0xff] %v6541
        %6558 = vst [vmem:[%s634 + $0x68] sm:$0xff] %v6542
        %6559 = vst [vmem:[%s634 + $0x70] sm:$0xff] %v6543
        %6560 = vst [vmem:[%s634 + $0x78] sm:$0xff] %v6544
        %s6561 = sand.u32 %s365, 1
        %s6562 = scalar_lea.sflag [#allocation4], %s6561
        %s6563 = sand.u32 %s365, 1
        %s6564 = smul.addr %s6563, 128
        %s6565 = scalar_lea.vmem [#allocation19], %s6564
        // Predicated region
        $region121: #{tpu_custom_call.1} parent=79 // pred_check
          %p6566 = pneg %p375
        $region122: #{tpu_custom_call.1} parent=79 // pred_check_branch
          %6568 = sbr.rel (%p6566) target = $region124
        $region123: #{tpu_custom_call.1} parent=79 // pred_region
          %s6569 = smul.u32 2, %s37
          %s6571 = ssub.s32 2048, 2048
          %6572 = vsyncadd %s6562, %s6571
          %s6573 = smul.addr %s6569, 8
          %s6574 = smul.addr %s6573, 128
          %s6575 = scalar_lea.hbm %s15, %s6574
          %s6576 = sshll.u32 %s6565, 4
          %s6577 = int_to_ptr.vmem [resolvable:$true] %s6576
          %6582 = dma.vmem_to_hbm [thread:$0]  %s6577, 2048, %s6575, %s6562, 128, 128, 8
        $region124: #{tpu_custom_call.1} parent=79 // pred_fallthru
          _
      $region80: #{tpu_custom_call.1} parent=5 // pred_fallthru
        _
      %p6583 = scmp.le.s32.totalorder 2, %s32
      // Predicated region
      $region125: #{tpu_custom_call.1} parent=5 // pred_check
        %p6584 = pneg %p6583
      $region126: #{tpu_custom_call.1} parent=5 // pred_check_branch
        %6586 = sbr.rel (%p6584) target = $region128
      $region127: #{tpu_custom_call.1} parent=5 // pred_region
        %s6587 = ssub.s32 %s32, 2
        // Predicated region
        $region129: #{tpu_custom_call.1} parent=127 // pred_check
          %p6588 = pneg %p381
        $region130: #{tpu_custom_call.1} parent=127 // pred_check_branch
          %6590 = sbr.rel (%p6588) target = $region132
        $region131: #{tpu_custom_call.1} parent=127 // pred_region
          %s6591 = sand.u32 %s366, 1
          %s6592 = scalar_lea.sflag [#allocation4], %s6591
          %s6593 = sand.u32 %s366, 1
          %s6594 = smul.addr %s6593, 128
          %s6595 = scalar_lea.vmem [#allocation19], %s6594
          %6596 = dma.done %s6592, 2048
        $region132: #{tpu_custom_call.1} parent=127 // pred_fallthru
          _
      $region128: #{tpu_custom_call.1} parent=5 // pred_fallthru
        _
    $region6: #{tpu_custom_call.1} parent=1 // loop_footer
      %s36 = sadd.s32 1, %s32
    $region7: #{tpu_custom_call.1} parent=1 // loop_footer_branch
      %31 = sbr.rel target = $region3
    $region8: #{tpu_custom_call.1} parent=1 // loop_exit
      _
    %6597 = vsyncpa [#allocation3], 1
    %s6598 = scalar_lea.sflag [#allocation3], 1
    %6599 = vsyncpa %s6598, 1
    %6600 = vsyncpa [#allocation6], 1
    %6601 = vsyncpa [#allocation9], 1
    %6602 = vsyncpa [#allocation12], 1
    %6603 = vsyncpa [#allocation15], 1
    %6604 = vsyncpa [#allocation18], 1
    %6605 = vsyncpa [#allocation4], 1
    %s6606 = scalar_lea.sflag [#allocation4], 1
    %6607 = vsyncpa %s6606, 1

</llo_original>
